<compile_context>
chip_gen: v5e
topology: v5e:2x2
jax: 0.10.0
libtpu: 0.0.40
codegen_flags: <defaults>
</compile_context>

<pallas_src>
import jax
import jax.numpy as jnp
from jax import lax
from jax.experimental import pallas as pl
from jax.experimental.pallas import tpu as pltpu


def _tv3d_kernel(lut_ref, tv_ref, mn_ref):
    lut = lut_ref[...]                                   # (3, D, D, D) f32
    D = lut.shape[-1]
    inv_n = 1.0 / float(3 * D * D * (D - 1))             # shared static denominator

    # In-register edge weights (built once; tiny slabs, no HBM traffic).
    lane_idx = lax.broadcasted_iota(jnp.int32, (D, D - 1), 1)
    w_r = jnp.where((lane_idx == 0) | (lane_idx == D - 2), 2.0, 1.0)  # (D, D-1)
    sub_idx = lax.broadcasted_iota(jnp.int32, (D - 1, D), 0)
    w_g = jnp.where((sub_idx == 0) | (sub_idx == D - 2), 2.0, 1.0)    # (D-1, D)

    # ---- r term: diff along the lane (last) axis ---------------------------
    dif_r = lut[:, :, :, :-1] - lut[:, :, :, 1:]         # (3, D, D, D-1)
    slab_sq_r = jnp.sum(dif_r * dif_r, axis=(0, 1))      # (D, D-1)   VPU adds
    slab_mn_r = jnp.sum(jnp.maximum(dif_r, 0.0), axis=(0, 1))

    # ---- g term: diff along the sublane axis --------------------------------
    dif_g = lut[:, :, :-1, :] - lut[:, :, 1:, :]          # (3, D, D-1, D)
    slab_sq_g = jnp.sum(dif_g * dif_g, axis=(0, 1))       # (D-1, D)
    slab_mn_g = jnp.sum(jnp.maximum(dif_g, 0.0), axis=(0, 1))

    # ---- b term: diff along a leading axis (whole-vreg slices, no relayout) -
    dif_b = lut[:, :-1, :, :] - lut[:, 1:, :, :]           # (3, D-1, D, D)
    sq_b = dif_b * dif_b
    slab_sq_b = (jnp.sum(sq_b, axis=(0, 1))                        # plain sum  (D, D)
                 + jnp.sum(sq_b[:, 0] + sq_b[:, D - 2], axis=0))   # edge extra (D, D)
    slab_mn_b = jnp.sum(jnp.maximum(dif_b, 0.0), axis=(0, 1))      # (D, D)

    # ---- final small cross-lane reduces (XLU) + single static divide -------
    tv_sum = (jnp.sum(slab_sq_r * w_r)
              + jnp.sum(slab_sq_g * w_g)
              + jnp.sum(slab_sq_b))
    mn_sum = jnp.sum(slab_mn_r) + jnp.sum(slab_mn_g) + jnp.sum(slab_mn_b)

    tv_ref[...] = jnp.reshape(tv_sum * inv_n, (1, 1))
    mn_ref[...] = jnp.reshape(mn_sum * inv_n, (1, 1))


def tv_3d(lut):
    """Pallas implementation of TV_3D.forward. lut: (3, D, D, D) float32."""
    D = lut.shape[-1]
    vmem = pl.BlockSpec(memory_space=pltpu.MemorySpace.VMEM)

    cost = pl.CostEstimate(
        flops=10 * 3 * D ** 3,                   # diffs, squares, relus, reduces
        transcendentals=0,
        bytes_accessed=lut.size * lut.dtype.itemsize + 8,
    )

    tv2d, mn2d = pl.pallas_call(
        _tv3d_kernel,
        out_shape=(jax.ShapeDtypeStruct((1, 1), jnp.float32),
                   jax.ShapeDtypeStruct((1, 1), jnp.float32)),
        in_specs=[vmem],
        out_specs=(vmem, vmem),
        cost_estimate=cost,
    )(lut)
    return tv2d[0, 0], mn2d[0, 0]


# ----------------------------- reference ------------------------------------
def _make_weights(dim):
    # Exactly mirrors the PyTorch module's weight construction (reference only;
    # the kernel never materializes these).
    wr = jnp.ones((3, dim, dim, dim - 1), jnp.float32)
    wr = wr.at[:, :, :, 0].multiply(2.0).at[:, :, :, dim - 2].multiply(2.0)
    wg = jnp.ones((3, dim, dim - 1, dim), jnp.float32)
    wg = wg.at[:, :, 0, :].multiply(2.0).at[:, :, dim - 2, :].multiply(2.0)
    wb = jnp.ones((3, dim - 1, dim, dim), jnp.float32)
    wb = wb.at[:, 0, :, :].multiply(2.0).at[:, dim - 2, :, :].multiply(2.0)
    return wr, wg, wb


def _tv_3d_ref(lut):
    """Pure-JAX reference (mirrors the PyTorch forward) for validation."""
    dim = lut.shape[-1]
    wr, wg, wb = _make_weights(dim)
    dif_r = lut[:, :, :, :-1] - lut[:, :, :, 1:]
    dif_g = lut[:, :, :-1, :] - lut[:, :, 1:, :]
    dif_b = lut[:, :-1, :, :] - lut[:, 1:, :, :]
    tv = (jnp.mean(dif_r ** 2 * wr) + jnp.mean(dif_g ** 2 * wg)
          + jnp.mean(dif_b ** 2 * wb))
    mn = (jnp.mean(jax.nn.relu(dif_r)) + jnp.mean(jax.nn.relu(dif_g))
          + jnp.mean(jax.nn.relu(dif_b)))
    return tv, mn


if __name__ == "__main__":
    dim = 33  # default LUT grid size from the module
    key = jax.random.PRNGKey(0)
    lut = jax.random.normal(key, (3, dim, dim, dim), dtype=jnp.float32)

    tv, mn = tv_3d(lut)
    tv, mn = jax.block_until_ready((tv, mn))

    tv_ref, mn_ref = _tv_3d_ref(lut)
    assert jnp.allclose(tv, tv_ref, rtol=1e-4, atol=1e-5), (tv, tv_ref)
    assert jnp.allclose(mn, mn_ref, rtol=1e-4, atol=1e-5), (mn, mn_ref)

    print("KERNEL_OK")
</pallas_src>

<mosaic_0001>
module attributes {stable_mosaic.version = 11 : i64} {
  func.func @_tv3d_kernel(%arg0: memref<3x33x33x33xf32, #tpu.memory_space<vmem>>, %arg1: memref<1x1xf32, #tpu.memory_space<vmem>>, %arg2: memref<1x1xf32, #tpu.memory_space<vmem>>) attributes {dimension_semantics = [], scalar_prefetch = 0 : i64, scratch_operands = 0 : i64, tpu.core_type = #tpu.core_type<tc>} {
    %c0 = arith.constant 0 : index
    %c0_0 = arith.constant 0 : index
    %c0_1 = arith.constant 0 : index
    %c0_2 = arith.constant 0 : index
    %0 = vector.load %arg0[%c0, %c0_0, %c0_1, %c0_2] : memref<3x33x33x33xf32, #tpu.memory_space<vmem>>, vector<3x33x33x33xf32>
    %1 = tpu.iota {dimensions = array<i32: 1>} : vector<33x32xi32>
    %c0_i32 = arith.constant 0 : i32
    %2 = vector.broadcast %c0_i32 : i32 to vector<33x32xi32>
    %3 = arith.cmpi eq, %1, %2 : vector<33x32xi32>
    %c31_i32 = arith.constant 31 : i32
    %4 = vector.broadcast %c31_i32 : i32 to vector<33x32xi32>
    %5 = arith.cmpi eq, %1, %4 : vector<33x32xi32>
    %6 = arith.ori %3, %5 : vector<33x32xi1>
    %cst = arith.constant 2.000000e+00 : f32
    %cst_3 = arith.constant 1.000000e+00 : f32
    %7 = vector.broadcast %cst : f32 to vector<33x32xf32>
    %8 = vector.broadcast %cst_3 : f32 to vector<33x32xf32>
    %9 = arith.select %6, %7, %8 : vector<33x32xi1>, vector<33x32xf32>
    %10 = tpu.iota {dimensions = array<i32: 0>} : vector<32x33xi32>
    %c0_i32_4 = arith.constant 0 : i32
    %11 = vector.broadcast %c0_i32_4 : i32 to vector<32x33xi32>
    %12 = arith.cmpi eq, %10, %11 : vector<32x33xi32>
    %c31_i32_5 = arith.constant 31 : i32
    %13 = vector.broadcast %c31_i32_5 : i32 to vector<32x33xi32>
    %14 = arith.cmpi eq, %10, %13 : vector<32x33xi32>
    %15 = arith.ori %12, %14 : vector<32x33xi1>
    %cst_6 = arith.constant 2.000000e+00 : f32
    %cst_7 = arith.constant 1.000000e+00 : f32
    %16 = vector.broadcast %cst_6 : f32 to vector<32x33xf32>
    %17 = vector.broadcast %cst_7 : f32 to vector<32x33xf32>
    %18 = arith.select %15, %16, %17 : vector<32x33xi1>, vector<32x33xf32>
    %19 = vector.extract_strided_slice %0 {offsets = [0, 0, 0, 0], sizes = [3, 33, 33, 32], strides = [1, 1, 1, 1]} : vector<3x33x33x33xf32> to vector<3x33x33x32xf32>
    %20 = vector.extract_strided_slice %0 {offsets = [0, 0, 0, 1], sizes = [3, 33, 33, 32], strides = [1, 1, 1, 1]} : vector<3x33x33x33xf32> to vector<3x33x33x32xf32>
    %21 = arith.subf %19, %20 : vector<3x33x33x32xf32>
    %22 = arith.mulf %21, %21 : vector<3x33x33x32xf32>
    %cst_8 = arith.constant dense<0.000000e+00> : vector<33x32xf32>
    %23 = vector.multi_reduction <add>, %22, %cst_8 [0, 1] : vector<3x33x33x32xf32> to vector<33x32xf32>
    %cst_9 = arith.constant 0.000000e+00 : f32
    %24 = vector.broadcast %cst_9 : f32 to vector<3x33x33x32xf32>
    %25 = arith.maximumf %21, %24 : vector<3x33x33x32xf32>
    %cst_10 = arith.constant dense<0.000000e+00> : vector<33x32xf32>
    %26 = vector.multi_reduction <add>, %25, %cst_10 [0, 1] : vector<3x33x33x32xf32> to vector<33x32xf32>
    %27 = vector.extract_strided_slice %0 {offsets = [0, 0, 0, 0], sizes = [3, 33, 32, 33], strides = [1, 1, 1, 1]} : vector<3x33x33x33xf32> to vector<3x33x32x33xf32>
    %28 = vector.extract_strided_slice %0 {offsets = [0, 0, 1, 0], sizes = [3, 33, 32, 33], strides = [1, 1, 1, 1]} : vector<3x33x33x33xf32> to vector<3x33x32x33xf32>
    %29 = arith.subf %27, %28 : vector<3x33x32x33xf32>
    %30 = arith.mulf %29, %29 : vector<3x33x32x33xf32>
    %cst_11 = arith.constant dense<0.000000e+00> : vector<32x33xf32>
    %31 = vector.multi_reduction <add>, %30, %cst_11 [0, 1] : vector<3x33x32x33xf32> to vector<32x33xf32>
    %cst_12 = arith.constant 0.000000e+00 : f32
    %32 = vector.broadcast %cst_12 : f32 to vector<3x33x32x33xf32>
    %33 = arith.maximumf %29, %32 : vector<3x33x32x33xf32>
    %cst_13 = arith.constant dense<0.000000e+00> : vector<32x33xf32>
    %34 = vector.multi_reduction <add>, %33, %cst_13 [0, 1] : vector<3x33x32x33xf32> to vector<32x33xf32>
    %35 = vector.extract_strided_slice %0 {offsets = [0, 0, 0, 0], sizes = [3, 32, 33, 33], strides = [1, 1, 1, 1]} : vector<3x33x33x33xf32> to vector<3x32x33x33xf32>
    %36 = vector.extract_strided_slice %0 {offsets = [0, 1, 0, 0], sizes = [3, 32, 33, 33], strides = [1, 1, 1, 1]} : vector<3x33x33x33xf32> to vector<3x32x33x33xf32>
    %37 = arith.subf %35, %36 : vector<3x32x33x33xf32>
    %38 = arith.mulf %37, %37 : vector<3x32x33x33xf32>
    %cst_14 = arith.constant dense<0.000000e+00> : vector<33x33xf32>
    %39 = vector.multi_reduction <add>, %38, %cst_14 [0, 1] : vector<3x32x33x33xf32> to vector<33x33xf32>
    %40 = vector.extract_strided_slice %38 {offsets = [0, 0, 0, 0], sizes = [3, 1, 33, 33], strides = [1, 1, 1, 1]} : vector<3x32x33x33xf32> to vector<3x1x33x33xf32>
    %41 = vector.shape_cast %40 : vector<3x1x33x33xf32> to vector<3x33x33xf32>
    %42 = vector.extract_strided_slice %38 {offsets = [0, 31, 0, 0], sizes = [3, 1, 33, 33], strides = [1, 1, 1, 1]} : vector<3x32x33x33xf32> to vector<3x1x33x33xf32>
    %43 = vector.shape_cast %42 : vector<3x1x33x33xf32> to vector<3x33x33xf32>
    %44 = arith.addf %41, %43 : vector<3x33x33xf32>
    %cst_15 = arith.constant dense<0.000000e+00> : vector<33x33xf32>
    %45 = vector.multi_reduction <add>, %44, %cst_15 [0] : vector<3x33x33xf32> to vector<33x33xf32>
    %46 = arith.addf %39, %45 : vector<33x33xf32>
    %cst_16 = arith.constant 0.000000e+00 : f32
    %47 = vector.broadcast %cst_16 : f32 to vector<3x32x33x33xf32>
    %48 = arith.maximumf %37, %47 : vector<3x32x33x33xf32>
    %cst_17 = arith.constant dense<0.000000e+00> : vector<33x33xf32>
    %49 = vector.multi_reduction <add>, %48, %cst_17 [0, 1] : vector<3x32x33x33xf32> to vector<33x33xf32>
    %50 = arith.mulf %23, %9 : vector<33x32xf32>
    %51 = vector.shape_cast %50 : vector<33x32xf32> to vector<1x33x32xf32>
    %cst_18 = arith.constant dense<0.000000e+00> : vector<1xf32>
    %52 = vector.multi_reduction <add>, %51, %cst_18 [1, 2] : vector<1x33x32xf32> to vector<1xf32>
    %53 = vector.shape_cast %52 : vector<1xf32> to vector<1x1x1xf32>
    %54 = vector.extract %53[0, 0, 0] : f32 from vector<1x1x1xf32>
    %55 = arith.mulf %31, %18 : vector<32x33xf32>
    %56 = vector.shape_cast %55 : vector<32x33xf32> to vector<1x32x33xf32>
    %cst_19 = arith.constant dense<0.000000e+00> : vector<1xf32>
    %57 = vector.multi_reduction <add>, %56, %cst_19 [1, 2] : vector<1x32x33xf32> to vector<1xf32>
    %58 = vector.shape_cast %57 : vector<1xf32> to vector<1x1x1xf32>
    %59 = vector.extract %58[0, 0, 0] : f32 from vector<1x1x1xf32>
    %60 = arith.addf %54, %59 : f32
    %61 = vector.shape_cast %46 : vector<33x33xf32> to vector<1x33x33xf32>
    %cst_20 = arith.constant dense<0.000000e+00> : vector<1xf32>
    %62 = vector.multi_reduction <add>, %61, %cst_20 [1, 2] : vector<1x33x33xf32> to vector<1xf32>
    %63 = vector.shape_cast %62 : vector<1xf32> to vector<1x1x1xf32>
    %64 = vector.extract %63[0, 0, 0] : f32 from vector<1x1x1xf32>
    %65 = arith.addf %60, %64 : f32
    %66 = vector.shape_cast %26 : vector<33x32xf32> to vector<1x33x32xf32>
    %cst_21 = arith.constant dense<0.000000e+00> : vector<1xf32>
    %67 = vector.multi_reduction <add>, %66, %cst_21 [1, 2] : vector<1x33x32xf32> to vector<1xf32>
    %68 = vector.shape_cast %67 : vector<1xf32> to vector<1x1x1xf32>
    %69 = vector.extract %68[0, 0, 0] : f32 from vector<1x1x1xf32>
    %70 = vector.shape_cast %34 : vector<32x33xf32> to vector<1x32x33xf32>
    %cst_22 = arith.constant dense<0.000000e+00> : vector<1xf32>
    %71 = vector.multi_reduction <add>, %70, %cst_22 [1, 2] : vector<1x32x33xf32> to vector<1xf32>
    %72 = vector.shape_cast %71 : vector<1xf32> to vector<1x1x1xf32>
    %73 = vector.extract %72[0, 0, 0] : f32 from vector<1x1x1xf32>
    %74 = arith.addf %69, %73 : f32
    %75 = vector.shape_cast %49 : vector<33x33xf32> to vector<1x33x33xf32>
    %cst_23 = arith.constant dense<0.000000e+00> : vector<1xf32>
    %76 = vector.multi_reduction <add>, %75, %cst_23 [1, 2] : vector<1x33x33xf32> to vector<1xf32>
    %77 = vector.shape_cast %76 : vector<1xf32> to vector<1x1x1xf32>
    %78 = vector.extract %77[0, 0, 0] : f32 from vector<1x1x1xf32>
    %79 = arith.addf %74, %78 : f32
    %cst_24 = arith.constant 9.565350e-06 : f32
    %80 = arith.mulf %65, %cst_24 : f32
    %81 = vector.broadcast %80 : f32 to vector<1x1xf32>
    %c0_25 = arith.constant 0 : index
    %c0_26 = arith.constant 0 : index
    %82 = vector.load %arg1[%c0_25, %c0_26] : memref<1x1xf32, #tpu.memory_space<vmem>>, vector<1x1xf32>
    tpu.vector_store %arg1[%c0_25, %c0_26], %81 {strides = array<i32>} : memref<1x1xf32, #tpu.memory_space<vmem>>, vector<1x1xf32>,
    %cst_27 = arith.constant 9.565350e-06 : f32
    %83 = arith.mulf %79, %cst_27 : f32
    %84 = vector.broadcast %83 : f32 to vector<1x1xf32>
    %c0_28 = arith.constant 0 : index
    %c0_29 = arith.constant 0 : index
    %85 = vector.load %arg2[%c0_28, %c0_29] : memref<1x1xf32, #tpu.memory_space<vmem>>, vector<1x1xf32>
    tpu.vector_store %arg2[%c0_28, %c0_29], %84 {strides = array<i32>} : memref<1x1xf32, #tpu.memory_space<vmem>>, vector<1x1xf32>,
    return
  }
}

</mosaic_0001>

<llo_original>
// kernel: tpu_custom_call.1
$region0: #{tpu_custom_call.1}
  #allocation0 [shape = 'u32[]', space=smem, size = 0x4, offset = 0x4, fixed_abs, tag = 'smem constant byte address 0x4 - core index']
  #allocation1 [shape = 'u32[72,128]{1,0:T(1,128)}', space=vmem, size = 0x9000, scoped, tag = 'internal scratch']
  %s0 = inlined_call_operand.hbm [shape: f32[3,33,33,33], index: 0, kind: input, shape index: {}]
  %s1 = inlined_call_operand.hbm [shape: f32[1,1], index: 1, kind: output, shape index: {0}]
  %s2 = inlined_call_operand.hbm [shape: f32[1,1], index: 2, kind: output, shape index: {1}]
  %3 = xla_tuple %s1, %s2
  %s4 = sld [smem:[#allocation0]]
  $region26: #{tpu_custom_call.1} parent=0
    _
  %s6 = ssub.s32 1, %s4
  %s7 = scalar_select 0, %s6, %s4
  $region1: #{tpu_custom_call.1} parent=0
    #allocation2 [shape = 'u8[2027520]{0}', space=vmem, size = 0x1ef000, scoped, tag = 'input window, operand 0, single buffered']
    #allocation3 [shape = 's32[1]{0}', space=sflag, size = 0x4, scoped, tag = 'scoped memory for tpu_custom_call.1']
    #allocation4 [shape = 's32[1]{0}', space=sflag, size = 0x4, scoped, tag = 'scoped memory for tpu_custom_call.1']
    #allocation5 [shape = 'u8[512]{0}', space=vmem, size = 0x400, scoped, tag = 'output window, operand 0, single buffered']
    #allocation6 [shape = 'u8[512]{0}', space=vmem, size = 0x400, scoped, tag = 'output window, operand 1, single buffered']
    #allocation7 [shape = 's32[1]{0}', space=sflag, size = 0x4, scoped, tag = 'scoped memory for tpu_custom_call.1']
    %8 = vsyncpa [#allocation3], 0
    %9 = vsyncpa [#allocation4], 0
    %10 = vsyncpa [#allocation7], 0
    // Predicated region
    $region2: #{tpu_custom_call.1} parent=1 // pred_check
      _
    $region3: #{tpu_custom_call.1} parent=1 // pred_check_branch
      %12 = sbr.rel (0) target = $region5
    $region4: #{tpu_custom_call.1} parent=1 // pred_region
      %14 = vsyncadd [#allocation3], 0
      %s15 = sshll.u32 %s0, 4
      %s16 = int_to_ptr.hbm [resolvable:$true] %s15
      %s17 = sshll.u32 [#allocation2], 4
      %s18 = int_to_ptr.vmem [resolvable:$true] %s17
      %23 = dma.hbm_to_vmem [thread:$0]  %s16, 63360, %s18, [#allocation3], 128, 128, 8
    $region5: #{tpu_custom_call.1} parent=1 // pred_fallthru
      _
    // Predicated region
    $region6: #{tpu_custom_call.1} parent=1 // pred_check
      _
    $region7: #{tpu_custom_call.1} parent=1 // pred_check_branch
      %25 = sbr.rel (0) target = $region9
    $region8: #{tpu_custom_call.1} parent=1 // pred_region
      %27 = dma.done [#allocation3], 63360
    $region9: #{tpu_custom_call.1} parent=1 // pred_fallthru
      _
    %v28 = vld [vmem:[#allocation2] sm:$0xff]
    %v29 = vld [vmem:[#allocation2 + $0x8] sm:$0xff]
    %v30 = vld [vmem:[#allocation2 + $0x10] sm:$0xff]
    %v31 = vld [vmem:[#allocation2 + $0x18] sm:$0xff]
    %v32 = vld [vmem:[#allocation2 + $0x20] sm:$0x1]
    %v33 = vld [vmem:[#allocation2 + $0x28] sm:$0xff]
    %v34 = vld [vmem:[#allocation2 + $0x30] sm:$0xff]
    %v35 = vld [vmem:[#allocation2 + $0x38] sm:$0xff]
    %v36 = vld [vmem:[#allocation2 + $0x40] sm:$0xff]
    %v37 = vld [vmem:[#allocation2 + $0x48] sm:$0x1]
    %v38 = vld [vmem:[#allocation2 + $0x50] sm:$0xff]
    %v39 = vld [vmem:[#allocation2 + $0x58] sm:$0xff]
    %v40 = vld [vmem:[#allocation2 + $0x60] sm:$0xff]
    %v41 = vld [vmem:[#allocation2 + $0x68] sm:$0xff]
    %v42 = vld [vmem:[#allocation2 + $0x70] sm:$0x1]
    %v43 = vld [vmem:[#allocation2 + $0x78] sm:$0xff]
    %v44 = vld [vmem:[#allocation2 + $0x80] sm:$0xff]
    %v45 = vld [vmem:[#allocation2 + $0x88] sm:$0xff]
    %v46 = vld [vmem:[#allocation2 + $0x90] sm:$0xff]
    %v47 = vld [vmem:[#allocation2 + $0x98] sm:$0x1]
    %v48 = vld [vmem:[#allocation2 + $0xa0] sm:$0xff]
    %v49 = vld [vmem:[#allocation2 + $0xa8] sm:$0xff]
    %v50 = vld [vmem:[#allocation2 + $0xb0] sm:$0xff]
    %v51 = vld [vmem:[#allocation2 + $0xb8] sm:$0xff]
    %v52 = vld [vmem:[#allocation2 + $0xc0] sm:$0x1]
    %v53 = vld [vmem:[#allocation2 + $0xc8] sm:$0xff]
    %v54 = vld [vmem:[#allocation2 + $0xd0] sm:$0xff]
    %v55 = vld [vmem:[#allocation2 + $0xd8] sm:$0xff]
    %v56 = vld [vmem:[#allocation2 + $0xe0] sm:$0xff]
    %v57 = vld [vmem:[#allocation2 + $0xe8] sm:$0x1]
    %v58 = vld [vmem:[#allocation2 + $0xf0] sm:$0xff]
    %v59 = vld [vmem:[#allocation2 + $0xf8] sm:$0xff]
    %v60 = vld [vmem:[#allocation2 + $0x100] sm:$0xff]
    %v61 = vld [vmem:[#allocation2 + $0x108] sm:$0xff]
    %v62 = vld [vmem:[#allocation2 + $0x110] sm:$0x1]
    %v63 = vld [vmem:[#allocation2 + $0x118] sm:$0xff]
    %v64 = vld [vmem:[#allocation2 + $0x120] sm:$0xff]
    %v65 = vld [vmem:[#allocation2 + $0x128] sm:$0xff]
    %v66 = vld [vmem:[#allocation2 + $0x130] sm:$0xff]
    %v67 = vld [vmem:[#allocation2 + $0x138] sm:$0x1]
    %v68 = vld [vmem:[#allocation2 + $0x140] sm:$0xff]
    %v69 = vld [vmem:[#allocation2 + $0x148] sm:$0xff]
    %v70 = vld [vmem:[#allocation2 + $0x150] sm:$0xff]
    %v71 = vld [vmem:[#allocation2 + $0x158] sm:$0xff]
    %v72 = vld [vmem:[#allocation2 + $0x160] sm:$0x1]
    %v73 = vld [vmem:[#allocation2 + $0x168] sm:$0xff]
    %v74 = vld [vmem:[#allocation2 + $0x170] sm:$0xff]
    %v75 = vld [vmem:[#allocation2 + $0x178] sm:$0xff]
    %v76 = vld [vmem:[#allocation2 + $0x180] sm:$0xff]
    %v77 = vld [vmem:[#allocation2 + $0x188] sm:$0x1]
    %v78 = vld [vmem:[#allocation2 + $0x190] sm:$0xff]
    %v79 = vld [vmem:[#allocation2 + $0x198] sm:$0xff]
    %v80 = vld [vmem:[#allocation2 + $0x1a0] sm:$0xff]
    %v81 = vld [vmem:[#allocation2 + $0x1a8] sm:$0xff]
    %v82 = vld [vmem:[#allocation2 + $0x1b0] sm:$0x1]
    %v83 = vld [vmem:[#allocation2 + $0x1b8] sm:$0xff]
    %v84 = vld [vmem:[#allocation2 + $0x1c0] sm:$0xff]
    %v85 = vld [vmem:[#allocation2 + $0x1c8] sm:$0xff]
    %v86 = vld [vmem:[#allocation2 + $0x1d0] sm:$0xff]
    %v87 = vld [vmem:[#allocation2 + $0x1d8] sm:$0x1]
    %v88 = vld [vmem:[#allocation2 + $0x1e0] sm:$0xff]
    %v89 = vld [vmem:[#allocation2 + $0x1e8] sm:$0xff]
    %v90 = vld [vmem:[#allocation2 + $0x1f0] sm:$0xff]
    %v91 = vld [vmem:[#allocation2 + $0x1f8] sm:$0xff]
    %v92 = vld [vmem:[#allocation2 + $0x200] sm:$0x1]
    %v93 = vld [vmem:[#allocation2 + $0x208] sm:$0xff]
    %v94 = vld [vmem:[#allocation2 + $0x210] sm:$0xff]
    %v95 = vld [vmem:[#allocation2 + $0x218] sm:$0xff]
    %v96 = vld [vmem:[#allocation2 + $0x220] sm:$0xff]
    %v97 = vld [vmem:[#allocation2 + $0x228] sm:$0x1]
    %v98 = vld [vmem:[#allocation2 + $0x230] sm:$0xff]
    %v99 = vld [vmem:[#allocation2 + $0x238] sm:$0xff]
    %v100 = vld [vmem:[#allocation2 + $0x240] sm:$0xff]
    %v101 = vld [vmem:[#allocation2 + $0x248] sm:$0xff]
    %v102 = vld [vmem:[#allocation2 + $0x250] sm:$0x1]
    %v103 = vld [vmem:[#allocation2 + $0x258] sm:$0xff]
    %v104 = vld [vmem:[#allocation2 + $0x260] sm:$0xff]
    %v105 = vld [vmem:[#allocation2 + $0x268] sm:$0xff]
    %v106 = vld [vmem:[#allocation2 + $0x270] sm:$0xff]
    %v107 = vld [vmem:[#allocation2 + $0x278] sm:$0x1]
    %v108 = vld [vmem:[#allocation2 + $0x280] sm:$0xff]
    %v109 = vld [vmem:[#allocation2 + $0x288] sm:$0xff]
    %v110 = vld [vmem:[#allocation2 + $0x290] sm:$0xff]
    %v111 = vld [vmem:[#allocation2 + $0x298] sm:$0xff]
    %v112 = vld [vmem:[#allocation2 + $0x2a0] sm:$0x1]
    %v113 = vld [vmem:[#allocation2 + $0x2a8] sm:$0xff]
    %v114 = vld [vmem:[#allocation2 + $0x2b0] sm:$0xff]
    %v115 = vld [vmem:[#allocation2 + $0x2b8] sm:$0xff]
    %v116 = vld [vmem:[#allocation2 + $0x2c0] sm:$0xff]
    %v117 = vld [vmem:[#allocation2 + $0x2c8] sm:$0x1]
    %v118 = vld [vmem:[#allocation2 + $0x2d0] sm:$0xff]
    %v119 = vld [vmem:[#allocation2 + $0x2d8] sm:$0xff]
    %v120 = vld [vmem:[#allocation2 + $0x2e0] sm:$0xff]
    %v121 = vld [vmem:[#allocation2 + $0x2e8] sm:$0xff]
    %v122 = vld [vmem:[#allocation2 + $0x2f0] sm:$0x1]
    %v123 = vld [vmem:[#allocation2 + $0x2f8] sm:$0xff]
    %v124 = vld [vmem:[#allocation2 + $0x300] sm:$0xff]
    %v125 = vld [vmem:[#allocation2 + $0x308] sm:$0xff]
    %v126 = vld [vmem:[#allocation2 + $0x310] sm:$0xff]
    %v127 = vld [vmem:[#allocation2 + $0x318] sm:$0x1]
    %v128 = vld [vmem:[#allocation2 + $0x320] sm:$0xff]
    %v129 = vld [vmem:[#allocation2 + $0x328] sm:$0xff]
    %v130 = vld [vmem:[#allocation2 + $0x330] sm:$0xff]
    %v131 = vld [vmem:[#allocation2 + $0x338] sm:$0xff]
    %v132 = vld [vmem:[#allocation2 + $0x340] sm:$0x1]
    %v133 = vld [vmem:[#allocation2 + $0x348] sm:$0xff]
    %v134 = vld [vmem:[#allocation2 + $0x350] sm:$0xff]
    %v135 = vld [vmem:[#allocation2 + $0x358] sm:$0xff]
    %v136 = vld [vmem:[#allocation2 + $0x360] sm:$0xff]
    %v137 = vld [vmem:[#allocation2 + $0x368] sm:$0x1]
    %v138 = vld [vmem:[#allocation2 + $0x370] sm:$0xff]
    %v139 = vld [vmem:[#allocation2 + $0x378] sm:$0xff]
    %v140 = vld [vmem:[#allocation2 + $0x380] sm:$0xff]
    %v141 = vld [vmem:[#allocation2 + $0x388] sm:$0xff]
    %v142 = vld [vmem:[#allocation2 + $0x390] sm:$0x1]
    %v143 = vld [vmem:[#allocation2 + $0x398] sm:$0xff]
    %v144 = vld [vmem:[#allocation2 + $0x3a0] sm:$0xff]
    %v145 = vld [vmem:[#allocation2 + $0x3a8] sm:$0xff]
    %v146 = vld [vmem:[#allocation2 + $0x3b0] sm:$0xff]
    %v147 = vld [vmem:[#allocation2 + $0x3b8] sm:$0x1]
    %v148 = vld [vmem:[#allocation2 + $0x3c0] sm:$0xff]
    %v149 = vld [vmem:[#allocation2 + $0x3c8] sm:$0xff]
    %v150 = vld [vmem:[#allocation2 + $0x3d0] sm:$0xff]
    %v151 = vld [vmem:[#allocation2 + $0x3d8] sm:$0xff]
    %v152 = vld [vmem:[#allocation2 + $0x3e0] sm:$0x1]
    %v153 = vld [vmem:[#allocation2 + $0x3e8] sm:$0xff]
    %v154 = vld [vmem:[#allocation2 + $0x3f0] sm:$0xff]
    %v155 = vld [vmem:[#allocation2 + $0x3f8] sm:$0xff]
    %v156 = vld [vmem:[#allocation2 + $0x400] sm:$0xff]
    %v157 = vld [vmem:[#allocation2 + $0x408] sm:$0x1]
    %v158 = vld [vmem:[#allocation2 + $0x410] sm:$0xff]
    %v159 = vld [vmem:[#allocation2 + $0x418] sm:$0xff]
    %v160 = vld [vmem:[#allocation2 + $0x420] sm:$0xff]
    %v161 = vld [vmem:[#allocation2 + $0x428] sm:$0xff]
    %v162 = vld [vmem:[#allocation2 + $0x430] sm:$0x1]
    %v163 = vld [vmem:[#allocation2 + $0x438] sm:$0xff]
    %v164 = vld [vmem:[#allocation2 + $0x440] sm:$0xff]
    %v165 = vld [vmem:[#allocation2 + $0x448] sm:$0xff]
    %v166 = vld [vmem:[#allocation2 + $0x450] sm:$0xff]
    %v167 = vld [vmem:[#allocation2 + $0x458] sm:$0x1]
    %v168 = vld [vmem:[#allocation2 + $0x460] sm:$0xff]
    %v169 = vld [vmem:[#allocation2 + $0x468] sm:$0xff]
    %v170 = vld [vmem:[#allocation2 + $0x470] sm:$0xff]
    %v171 = vld [vmem:[#allocation2 + $0x478] sm:$0xff]
    %v172 = vld [vmem:[#allocation2 + $0x480] sm:$0x1]
    %v173 = vld [vmem:[#allocation2 + $0x488] sm:$0xff]
    %v174 = vld [vmem:[#allocation2 + $0x490] sm:$0xff]
    %v175 = vld [vmem:[#allocation2 + $0x498] sm:$0xff]
    %v176 = vld [vmem:[#allocation2 + $0x4a0] sm:$0xff]
    %v177 = vld [vmem:[#allocation2 + $0x4a8] sm:$0x1]
    %v178 = vld [vmem:[#allocation2 + $0x4b0] sm:$0xff]
    %v179 = vld [vmem:[#allocation2 + $0x4b8] sm:$0xff]
    %v180 = vld [vmem:[#allocation2 + $0x4c0] sm:$0xff]
    %v181 = vld [vmem:[#allocation2 + $0x4c8] sm:$0xff]
    %v182 = vld [vmem:[#allocation2 + $0x4d0] sm:$0x1]
    %v183 = vld [vmem:[#allocation2 + $0x4d8] sm:$0xff]
    %v184 = vld [vmem:[#allocation2 + $0x4e0] sm:$0xff]
    %v185 = vld [vmem:[#allocation2 + $0x4e8] sm:$0xff]
    %v186 = vld [vmem:[#allocation2 + $0x4f0] sm:$0xff]
    %v187 = vld [vmem:[#allocation2 + $0x4f8] sm:$0x1]
    %v188 = vld [vmem:[#allocation2 + $0x500] sm:$0xff]
    %v189 = vld [vmem:[#allocation2 + $0x508] sm:$0xff]
    %v190 = vld [vmem:[#allocation2 + $0x510] sm:$0xff]
    %v191 = vld [vmem:[#allocation2 + $0x518] sm:$0xff]
    %v192 = vld [vmem:[#allocation2 + $0x520] sm:$0x1]
    %v193 = vld [vmem:[#allocation2 + $0x528] sm:$0xff]
    %v194 = vld [vmem:[#allocation2 + $0x530] sm:$0xff]
    %v195 = vld [vmem:[#allocation2 + $0x538] sm:$0xff]
    %v196 = vld [vmem:[#allocation2 + $0x540] sm:$0xff]
    %v197 = vld [vmem:[#allocation2 + $0x548] sm:$0x1]
    %v198 = vld [vmem:[#allocation2 + $0x550] sm:$0xff]
    %v199 = vld [vmem:[#allocation2 + $0x558] sm:$0xff]
    %v200 = vld [vmem:[#allocation2 + $0x560] sm:$0xff]
    %v201 = vld [vmem:[#allocation2 + $0x568] sm:$0xff]
    %v202 = vld [vmem:[#allocation2 + $0x570] sm:$0x1]
    %v203 = vld [vmem:[#allocation2 + $0x578] sm:$0xff]
    %v204 = vld [vmem:[#allocation2 + $0x580] sm:$0xff]
    %v205 = vld [vmem:[#allocation2 + $0x588] sm:$0xff]
    %v206 = vld [vmem:[#allocation2 + $0x590] sm:$0xff]
    %v207 = vld [vmem:[#allocation2 + $0x598] sm:$0x1]
    %v208 = vld [vmem:[#allocation2 + $0x5a0] sm:$0xff]
    %v209 = vld [vmem:[#allocation2 + $0x5a8] sm:$0xff]
    %v210 = vld [vmem:[#allocation2 + $0x5b0] sm:$0xff]
    %v211 = vld [vmem:[#allocation2 + $0x5b8] sm:$0xff]
    %v212 = vld [vmem:[#allocation2 + $0x5c0] sm:$0x1]
    %v213 = vld [vmem:[#allocation2 + $0x5c8] sm:$0xff]
    %v214 = vld [vmem:[#allocation2 + $0x5d0] sm:$0xff]
    %v215 = vld [vmem:[#allocation2 + $0x5d8] sm:$0xff]
    %v216 = vld [vmem:[#allocation2 + $0x5e0] sm:$0xff]
    %v217 = vld [vmem:[#allocation2 + $0x5e8] sm:$0x1]
    %v218 = vld [vmem:[#allocation2 + $0x5f0] sm:$0xff]
    %v219 = vld [vmem:[#allocation2 + $0x5f8] sm:$0xff]
    %v220 = vld [vmem:[#allocation2 + $0x600] sm:$0xff]
    %v221 = vld [vmem:[#allocation2 + $0x608] sm:$0xff]
    %v222 = vld [vmem:[#allocation2 + $0x610] sm:$0x1]
    %v223 = vld [vmem:[#allocation2 + $0x618] sm:$0xff]
    %v224 = vld [vmem:[#allocation2 + $0x620] sm:$0xff]
    %v225 = vld [vmem:[#allocation2 + $0x628] sm:$0xff]
    %v226 = vld [vmem:[#allocation2 + $0x630] sm:$0xff]
    %v227 = vld [vmem:[#allocation2 + $0x638] sm:$0x1]
    %v228 = vld [vmem:[#allocation2 + $0x640] sm:$0xff]
    %v229 = vld [vmem:[#allocation2 + $0x648] sm:$0xff]
    %v230 = vld [vmem:[#allocation2 + $0x650] sm:$0xff]
    %v231 = vld [vmem:[#allocation2 + $0x658] sm:$0xff]
    %v232 = vld [vmem:[#allocation2 + $0x660] sm:$0x1]
    %v233 = vld [vmem:[#allocation2 + $0x668] sm:$0xff]
    %v234 = vld [vmem:[#allocation2 + $0x670] sm:$0xff]
    %v235 = vld [vmem:[#allocation2 + $0x678] sm:$0xff]
    %v236 = vld [vmem:[#allocation2 + $0x680] sm:$0xff]
    %v237 = vld [vmem:[#allocation2 + $0x688] sm:$0x1]
    %v238 = vld [vmem:[#allocation2 + $0x690] sm:$0xff]
    %v239 = vld [vmem:[#allocation2 + $0x698] sm:$0xff]
    %v240 = vld [vmem:[#allocation2 + $0x6a0] sm:$0xff]
    %v241 = vld [vmem:[#allocation2 + $0x6a8] sm:$0xff]
    %v242 = vld [vmem:[#allocation2 + $0x6b0] sm:$0x1]
    %v243 = vld [vmem:[#allocation2 + $0x6b8] sm:$0xff]
    %v244 = vld [vmem:[#allocation2 + $0x6c0] sm:$0xff]
    %v245 = vld [vmem:[#allocation2 + $0x6c8] sm:$0xff]
    %v246 = vld [vmem:[#allocation2 + $0x6d0] sm:$0xff]
    %v247 = vld [vmem:[#allocation2 + $0x6d8] sm:$0x1]
    %v248 = vld [vmem:[#allocation2 + $0x6e0] sm:$0xff]
    %v249 = vld [vmem:[#allocation2 + $0x6e8] sm:$0xff]
    %v250 = vld [vmem:[#allocation2 + $0x6f0] sm:$0xff]
    %v251 = vld [vmem:[#allocation2 + $0x6f8] sm:$0xff]
    %v252 = vld [vmem:[#allocation2 + $0x700] sm:$0x1]
    %v253 = vld [vmem:[#allocation2 + $0x708] sm:$0xff]
    %v254 = vld [vmem:[#allocation2 + $0x710] sm:$0xff]
    %v255 = vld [vmem:[#allocation2 + $0x718] sm:$0xff]
    %v256 = vld [vmem:[#allocation2 + $0x720] sm:$0xff]
    %v257 = vld [vmem:[#allocation2 + $0x728] sm:$0x1]
    %v258 = vld [vmem:[#allocation2 + $0x730] sm:$0xff]
    %v259 = vld [vmem:[#allocation2 + $0x738] sm:$0xff]
    %v260 = vld [vmem:[#allocation2 + $0x740] sm:$0xff]
    %v261 = vld [vmem:[#allocation2 + $0x748] sm:$0xff]
    %v262 = vld [vmem:[#allocation2 + $0x750] sm:$0x1]
    %v263 = vld [vmem:[#allocation2 + $0x758] sm:$0xff]
    %v264 = vld [vmem:[#allocation2 + $0x760] sm:$0xff]
    %v265 = vld [vmem:[#allocation2 + $0x768] sm:$0xff]
    %v266 = vld [vmem:[#allocation2 + $0x770] sm:$0xff]
    %v267 = vld [vmem:[#allocation2 + $0x778] sm:$0x1]
    %v268 = vld [vmem:[#allocation2 + $0x780] sm:$0xff]
    %v269 = vld [vmem:[#allocation2 + $0x788] sm:$0xff]
    %v270 = vld [vmem:[#allocation2 + $0x790] sm:$0xff]
    %v271 = vld [vmem:[#allocation2 + $0x798] sm:$0xff]
    %v272 = vld [vmem:[#allocation2 + $0x7a0] sm:$0x1]
    %v273 = vld [vmem:[#allocation2 + $0x7a8] sm:$0xff]
    %v274 = vld [vmem:[#allocation2 + $0x7b0] sm:$0xff]
    %v275 = vld [vmem:[#allocation2 + $0x7b8] sm:$0xff]
    %v276 = vld [vmem:[#allocation2 + $0x7c0] sm:$0xff]
    %v277 = vld [vmem:[#allocation2 + $0x7c8] sm:$0x1]
    %v278 = vld [vmem:[#allocation2 + $0x7d0] sm:$0xff]
    %v279 = vld [vmem:[#allocation2 + $0x7d8] sm:$0xff]
    %v280 = vld [vmem:[#allocation2 + $0x7e0] sm:$0xff]
    %v281 = vld [vmem:[#allocation2 + $0x7e8] sm:$0xff]
    %v282 = vld [vmem:[#allocation2 + $0x7f0] sm:$0x1]
    %v283 = vld [vmem:[#allocation2 + $0x7f8] sm:$0xff]
    %v284 = vld [vmem:[#allocation2 + $0x800] sm:$0xff]
    %v285 = vld [vmem:[#allocation2 + $0x808] sm:$0xff]
    %v286 = vld [vmem:[#allocation2 + $0x810] sm:$0xff]
    %v287 = vld [vmem:[#allocation2 + $0x818] sm:$0x1]
    %v288 = vld [vmem:[#allocation2 + $0x820] sm:$0xff]
    %v289 = vld [vmem:[#allocation2 + $0x828] sm:$0xff]
    %v290 = vld [vmem:[#allocation2 + $0x830] sm:$0xff]
    %v291 = vld [vmem:[#allocation2 + $0x838] sm:$0xff]
    %v292 = vld [vmem:[#allocation2 + $0x840] sm:$0x1]
    %v293 = vld [vmem:[#allocation2 + $0x848] sm:$0xff]
    %v294 = vld [vmem:[#allocation2 + $0x850] sm:$0xff]
    %v295 = vld [vmem:[#allocation2 + $0x858] sm:$0xff]
    %v296 = vld [vmem:[#allocation2 + $0x860] sm:$0xff]
    %v297 = vld [vmem:[#allocation2 + $0x868] sm:$0x1]
    %v298 = vld [vmem:[#allocation2 + $0x870] sm:$0xff]
    %v299 = vld [vmem:[#allocation2 + $0x878] sm:$0xff]
    %v300 = vld [vmem:[#allocation2 + $0x880] sm:$0xff]
    %v301 = vld [vmem:[#allocation2 + $0x888] sm:$0xff]
    %v302 = vld [vmem:[#allocation2 + $0x890] sm:$0x1]
    %v303 = vld [vmem:[#allocation2 + $0x898] sm:$0xff]
    %v304 = vld [vmem:[#allocation2 + $0x8a0] sm:$0xff]
    %v305 = vld [vmem:[#allocation2 + $0x8a8] sm:$0xff]
    %v306 = vld [vmem:[#allocation2 + $0x8b0] sm:$0xff]
    %v307 = vld [vmem:[#allocation2 + $0x8b8] sm:$0x1]
    %v308 = vld [vmem:[#allocation2 + $0x8c0] sm:$0xff]
    %v309 = vld [vmem:[#allocation2 + $0x8c8] sm:$0xff]
    %v310 = vld [vmem:[#allocation2 + $0x8d0] sm:$0xff]
    %v311 = vld [vmem:[#allocation2 + $0x8d8] sm:$0xff]
    %v312 = vld [vmem:[#allocation2 + $0x8e0] sm:$0x1]
    %v313 = vld [vmem:[#allocation2 + $0x8e8] sm:$0xff]
    %v314 = vld [vmem:[#allocation2 + $0x8f0] sm:$0xff]
    %v315 = vld [vmem:[#allocation2 + $0x8f8] sm:$0xff]
    %v316 = vld [vmem:[#allocation2 + $0x900] sm:$0xff]
    %v317 = vld [vmem:[#allocation2 + $0x908] sm:$0x1]
    %v318 = vld [vmem:[#allocation2 + $0x910] sm:$0xff]
    %v319 = vld [vmem:[#allocation2 + $0x918] sm:$0xff]
    %v320 = vld [vmem:[#allocation2 + $0x920] sm:$0xff]
    %v321 = vld [vmem:[#allocation2 + $0x928] sm:$0xff]
    %v322 = vld [vmem:[#allocation2 + $0x930] sm:$0x1]
    %v323 = vld [vmem:[#allocation2 + $0x938] sm:$0xff]
    %v324 = vld [vmem:[#allocation2 + $0x940] sm:$0xff]
    %v325 = vld [vmem:[#allocation2 + $0x948] sm:$0xff]
    %v326 = vld [vmem:[#allocation2 + $0x950] sm:$0xff]
    %v327 = vld [vmem:[#allocation2 + $0x958] sm:$0x1]
    %v328 = vld [vmem:[#allocation2 + $0x960] sm:$0xff]
    %v329 = vld [vmem:[#allocation2 + $0x968] sm:$0xff]
    %v330 = vld [vmem:[#allocation2 + $0x970] sm:$0xff]
    %v331 = vld [vmem:[#allocation2 + $0x978] sm:$0xff]
    %v332 = vld [vmem:[#allocation2 + $0x980] sm:$0x1]
    %v333 = vld [vmem:[#allocation2 + $0x988] sm:$0xff]
    %v334 = vld [vmem:[#allocation2 + $0x990] sm:$0xff]
    %v335 = vld [vmem:[#allocation2 + $0x998] sm:$0xff]
    %v336 = vld [vmem:[#allocation2 + $0x9a0] sm:$0xff]
    %v337 = vld [vmem:[#allocation2 + $0x9a8] sm:$0x1]
    %v338 = vld [vmem:[#allocation2 + $0x9b0] sm:$0xff]
    %v339 = vld [vmem:[#allocation2 + $0x9b8] sm:$0xff]
    %v340 = vld [vmem:[#allocation2 + $0x9c0] sm:$0xff]
    %v341 = vld [vmem:[#allocation2 + $0x9c8] sm:$0xff]
    %v342 = vld [vmem:[#allocation2 + $0x9d0] sm:$0x1]
    %v343 = vld [vmem:[#allocation2 + $0x9d8] sm:$0xff]
    %v344 = vld [vmem:[#allocation2 + $0x9e0] sm:$0xff]
    %v345 = vld [vmem:[#allocation2 + $0x9e8] sm:$0xff]
    %v346 = vld [vmem:[#allocation2 + $0x9f0] sm:$0xff]
    %v347 = vld [vmem:[#allocation2 + $0x9f8] sm:$0x1]
    %v348 = vld [vmem:[#allocation2 + $0xa00] sm:$0xff]
    %v349 = vld [vmem:[#allocation2 + $0xa08] sm:$0xff]
    %v350 = vld [vmem:[#allocation2 + $0xa10] sm:$0xff]
    %v351 = vld [vmem:[#allocation2 + $0xa18] sm:$0xff]
    %v352 = vld [vmem:[#allocation2 + $0xa20] sm:$0x1]
    %v353 = vld [vmem:[#allocation2 + $0xa28] sm:$0xff]
    %v354 = vld [vmem:[#allocation2 + $0xa30] sm:$0xff]
    %v355 = vld [vmem:[#allocation2 + $0xa38] sm:$0xff]
    %v356 = vld [vmem:[#allocation2 + $0xa40] sm:$0xff]
    %v357 = vld [vmem:[#allocation2 + $0xa48] sm:$0x1]
    %v358 = vld [vmem:[#allocation2 + $0xa50] sm:$0xff]
    %v359 = vld [vmem:[#allocation2 + $0xa58] sm:$0xff]
    %v360 = vld [vmem:[#allocation2 + $0xa60] sm:$0xff]
    %v361 = vld [vmem:[#allocation2 + $0xa68] sm:$0xff]
    %v362 = vld [vmem:[#allocation2 + $0xa70] sm:$0x1]
    %v363 = vld [vmem:[#allocation2 + $0xa78] sm:$0xff]
    %v364 = vld [vmem:[#allocation2 + $0xa80] sm:$0xff]
    %v365 = vld [vmem:[#allocation2 + $0xa88] sm:$0xff]
    %v366 = vld [vmem:[#allocation2 + $0xa90] sm:$0xff]
    %v367 = vld [vmem:[#allocation2 + $0xa98] sm:$0x1]
    %v368 = vld [vmem:[#allocation2 + $0xaa0] sm:$0xff]
    %v369 = vld [vmem:[#allocation2 + $0xaa8] sm:$0xff]
    %v370 = vld [vmem:[#allocation2 + $0xab0] sm:$0xff]
    %v371 = vld [vmem:[#allocation2 + $0xab8] sm:$0xff]
    %v372 = vld [vmem:[#allocation2 + $0xac0] sm:$0x1]
    %v373 = vld [vmem:[#allocation2 + $0xac8] sm:$0xff]
    %v374 = vld [vmem:[#allocation2 + $0xad0] sm:$0xff]
    %v375 = vld [vmem:[#allocation2 + $0xad8] sm:$0xff]
    %v376 = vld [vmem:[#allocation2 + $0xae0] sm:$0xff]
    %v377 = vld [vmem:[#allocation2 + $0xae8] sm:$0x1]
    %v378 = vld [vmem:[#allocation2 + $0xaf0] sm:$0xff]
    %v379 = vld [vmem:[#allocation2 + $0xaf8] sm:$0xff]
    %v380 = vld [vmem:[#allocation2 + $0xb00] sm:$0xff]
    %v381 = vld [vmem:[#allocation2 + $0xb08] sm:$0xff]
    %v382 = vld [vmem:[#allocation2 + $0xb10] sm:$0x1]
    %v383 = vld [vmem:[#allocation2 + $0xb18] sm:$0xff]
    %v384 = vld [vmem:[#allocation2 + $0xb20] sm:$0xff]
    %v385 = vld [vmem:[#allocation2 + $0xb28] sm:$0xff]
    %v386 = vld [vmem:[#allocation2 + $0xb30] sm:$0xff]
    %v387 = vld [vmem:[#allocation2 + $0xb38] sm:$0x1]
    %v388 = vld [vmem:[#allocation2 + $0xb40] sm:$0xff]
    %v389 = vld [vmem:[#allocation2 + $0xb48] sm:$0xff]
    %v390 = vld [vmem:[#allocation2 + $0xb50] sm:$0xff]
    %v391 = vld [vmem:[#allocation2 + $0xb58] sm:$0xff]
    %v392 = vld [vmem:[#allocation2 + $0xb60] sm:$0x1]
    %v393 = vld [vmem:[#allocation2 + $0xb68] sm:$0xff]
    %v394 = vld [vmem:[#allocation2 + $0xb70] sm:$0xff]
    %v395 = vld [vmem:[#allocation2 + $0xb78] sm:$0xff]
    %v396 = vld [vmem:[#allocation2 + $0xb80] sm:$0xff]
    %v397 = vld [vmem:[#allocation2 + $0xb88] sm:$0x1]
    %v398 = vld [vmem:[#allocation2 + $0xb90] sm:$0xff]
    %v399 = vld [vmem:[#allocation2 + $0xb98] sm:$0xff]
    %v400 = vld [vmem:[#allocation2 + $0xba0] sm:$0xff]
    %v401 = vld [vmem:[#allocation2 + $0xba8] sm:$0xff]
    %v402 = vld [vmem:[#allocation2 + $0xbb0] sm:$0x1]
    %v403 = vld [vmem:[#allocation2 + $0xbb8] sm:$0xff]
    %v404 = vld [vmem:[#allocation2 + $0xbc0] sm:$0xff]
    %v405 = vld [vmem:[#allocation2 + $0xbc8] sm:$0xff]
    %v406 = vld [vmem:[#allocation2 + $0xbd0] sm:$0xff]
    %v407 = vld [vmem:[#allocation2 + $0xbd8] sm:$0x1]
    %v408 = vld [vmem:[#allocation2 + $0xbe0] sm:$0xff]
    %v409 = vld [vmem:[#allocation2 + $0xbe8] sm:$0xff]
    %v410 = vld [vmem:[#allocation2 + $0xbf0] sm:$0xff]
    %v411 = vld [vmem:[#allocation2 + $0xbf8] sm:$0xff]
    %v412 = vld [vmem:[#allocation2 + $0xc00] sm:$0x1]
    %v413 = vld [vmem:[#allocation2 + $0xc08] sm:$0xff]
    %v414 = vld [vmem:[#allocation2 + $0xc10] sm:$0xff]
    %v415 = vld [vmem:[#allocation2 + $0xc18] sm:$0xff]
    %v416 = vld [vmem:[#allocation2 + $0xc20] sm:$0xff]
    %v417 = vld [vmem:[#allocation2 + $0xc28] sm:$0x1]
    %v418 = vld [vmem:[#allocation2 + $0xc30] sm:$0xff]
    %v419 = vld [vmem:[#allocation2 + $0xc38] sm:$0xff]
    %v420 = vld [vmem:[#allocation2 + $0xc40] sm:$0xff]
    %v421 = vld [vmem:[#allocation2 + $0xc48] sm:$0xff]
    %v422 = vld [vmem:[#allocation2 + $0xc50] sm:$0x1]
    %v423 = vld [vmem:[#allocation2 + $0xc58] sm:$0xff]
    %v424 = vld [vmem:[#allocation2 + $0xc60] sm:$0xff]
    %v425 = vld [vmem:[#allocation2 + $0xc68] sm:$0xff]
    %v426 = vld [vmem:[#allocation2 + $0xc70] sm:$0xff]
    %v427 = vld [vmem:[#allocation2 + $0xc78] sm:$0x1]
    %v428 = vld [vmem:[#allocation2 + $0xc80] sm:$0xff]
    %v429 = vld [vmem:[#allocation2 + $0xc88] sm:$0xff]
    %v430 = vld [vmem:[#allocation2 + $0xc90] sm:$0xff]
    %v431 = vld [vmem:[#allocation2 + $0xc98] sm:$0xff]
    %v432 = vld [vmem:[#allocation2 + $0xca0] sm:$0x1]
    %v433 = vld [vmem:[#allocation2 + $0xca8] sm:$0xff]
    %v434 = vld [vmem:[#allocation2 + $0xcb0] sm:$0xff]
    %v435 = vld [vmem:[#allocation2 + $0xcb8] sm:$0xff]
    %v436 = vld [vmem:[#allocation2 + $0xcc0] sm:$0xff]
    %v437 = vld [vmem:[#allocation2 + $0xcc8] sm:$0x1]
    %v438 = vld [vmem:[#allocation2 + $0xcd0] sm:$0xff]
    %v439 = vld [vmem:[#allocation2 + $0xcd8] sm:$0xff]
    %v440 = vld [vmem:[#allocation2 + $0xce0] sm:$0xff]
    %v441 = vld [vmem:[#allocation2 + $0xce8] sm:$0xff]
    %v442 = vld [vmem:[#allocation2 + $0xcf0] sm:$0x1]
    %v443 = vld [vmem:[#allocation2 + $0xcf8] sm:$0xff]
    %v444 = vld [vmem:[#allocation2 + $0xd00] sm:$0xff]
    %v445 = vld [vmem:[#allocation2 + $0xd08] sm:$0xff]
    %v446 = vld [vmem:[#allocation2 + $0xd10] sm:$0xff]
    %v447 = vld [vmem:[#allocation2 + $0xd18] sm:$0x1]
    %v448 = vld [vmem:[#allocation2 + $0xd20] sm:$0xff]
    %v449 = vld [vmem:[#allocation2 + $0xd28] sm:$0xff]
    %v450 = vld [vmem:[#allocation2 + $0xd30] sm:$0xff]
    %v451 = vld [vmem:[#allocation2 + $0xd38] sm:$0xff]
    %v452 = vld [vmem:[#allocation2 + $0xd40] sm:$0x1]
    %v453 = vld [vmem:[#allocation2 + $0xd48] sm:$0xff]
    %v454 = vld [vmem:[#allocation2 + $0xd50] sm:$0xff]
    %v455 = vld [vmem:[#allocation2 + $0xd58] sm:$0xff]
    %v456 = vld [vmem:[#allocation2 + $0xd60] sm:$0xff]
    %v457 = vld [vmem:[#allocation2 + $0xd68] sm:$0x1]
    %v458 = vld [vmem:[#allocation2 + $0xd70] sm:$0xff]
    %v459 = vld [vmem:[#allocation2 + $0xd78] sm:$0xff]
    %v460 = vld [vmem:[#allocation2 + $0xd80] sm:$0xff]
    %v461 = vld [vmem:[#allocation2 + $0xd88] sm:$0xff]
    %v462 = vld [vmem:[#allocation2 + $0xd90] sm:$0x1]
    %v463 = vld [vmem:[#allocation2 + $0xd98] sm:$0xff]
    %v464 = vld [vmem:[#allocation2 + $0xda0] sm:$0xff]
    %v465 = vld [vmem:[#allocation2 + $0xda8] sm:$0xff]
    %v466 = vld [vmem:[#allocation2 + $0xdb0] sm:$0xff]
    %v467 = vld [vmem:[#allocation2 + $0xdb8] sm:$0x1]
    %v468 = vld [vmem:[#allocation2 + $0xdc0] sm:$0xff]
    %v469 = vld [vmem:[#allocation2 + $0xdc8] sm:$0xff]
    %v470 = vld [vmem:[#allocation2 + $0xdd0] sm:$0xff]
    %v471 = vld [vmem:[#allocation2 + $0xdd8] sm:$0xff]
    %v472 = vld [vmem:[#allocation2 + $0xde0] sm:$0x1]
    %v473 = vld [vmem:[#allocation2 + $0xde8] sm:$0xff]
    %v474 = vld [vmem:[#allocation2 + $0xdf0] sm:$0xff]
    %v475 = vld [vmem:[#allocation2 + $0xdf8] sm:$0xff]
    %v476 = vld [vmem:[#allocation2 + $0xe00] sm:$0xff]
    %v477 = vld [vmem:[#allocation2 + $0xe08] sm:$0x1]
    %v478 = vld [vmem:[#allocation2 + $0xe10] sm:$0xff]
    %v479 = vld [vmem:[#allocation2 + $0xe18] sm:$0xff]
    %v480 = vld [vmem:[#allocation2 + $0xe20] sm:$0xff]
    %v481 = vld [vmem:[#allocation2 + $0xe28] sm:$0xff]
    %v482 = vld [vmem:[#allocation2 + $0xe30] sm:$0x1]
    %v483 = vld [vmem:[#allocation2 + $0xe38] sm:$0xff]
    %v484 = vld [vmem:[#allocation2 + $0xe40] sm:$0xff]
    %v485 = vld [vmem:[#allocation2 + $0xe48] sm:$0xff]
    %v486 = vld [vmem:[#allocation2 + $0xe50] sm:$0xff]
    %v487 = vld [vmem:[#allocation2 + $0xe58] sm:$0x1]
    %v488 = vld [vmem:[#allocation2 + $0xe60] sm:$0xff]
    %v489 = vld [vmem:[#allocation2 + $0xe68] sm:$0xff]
    %v490 = vld [vmem:[#allocation2 + $0xe70] sm:$0xff]
    %v491 = vld [vmem:[#allocation2 + $0xe78] sm:$0xff]
    %v492 = vld [vmem:[#allocation2 + $0xe80] sm:$0x1]
    %v493 = vld [vmem:[#allocation2 + $0xe88] sm:$0xff]
    %v494 = vld [vmem:[#allocation2 + $0xe90] sm:$0xff]
    %v495 = vld [vmem:[#allocation2 + $0xe98] sm:$0xff]
    %v496 = vld [vmem:[#allocation2 + $0xea0] sm:$0xff]
    %v497 = vld [vmem:[#allocation2 + $0xea8] sm:$0x1]
    %v498 = vld [vmem:[#allocation2 + $0xeb0] sm:$0xff]
    %v499 = vld [vmem:[#allocation2 + $0xeb8] sm:$0xff]
    %v500 = vld [vmem:[#allocation2 + $0xec0] sm:$0xff]
    %v501 = vld [vmem:[#allocation2 + $0xec8] sm:$0xff]
    %v502 = vld [vmem:[#allocation2 + $0xed0] sm:$0x1]
    %v503 = vld [vmem:[#allocation2 + $0xed8] sm:$0xff]
    %v504 = vld [vmem:[#allocation2 + $0xee0] sm:$0xff]
    %v505 = vld [vmem:[#allocation2 + $0xee8] sm:$0xff]
    %v506 = vld [vmem:[#allocation2 + $0xef0] sm:$0xff]
    %v507 = vld [vmem:[#allocation2 + $0xef8] sm:$0x1]
    %v508 = vld [vmem:[#allocation2 + $0xf00] sm:$0xff]
    %v509 = vld [vmem:[#allocation2 + $0xf08] sm:$0xff]
    %v510 = vld [vmem:[#allocation2 + $0xf10] sm:$0xff]
    %v511 = vld [vmem:[#allocation2 + $0xf18] sm:$0xff]
    %v512 = vld [vmem:[#allocation2 + $0xf20] sm:$0x1]
    %v513 = vld [vmem:[#allocation2 + $0xf28] sm:$0xff]
    %v514 = vld [vmem:[#allocation2 + $0xf30] sm:$0xff]
    %v515 = vld [vmem:[#allocation2 + $0xf38] sm:$0xff]
    %v516 = vld [vmem:[#allocation2 + $0xf40] sm:$0xff]
    %v517 = vld [vmem:[#allocation2 + $0xf48] sm:$0x1]
    %v518 = vld [vmem:[#allocation2 + $0xf50] sm:$0xff]
    %v519 = vld [vmem:[#allocation2 + $0xf58] sm:$0xff]
    %v520 = vld [vmem:[#allocation2 + $0xf60] sm:$0xff]
    %v521 = vld [vmem:[#allocation2 + $0xf68] sm:$0xff]
    %v522 = vld [vmem:[#allocation2 + $0xf70] sm:$0x1]
    %v523 = vlaneseq
    %v524 = vand.u32 %v523, 127
    %vm525 = vcmp.eq.s32.totalorder %v524, 0
    %vm526 = vcmp.eq.s32.totalorder %v524, 31
    %vm527 = vmor %vm525, %vm526
    %v528 = vsel %vm527, 2.0, 1.0
    %v529 = vlaneseq
    %v530 = vshrl.u32 %v529, 7
    %v531 = vadd.s32 %v530, 8
    %v532 = vadd.s32 %v530, 16
    %v533 = vadd.s32 %v530, 24
    %vm534 = vcmp.eq.s32.totalorder %v530, 0
    %vm535 = vcmp.eq.s32.totalorder %v531, 0
    %vm536 = vcmp.eq.s32.totalorder %v532, 0
    %vm537 = vcmp.eq.s32.totalorder %v533, 0
    %vm538 = vcmp.eq.s32.totalorder %v530, 31
    %vm539 = vcmp.eq.s32.totalorder %v531, 31
    %vm540 = vcmp.eq.s32.totalorder %v532, 31
    %vm541 = vcmp.eq.s32.totalorder %v533, 31
    %vm542 = vmor %vm534, %vm538
    %vm543 = vmor %vm535, %vm539
    %vm544 = vmor %vm536, %vm540
    %vm545 = vmor %vm537, %vm541
    %v546 = vsel %vm542, 2.0, 1.0
    %v547 = vsel %vm543, 2.0, 1.0
    %v548 = vsel %vm544, 2.0, 1.0
    %v549 = vsel %vm545, 2.0, 1.0
    %1045 = vrot.lane.b32.xlu0 %v28, 127
    %v1046 = vpop.permute.xlu0 %1045
    %1047 = vrot.lane.b32.xlu0 %v29, 127
    %v1048 = vpop.permute.xlu0 %1047
    %1049 = vrot.lane.b32.xlu0 %v30, 127
    %v1050 = vpop.permute.xlu0 %1049
    %1051 = vrot.lane.b32.xlu0 %v31, 127
    %v1052 = vpop.permute.xlu0 %1051
    %1053 = vrot.lane.b32.xlu0 %v32, 127
    %v1054 = vpop.permute.xlu0 %1053
    %1055 = vrot.lane.b32.xlu0 %v33, 127
    %v1056 = vpop.permute.xlu0 %1055
    %1057 = vrot.lane.b32.xlu0 %v34, 127
    %v1058 = vpop.permute.xlu0 %1057
    %1059 = vrot.lane.b32.xlu0 %v35, 127
    %v1060 = vpop.permute.xlu0 %1059
    %1061 = vrot.lane.b32.xlu0 %v36, 127
    %v1062 = vpop.permute.xlu0 %1061
    %1063 = vrot.lane.b32.xlu0 %v37, 127
    %v1064 = vpop.permute.xlu0 %1063
    %1065 = vrot.lane.b32.xlu0 %v38, 127
    %v1066 = vpop.permute.xlu0 %1065
    %1067 = vrot.lane.b32.xlu0 %v39, 127
    %v1068 = vpop.permute.xlu0 %1067
    %1069 = vrot.lane.b32.xlu0 %v40, 127
    %v1070 = vpop.permute.xlu0 %1069
    %1071 = vrot.lane.b32.xlu0 %v41, 127
    %v1072 = vpop.permute.xlu0 %1071
    %1073 = vrot.lane.b32.xlu0 %v42, 127
    %v1074 = vpop.permute.xlu0 %1073
    %1075 = vrot.lane.b32.xlu0 %v43, 127
    %v1076 = vpop.permute.xlu0 %1075
    %1077 = vrot.lane.b32.xlu0 %v44, 127
    %v1078 = vpop.permute.xlu0 %1077
    %1079 = vrot.lane.b32.xlu0 %v45, 127
    %v1080 = vpop.permute.xlu0 %1079
    %1081 = vrot.lane.b32.xlu0 %v46, 127
    %v1082 = vpop.permute.xlu0 %1081
    %1083 = vrot.lane.b32.xlu0 %v47, 127
    %v1084 = vpop.permute.xlu0 %1083
    %1085 = vrot.lane.b32.xlu0 %v48, 127
    %v1086 = vpop.permute.xlu0 %1085
    %1087 = vrot.lane.b32.xlu0 %v49, 127
    %v1088 = vpop.permute.xlu0 %1087
    %1089 = vrot.lane.b32.xlu0 %v50, 127
    %v1090 = vpop.permute.xlu0 %1089
    %1091 = vrot.lane.b32.xlu0 %v51, 127
    %v1092 = vpop.permute.xlu0 %1091
    %1093 = vrot.lane.b32.xlu0 %v52, 127
    %v1094 = vpop.permute.xlu0 %1093
    %1095 = vrot.lane.b32.xlu0 %v53, 127
    %v1096 = vpop.permute.xlu0 %1095
    %1097 = vrot.lane.b32.xlu0 %v54, 127
    %v1098 = vpop.permute.xlu0 %1097
    %1099 = vrot.lane.b32.xlu0 %v55, 127
    %v1100 = vpop.permute.xlu0 %1099
    %1101 = vrot.lane.b32.xlu0 %v56, 127
    %v1102 = vpop.permute.xlu0 %1101
    %1103 = vrot.lane.b32.xlu0 %v57, 127
    %v1104 = vpop.permute.xlu0 %1103
    %1105 = vrot.lane.b32.xlu0 %v58, 127
    %v1106 = vpop.permute.xlu0 %1105
    %1107 = vrot.lane.b32.xlu0 %v59, 127
    %v1108 = vpop.permute.xlu0 %1107
    %1109 = vrot.lane.b32.xlu0 %v60, 127
    %v1110 = vpop.permute.xlu0 %1109
    %1111 = vrot.lane.b32.xlu0 %v61, 127
    %v1112 = vpop.permute.xlu0 %1111
    %1113 = vrot.lane.b32.xlu0 %v62, 127
    %v1114 = vpop.permute.xlu0 %1113
    %1115 = vrot.lane.b32.xlu0 %v63, 127
    %v1116 = vpop.permute.xlu0 %1115
    %1117 = vrot.lane.b32.xlu0 %v64, 127
    %v1118 = vpop.permute.xlu0 %1117
    %1119 = vrot.lane.b32.xlu0 %v65, 127
    %v1120 = vpop.permute.xlu0 %1119
    %1121 = vrot.lane.b32.xlu0 %v66, 127
    %v1122 = vpop.permute.xlu0 %1121
    %1123 = vrot.lane.b32.xlu0 %v67, 127
    %v1124 = vpop.permute.xlu0 %1123
    %1125 = vrot.lane.b32.xlu0 %v68, 127
    %v1126 = vpop.permute.xlu0 %1125
    %1127 = vrot.lane.b32.xlu0 %v69, 127
    %v1128 = vpop.permute.xlu0 %1127
    %1129 = vrot.lane.b32.xlu0 %v70, 127
    %v1130 = vpop.permute.xlu0 %1129
    %1131 = vrot.lane.b32.xlu0 %v71, 127
    %v1132 = vpop.permute.xlu0 %1131
    %1133 = vrot.lane.b32.xlu0 %v72, 127
    %v1134 = vpop.permute.xlu0 %1133
    %1135 = vrot.lane.b32.xlu0 %v73, 127
    %v1136 = vpop.permute.xlu0 %1135
    %1137 = vrot.lane.b32.xlu0 %v74, 127
    %v1138 = vpop.permute.xlu0 %1137
    %1139 = vrot.lane.b32.xlu0 %v75, 127
    %v1140 = vpop.permute.xlu0 %1139
    %1141 = vrot.lane.b32.xlu0 %v76, 127
    %v1142 = vpop.permute.xlu0 %1141
    %1143 = vrot.lane.b32.xlu0 %v77, 127
    %v1144 = vpop.permute.xlu0 %1143
    %1145 = vrot.lane.b32.xlu0 %v78, 127
    %v1146 = vpop.permute.xlu0 %1145
    %1147 = vrot.lane.b32.xlu0 %v79, 127
    %v1148 = vpop.permute.xlu0 %1147
    %1149 = vrot.lane.b32.xlu0 %v80, 127
    %v1150 = vpop.permute.xlu0 %1149
    %1151 = vrot.lane.b32.xlu0 %v81, 127
    %v1152 = vpop.permute.xlu0 %1151
    %1153 = vrot.lane.b32.xlu0 %v82, 127
    %v1154 = vpop.permute.xlu0 %1153
    %1155 = vrot.lane.b32.xlu0 %v83, 127
    %v1156 = vpop.permute.xlu0 %1155
    %1157 = vrot.lane.b32.xlu0 %v84, 127
    %v1158 = vpop.permute.xlu0 %1157
    %1159 = vrot.lane.b32.xlu0 %v85, 127
    %v1160 = vpop.permute.xlu0 %1159
    %1161 = vrot.lane.b32.xlu0 %v86, 127
    %v1162 = vpop.permute.xlu0 %1161
    %1163 = vrot.lane.b32.xlu0 %v87, 127
    %v1164 = vpop.permute.xlu0 %1163
    %1165 = vrot.lane.b32.xlu0 %v88, 127
    %v1166 = vpop.permute.xlu0 %1165
    %1167 = vrot.lane.b32.xlu0 %v89, 127
    %v1168 = vpop.permute.xlu0 %1167
    %1169 = vrot.lane.b32.xlu0 %v90, 127
    %v1170 = vpop.permute.xlu0 %1169
    %1171 = vrot.lane.b32.xlu0 %v91, 127
    %v1172 = vpop.permute.xlu0 %1171
    %1173 = vrot.lane.b32.xlu0 %v92, 127
    %v1174 = vpop.permute.xlu0 %1173
    %1175 = vrot.lane.b32.xlu0 %v93, 127
    %v1176 = vpop.permute.xlu0 %1175
    %1177 = vrot.lane.b32.xlu0 %v94, 127
    %v1178 = vpop.permute.xlu0 %1177
    %1179 = vrot.lane.b32.xlu0 %v95, 127
    %v1180 = vpop.permute.xlu0 %1179
    %1181 = vrot.lane.b32.xlu0 %v96, 127
    %v1182 = vpop.permute.xlu0 %1181
    %1183 = vrot.lane.b32.xlu0 %v97, 127
    %v1184 = vpop.permute.xlu0 %1183
    %1185 = vrot.lane.b32.xlu0 %v98, 127
    %v1186 = vpop.permute.xlu0 %1185
    %1187 = vrot.lane.b32.xlu0 %v99, 127
    %v1188 = vpop.permute.xlu0 %1187
    %1189 = vrot.lane.b32.xlu0 %v100, 127
    %v1190 = vpop.permute.xlu0 %1189
    %1191 = vrot.lane.b32.xlu0 %v101, 127
    %v1192 = vpop.permute.xlu0 %1191
    %1193 = vrot.lane.b32.xlu0 %v102, 127
    %v1194 = vpop.permute.xlu0 %1193
    %1195 = vrot.lane.b32.xlu0 %v103, 127
    %v1196 = vpop.permute.xlu0 %1195
    %1197 = vrot.lane.b32.xlu0 %v104, 127
    %v1198 = vpop.permute.xlu0 %1197
    %1199 = vrot.lane.b32.xlu0 %v105, 127
    %v1200 = vpop.permute.xlu0 %1199
    %1201 = vrot.lane.b32.xlu0 %v106, 127
    %v1202 = vpop.permute.xlu0 %1201
    %1203 = vrot.lane.b32.xlu0 %v107, 127
    %v1204 = vpop.permute.xlu0 %1203
    %1205 = vrot.lane.b32.xlu0 %v108, 127
    %v1206 = vpop.permute.xlu0 %1205
    %1207 = vrot.lane.b32.xlu0 %v109, 127
    %v1208 = vpop.permute.xlu0 %1207
    %1209 = vrot.lane.b32.xlu0 %v110, 127
    %v1210 = vpop.permute.xlu0 %1209
    %1211 = vrot.lane.b32.xlu0 %v111, 127
    %v1212 = vpop.permute.xlu0 %1211
    %1213 = vrot.lane.b32.xlu0 %v112, 127
    %v1214 = vpop.permute.xlu0 %1213
    %1215 = vrot.lane.b32.xlu0 %v113, 127
    %v1216 = vpop.permute.xlu0 %1215
    %1217 = vrot.lane.b32.xlu0 %v114, 127
    %v1218 = vpop.permute.xlu0 %1217
    %1219 = vrot.lane.b32.xlu0 %v115, 127
    %v1220 = vpop.permute.xlu0 %1219
    %1221 = vrot.lane.b32.xlu0 %v116, 127
    %v1222 = vpop.permute.xlu0 %1221
    %1223 = vrot.lane.b32.xlu0 %v117, 127
    %v1224 = vpop.permute.xlu0 %1223
    %1225 = vrot.lane.b32.xlu0 %v118, 127
    %v1226 = vpop.permute.xlu0 %1225
    %1227 = vrot.lane.b32.xlu0 %v119, 127
    %v1228 = vpop.permute.xlu0 %1227
    %1229 = vrot.lane.b32.xlu0 %v120, 127
    %v1230 = vpop.permute.xlu0 %1229
    %1231 = vrot.lane.b32.xlu0 %v121, 127
    %v1232 = vpop.permute.xlu0 %1231
    %1233 = vrot.lane.b32.xlu0 %v122, 127
    %v1234 = vpop.permute.xlu0 %1233
    %1235 = vrot.lane.b32.xlu0 %v123, 127
    %v1236 = vpop.permute.xlu0 %1235
    %1237 = vrot.lane.b32.xlu0 %v124, 127
    %v1238 = vpop.permute.xlu0 %1237
    %1239 = vrot.lane.b32.xlu0 %v125, 127
    %v1240 = vpop.permute.xlu0 %1239
    %1241 = vrot.lane.b32.xlu0 %v126, 127
    %v1242 = vpop.permute.xlu0 %1241
    %1243 = vrot.lane.b32.xlu0 %v127, 127
    %v1244 = vpop.permute.xlu0 %1243
    %1245 = vrot.lane.b32.xlu0 %v128, 127
    %v1246 = vpop.permute.xlu0 %1245
    %1247 = vrot.lane.b32.xlu0 %v129, 127
    %v1248 = vpop.permute.xlu0 %1247
    %1249 = vrot.lane.b32.xlu0 %v130, 127
    %v1250 = vpop.permute.xlu0 %1249
    %1251 = vrot.lane.b32.xlu0 %v131, 127
    %v1252 = vpop.permute.xlu0 %1251
    %1253 = vrot.lane.b32.xlu0 %v132, 127
    %v1254 = vpop.permute.xlu0 %1253
    %1255 = vrot.lane.b32.xlu0 %v133, 127
    %v1256 = vpop.permute.xlu0 %1255
    %1257 = vrot.lane.b32.xlu0 %v134, 127
    %v1258 = vpop.permute.xlu0 %1257
    %1259 = vrot.lane.b32.xlu0 %v135, 127
    %v1260 = vpop.permute.xlu0 %1259
    %1261 = vrot.lane.b32.xlu0 %v136, 127
    %v1262 = vpop.permute.xlu0 %1261
    %1263 = vrot.lane.b32.xlu0 %v137, 127
    %v1264 = vpop.permute.xlu0 %1263
    %1265 = vrot.lane.b32.xlu0 %v138, 127
    %v1266 = vpop.permute.xlu0 %1265
    %1267 = vrot.lane.b32.xlu0 %v139, 127
    %v1268 = vpop.permute.xlu0 %1267
    %1269 = vrot.lane.b32.xlu0 %v140, 127
    %v1270 = vpop.permute.xlu0 %1269
    %1271 = vrot.lane.b32.xlu0 %v141, 127
    %v1272 = vpop.permute.xlu0 %1271
    %1273 = vrot.lane.b32.xlu0 %v142, 127
    %v1274 = vpop.permute.xlu0 %1273
    %1275 = vrot.lane.b32.xlu0 %v143, 127
    %v1276 = vpop.permute.xlu0 %1275
    %1277 = vrot.lane.b32.xlu0 %v144, 127
    %v1278 = vpop.permute.xlu0 %1277
    %1279 = vrot.lane.b32.xlu0 %v145, 127
    %v1280 = vpop.permute.xlu0 %1279
    %1281 = vrot.lane.b32.xlu0 %v146, 127
    %v1282 = vpop.permute.xlu0 %1281
    %1283 = vrot.lane.b32.xlu0 %v147, 127
    %v1284 = vpop.permute.xlu0 %1283
    %1285 = vrot.lane.b32.xlu0 %v148, 127
    %v1286 = vpop.permute.xlu0 %1285
    %1287 = vrot.lane.b32.xlu0 %v149, 127
    %v1288 = vpop.permute.xlu0 %1287
    %1289 = vrot.lane.b32.xlu0 %v150, 127
    %v1290 = vpop.permute.xlu0 %1289
    %1291 = vrot.lane.b32.xlu0 %v151, 127
    %v1292 = vpop.permute.xlu0 %1291
    %1293 = vrot.lane.b32.xlu0 %v152, 127
    %v1294 = vpop.permute.xlu0 %1293
    %1295 = vrot.lane.b32.xlu0 %v153, 127
    %v1296 = vpop.permute.xlu0 %1295
    %1297 = vrot.lane.b32.xlu0 %v154, 127
    %v1298 = vpop.permute.xlu0 %1297
    %1299 = vrot.lane.b32.xlu0 %v155, 127
    %v1300 = vpop.permute.xlu0 %1299
    %1301 = vrot.lane.b32.xlu0 %v156, 127
    %v1302 = vpop.permute.xlu0 %1301
    %1303 = vrot.lane.b32.xlu0 %v157, 127
    %v1304 = vpop.permute.xlu0 %1303
    %1305 = vrot.lane.b32.xlu0 %v158, 127
    %v1306 = vpop.permute.xlu0 %1305
    %1307 = vrot.lane.b32.xlu0 %v159, 127
    %v1308 = vpop.permute.xlu0 %1307
    %1309 = vrot.lane.b32.xlu0 %v160, 127
    %v1310 = vpop.permute.xlu0 %1309
    %1311 = vrot.lane.b32.xlu0 %v161, 127
    %v1312 = vpop.permute.xlu0 %1311
    %1313 = vrot.lane.b32.xlu0 %v162, 127
    %v1314 = vpop.permute.xlu0 %1313
    %1315 = vrot.lane.b32.xlu0 %v163, 127
    %v1316 = vpop.permute.xlu0 %1315
    %1317 = vrot.lane.b32.xlu0 %v164, 127
    %v1318 = vpop.permute.xlu0 %1317
    %1319 = vrot.lane.b32.xlu0 %v165, 127
    %v1320 = vpop.permute.xlu0 %1319
    %1321 = vrot.lane.b32.xlu0 %v166, 127
    %v1322 = vpop.permute.xlu0 %1321
    %1323 = vrot.lane.b32.xlu0 %v167, 127
    %v1324 = vpop.permute.xlu0 %1323
    %1325 = vrot.lane.b32.xlu0 %v168, 127
    %v1326 = vpop.permute.xlu0 %1325
    %1327 = vrot.lane.b32.xlu0 %v169, 127
    %v1328 = vpop.permute.xlu0 %1327
    %1329 = vrot.lane.b32.xlu0 %v170, 127
    %v1330 = vpop.permute.xlu0 %1329
    %1331 = vrot.lane.b32.xlu0 %v171, 127
    %v1332 = vpop.permute.xlu0 %1331
    %1333 = vrot.lane.b32.xlu0 %v172, 127
    %v1334 = vpop.permute.xlu0 %1333
    %1335 = vrot.lane.b32.xlu0 %v173, 127
    %v1336 = vpop.permute.xlu0 %1335
    %1337 = vrot.lane.b32.xlu0 %v174, 127
    %v1338 = vpop.permute.xlu0 %1337
    %1339 = vrot.lane.b32.xlu0 %v175, 127
    %v1340 = vpop.permute.xlu0 %1339
    %1341 = vrot.lane.b32.xlu0 %v176, 127
    %v1342 = vpop.permute.xlu0 %1341
    %1343 = vrot.lane.b32.xlu0 %v177, 127
    %v1344 = vpop.permute.xlu0 %1343
    %1345 = vrot.lane.b32.xlu0 %v178, 127
    %v1346 = vpop.permute.xlu0 %1345
    %1347 = vrot.lane.b32.xlu0 %v179, 127
    %v1348 = vpop.permute.xlu0 %1347
    %1349 = vrot.lane.b32.xlu0 %v180, 127
    %v1350 = vpop.permute.xlu0 %1349
    %1351 = vrot.lane.b32.xlu0 %v181, 127
    %v1352 = vpop.permute.xlu0 %1351
    %1353 = vrot.lane.b32.xlu0 %v182, 127
    %v1354 = vpop.permute.xlu0 %1353
    %1355 = vrot.lane.b32.xlu0 %v183, 127
    %v1356 = vpop.permute.xlu0 %1355
    %1357 = vrot.lane.b32.xlu0 %v184, 127
    %v1358 = vpop.permute.xlu0 %1357
    %1359 = vrot.lane.b32.xlu0 %v185, 127
    %v1360 = vpop.permute.xlu0 %1359
    %1361 = vrot.lane.b32.xlu0 %v186, 127
    %v1362 = vpop.permute.xlu0 %1361
    %1363 = vrot.lane.b32.xlu0 %v187, 127
    %v1364 = vpop.permute.xlu0 %1363
    %1365 = vrot.lane.b32.xlu0 %v188, 127
    %v1366 = vpop.permute.xlu0 %1365
    %1367 = vrot.lane.b32.xlu0 %v189, 127
    %v1368 = vpop.permute.xlu0 %1367
    %1369 = vrot.lane.b32.xlu0 %v190, 127
    %v1370 = vpop.permute.xlu0 %1369
    %1371 = vrot.lane.b32.xlu0 %v191, 127
    %v1372 = vpop.permute.xlu0 %1371
    %1373 = vrot.lane.b32.xlu0 %v192, 127
    %v1374 = vpop.permute.xlu0 %1373
    %1375 = vrot.lane.b32.xlu0 %v193, 127
    %v1376 = vpop.permute.xlu0 %1375
    %1377 = vrot.lane.b32.xlu0 %v194, 127
    %v1378 = vpop.permute.xlu0 %1377
    %1379 = vrot.lane.b32.xlu0 %v195, 127
    %v1380 = vpop.permute.xlu0 %1379
    %1381 = vrot.lane.b32.xlu0 %v196, 127
    %v1382 = vpop.permute.xlu0 %1381
    %1383 = vrot.lane.b32.xlu0 %v197, 127
    %v1384 = vpop.permute.xlu0 %1383
    %1385 = vrot.lane.b32.xlu0 %v198, 127
    %v1386 = vpop.permute.xlu0 %1385
    %1387 = vrot.lane.b32.xlu0 %v199, 127
    %v1388 = vpop.permute.xlu0 %1387
    %1389 = vrot.lane.b32.xlu0 %v200, 127
    %v1390 = vpop.permute.xlu0 %1389
    %1391 = vrot.lane.b32.xlu0 %v201, 127
    %v1392 = vpop.permute.xlu0 %1391
    %1393 = vrot.lane.b32.xlu0 %v202, 127
    %v1394 = vpop.permute.xlu0 %1393
    %1395 = vrot.lane.b32.xlu0 %v203, 127
    %v1396 = vpop.permute.xlu0 %1395
    %1397 = vrot.lane.b32.xlu0 %v204, 127
    %v1398 = vpop.permute.xlu0 %1397
    %1399 = vrot.lane.b32.xlu0 %v205, 127
    %v1400 = vpop.permute.xlu0 %1399
    %1401 = vrot.lane.b32.xlu0 %v206, 127
    %v1402 = vpop.permute.xlu0 %1401
    %1403 = vrot.lane.b32.xlu0 %v207, 127
    %v1404 = vpop.permute.xlu0 %1403
    %1405 = vrot.lane.b32.xlu0 %v208, 127
    %v1406 = vpop.permute.xlu0 %1405
    %1407 = vrot.lane.b32.xlu0 %v209, 127
    %v1408 = vpop.permute.xlu0 %1407
    %1409 = vrot.lane.b32.xlu0 %v210, 127
    %v1410 = vpop.permute.xlu0 %1409
    %1411 = vrot.lane.b32.xlu0 %v211, 127
    %v1412 = vpop.permute.xlu0 %1411
    %1413 = vrot.lane.b32.xlu0 %v212, 127
    %v1414 = vpop.permute.xlu0 %1413
    %1415 = vrot.lane.b32.xlu0 %v213, 127
    %v1416 = vpop.permute.xlu0 %1415
    %1417 = vrot.lane.b32.xlu0 %v214, 127
    %v1418 = vpop.permute.xlu0 %1417
    %1419 = vrot.lane.b32.xlu0 %v215, 127
    %v1420 = vpop.permute.xlu0 %1419
    %1421 = vrot.lane.b32.xlu0 %v216, 127
    %v1422 = vpop.permute.xlu0 %1421
    %1423 = vrot.lane.b32.xlu0 %v217, 127
    %v1424 = vpop.permute.xlu0 %1423
    %1425 = vrot.lane.b32.xlu0 %v218, 127
    %v1426 = vpop.permute.xlu0 %1425
    %1427 = vrot.lane.b32.xlu0 %v219, 127
    %v1428 = vpop.permute.xlu0 %1427
    %1429 = vrot.lane.b32.xlu0 %v220, 127
    %v1430 = vpop.permute.xlu0 %1429
    %1431 = vrot.lane.b32.xlu0 %v221, 127
    %v1432 = vpop.permute.xlu0 %1431
    %1433 = vrot.lane.b32.xlu0 %v222, 127
    %v1434 = vpop.permute.xlu0 %1433
    %1435 = vrot.lane.b32.xlu0 %v223, 127
    %v1436 = vpop.permute.xlu0 %1435
    %1437 = vrot.lane.b32.xlu0 %v224, 127
    %v1438 = vpop.permute.xlu0 %1437
    %1439 = vrot.lane.b32.xlu0 %v225, 127
    %v1440 = vpop.permute.xlu0 %1439
    %1441 = vrot.lane.b32.xlu0 %v226, 127
    %v1442 = vpop.permute.xlu0 %1441
    %1443 = vrot.lane.b32.xlu0 %v227, 127
    %v1444 = vpop.permute.xlu0 %1443
    %1445 = vrot.lane.b32.xlu0 %v228, 127
    %v1446 = vpop.permute.xlu0 %1445
    %1447 = vrot.lane.b32.xlu0 %v229, 127
    %v1448 = vpop.permute.xlu0 %1447
    %1449 = vrot.lane.b32.xlu0 %v230, 127
    %v1450 = vpop.permute.xlu0 %1449
    %1451 = vrot.lane.b32.xlu0 %v231, 127
    %v1452 = vpop.permute.xlu0 %1451
    %1453 = vrot.lane.b32.xlu0 %v232, 127
    %v1454 = vpop.permute.xlu0 %1453
    %1455 = vrot.lane.b32.xlu0 %v233, 127
    %v1456 = vpop.permute.xlu0 %1455
    %1457 = vrot.lane.b32.xlu0 %v234, 127
    %v1458 = vpop.permute.xlu0 %1457
    %1459 = vrot.lane.b32.xlu0 %v235, 127
    %v1460 = vpop.permute.xlu0 %1459
    %1461 = vrot.lane.b32.xlu0 %v236, 127
    %v1462 = vpop.permute.xlu0 %1461
    %1463 = vrot.lane.b32.xlu0 %v237, 127
    %v1464 = vpop.permute.xlu0 %1463
    %1465 = vrot.lane.b32.xlu0 %v238, 127
    %v1466 = vpop.permute.xlu0 %1465
    %1467 = vrot.lane.b32.xlu0 %v239, 127
    %v1468 = vpop.permute.xlu0 %1467
    %1469 = vrot.lane.b32.xlu0 %v240, 127
    %v1470 = vpop.permute.xlu0 %1469
    %1471 = vrot.lane.b32.xlu0 %v241, 127
    %v1472 = vpop.permute.xlu0 %1471
    %1473 = vrot.lane.b32.xlu0 %v242, 127
    %v1474 = vpop.permute.xlu0 %1473
    %1475 = vrot.lane.b32.xlu0 %v243, 127
    %v1476 = vpop.permute.xlu0 %1475
    %1477 = vrot.lane.b32.xlu0 %v244, 127
    %v1478 = vpop.permute.xlu0 %1477
    %1479 = vrot.lane.b32.xlu0 %v245, 127
    %v1480 = vpop.permute.xlu0 %1479
    %1481 = vrot.lane.b32.xlu0 %v246, 127
    %v1482 = vpop.permute.xlu0 %1481
    %1483 = vrot.lane.b32.xlu0 %v247, 127
    %v1484 = vpop.permute.xlu0 %1483
    %1485 = vrot.lane.b32.xlu0 %v248, 127
    %v1486 = vpop.permute.xlu0 %1485
    %1487 = vrot.lane.b32.xlu0 %v249, 127
    %v1488 = vpop.permute.xlu0 %1487
    %1489 = vrot.lane.b32.xlu0 %v250, 127
    %v1490 = vpop.permute.xlu0 %1489
    %1491 = vrot.lane.b32.xlu0 %v251, 127
    %v1492 = vpop.permute.xlu0 %1491
    %1493 = vrot.lane.b32.xlu0 %v252, 127
    %v1494 = vpop.permute.xlu0 %1493
    %1495 = vrot.lane.b32.xlu0 %v253, 127
    %v1496 = vpop.permute.xlu0 %1495
    %1497 = vrot.lane.b32.xlu0 %v254, 127
    %v1498 = vpop.permute.xlu0 %1497
    %1499 = vrot.lane.b32.xlu0 %v255, 127
    %v1500 = vpop.permute.xlu0 %1499
    %1501 = vrot.lane.b32.xlu0 %v256, 127
    %v1502 = vpop.permute.xlu0 %1501
    %1503 = vrot.lane.b32.xlu0 %v257, 127
    %v1504 = vpop.permute.xlu0 %1503
    %1505 = vrot.lane.b32.xlu0 %v258, 127
    %v1506 = vpop.permute.xlu0 %1505
    %1507 = vrot.lane.b32.xlu0 %v259, 127
    %v1508 = vpop.permute.xlu0 %1507
    %1509 = vrot.lane.b32.xlu0 %v260, 127
    %v1510 = vpop.permute.xlu0 %1509
    %1511 = vrot.lane.b32.xlu0 %v261, 127
    %v1512 = vpop.permute.xlu0 %1511
    %1513 = vrot.lane.b32.xlu0 %v262, 127
    %v1514 = vpop.permute.xlu0 %1513
    %1515 = vrot.lane.b32.xlu0 %v263, 127
    %v1516 = vpop.permute.xlu0 %1515
    %1517 = vrot.lane.b32.xlu0 %v264, 127
    %v1518 = vpop.permute.xlu0 %1517
    %1519 = vrot.lane.b32.xlu0 %v265, 127
    %v1520 = vpop.permute.xlu0 %1519
    %1521 = vrot.lane.b32.xlu0 %v266, 127
    %v1522 = vpop.permute.xlu0 %1521
    %1523 = vrot.lane.b32.xlu0 %v267, 127
    %v1524 = vpop.permute.xlu0 %1523
    %1525 = vrot.lane.b32.xlu0 %v268, 127
    %v1526 = vpop.permute.xlu0 %1525
    %1527 = vrot.lane.b32.xlu0 %v269, 127
    %v1528 = vpop.permute.xlu0 %1527
    %1529 = vrot.lane.b32.xlu0 %v270, 127
    %v1530 = vpop.permute.xlu0 %1529
    %1531 = vrot.lane.b32.xlu0 %v271, 127
    %v1532 = vpop.permute.xlu0 %1531
    %1533 = vrot.lane.b32.xlu0 %v272, 127
    %v1534 = vpop.permute.xlu0 %1533
    %1535 = vrot.lane.b32.xlu0 %v273, 127
    %v1536 = vpop.permute.xlu0 %1535
    %1537 = vrot.lane.b32.xlu0 %v274, 127
    %v1538 = vpop.permute.xlu0 %1537
    %1539 = vrot.lane.b32.xlu0 %v275, 127
    %v1540 = vpop.permute.xlu0 %1539
    %1541 = vrot.lane.b32.xlu0 %v276, 127
    %v1542 = vpop.permute.xlu0 %1541
    %1543 = vrot.lane.b32.xlu0 %v277, 127
    %v1544 = vpop.permute.xlu0 %1543
    %1545 = vrot.lane.b32.xlu0 %v278, 127
    %v1546 = vpop.permute.xlu0 %1545
    %1547 = vrot.lane.b32.xlu0 %v279, 127
    %v1548 = vpop.permute.xlu0 %1547
    %1549 = vrot.lane.b32.xlu0 %v280, 127
    %v1550 = vpop.permute.xlu0 %1549
    %1551 = vrot.lane.b32.xlu0 %v281, 127
    %v1552 = vpop.permute.xlu0 %1551
    %1553 = vrot.lane.b32.xlu0 %v282, 127
    %v1554 = vpop.permute.xlu0 %1553
    %1555 = vrot.lane.b32.xlu0 %v283, 127
    %v1556 = vpop.permute.xlu0 %1555
    %1557 = vrot.lane.b32.xlu0 %v284, 127
    %v1558 = vpop.permute.xlu0 %1557
    %1559 = vrot.lane.b32.xlu0 %v285, 127
    %v1560 = vpop.permute.xlu0 %1559
    %1561 = vrot.lane.b32.xlu0 %v286, 127
    %v1562 = vpop.permute.xlu0 %1561
    %1563 = vrot.lane.b32.xlu0 %v287, 127
    %v1564 = vpop.permute.xlu0 %1563
    %1565 = vrot.lane.b32.xlu0 %v288, 127
    %v1566 = vpop.permute.xlu0 %1565
    %1567 = vrot.lane.b32.xlu0 %v289, 127
    %v1568 = vpop.permute.xlu0 %1567
    %1569 = vrot.lane.b32.xlu0 %v290, 127
    %v1570 = vpop.permute.xlu0 %1569
    %1571 = vrot.lane.b32.xlu0 %v291, 127
    %v1572 = vpop.permute.xlu0 %1571
    %1573 = vrot.lane.b32.xlu0 %v292, 127
    %v1574 = vpop.permute.xlu0 %1573
    %1575 = vrot.lane.b32.xlu0 %v293, 127
    %v1576 = vpop.permute.xlu0 %1575
    %1577 = vrot.lane.b32.xlu0 %v294, 127
    %v1578 = vpop.permute.xlu0 %1577
    %1579 = vrot.lane.b32.xlu0 %v295, 127
    %v1580 = vpop.permute.xlu0 %1579
    %1581 = vrot.lane.b32.xlu0 %v296, 127
    %v1582 = vpop.permute.xlu0 %1581
    %1583 = vrot.lane.b32.xlu0 %v297, 127
    %v1584 = vpop.permute.xlu0 %1583
    %1585 = vrot.lane.b32.xlu0 %v298, 127
    %v1586 = vpop.permute.xlu0 %1585
    %1587 = vrot.lane.b32.xlu0 %v299, 127
    %v1588 = vpop.permute.xlu0 %1587
    %1589 = vrot.lane.b32.xlu0 %v300, 127
    %v1590 = vpop.permute.xlu0 %1589
    %1591 = vrot.lane.b32.xlu0 %v301, 127
    %v1592 = vpop.permute.xlu0 %1591
    %1593 = vrot.lane.b32.xlu0 %v302, 127
    %v1594 = vpop.permute.xlu0 %1593
    %1595 = vrot.lane.b32.xlu0 %v303, 127
    %v1596 = vpop.permute.xlu0 %1595
    %1597 = vrot.lane.b32.xlu0 %v304, 127
    %v1598 = vpop.permute.xlu0 %1597
    %1599 = vrot.lane.b32.xlu0 %v305, 127
    %v1600 = vpop.permute.xlu0 %1599
    %1601 = vrot.lane.b32.xlu0 %v306, 127
    %v1602 = vpop.permute.xlu0 %1601
    %1603 = vrot.lane.b32.xlu0 %v307, 127
    %v1604 = vpop.permute.xlu0 %1603
    %1605 = vrot.lane.b32.xlu0 %v308, 127
    %v1606 = vpop.permute.xlu0 %1605
    %1607 = vrot.lane.b32.xlu0 %v309, 127
    %v1608 = vpop.permute.xlu0 %1607
    %1609 = vrot.lane.b32.xlu0 %v310, 127
    %v1610 = vpop.permute.xlu0 %1609
    %1611 = vrot.lane.b32.xlu0 %v311, 127
    %v1612 = vpop.permute.xlu0 %1611
    %1613 = vrot.lane.b32.xlu0 %v312, 127
    %v1614 = vpop.permute.xlu0 %1613
    %1615 = vrot.lane.b32.xlu0 %v313, 127
    %v1616 = vpop.permute.xlu0 %1615
    %1617 = vrot.lane.b32.xlu0 %v314, 127
    %v1618 = vpop.permute.xlu0 %1617
    %1619 = vrot.lane.b32.xlu0 %v315, 127
    %v1620 = vpop.permute.xlu0 %1619
    %1621 = vrot.lane.b32.xlu0 %v316, 127
    %v1622 = vpop.permute.xlu0 %1621
    %1623 = vrot.lane.b32.xlu0 %v317, 127
    %v1624 = vpop.permute.xlu0 %1623
    %1625 = vrot.lane.b32.xlu0 %v318, 127
    %v1626 = vpop.permute.xlu0 %1625
    %1627 = vrot.lane.b32.xlu0 %v319, 127
    %v1628 = vpop.permute.xlu0 %1627
    %1629 = vrot.lane.b32.xlu0 %v320, 127
    %v1630 = vpop.permute.xlu0 %1629
    %1631 = vrot.lane.b32.xlu0 %v321, 127
    %v1632 = vpop.permute.xlu0 %1631
    %1633 = vrot.lane.b32.xlu0 %v322, 127
    %v1634 = vpop.permute.xlu0 %1633
    %1635 = vrot.lane.b32.xlu0 %v323, 127
    %v1636 = vpop.permute.xlu0 %1635
    %1637 = vrot.lane.b32.xlu0 %v324, 127
    %v1638 = vpop.permute.xlu0 %1637
    %1639 = vrot.lane.b32.xlu0 %v325, 127
    %v1640 = vpop.permute.xlu0 %1639
    %1641 = vrot.lane.b32.xlu0 %v326, 127
    %v1642 = vpop.permute.xlu0 %1641
    %1643 = vrot.lane.b32.xlu0 %v327, 127
    %v1644 = vpop.permute.xlu0 %1643
    %1645 = vrot.lane.b32.xlu0 %v328, 127
    %v1646 = vpop.permute.xlu0 %1645
    %1647 = vrot.lane.b32.xlu0 %v329, 127
    %v1648 = vpop.permute.xlu0 %1647
    %1649 = vrot.lane.b32.xlu0 %v330, 127
    %v1650 = vpop.permute.xlu0 %1649
    %1651 = vrot.lane.b32.xlu0 %v331, 127
    %v1652 = vpop.permute.xlu0 %1651
    %1653 = vrot.lane.b32.xlu0 %v332, 127
    %v1654 = vpop.permute.xlu0 %1653
    %1655 = vrot.lane.b32.xlu0 %v333, 127
    %v1656 = vpop.permute.xlu0 %1655
    %1657 = vrot.lane.b32.xlu0 %v334, 127
    %v1658 = vpop.permute.xlu0 %1657
    %1659 = vrot.lane.b32.xlu0 %v335, 127
    %v1660 = vpop.permute.xlu0 %1659
    %1661 = vrot.lane.b32.xlu0 %v336, 127
    %v1662 = vpop.permute.xlu0 %1661
    %1663 = vrot.lane.b32.xlu0 %v337, 127
    %v1664 = vpop.permute.xlu0 %1663
    %1665 = vrot.lane.b32.xlu0 %v338, 127
    %v1666 = vpop.permute.xlu0 %1665
    %1667 = vrot.lane.b32.xlu0 %v339, 127
    %v1668 = vpop.permute.xlu0 %1667
    %1669 = vrot.lane.b32.xlu0 %v340, 127
    %v1670 = vpop.permute.xlu0 %1669
    %1671 = vrot.lane.b32.xlu0 %v341, 127
    %v1672 = vpop.permute.xlu0 %1671
    %1673 = vrot.lane.b32.xlu0 %v342, 127
    %v1674 = vpop.permute.xlu0 %1673
    %1675 = vrot.lane.b32.xlu0 %v343, 127
    %v1676 = vpop.permute.xlu0 %1675
    %1677 = vrot.lane.b32.xlu0 %v344, 127
    %v1678 = vpop.permute.xlu0 %1677
    %1679 = vrot.lane.b32.xlu0 %v345, 127
    %v1680 = vpop.permute.xlu0 %1679
    %1681 = vrot.lane.b32.xlu0 %v346, 127
    %v1682 = vpop.permute.xlu0 %1681
    %1683 = vrot.lane.b32.xlu0 %v347, 127
    %v1684 = vpop.permute.xlu0 %1683
    %1685 = vrot.lane.b32.xlu0 %v348, 127
    %v1686 = vpop.permute.xlu0 %1685
    %1687 = vrot.lane.b32.xlu0 %v349, 127
    %v1688 = vpop.permute.xlu0 %1687
    %1689 = vrot.lane.b32.xlu0 %v350, 127
    %v1690 = vpop.permute.xlu0 %1689
    %1691 = vrot.lane.b32.xlu0 %v351, 127
    %v1692 = vpop.permute.xlu0 %1691
    %1693 = vrot.lane.b32.xlu0 %v352, 127
    %v1694 = vpop.permute.xlu0 %1693
    %1695 = vrot.lane.b32.xlu0 %v353, 127
    %v1696 = vpop.permute.xlu0 %1695
    %1697 = vrot.lane.b32.xlu0 %v354, 127
    %v1698 = vpop.permute.xlu0 %1697
    %1699 = vrot.lane.b32.xlu0 %v355, 127
    %v1700 = vpop.permute.xlu0 %1699
    %1701 = vrot.lane.b32.xlu0 %v356, 127
    %v1702 = vpop.permute.xlu0 %1701
    %1703 = vrot.lane.b32.xlu0 %v357, 127
    %v1704 = vpop.permute.xlu0 %1703
    %1705 = vrot.lane.b32.xlu0 %v358, 127
    %v1706 = vpop.permute.xlu0 %1705
    %1707 = vrot.lane.b32.xlu0 %v359, 127
    %v1708 = vpop.permute.xlu0 %1707
    %1709 = vrot.lane.b32.xlu0 %v360, 127
    %v1710 = vpop.permute.xlu0 %1709
    %1711 = vrot.lane.b32.xlu0 %v361, 127
    %v1712 = vpop.permute.xlu0 %1711
    %1713 = vrot.lane.b32.xlu0 %v362, 127
    %v1714 = vpop.permute.xlu0 %1713
    %1715 = vrot.lane.b32.xlu0 %v363, 127
    %v1716 = vpop.permute.xlu0 %1715
    %1717 = vrot.lane.b32.xlu0 %v364, 127
    %v1718 = vpop.permute.xlu0 %1717
    %1719 = vrot.lane.b32.xlu0 %v365, 127
    %v1720 = vpop.permute.xlu0 %1719
    %1721 = vrot.lane.b32.xlu0 %v366, 127
    %v1722 = vpop.permute.xlu0 %1721
    %1723 = vrot.lane.b32.xlu0 %v367, 127
    %v1724 = vpop.permute.xlu0 %1723
    %1725 = vrot.lane.b32.xlu0 %v368, 127
    %v1726 = vpop.permute.xlu0 %1725
    %1727 = vrot.lane.b32.xlu0 %v369, 127
    %v1728 = vpop.permute.xlu0 %1727
    %1729 = vrot.lane.b32.xlu0 %v370, 127
    %v1730 = vpop.permute.xlu0 %1729
    %1731 = vrot.lane.b32.xlu0 %v371, 127
    %v1732 = vpop.permute.xlu0 %1731
    %1733 = vrot.lane.b32.xlu0 %v372, 127
    %v1734 = vpop.permute.xlu0 %1733
    %1735 = vrot.lane.b32.xlu0 %v373, 127
    %v1736 = vpop.permute.xlu0 %1735
    %1737 = vrot.lane.b32.xlu0 %v374, 127
    %v1738 = vpop.permute.xlu0 %1737
    %1739 = vrot.lane.b32.xlu0 %v375, 127
    %v1740 = vpop.permute.xlu0 %1739
    %1741 = vrot.lane.b32.xlu0 %v376, 127
    %v1742 = vpop.permute.xlu0 %1741
    %1743 = vrot.lane.b32.xlu0 %v377, 127
    %v1744 = vpop.permute.xlu0 %1743
    %1745 = vrot.lane.b32.xlu0 %v378, 127
    %v1746 = vpop.permute.xlu0 %1745
    %1747 = vrot.lane.b32.xlu0 %v379, 127
    %v1748 = vpop.permute.xlu0 %1747
    %1749 = vrot.lane.b32.xlu0 %v380, 127
    %v1750 = vpop.permute.xlu0 %1749
    %1751 = vrot.lane.b32.xlu0 %v381, 127
    %v1752 = vpop.permute.xlu0 %1751
    %1753 = vrot.lane.b32.xlu0 %v382, 127
    %v1754 = vpop.permute.xlu0 %1753
    %1755 = vrot.lane.b32.xlu0 %v383, 127
    %v1756 = vpop.permute.xlu0 %1755
    %1757 = vrot.lane.b32.xlu0 %v384, 127
    %v1758 = vpop.permute.xlu0 %1757
    %1759 = vrot.lane.b32.xlu0 %v385, 127
    %v1760 = vpop.permute.xlu0 %1759
    %1761 = vrot.lane.b32.xlu0 %v386, 127
    %v1762 = vpop.permute.xlu0 %1761
    %1763 = vrot.lane.b32.xlu0 %v387, 127
    %v1764 = vpop.permute.xlu0 %1763
    %1765 = vrot.lane.b32.xlu0 %v388, 127
    %v1766 = vpop.permute.xlu0 %1765
    %1767 = vrot.lane.b32.xlu0 %v389, 127
    %v1768 = vpop.permute.xlu0 %1767
    %1769 = vrot.lane.b32.xlu0 %v390, 127
    %v1770 = vpop.permute.xlu0 %1769
    %1771 = vrot.lane.b32.xlu0 %v391, 127
    %v1772 = vpop.permute.xlu0 %1771
    %1773 = vrot.lane.b32.xlu0 %v392, 127
    %v1774 = vpop.permute.xlu0 %1773
    %1775 = vrot.lane.b32.xlu0 %v393, 127
    %v1776 = vpop.permute.xlu0 %1775
    %1777 = vrot.lane.b32.xlu0 %v394, 127
    %v1778 = vpop.permute.xlu0 %1777
    %1779 = vrot.lane.b32.xlu0 %v395, 127
    %v1780 = vpop.permute.xlu0 %1779
    %1781 = vrot.lane.b32.xlu0 %v396, 127
    %v1782 = vpop.permute.xlu0 %1781
    %1783 = vrot.lane.b32.xlu0 %v397, 127
    %v1784 = vpop.permute.xlu0 %1783
    %1785 = vrot.lane.b32.xlu0 %v398, 127
    %v1786 = vpop.permute.xlu0 %1785
    %1787 = vrot.lane.b32.xlu0 %v399, 127
    %v1788 = vpop.permute.xlu0 %1787
    %1789 = vrot.lane.b32.xlu0 %v400, 127
    %v1790 = vpop.permute.xlu0 %1789
    %1791 = vrot.lane.b32.xlu0 %v401, 127
    %v1792 = vpop.permute.xlu0 %1791
    %1793 = vrot.lane.b32.xlu0 %v402, 127
    %v1794 = vpop.permute.xlu0 %1793
    %1795 = vrot.lane.b32.xlu0 %v403, 127
    %v1796 = vpop.permute.xlu0 %1795
    %1797 = vrot.lane.b32.xlu0 %v404, 127
    %v1798 = vpop.permute.xlu0 %1797
    %1799 = vrot.lane.b32.xlu0 %v405, 127
    %v1800 = vpop.permute.xlu0 %1799
    %1801 = vrot.lane.b32.xlu0 %v406, 127
    %v1802 = vpop.permute.xlu0 %1801
    %1803 = vrot.lane.b32.xlu0 %v407, 127
    %v1804 = vpop.permute.xlu0 %1803
    %1805 = vrot.lane.b32.xlu0 %v408, 127
    %v1806 = vpop.permute.xlu0 %1805
    %1807 = vrot.lane.b32.xlu0 %v409, 127
    %v1808 = vpop.permute.xlu0 %1807
    %1809 = vrot.lane.b32.xlu0 %v410, 127
    %v1810 = vpop.permute.xlu0 %1809
    %1811 = vrot.lane.b32.xlu0 %v411, 127
    %v1812 = vpop.permute.xlu0 %1811
    %1813 = vrot.lane.b32.xlu0 %v412, 127
    %v1814 = vpop.permute.xlu0 %1813
    %1815 = vrot.lane.b32.xlu0 %v413, 127
    %v1816 = vpop.permute.xlu0 %1815
    %1817 = vrot.lane.b32.xlu0 %v414, 127
    %v1818 = vpop.permute.xlu0 %1817
    %1819 = vrot.lane.b32.xlu0 %v415, 127
    %v1820 = vpop.permute.xlu0 %1819
    %1821 = vrot.lane.b32.xlu0 %v416, 127
    %v1822 = vpop.permute.xlu0 %1821
    %1823 = vrot.lane.b32.xlu0 %v417, 127
    %v1824 = vpop.permute.xlu0 %1823
    %1825 = vrot.lane.b32.xlu0 %v418, 127
    %v1826 = vpop.permute.xlu0 %1825
    %1827 = vrot.lane.b32.xlu0 %v419, 127
    %v1828 = vpop.permute.xlu0 %1827
    %1829 = vrot.lane.b32.xlu0 %v420, 127
    %v1830 = vpop.permute.xlu0 %1829
    %1831 = vrot.lane.b32.xlu0 %v421, 127
    %v1832 = vpop.permute.xlu0 %1831
    %1833 = vrot.lane.b32.xlu0 %v422, 127
    %v1834 = vpop.permute.xlu0 %1833
    %1835 = vrot.lane.b32.xlu0 %v423, 127
    %v1836 = vpop.permute.xlu0 %1835
    %1837 = vrot.lane.b32.xlu0 %v424, 127
    %v1838 = vpop.permute.xlu0 %1837
    %1839 = vrot.lane.b32.xlu0 %v425, 127
    %v1840 = vpop.permute.xlu0 %1839
    %1841 = vrot.lane.b32.xlu0 %v426, 127
    %v1842 = vpop.permute.xlu0 %1841
    %1843 = vrot.lane.b32.xlu0 %v427, 127
    %v1844 = vpop.permute.xlu0 %1843
    %1845 = vrot.lane.b32.xlu0 %v428, 127
    %v1846 = vpop.permute.xlu0 %1845
    %1847 = vrot.lane.b32.xlu0 %v429, 127
    %v1848 = vpop.permute.xlu0 %1847
    %1849 = vrot.lane.b32.xlu0 %v430, 127
    %v1850 = vpop.permute.xlu0 %1849
    %1851 = vrot.lane.b32.xlu0 %v431, 127
    %v1852 = vpop.permute.xlu0 %1851
    %1853 = vrot.lane.b32.xlu0 %v432, 127
    %v1854 = vpop.permute.xlu0 %1853
    %1855 = vrot.lane.b32.xlu0 %v433, 127
    %v1856 = vpop.permute.xlu0 %1855
    %1857 = vrot.lane.b32.xlu0 %v434, 127
    %v1858 = vpop.permute.xlu0 %1857
    %1859 = vrot.lane.b32.xlu0 %v435, 127
    %v1860 = vpop.permute.xlu0 %1859
    %1861 = vrot.lane.b32.xlu0 %v436, 127
    %v1862 = vpop.permute.xlu0 %1861
    %1863 = vrot.lane.b32.xlu0 %v437, 127
    %v1864 = vpop.permute.xlu0 %1863
    %1865 = vrot.lane.b32.xlu0 %v438, 127
    %v1866 = vpop.permute.xlu0 %1865
    %1867 = vrot.lane.b32.xlu0 %v439, 127
    %v1868 = vpop.permute.xlu0 %1867
    %1869 = vrot.lane.b32.xlu0 %v440, 127
    %v1870 = vpop.permute.xlu0 %1869
    %1871 = vrot.lane.b32.xlu0 %v441, 127
    %v1872 = vpop.permute.xlu0 %1871
    %1873 = vrot.lane.b32.xlu0 %v442, 127
    %v1874 = vpop.permute.xlu0 %1873
    %1875 = vrot.lane.b32.xlu0 %v443, 127
    %v1876 = vpop.permute.xlu0 %1875
    %1877 = vrot.lane.b32.xlu0 %v444, 127
    %v1878 = vpop.permute.xlu0 %1877
    %1879 = vrot.lane.b32.xlu0 %v445, 127
    %v1880 = vpop.permute.xlu0 %1879
    %1881 = vrot.lane.b32.xlu0 %v446, 127
    %v1882 = vpop.permute.xlu0 %1881
    %1883 = vrot.lane.b32.xlu0 %v447, 127
    %v1884 = vpop.permute.xlu0 %1883
    %1885 = vrot.lane.b32.xlu0 %v448, 127
    %v1886 = vpop.permute.xlu0 %1885
    %1887 = vrot.lane.b32.xlu0 %v449, 127
    %v1888 = vpop.permute.xlu0 %1887
    %1889 = vrot.lane.b32.xlu0 %v450, 127
    %v1890 = vpop.permute.xlu0 %1889
    %1891 = vrot.lane.b32.xlu0 %v451, 127
    %v1892 = vpop.permute.xlu0 %1891
    %1893 = vrot.lane.b32.xlu0 %v452, 127
    %v1894 = vpop.permute.xlu0 %1893
    %1895 = vrot.lane.b32.xlu0 %v453, 127
    %v1896 = vpop.permute.xlu0 %1895
    %1897 = vrot.lane.b32.xlu0 %v454, 127
    %v1898 = vpop.permute.xlu0 %1897
    %1899 = vrot.lane.b32.xlu0 %v455, 127
    %v1900 = vpop.permute.xlu0 %1899
    %1901 = vrot.lane.b32.xlu0 %v456, 127
    %v1902 = vpop.permute.xlu0 %1901
    %1903 = vrot.lane.b32.xlu0 %v457, 127
    %v1904 = vpop.permute.xlu0 %1903
    %1905 = vrot.lane.b32.xlu0 %v458, 127
    %v1906 = vpop.permute.xlu0 %1905
    %1907 = vrot.lane.b32.xlu0 %v459, 127
    %v1908 = vpop.permute.xlu0 %1907
    %1909 = vrot.lane.b32.xlu0 %v460, 127
    %v1910 = vpop.permute.xlu0 %1909
    %1911 = vrot.lane.b32.xlu0 %v461, 127
    %v1912 = vpop.permute.xlu0 %1911
    %1913 = vrot.lane.b32.xlu0 %v462, 127
    %v1914 = vpop.permute.xlu0 %1913
    %1915 = vrot.lane.b32.xlu0 %v463, 127
    %v1916 = vpop.permute.xlu0 %1915
    %1917 = vrot.lane.b32.xlu0 %v464, 127
    %v1918 = vpop.permute.xlu0 %1917
    %1919 = vrot.lane.b32.xlu0 %v465, 127
    %v1920 = vpop.permute.xlu0 %1919
    %1921 = vrot.lane.b32.xlu0 %v466, 127
    %v1922 = vpop.permute.xlu0 %1921
    %1923 = vrot.lane.b32.xlu0 %v467, 127
    %v1924 = vpop.permute.xlu0 %1923
    %1925 = vrot.lane.b32.xlu0 %v468, 127
    %v1926 = vpop.permute.xlu0 %1925
    %1927 = vrot.lane.b32.xlu0 %v469, 127
    %v1928 = vpop.permute.xlu0 %1927
    %1929 = vrot.lane.b32.xlu0 %v470, 127
    %v1930 = vpop.permute.xlu0 %1929
    %1931 = vrot.lane.b32.xlu0 %v471, 127
    %v1932 = vpop.permute.xlu0 %1931
    %1933 = vrot.lane.b32.xlu0 %v472, 127
    %v1934 = vpop.permute.xlu0 %1933
    %1935 = vrot.lane.b32.xlu0 %v473, 127
    %v1936 = vpop.permute.xlu0 %1935
    %1937 = vrot.lane.b32.xlu0 %v474, 127
    %v1938 = vpop.permute.xlu0 %1937
    %1939 = vrot.lane.b32.xlu0 %v475, 127
    %v1940 = vpop.permute.xlu0 %1939
    %1941 = vrot.lane.b32.xlu0 %v476, 127
    %v1942 = vpop.permute.xlu0 %1941
    %1943 = vrot.lane.b32.xlu0 %v477, 127
    %v1944 = vpop.permute.xlu0 %1943
    %1945 = vrot.lane.b32.xlu0 %v478, 127
    %v1946 = vpop.permute.xlu0 %1945
    %1947 = vrot.lane.b32.xlu0 %v479, 127
    %v1948 = vpop.permute.xlu0 %1947
    %1949 = vrot.lane.b32.xlu0 %v480, 127
    %v1950 = vpop.permute.xlu0 %1949
    %1951 = vrot.lane.b32.xlu0 %v481, 127
    %v1952 = vpop.permute.xlu0 %1951
    %1953 = vrot.lane.b32.xlu0 %v482, 127
    %v1954 = vpop.permute.xlu0 %1953
    %1955 = vrot.lane.b32.xlu0 %v483, 127
    %v1956 = vpop.permute.xlu0 %1955
    %1957 = vrot.lane.b32.xlu0 %v484, 127
    %v1958 = vpop.permute.xlu0 %1957
    %1959 = vrot.lane.b32.xlu0 %v485, 127
    %v1960 = vpop.permute.xlu0 %1959
    %1961 = vrot.lane.b32.xlu0 %v486, 127
    %v1962 = vpop.permute.xlu0 %1961
    %1963 = vrot.lane.b32.xlu0 %v487, 127
    %v1964 = vpop.permute.xlu0 %1963
    %1965 = vrot.lane.b32.xlu0 %v488, 127
    %v1966 = vpop.permute.xlu0 %1965
    %1967 = vrot.lane.b32.xlu0 %v489, 127
    %v1968 = vpop.permute.xlu0 %1967
    %1969 = vrot.lane.b32.xlu0 %v490, 127
    %v1970 = vpop.permute.xlu0 %1969
    %1971 = vrot.lane.b32.xlu0 %v491, 127
    %v1972 = vpop.permute.xlu0 %1971
    %1973 = vrot.lane.b32.xlu0 %v492, 127
    %v1974 = vpop.permute.xlu0 %1973
    %1975 = vrot.lane.b32.xlu0 %v493, 127
    %v1976 = vpop.permute.xlu0 %1975
    %1977 = vrot.lane.b32.xlu0 %v494, 127
    %v1978 = vpop.permute.xlu0 %1977
    %1979 = vrot.lane.b32.xlu0 %v495, 127
    %v1980 = vpop.permute.xlu0 %1979
    %1981 = vrot.lane.b32.xlu0 %v496, 127
    %v1982 = vpop.permute.xlu0 %1981
    %1983 = vrot.lane.b32.xlu0 %v497, 127
    %v1984 = vpop.permute.xlu0 %1983
    %1985 = vrot.lane.b32.xlu0 %v498, 127
    %v1986 = vpop.permute.xlu0 %1985
    %1987 = vrot.lane.b32.xlu0 %v499, 127
    %v1988 = vpop.permute.xlu0 %1987
    %1989 = vrot.lane.b32.xlu0 %v500, 127
    %v1990 = vpop.permute.xlu0 %1989
    %1991 = vrot.lane.b32.xlu0 %v501, 127
    %v1992 = vpop.permute.xlu0 %1991
    %1993 = vrot.lane.b32.xlu0 %v502, 127
    %v1994 = vpop.permute.xlu0 %1993
    %1995 = vrot.lane.b32.xlu0 %v503, 127
    %v1996 = vpop.permute.xlu0 %1995
    %1997 = vrot.lane.b32.xlu0 %v504, 127
    %v1998 = vpop.permute.xlu0 %1997
    %1999 = vrot.lane.b32.xlu0 %v505, 127
    %v2000 = vpop.permute.xlu0 %1999
    %2001 = vrot.lane.b32.xlu0 %v506, 127
    %v2002 = vpop.permute.xlu0 %2001
    %2003 = vrot.lane.b32.xlu0 %v507, 127
    %v2004 = vpop.permute.xlu0 %2003
    %2005 = vrot.lane.b32.xlu0 %v508, 127
    %v2006 = vpop.permute.xlu0 %2005
    %2007 = vrot.lane.b32.xlu0 %v509, 127
    %v2008 = vpop.permute.xlu0 %2007
    %2009 = vrot.lane.b32.xlu0 %v510, 127
    %v2010 = vpop.permute.xlu0 %2009
    %2011 = vrot.lane.b32.xlu0 %v511, 127
    %v2012 = vpop.permute.xlu0 %2011
    %2013 = vrot.lane.b32.xlu0 %v512, 127
    %v2014 = vpop.permute.xlu0 %2013
    %2015 = vrot.lane.b32.xlu0 %v513, 127
    %v2016 = vpop.permute.xlu0 %2015
    %2017 = vrot.lane.b32.xlu0 %v514, 127
    %v2018 = vpop.permute.xlu0 %2017
    %2019 = vrot.lane.b32.xlu0 %v515, 127
    %v2020 = vpop.permute.xlu0 %2019
    %2021 = vrot.lane.b32.xlu0 %v516, 127
    %v2022 = vpop.permute.xlu0 %2021
    %2023 = vrot.lane.b32.xlu0 %v517, 127
    %v2024 = vpop.permute.xlu0 %2023
    %2025 = vrot.lane.b32.xlu0 %v518, 127
    %v2026 = vpop.permute.xlu0 %2025
    %2027 = vrot.lane.b32.xlu0 %v519, 127
    %v2028 = vpop.permute.xlu0 %2027
    %2029 = vrot.lane.b32.xlu0 %v520, 127
    %v2030 = vpop.permute.xlu0 %2029
    %2031 = vrot.lane.b32.xlu0 %v521, 127
    %v2032 = vpop.permute.xlu0 %2031
    %2033 = vrot.lane.b32.xlu0 %v522, 127
    %v2034 = vpop.permute.xlu0 %2033
    %v2530 = vsub.f32 %v28, %v1046
    %v2531 = vsub.f32 %v29, %v1048
    %v2532 = vsub.f32 %v30, %v1050
    %v2533 = vsub.f32 %v31, %v1052
    %v2534 = vsub.f32 %v32, %v1054
    %v2535 = vsub.f32 %v33, %v1056
    %v2536 = vsub.f32 %v34, %v1058
    %v2537 = vsub.f32 %v35, %v1060
    %v2538 = vsub.f32 %v36, %v1062
    %v2539 = vsub.f32 %v37, %v1064
    %v2540 = vsub.f32 %v38, %v1066
    %v2541 = vsub.f32 %v39, %v1068
    %v2542 = vsub.f32 %v40, %v1070
    %v2543 = vsub.f32 %v41, %v1072
    %v2544 = vsub.f32 %v42, %v1074
    %v2545 = vsub.f32 %v43, %v1076
    %v2546 = vsub.f32 %v44, %v1078
    %v2547 = vsub.f32 %v45, %v1080
    %v2548 = vsub.f32 %v46, %v1082
    %v2549 = vsub.f32 %v47, %v1084
    %v2550 = vsub.f32 %v48, %v1086
    %v2551 = vsub.f32 %v49, %v1088
    %v2552 = vsub.f32 %v50, %v1090
    %v2553 = vsub.f32 %v51, %v1092
    %v2554 = vsub.f32 %v52, %v1094
    %v2555 = vsub.f32 %v53, %v1096
    %v2556 = vsub.f32 %v54, %v1098
    %v2557 = vsub.f32 %v55, %v1100
    %v2558 = vsub.f32 %v56, %v1102
    %v2559 = vsub.f32 %v57, %v1104
    %v2560 = vsub.f32 %v58, %v1106
    %v2561 = vsub.f32 %v59, %v1108
    %v2562 = vsub.f32 %v60, %v1110
    %v2563 = vsub.f32 %v61, %v1112
    %v2564 = vsub.f32 %v62, %v1114
    %v2565 = vsub.f32 %v63, %v1116
    %v2566 = vsub.f32 %v64, %v1118
    %v2567 = vsub.f32 %v65, %v1120
    %v2568 = vsub.f32 %v66, %v1122
    %v2569 = vsub.f32 %v67, %v1124
    %v2570 = vsub.f32 %v68, %v1126
    %v2571 = vsub.f32 %v69, %v1128
    %v2572 = vsub.f32 %v70, %v1130
    %v2573 = vsub.f32 %v71, %v1132
    %v2574 = vsub.f32 %v72, %v1134
    %v2575 = vsub.f32 %v73, %v1136
    %v2576 = vsub.f32 %v74, %v1138
    %v2577 = vsub.f32 %v75, %v1140
    %v2578 = vsub.f32 %v76, %v1142
    %v2579 = vsub.f32 %v77, %v1144
    %v2580 = vsub.f32 %v78, %v1146
    %v2581 = vsub.f32 %v79, %v1148
    %v2582 = vsub.f32 %v80, %v1150
    %v2583 = vsub.f32 %v81, %v1152
    %v2584 = vsub.f32 %v82, %v1154
    %v2585 = vsub.f32 %v83, %v1156
    %v2586 = vsub.f32 %v84, %v1158
    %v2587 = vsub.f32 %v85, %v1160
    %v2588 = vsub.f32 %v86, %v1162
    %v2589 = vsub.f32 %v87, %v1164
    %v2590 = vsub.f32 %v88, %v1166
    %v2591 = vsub.f32 %v89, %v1168
    %v2592 = vsub.f32 %v90, %v1170
    %v2593 = vsub.f32 %v91, %v1172
    %v2594 = vsub.f32 %v92, %v1174
    %v2595 = vsub.f32 %v93, %v1176
    %v2596 = vsub.f32 %v94, %v1178
    %v2597 = vsub.f32 %v95, %v1180
    %v2598 = vsub.f32 %v96, %v1182
    %v2599 = vsub.f32 %v97, %v1184
    %v2600 = vsub.f32 %v98, %v1186
    %v2601 = vsub.f32 %v99, %v1188
    %v2602 = vsub.f32 %v100, %v1190
    %v2603 = vsub.f32 %v101, %v1192
    %v2604 = vsub.f32 %v102, %v1194
    %v2605 = vsub.f32 %v103, %v1196
    %v2606 = vsub.f32 %v104, %v1198
    %v2607 = vsub.f32 %v105, %v1200
    %v2608 = vsub.f32 %v106, %v1202
    %v2609 = vsub.f32 %v107, %v1204
    %v2610 = vsub.f32 %v108, %v1206
    %v2611 = vsub.f32 %v109, %v1208
    %v2612 = vsub.f32 %v110, %v1210
    %v2613 = vsub.f32 %v111, %v1212
    %v2614 = vsub.f32 %v112, %v1214
    %v2615 = vsub.f32 %v113, %v1216
    %v2616 = vsub.f32 %v114, %v1218
    %v2617 = vsub.f32 %v115, %v1220
    %v2618 = vsub.f32 %v116, %v1222
    %v2619 = vsub.f32 %v117, %v1224
    %v2620 = vsub.f32 %v118, %v1226
    %v2621 = vsub.f32 %v119, %v1228
    %v2622 = vsub.f32 %v120, %v1230
    %v2623 = vsub.f32 %v121, %v1232
    %v2624 = vsub.f32 %v122, %v1234
    %v2625 = vsub.f32 %v123, %v1236
    %v2626 = vsub.f32 %v124, %v1238
    %v2627 = vsub.f32 %v125, %v1240
    %v2628 = vsub.f32 %v126, %v1242
    %v2629 = vsub.f32 %v127, %v1244
    %v2630 = vsub.f32 %v128, %v1246
    %v2631 = vsub.f32 %v129, %v1248
    %v2632 = vsub.f32 %v130, %v1250
    %v2633 = vsub.f32 %v131, %v1252
    %v2634 = vsub.f32 %v132, %v1254
    %v2635 = vsub.f32 %v133, %v1256
    %v2636 = vsub.f32 %v134, %v1258
    %v2637 = vsub.f32 %v135, %v1260
    %v2638 = vsub.f32 %v136, %v1262
    %v2639 = vsub.f32 %v137, %v1264
    %v2640 = vsub.f32 %v138, %v1266
    %v2641 = vsub.f32 %v139, %v1268
    %v2642 = vsub.f32 %v140, %v1270
    %v2643 = vsub.f32 %v141, %v1272
    %v2644 = vsub.f32 %v142, %v1274
    %v2645 = vsub.f32 %v143, %v1276
    %v2646 = vsub.f32 %v144, %v1278
    %v2647 = vsub.f32 %v145, %v1280
    %v2648 = vsub.f32 %v146, %v1282
    %v2649 = vsub.f32 %v147, %v1284
    %v2650 = vsub.f32 %v148, %v1286
    %v2651 = vsub.f32 %v149, %v1288
    %v2652 = vsub.f32 %v150, %v1290
    %v2653 = vsub.f32 %v151, %v1292
    %v2654 = vsub.f32 %v152, %v1294
    %v2655 = vsub.f32 %v153, %v1296
    %v2656 = vsub.f32 %v154, %v1298
    %v2657 = vsub.f32 %v155, %v1300
    %v2658 = vsub.f32 %v156, %v1302
    %v2659 = vsub.f32 %v157, %v1304
    %v2660 = vsub.f32 %v158, %v1306
    %v2661 = vsub.f32 %v159, %v1308
    %v2662 = vsub.f32 %v160, %v1310
    %v2663 = vsub.f32 %v161, %v1312
    %v2664 = vsub.f32 %v162, %v1314
    %v2665 = vsub.f32 %v163, %v1316
    %v2666 = vsub.f32 %v164, %v1318
    %v2667 = vsub.f32 %v165, %v1320
    %v2668 = vsub.f32 %v166, %v1322
    %v2669 = vsub.f32 %v167, %v1324
    %v2670 = vsub.f32 %v168, %v1326
    %v2671 = vsub.f32 %v169, %v1328
    %v2672 = vsub.f32 %v170, %v1330
    %v2673 = vsub.f32 %v171, %v1332
    %v2674 = vsub.f32 %v172, %v1334
    %v2675 = vsub.f32 %v173, %v1336
    %v2676 = vsub.f32 %v174, %v1338
    %v2677 = vsub.f32 %v175, %v1340
    %v2678 = vsub.f32 %v176, %v1342
    %v2679 = vsub.f32 %v177, %v1344
    %v2680 = vsub.f32 %v178, %v1346
    %v2681 = vsub.f32 %v179, %v1348
    %v2682 = vsub.f32 %v180, %v1350
    %v2683 = vsub.f32 %v181, %v1352
    %v2684 = vsub.f32 %v182, %v1354
    %v2685 = vsub.f32 %v183, %v1356
    %v2686 = vsub.f32 %v184, %v1358
    %v2687 = vsub.f32 %v185, %v1360
    %v2688 = vsub.f32 %v186, %v1362
    %v2689 = vsub.f32 %v187, %v1364
    %v2690 = vsub.f32 %v188, %v1366
    %v2691 = vsub.f32 %v189, %v1368
    %v2692 = vsub.f32 %v190, %v1370
    %v2693 = vsub.f32 %v191, %v1372
    %v2694 = vsub.f32 %v192, %v1374
    %v2695 = vsub.f32 %v193, %v1376
    %v2696 = vsub.f32 %v194, %v1378
    %v2697 = vsub.f32 %v195, %v1380
    %v2698 = vsub.f32 %v196, %v1382
    %v2699 = vsub.f32 %v197, %v1384
    %v2700 = vsub.f32 %v198, %v1386
    %v2701 = vsub.f32 %v199, %v1388
    %v2702 = vsub.f32 %v200, %v1390
    %v2703 = vsub.f32 %v201, %v1392
    %v2704 = vsub.f32 %v202, %v1394
    %v2705 = vsub.f32 %v203, %v1396
    %v2706 = vsub.f32 %v204, %v1398
    %v2707 = vsub.f32 %v205, %v1400
    %v2708 = vsub.f32 %v206, %v1402
    %v2709 = vsub.f32 %v207, %v1404
    %v2710 = vsub.f32 %v208, %v1406
    %v2711 = vsub.f32 %v209, %v1408
    %v2712 = vsub.f32 %v210, %v1410
    %v2713 = vsub.f32 %v211, %v1412
    %v2714 = vsub.f32 %v212, %v1414
    %v2715 = vsub.f32 %v213, %v1416
    %v2716 = vsub.f32 %v214, %v1418
    %v2717 = vsub.f32 %v215, %v1420
    %v2718 = vsub.f32 %v216, %v1422
    %v2719 = vsub.f32 %v217, %v1424
    %v2720 = vsub.f32 %v218, %v1426
    %v2721 = vsub.f32 %v219, %v1428
    %v2722 = vsub.f32 %v220, %v1430
    %v2723 = vsub.f32 %v221, %v1432
    %v2724 = vsub.f32 %v222, %v1434
    %v2725 = vsub.f32 %v223, %v1436
    %v2726 = vsub.f32 %v224, %v1438
    %v2727 = vsub.f32 %v225, %v1440
    %v2728 = vsub.f32 %v226, %v1442
    %v2729 = vsub.f32 %v227, %v1444
    %v2730 = vsub.f32 %v228, %v1446
    %v2731 = vsub.f32 %v229, %v1448
    %v2732 = vsub.f32 %v230, %v1450
    %v2733 = vsub.f32 %v231, %v1452
    %v2734 = vsub.f32 %v232, %v1454
    %v2735 = vsub.f32 %v233, %v1456
    %v2736 = vsub.f32 %v234, %v1458
    %v2737 = vsub.f32 %v235, %v1460
    %v2738 = vsub.f32 %v236, %v1462
    %v2739 = vsub.f32 %v237, %v1464
    %v2740 = vsub.f32 %v238, %v1466
    %v2741 = vsub.f32 %v239, %v1468
    %v2742 = vsub.f32 %v240, %v1470
    %v2743 = vsub.f32 %v241, %v1472
    %v2744 = vsub.f32 %v242, %v1474
    %v2745 = vsub.f32 %v243, %v1476
    %v2746 = vsub.f32 %v244, %v1478
    %v2747 = vsub.f32 %v245, %v1480
    %v2748 = vsub.f32 %v246, %v1482
    %v2749 = vsub.f32 %v247, %v1484
    %v2750 = vsub.f32 %v248, %v1486
    %v2751 = vsub.f32 %v249, %v1488
    %v2752 = vsub.f32 %v250, %v1490
    %v2753 = vsub.f32 %v251, %v1492
    %v2754 = vsub.f32 %v252, %v1494
    %v2755 = vsub.f32 %v253, %v1496
    %v2756 = vsub.f32 %v254, %v1498
    %v2757 = vsub.f32 %v255, %v1500
    %v2758 = vsub.f32 %v256, %v1502
    %v2759 = vsub.f32 %v257, %v1504
    %v2760 = vsub.f32 %v258, %v1506
    %v2761 = vsub.f32 %v259, %v1508
    %v2762 = vsub.f32 %v260, %v1510
    %v2763 = vsub.f32 %v261, %v1512
    %v2764 = vsub.f32 %v262, %v1514
    %v2765 = vsub.f32 %v263, %v1516
    %v2766 = vsub.f32 %v264, %v1518
    %v2767 = vsub.f32 %v265, %v1520
    %v2768 = vsub.f32 %v266, %v1522
    %v2769 = vsub.f32 %v267, %v1524
    %v2770 = vsub.f32 %v268, %v1526
    %v2771 = vsub.f32 %v269, %v1528
    %v2772 = vsub.f32 %v270, %v1530
    %v2773 = vsub.f32 %v271, %v1532
    %v2774 = vsub.f32 %v272, %v1534
    %v2775 = vsub.f32 %v273, %v1536
    %v2776 = vsub.f32 %v274, %v1538
    %v2777 = vsub.f32 %v275, %v1540
    %v2778 = vsub.f32 %v276, %v1542
    %v2779 = vsub.f32 %v277, %v1544
    %v2780 = vsub.f32 %v278, %v1546
    %v2781 = vsub.f32 %v279, %v1548
    %v2782 = vsub.f32 %v280, %v1550
    %v2783 = vsub.f32 %v281, %v1552
    %v2784 = vsub.f32 %v282, %v1554
    %v2785 = vsub.f32 %v283, %v1556
    %v2786 = vsub.f32 %v284, %v1558
    %v2787 = vsub.f32 %v285, %v1560
    %v2788 = vsub.f32 %v286, %v1562
    %v2789 = vsub.f32 %v287, %v1564
    %v2790 = vsub.f32 %v288, %v1566
    %v2791 = vsub.f32 %v289, %v1568
    %v2792 = vsub.f32 %v290, %v1570
    %v2793 = vsub.f32 %v291, %v1572
    %v2794 = vsub.f32 %v292, %v1574
    %v2795 = vsub.f32 %v293, %v1576
    %v2796 = vsub.f32 %v294, %v1578
    %v2797 = vsub.f32 %v295, %v1580
    %v2798 = vsub.f32 %v296, %v1582
    %v2799 = vsub.f32 %v297, %v1584
    %v2800 = vsub.f32 %v298, %v1586
    %v2801 = vsub.f32 %v299, %v1588
    %v2802 = vsub.f32 %v300, %v1590
    %v2803 = vsub.f32 %v301, %v1592
    %v2804 = vsub.f32 %v302, %v1594
    %v2805 = vsub.f32 %v303, %v1596
    %v2806 = vsub.f32 %v304, %v1598
    %v2807 = vsub.f32 %v305, %v1600
    %v2808 = vsub.f32 %v306, %v1602
    %v2809 = vsub.f32 %v307, %v1604
    %v2810 = vsub.f32 %v308, %v1606
    %v2811 = vsub.f32 %v309, %v1608
    %v2812 = vsub.f32 %v310, %v1610
    %v2813 = vsub.f32 %v311, %v1612
    %v2814 = vsub.f32 %v312, %v1614
    %v2815 = vsub.f32 %v313, %v1616
    %v2816 = vsub.f32 %v314, %v1618
    %v2817 = vsub.f32 %v315, %v1620
    %v2818 = vsub.f32 %v316, %v1622
    %v2819 = vsub.f32 %v317, %v1624
    %v2820 = vsub.f32 %v318, %v1626
    %v2821 = vsub.f32 %v319, %v1628
    %v2822 = vsub.f32 %v320, %v1630
    %v2823 = vsub.f32 %v321, %v1632
    %v2824 = vsub.f32 %v322, %v1634
    %v2825 = vsub.f32 %v323, %v1636
    %v2826 = vsub.f32 %v324, %v1638
    %v2827 = vsub.f32 %v325, %v1640
    %v2828 = vsub.f32 %v326, %v1642
    %v2829 = vsub.f32 %v327, %v1644
    %v2830 = vsub.f32 %v328, %v1646
    %v2831 = vsub.f32 %v329, %v1648
    %v2832 = vsub.f32 %v330, %v1650
    %v2833 = vsub.f32 %v331, %v1652
    %v2834 = vsub.f32 %v332, %v1654
    %v2835 = vsub.f32 %v333, %v1656
    %v2836 = vsub.f32 %v334, %v1658
    %v2837 = vsub.f32 %v335, %v1660
    %v2838 = vsub.f32 %v336, %v1662
    %v2839 = vsub.f32 %v337, %v1664
    %v2840 = vsub.f32 %v338, %v1666
    %v2841 = vsub.f32 %v339, %v1668
    %v2842 = vsub.f32 %v340, %v1670
    %v2843 = vsub.f32 %v341, %v1672
    %v2844 = vsub.f32 %v342, %v1674
    %v2845 = vsub.f32 %v343, %v1676
    %v2846 = vsub.f32 %v344, %v1678
    %v2847 = vsub.f32 %v345, %v1680
    %v2848 = vsub.f32 %v346, %v1682
    %v2849 = vsub.f32 %v347, %v1684
    %v2850 = vsub.f32 %v348, %v1686
    %v2851 = vsub.f32 %v349, %v1688
    %v2852 = vsub.f32 %v350, %v1690
    %v2853 = vsub.f32 %v351, %v1692
    %v2854 = vsub.f32 %v352, %v1694
    %v2855 = vsub.f32 %v353, %v1696
    %v2856 = vsub.f32 %v354, %v1698
    %v2857 = vsub.f32 %v355, %v1700
    %v2858 = vsub.f32 %v356, %v1702
    %v2859 = vsub.f32 %v357, %v1704
    %v2860 = vsub.f32 %v358, %v1706
    %v2861 = vsub.f32 %v359, %v1708
    %v2862 = vsub.f32 %v360, %v1710
    %v2863 = vsub.f32 %v361, %v1712
    %v2864 = vsub.f32 %v362, %v1714
    %v2865 = vsub.f32 %v363, %v1716
    %v2866 = vsub.f32 %v364, %v1718
    %v2867 = vsub.f32 %v365, %v1720
    %v2868 = vsub.f32 %v366, %v1722
    %v2869 = vsub.f32 %v367, %v1724
    %v2870 = vsub.f32 %v368, %v1726
    %v2871 = vsub.f32 %v369, %v1728
    %v2872 = vsub.f32 %v370, %v1730
    %v2873 = vsub.f32 %v371, %v1732
    %v2874 = vsub.f32 %v372, %v1734
    %v2875 = vsub.f32 %v373, %v1736
    %v2876 = vsub.f32 %v374, %v1738
    %v2877 = vsub.f32 %v375, %v1740
    %v2878 = vsub.f32 %v376, %v1742
    %v2879 = vsub.f32 %v377, %v1744
    %v2880 = vsub.f32 %v378, %v1746
    %v2881 = vsub.f32 %v379, %v1748
    %v2882 = vsub.f32 %v380, %v1750
    %v2883 = vsub.f32 %v381, %v1752
    %v2884 = vsub.f32 %v382, %v1754
    %v2885 = vsub.f32 %v383, %v1756
    %v2886 = vsub.f32 %v384, %v1758
    %v2887 = vsub.f32 %v385, %v1760
    %v2888 = vsub.f32 %v386, %v1762
    %v2889 = vsub.f32 %v387, %v1764
    %v2890 = vsub.f32 %v388, %v1766
    %v2891 = vsub.f32 %v389, %v1768
    %v2892 = vsub.f32 %v390, %v1770
    %v2893 = vsub.f32 %v391, %v1772
    %v2894 = vsub.f32 %v392, %v1774
    %v2895 = vsub.f32 %v393, %v1776
    %v2896 = vsub.f32 %v394, %v1778
    %v2897 = vsub.f32 %v395, %v1780
    %v2898 = vsub.f32 %v396, %v1782
    %v2899 = vsub.f32 %v397, %v1784
    %v2900 = vsub.f32 %v398, %v1786
    %v2901 = vsub.f32 %v399, %v1788
    %v2902 = vsub.f32 %v400, %v1790
    %v2903 = vsub.f32 %v401, %v1792
    %v2904 = vsub.f32 %v402, %v1794
    %v2905 = vsub.f32 %v403, %v1796
    %v2906 = vsub.f32 %v404, %v1798
    %v2907 = vsub.f32 %v405, %v1800
    %v2908 = vsub.f32 %v406, %v1802
    %v2909 = vsub.f32 %v407, %v1804
    %v2910 = vsub.f32 %v408, %v1806
    %v2911 = vsub.f32 %v409, %v1808
    %v2912 = vsub.f32 %v410, %v1810
    %v2913 = vsub.f32 %v411, %v1812
    %v2914 = vsub.f32 %v412, %v1814
    %v2915 = vsub.f32 %v413, %v1816
    %v2916 = vsub.f32 %v414, %v1818
    %v2917 = vsub.f32 %v415, %v1820
    %v2918 = vsub.f32 %v416, %v1822
    %v2919 = vsub.f32 %v417, %v1824
    %v2920 = vsub.f32 %v418, %v1826
    %v2921 = vsub.f32 %v419, %v1828
    %v2922 = vsub.f32 %v420, %v1830
    %v2923 = vsub.f32 %v421, %v1832
    %v2924 = vsub.f32 %v422, %v1834
    %v2925 = vsub.f32 %v423, %v1836
    %v2926 = vsub.f32 %v424, %v1838
    %v2927 = vsub.f32 %v425, %v1840
    %v2928 = vsub.f32 %v426, %v1842
    %v2929 = vsub.f32 %v427, %v1844
    %v2930 = vsub.f32 %v428, %v1846
    %v2931 = vsub.f32 %v429, %v1848
    %v2932 = vsub.f32 %v430, %v1850
    %v2933 = vsub.f32 %v431, %v1852
    %v2934 = vsub.f32 %v432, %v1854
    %v2935 = vsub.f32 %v433, %v1856
    %v2936 = vsub.f32 %v434, %v1858
    %v2937 = vsub.f32 %v435, %v1860
    %v2938 = vsub.f32 %v436, %v1862
    %v2939 = vsub.f32 %v437, %v1864
    %v2940 = vsub.f32 %v438, %v1866
    %v2941 = vsub.f32 %v439, %v1868
    %v2942 = vsub.f32 %v440, %v1870
    %v2943 = vsub.f32 %v441, %v1872
    %v2944 = vsub.f32 %v442, %v1874
    %v2945 = vsub.f32 %v443, %v1876
    %v2946 = vsub.f32 %v444, %v1878
    %v2947 = vsub.f32 %v445, %v1880
    %v2948 = vsub.f32 %v446, %v1882
    %v2949 = vsub.f32 %v447, %v1884
    %v2950 = vsub.f32 %v448, %v1886
    %v2951 = vsub.f32 %v449, %v1888
    %v2952 = vsub.f32 %v450, %v1890
    %v2953 = vsub.f32 %v451, %v1892
    %v2954 = vsub.f32 %v452, %v1894
    %v2955 = vsub.f32 %v453, %v1896
    %v2956 = vsub.f32 %v454, %v1898
    %v2957 = vsub.f32 %v455, %v1900
    %v2958 = vsub.f32 %v456, %v1902
    %v2959 = vsub.f32 %v457, %v1904
    %v2960 = vsub.f32 %v458, %v1906
    %v2961 = vsub.f32 %v459, %v1908
    %v2962 = vsub.f32 %v460, %v1910
    %v2963 = vsub.f32 %v461, %v1912
    %v2964 = vsub.f32 %v462, %v1914
    %v2965 = vsub.f32 %v463, %v1916
    %v2966 = vsub.f32 %v464, %v1918
    %v2967 = vsub.f32 %v465, %v1920
    %v2968 = vsub.f32 %v466, %v1922
    %v2969 = vsub.f32 %v467, %v1924
    %v2970 = vsub.f32 %v468, %v1926
    %v2971 = vsub.f32 %v469, %v1928
    %v2972 = vsub.f32 %v470, %v1930
    %v2973 = vsub.f32 %v471, %v1932
    %v2974 = vsub.f32 %v472, %v1934
    %v2975 = vsub.f32 %v473, %v1936
    %v2976 = vsub.f32 %v474, %v1938
    %v2977 = vsub.f32 %v475, %v1940
    %v2978 = vsub.f32 %v476, %v1942
    %v2979 = vsub.f32 %v477, %v1944
    %v2980 = vsub.f32 %v478, %v1946
    %v2981 = vsub.f32 %v479, %v1948
    %v2982 = vsub.f32 %v480, %v1950
    %v2983 = vsub.f32 %v481, %v1952
    %v2984 = vsub.f32 %v482, %v1954
    %v2985 = vsub.f32 %v483, %v1956
    %v2986 = vsub.f32 %v484, %v1958
    %v2987 = vsub.f32 %v485, %v1960
    %v2988 = vsub.f32 %v486, %v1962
    %v2989 = vsub.f32 %v487, %v1964
    %v2990 = vsub.f32 %v488, %v1966
    %v2991 = vsub.f32 %v489, %v1968
    %v2992 = vsub.f32 %v490, %v1970
    %v2993 = vsub.f32 %v491, %v1972
    %v2994 = vsub.f32 %v492, %v1974
    %v2995 = vsub.f32 %v493, %v1976
    %v2996 = vsub.f32 %v494, %v1978
    %v2997 = vsub.f32 %v495, %v1980
    %v2998 = vsub.f32 %v496, %v1982
    %v2999 = vsub.f32 %v497, %v1984
    %v3000 = vsub.f32 %v498, %v1986
    %v3001 = vsub.f32 %v499, %v1988
    %v3002 = vsub.f32 %v500, %v1990
    %v3003 = vsub.f32 %v501, %v1992
    %v3004 = vsub.f32 %v502, %v1994
    %v3005 = vsub.f32 %v503, %v1996
    %v3006 = vsub.f32 %v504, %v1998
    %v3007 = vsub.f32 %v505, %v2000
    %v3008 = vsub.f32 %v506, %v2002
    %v3009 = vsub.f32 %v507, %v2004
    %v3010 = vsub.f32 %v508, %v2006
    %v3011 = vsub.f32 %v509, %v2008
    %v3012 = vsub.f32 %v510, %v2010
    %v3013 = vsub.f32 %v511, %v2012
    %v3014 = vsub.f32 %v512, %v2014
    %v3015 = vsub.f32 %v513, %v2016
    %v3016 = vsub.f32 %v514, %v2018
    %v3017 = vsub.f32 %v515, %v2020
    %v3018 = vsub.f32 %v516, %v2022
    %v3019 = vsub.f32 %v517, %v2024
    %v3020 = vsub.f32 %v518, %v2026
    %v3021 = vsub.f32 %v519, %v2028
    %v3022 = vsub.f32 %v520, %v2030
    %v3023 = vsub.f32 %v521, %v2032
    %v3024 = vsub.f32 %v522, %v2034
    %v3025 = vmul.f32 %v2530, %v2530
    %v3026 = vmul.f32 %v2531, %v2531
    %v3027 = vmul.f32 %v2532, %v2532
    %v3028 = vmul.f32 %v2533, %v2533
    %v3029 = vmul.f32 %v2534, %v2534
    %v3030 = vmul.f32 %v2535, %v2535
    %v3031 = vmul.f32 %v2536, %v2536
    %v3032 = vmul.f32 %v2537, %v2537
    %v3033 = vmul.f32 %v2538, %v2538
    %v3034 = vmul.f32 %v2539, %v2539
    %v3035 = vmul.f32 %v2540, %v2540
    %v3036 = vmul.f32 %v2541, %v2541
    %v3037 = vmul.f32 %v2542, %v2542
    %v3038 = vmul.f32 %v2543, %v2543
    %v3039 = vmul.f32 %v2544, %v2544
    %v3040 = vmul.f32 %v2545, %v2545
    %v3041 = vmul.f32 %v2546, %v2546
    %v3042 = vmul.f32 %v2547, %v2547
    %v3043 = vmul.f32 %v2548, %v2548
    %v3044 = vmul.f32 %v2549, %v2549
    %v3045 = vmul.f32 %v2550, %v2550
    %v3046 = vmul.f32 %v2551, %v2551
    %v3047 = vmul.f32 %v2552, %v2552
    %v3048 = vmul.f32 %v2553, %v2553
    %v3049 = vmul.f32 %v2554, %v2554
    %v3050 = vmul.f32 %v2555, %v2555
    %v3051 = vmul.f32 %v2556, %v2556
    %v3052 = vmul.f32 %v2557, %v2557
    %v3053 = vmul.f32 %v2558, %v2558
    %v3054 = vmul.f32 %v2559, %v2559
    %v3055 = vmul.f32 %v2560, %v2560
    %v3056 = vmul.f32 %v2561, %v2561
    %v3057 = vmul.f32 %v2562, %v2562
    %v3058 = vmul.f32 %v2563, %v2563
    %v3059 = vmul.f32 %v2564, %v2564
    %v3060 = vmul.f32 %v2565, %v2565
    %v3061 = vmul.f32 %v2566, %v2566
    %v3062 = vmul.f32 %v2567, %v2567
    %v3063 = vmul.f32 %v2568, %v2568
    %v3064 = vmul.f32 %v2569, %v2569
    %v3065 = vmul.f32 %v2570, %v2570
    %v3066 = vmul.f32 %v2571, %v2571
    %v3067 = vmul.f32 %v2572, %v2572
    %v3068 = vmul.f32 %v2573, %v2573
    %v3069 = vmul.f32 %v2574, %v2574
    %v3070 = vmul.f32 %v2575, %v2575
    %v3071 = vmul.f32 %v2576, %v2576
    %v3072 = vmul.f32 %v2577, %v2577
    %v3073 = vmul.f32 %v2578, %v2578
    %v3074 = vmul.f32 %v2579, %v2579
    %v3075 = vmul.f32 %v2580, %v2580
    %v3076 = vmul.f32 %v2581, %v2581
    %v3077 = vmul.f32 %v2582, %v2582
    %v3078 = vmul.f32 %v2583, %v2583
    %v3079 = vmul.f32 %v2584, %v2584
    %v3080 = vmul.f32 %v2585, %v2585
    %v3081 = vmul.f32 %v2586, %v2586
    %v3082 = vmul.f32 %v2587, %v2587
    %v3083 = vmul.f32 %v2588, %v2588
    %v3084 = vmul.f32 %v2589, %v2589
    %v3085 = vmul.f32 %v2590, %v2590
    %v3086 = vmul.f32 %v2591, %v2591
    %v3087 = vmul.f32 %v2592, %v2592
    %v3088 = vmul.f32 %v2593, %v2593
    %v3089 = vmul.f32 %v2594, %v2594
    %v3090 = vmul.f32 %v2595, %v2595
    %v3091 = vmul.f32 %v2596, %v2596
    %v3092 = vmul.f32 %v2597, %v2597
    %v3093 = vmul.f32 %v2598, %v2598
    %v3094 = vmul.f32 %v2599, %v2599
    %v3095 = vmul.f32 %v2600, %v2600
    %v3096 = vmul.f32 %v2601, %v2601
    %v3097 = vmul.f32 %v2602, %v2602
    %v3098 = vmul.f32 %v2603, %v2603
    %v3099 = vmul.f32 %v2604, %v2604
    %v3100 = vmul.f32 %v2605, %v2605
    %v3101 = vmul.f32 %v2606, %v2606
    %v3102 = vmul.f32 %v2607, %v2607
    %v3103 = vmul.f32 %v2608, %v2608
    %v3104 = vmul.f32 %v2609, %v2609
    %v3105 = vmul.f32 %v2610, %v2610
    %v3106 = vmul.f32 %v2611, %v2611
    %v3107 = vmul.f32 %v2612, %v2612
    %v3108 = vmul.f32 %v2613, %v2613
    %v3109 = vmul.f32 %v2614, %v2614
    %v3110 = vmul.f32 %v2615, %v2615
    %v3111 = vmul.f32 %v2616, %v2616
    %v3112 = vmul.f32 %v2617, %v2617
    %v3113 = vmul.f32 %v2618, %v2618
    %v3114 = vmul.f32 %v2619, %v2619
    %v3115 = vmul.f32 %v2620, %v2620
    %v3116 = vmul.f32 %v2621, %v2621
    %v3117 = vmul.f32 %v2622, %v2622
    %v3118 = vmul.f32 %v2623, %v2623
    %v3119 = vmul.f32 %v2624, %v2624
    %v3120 = vmul.f32 %v2625, %v2625
    %v3121 = vmul.f32 %v2626, %v2626
    %v3122 = vmul.f32 %v2627, %v2627
    %v3123 = vmul.f32 %v2628, %v2628
    %v3124 = vmul.f32 %v2629, %v2629
    %v3125 = vmul.f32 %v2630, %v2630
    %v3126 = vmul.f32 %v2631, %v2631
    %v3127 = vmul.f32 %v2632, %v2632
    %v3128 = vmul.f32 %v2633, %v2633
    %v3129 = vmul.f32 %v2634, %v2634
    %v3130 = vmul.f32 %v2635, %v2635
    %v3131 = vmul.f32 %v2636, %v2636
    %v3132 = vmul.f32 %v2637, %v2637
    %v3133 = vmul.f32 %v2638, %v2638
    %v3134 = vmul.f32 %v2639, %v2639
    %v3135 = vmul.f32 %v2640, %v2640
    %v3136 = vmul.f32 %v2641, %v2641
    %v3137 = vmul.f32 %v2642, %v2642
    %v3138 = vmul.f32 %v2643, %v2643
    %v3139 = vmul.f32 %v2644, %v2644
    %v3140 = vmul.f32 %v2645, %v2645
    %v3141 = vmul.f32 %v2646, %v2646
    %v3142 = vmul.f32 %v2647, %v2647
    %v3143 = vmul.f32 %v2648, %v2648
    %v3144 = vmul.f32 %v2649, %v2649
    %v3145 = vmul.f32 %v2650, %v2650
    %v3146 = vmul.f32 %v2651, %v2651
    %v3147 = vmul.f32 %v2652, %v2652
    %v3148 = vmul.f32 %v2653, %v2653
    %v3149 = vmul.f32 %v2654, %v2654
    %v3150 = vmul.f32 %v2655, %v2655
    %v3151 = vmul.f32 %v2656, %v2656
    %v3152 = vmul.f32 %v2657, %v2657
    %v3153 = vmul.f32 %v2658, %v2658
    %v3154 = vmul.f32 %v2659, %v2659
    %v3155 = vmul.f32 %v2660, %v2660
    %v3156 = vmul.f32 %v2661, %v2661
    %v3157 = vmul.f32 %v2662, %v2662
    %v3158 = vmul.f32 %v2663, %v2663
    %v3159 = vmul.f32 %v2664, %v2664
    %v3160 = vmul.f32 %v2665, %v2665
    %v3161 = vmul.f32 %v2666, %v2666
    %v3162 = vmul.f32 %v2667, %v2667
    %v3163 = vmul.f32 %v2668, %v2668
    %v3164 = vmul.f32 %v2669, %v2669
    %v3165 = vmul.f32 %v2670, %v2670
    %v3166 = vmul.f32 %v2671, %v2671
    %v3167 = vmul.f32 %v2672, %v2672
    %v3168 = vmul.f32 %v2673, %v2673
    %v3169 = vmul.f32 %v2674, %v2674
    %v3170 = vmul.f32 %v2675, %v2675
    %v3171 = vmul.f32 %v2676, %v2676
    %v3172 = vmul.f32 %v2677, %v2677
    %v3173 = vmul.f32 %v2678, %v2678
    %v3174 = vmul.f32 %v2679, %v2679
    %v3175 = vmul.f32 %v2680, %v2680
    %v3176 = vmul.f32 %v2681, %v2681
    %v3177 = vmul.f32 %v2682, %v2682
    %v3178 = vmul.f32 %v2683, %v2683
    %v3179 = vmul.f32 %v2684, %v2684
    %v3180 = vmul.f32 %v2685, %v2685
    %v3181 = vmul.f32 %v2686, %v2686
    %v3182 = vmul.f32 %v2687, %v2687
    %v3183 = vmul.f32 %v2688, %v2688
    %v3184 = vmul.f32 %v2689, %v2689
    %v3185 = vmul.f32 %v2690, %v2690
    %v3186 = vmul.f32 %v2691, %v2691
    %v3187 = vmul.f32 %v2692, %v2692
    %v3188 = vmul.f32 %v2693, %v2693
    %v3189 = vmul.f32 %v2694, %v2694
    %v3190 = vmul.f32 %v2695, %v2695
    %v3191 = vmul.f32 %v2696, %v2696
    %v3192 = vmul.f32 %v2697, %v2697
    %v3193 = vmul.f32 %v2698, %v2698
    %v3194 = vmul.f32 %v2699, %v2699
    %v3195 = vmul.f32 %v2700, %v2700
    %v3196 = vmul.f32 %v2701, %v2701
    %v3197 = vmul.f32 %v2702, %v2702
    %v3198 = vmul.f32 %v2703, %v2703
    %v3199 = vmul.f32 %v2704, %v2704
    %v3200 = vmul.f32 %v2705, %v2705
    %v3201 = vmul.f32 %v2706, %v2706
    %v3202 = vmul.f32 %v2707, %v2707
    %v3203 = vmul.f32 %v2708, %v2708
    %v3204 = vmul.f32 %v2709, %v2709
    %v3205 = vmul.f32 %v2710, %v2710
    %v3206 = vmul.f32 %v2711, %v2711
    %v3207 = vmul.f32 %v2712, %v2712
    %v3208 = vmul.f32 %v2713, %v2713
    %v3209 = vmul.f32 %v2714, %v2714
    %v3210 = vmul.f32 %v2715, %v2715
    %v3211 = vmul.f32 %v2716, %v2716
    %v3212 = vmul.f32 %v2717, %v2717
    %v3213 = vmul.f32 %v2718, %v2718
    %v3214 = vmul.f32 %v2719, %v2719
    %v3215 = vmul.f32 %v2720, %v2720
    %v3216 = vmul.f32 %v2721, %v2721
    %v3217 = vmul.f32 %v2722, %v2722
    %v3218 = vmul.f32 %v2723, %v2723
    %v3219 = vmul.f32 %v2724, %v2724
    %v3220 = vmul.f32 %v2725, %v2725
    %v3221 = vmul.f32 %v2726, %v2726
    %v3222 = vmul.f32 %v2727, %v2727
    %v3223 = vmul.f32 %v2728, %v2728
    %v3224 = vmul.f32 %v2729, %v2729
    %v3225 = vmul.f32 %v2730, %v2730
    %v3226 = vmul.f32 %v2731, %v2731
    %v3227 = vmul.f32 %v2732, %v2732
    %v3228 = vmul.f32 %v2733, %v2733
    %v3229 = vmul.f32 %v2734, %v2734
    %v3230 = vmul.f32 %v2735, %v2735
    %v3231 = vmul.f32 %v2736, %v2736
    %v3232 = vmul.f32 %v2737, %v2737
    %v3233 = vmul.f32 %v2738, %v2738
    %v3234 = vmul.f32 %v2739, %v2739
    %v3235 = vmul.f32 %v2740, %v2740
    %v3236 = vmul.f32 %v2741, %v2741
    %v3237 = vmul.f32 %v2742, %v2742
    %v3238 = vmul.f32 %v2743, %v2743
    %v3239 = vmul.f32 %v2744, %v2744
    %v3240 = vmul.f32 %v2745, %v2745
    %v3241 = vmul.f32 %v2746, %v2746
    %v3242 = vmul.f32 %v2747, %v2747
    %v3243 = vmul.f32 %v2748, %v2748
    %v3244 = vmul.f32 %v2749, %v2749
    %v3245 = vmul.f32 %v2750, %v2750
    %v3246 = vmul.f32 %v2751, %v2751
    %v3247 = vmul.f32 %v2752, %v2752
    %v3248 = vmul.f32 %v2753, %v2753
    %v3249 = vmul.f32 %v2754, %v2754
    %v3250 = vmul.f32 %v2755, %v2755
    %v3251 = vmul.f32 %v2756, %v2756
    %v3252 = vmul.f32 %v2757, %v2757
    %v3253 = vmul.f32 %v2758, %v2758
    %v3254 = vmul.f32 %v2759, %v2759
    %v3255 = vmul.f32 %v2760, %v2760
    %v3256 = vmul.f32 %v2761, %v2761
    %v3257 = vmul.f32 %v2762, %v2762
    %v3258 = vmul.f32 %v2763, %v2763
    %v3259 = vmul.f32 %v2764, %v2764
    %v3260 = vmul.f32 %v2765, %v2765
    %v3261 = vmul.f32 %v2766, %v2766
    %v3262 = vmul.f32 %v2767, %v2767
    %v3263 = vmul.f32 %v2768, %v2768
    %v3264 = vmul.f32 %v2769, %v2769
    %v3265 = vmul.f32 %v2770, %v2770
    %v3266 = vmul.f32 %v2771, %v2771
    %v3267 = vmul.f32 %v2772, %v2772
    %v3268 = vmul.f32 %v2773, %v2773
    %v3269 = vmul.f32 %v2774, %v2774
    %v3270 = vmul.f32 %v2775, %v2775
    %v3271 = vmul.f32 %v2776, %v2776
    %v3272 = vmul.f32 %v2777, %v2777
    %v3273 = vmul.f32 %v2778, %v2778
    %v3274 = vmul.f32 %v2779, %v2779
    %v3275 = vmul.f32 %v2780, %v2780
    %v3276 = vmul.f32 %v2781, %v2781
    %v3277 = vmul.f32 %v2782, %v2782
    %v3278 = vmul.f32 %v2783, %v2783
    %v3279 = vmul.f32 %v2784, %v2784
    %v3280 = vmul.f32 %v2785, %v2785
    %v3281 = vmul.f32 %v2786, %v2786
    %v3282 = vmul.f32 %v2787, %v2787
    %v3283 = vmul.f32 %v2788, %v2788
    %v3284 = vmul.f32 %v2789, %v2789
    %v3285 = vmul.f32 %v2790, %v2790
    %v3286 = vmul.f32 %v2791, %v2791
    %v3287 = vmul.f32 %v2792, %v2792
    %v3288 = vmul.f32 %v2793, %v2793
    %v3289 = vmul.f32 %v2794, %v2794
    %v3290 = vmul.f32 %v2795, %v2795
    %v3291 = vmul.f32 %v2796, %v2796
    %v3292 = vmul.f32 %v2797, %v2797
    %v3293 = vmul.f32 %v2798, %v2798
    %v3294 = vmul.f32 %v2799, %v2799
    %v3295 = vmul.f32 %v2800, %v2800
    %v3296 = vmul.f32 %v2801, %v2801
    %v3297 = vmul.f32 %v2802, %v2802
    %v3298 = vmul.f32 %v2803, %v2803
    %v3299 = vmul.f32 %v2804, %v2804
    %v3300 = vmul.f32 %v2805, %v2805
    %v3301 = vmul.f32 %v2806, %v2806
    %v3302 = vmul.f32 %v2807, %v2807
    %v3303 = vmul.f32 %v2808, %v2808
    %v3304 = vmul.f32 %v2809, %v2809
    %v3305 = vmul.f32 %v2810, %v2810
    %v3306 = vmul.f32 %v2811, %v2811
    %v3307 = vmul.f32 %v2812, %v2812
    %v3308 = vmul.f32 %v2813, %v2813
    %v3309 = vmul.f32 %v2814, %v2814
    %v3310 = vmul.f32 %v2815, %v2815
    %v3311 = vmul.f32 %v2816, %v2816
    %v3312 = vmul.f32 %v2817, %v2817
    %v3313 = vmul.f32 %v2818, %v2818
    %v3314 = vmul.f32 %v2819, %v2819
    %v3315 = vmul.f32 %v2820, %v2820
    %v3316 = vmul.f32 %v2821, %v2821
    %v3317 = vmul.f32 %v2822, %v2822
    %v3318 = vmul.f32 %v2823, %v2823
    %v3319 = vmul.f32 %v2824, %v2824
    %v3320 = vmul.f32 %v2825, %v2825
    %v3321 = vmul.f32 %v2826, %v2826
    %v3322 = vmul.f32 %v2827, %v2827
    %v3323 = vmul.f32 %v2828, %v2828
    %v3324 = vmul.f32 %v2829, %v2829
    %v3325 = vmul.f32 %v2830, %v2830
    %v3326 = vmul.f32 %v2831, %v2831
    %v3327 = vmul.f32 %v2832, %v2832
    %v3328 = vmul.f32 %v2833, %v2833
    %v3329 = vmul.f32 %v2834, %v2834
    %v3330 = vmul.f32 %v2835, %v2835
    %v3331 = vmul.f32 %v2836, %v2836
    %v3332 = vmul.f32 %v2837, %v2837
    %v3333 = vmul.f32 %v2838, %v2838
    %v3334 = vmul.f32 %v2839, %v2839
    %v3335 = vmul.f32 %v2840, %v2840
    %v3336 = vmul.f32 %v2841, %v2841
    %v3337 = vmul.f32 %v2842, %v2842
    %v3338 = vmul.f32 %v2843, %v2843
    %v3339 = vmul.f32 %v2844, %v2844
    %v3340 = vmul.f32 %v2845, %v2845
    %v3341 = vmul.f32 %v2846, %v2846
    %v3342 = vmul.f32 %v2847, %v2847
    %v3343 = vmul.f32 %v2848, %v2848
    %v3344 = vmul.f32 %v2849, %v2849
    %v3345 = vmul.f32 %v2850, %v2850
    %v3346 = vmul.f32 %v2851, %v2851
    %v3347 = vmul.f32 %v2852, %v2852
    %v3348 = vmul.f32 %v2853, %v2853
    %v3349 = vmul.f32 %v2854, %v2854
    %v3350 = vmul.f32 %v2855, %v2855
    %v3351 = vmul.f32 %v2856, %v2856
    %v3352 = vmul.f32 %v2857, %v2857
    %v3353 = vmul.f32 %v2858, %v2858
    %v3354 = vmul.f32 %v2859, %v2859
    %v3355 = vmul.f32 %v2860, %v2860
    %v3356 = vmul.f32 %v2861, %v2861
    %v3357 = vmul.f32 %v2862, %v2862
    %v3358 = vmul.f32 %v2863, %v2863
    %v3359 = vmul.f32 %v2864, %v2864
    %v3360 = vmul.f32 %v2865, %v2865
    %v3361 = vmul.f32 %v2866, %v2866
    %v3362 = vmul.f32 %v2867, %v2867
    %v3363 = vmul.f32 %v2868, %v2868
    %v3364 = vmul.f32 %v2869, %v2869
    %v3365 = vmul.f32 %v2870, %v2870
    %v3366 = vmul.f32 %v2871, %v2871
    %v3367 = vmul.f32 %v2872, %v2872
    %v3368 = vmul.f32 %v2873, %v2873
    %v3369 = vmul.f32 %v2874, %v2874
    %v3370 = vmul.f32 %v2875, %v2875
    %v3371 = vmul.f32 %v2876, %v2876
    %v3372 = vmul.f32 %v2877, %v2877
    %v3373 = vmul.f32 %v2878, %v2878
    %v3374 = vmul.f32 %v2879, %v2879
    %v3375 = vmul.f32 %v2880, %v2880
    %v3376 = vmul.f32 %v2881, %v2881
    %v3377 = vmul.f32 %v2882, %v2882
    %v3378 = vmul.f32 %v2883, %v2883
    %v3379 = vmul.f32 %v2884, %v2884
    %v3380 = vmul.f32 %v2885, %v2885
    %v3381 = vmul.f32 %v2886, %v2886
    %v3382 = vmul.f32 %v2887, %v2887
    %v3383 = vmul.f32 %v2888, %v2888
    %v3384 = vmul.f32 %v2889, %v2889
    %v3385 = vmul.f32 %v2890, %v2890
    %v3386 = vmul.f32 %v2891, %v2891
    %v3387 = vmul.f32 %v2892, %v2892
    %v3388 = vmul.f32 %v2893, %v2893
    %v3389 = vmul.f32 %v2894, %v2894
    %v3390 = vmul.f32 %v2895, %v2895
    %v3391 = vmul.f32 %v2896, %v2896
    %v3392 = vmul.f32 %v2897, %v2897
    %v3393 = vmul.f32 %v2898, %v2898
    %v3394 = vmul.f32 %v2899, %v2899
    %v3395 = vmul.f32 %v2900, %v2900
    %v3396 = vmul.f32 %v2901, %v2901
    %v3397 = vmul.f32 %v2902, %v2902
    %v3398 = vmul.f32 %v2903, %v2903
    %v3399 = vmul.f32 %v2904, %v2904
    %v3400 = vmul.f32 %v2905, %v2905
    %v3401 = vmul.f32 %v2906, %v2906
    %v3402 = vmul.f32 %v2907, %v2907
    %v3403 = vmul.f32 %v2908, %v2908
    %v3404 = vmul.f32 %v2909, %v2909
    %v3405 = vmul.f32 %v2910, %v2910
    %v3406 = vmul.f32 %v2911, %v2911
    %v3407 = vmul.f32 %v2912, %v2912
    %v3408 = vmul.f32 %v2913, %v2913
    %v3409 = vmul.f32 %v2914, %v2914
    %v3410 = vmul.f32 %v2915, %v2915
    %v3411 = vmul.f32 %v2916, %v2916
    %v3412 = vmul.f32 %v2917, %v2917
    %v3413 = vmul.f32 %v2918, %v2918
    %v3414 = vmul.f32 %v2919, %v2919
    %v3415 = vmul.f32 %v2920, %v2920
    %v3416 = vmul.f32 %v2921, %v2921
    %v3417 = vmul.f32 %v2922, %v2922
    %v3418 = vmul.f32 %v2923, %v2923
    %v3419 = vmul.f32 %v2924, %v2924
    %v3420 = vmul.f32 %v2925, %v2925
    %v3421 = vmul.f32 %v2926, %v2926
    %v3422 = vmul.f32 %v2927, %v2927
    %v3423 = vmul.f32 %v2928, %v2928
    %v3424 = vmul.f32 %v2929, %v2929
    %v3425 = vmul.f32 %v2930, %v2930
    %v3426 = vmul.f32 %v2931, %v2931
    %v3427 = vmul.f32 %v2932, %v2932
    %v3428 = vmul.f32 %v2933, %v2933
    %v3429 = vmul.f32 %v2934, %v2934
    %v3430 = vmul.f32 %v2935, %v2935
    %v3431 = vmul.f32 %v2936, %v2936
    %v3432 = vmul.f32 %v2937, %v2937
    %v3433 = vmul.f32 %v2938, %v2938
    %v3434 = vmul.f32 %v2939, %v2939
    %v3435 = vmul.f32 %v2940, %v2940
    %v3436 = vmul.f32 %v2941, %v2941
    %v3437 = vmul.f32 %v2942, %v2942
    %v3438 = vmul.f32 %v2943, %v2943
    %v3439 = vmul.f32 %v2944, %v2944
    %v3440 = vmul.f32 %v2945, %v2945
    %v3441 = vmul.f32 %v2946, %v2946
    %v3442 = vmul.f32 %v2947, %v2947
    %v3443 = vmul.f32 %v2948, %v2948
    %v3444 = vmul.f32 %v2949, %v2949
    %v3445 = vmul.f32 %v2950, %v2950
    %v3446 = vmul.f32 %v2951, %v2951
    %v3447 = vmul.f32 %v2952, %v2952
    %v3448 = vmul.f32 %v2953, %v2953
    %v3449 = vmul.f32 %v2954, %v2954
    %v3450 = vmul.f32 %v2955, %v2955
    %v3451 = vmul.f32 %v2956, %v2956
    %v3452 = vmul.f32 %v2957, %v2957
    %v3453 = vmul.f32 %v2958, %v2958
    %v3454 = vmul.f32 %v2959, %v2959
    %v3455 = vmul.f32 %v2960, %v2960
    %v3456 = vmul.f32 %v2961, %v2961
    %v3457 = vmul.f32 %v2962, %v2962
    %v3458 = vmul.f32 %v2963, %v2963
    %v3459 = vmul.f32 %v2964, %v2964
    %v3460 = vmul.f32 %v2965, %v2965
    %v3461 = vmul.f32 %v2966, %v2966
    %v3462 = vmul.f32 %v2967, %v2967
    %v3463 = vmul.f32 %v2968, %v2968
    %v3464 = vmul.f32 %v2969, %v2969
    %v3465 = vmul.f32 %v2970, %v2970
    %v3466 = vmul.f32 %v2971, %v2971
    %v3467 = vmul.f32 %v2972, %v2972
    %v3468 = vmul.f32 %v2973, %v2973
    %v3469 = vmul.f32 %v2974, %v2974
    %v3470 = vmul.f32 %v2975, %v2975
    %v3471 = vmul.f32 %v2976, %v2976
    %v3472 = vmul.f32 %v2977, %v2977
    %v3473 = vmul.f32 %v2978, %v2978
    %v3474 = vmul.f32 %v2979, %v2979
    %v3475 = vmul.f32 %v2980, %v2980
    %v3476 = vmul.f32 %v2981, %v2981
    %v3477 = vmul.f32 %v2982, %v2982
    %v3478 = vmul.f32 %v2983, %v2983
    %v3479 = vmul.f32 %v2984, %v2984
    %v3480 = vmul.f32 %v2985, %v2985
    %v3481 = vmul.f32 %v2986, %v2986
    %v3482 = vmul.f32 %v2987, %v2987
    %v3483 = vmul.f32 %v2988, %v2988
    %v3484 = vmul.f32 %v2989, %v2989
    %v3485 = vmul.f32 %v2990, %v2990
    %v3486 = vmul.f32 %v2991, %v2991
    %v3487 = vmul.f32 %v2992, %v2992
    %v3488 = vmul.f32 %v2993, %v2993
    %v3489 = vmul.f32 %v2994, %v2994
    %v3490 = vmul.f32 %v2995, %v2995
    %v3491 = vmul.f32 %v2996, %v2996
    %v3492 = vmul.f32 %v2997, %v2997
    %v3493 = vmul.f32 %v2998, %v2998
    %v3494 = vmul.f32 %v2999, %v2999
    %v3495 = vmul.f32 %v3000, %v3000
    %v3496 = vmul.f32 %v3001, %v3001
    %v3497 = vmul.f32 %v3002, %v3002
    %v3498 = vmul.f32 %v3003, %v3003
    %v3499 = vmul.f32 %v3004, %v3004
    %v3500 = vmul.f32 %v3005, %v3005
    %v3501 = vmul.f32 %v3006, %v3006
    %v3502 = vmul.f32 %v3007, %v3007
    %v3503 = vmul.f32 %v3008, %v3008
    %v3504 = vmul.f32 %v3009, %v3009
    %v3505 = vmul.f32 %v3010, %v3010
    %v3506 = vmul.f32 %v3011, %v3011
    %v3507 = vmul.f32 %v3012, %v3012
    %v3508 = vmul.f32 %v3013, %v3013
    %v3509 = vmul.f32 %v3014, %v3014
    %v3510 = vmul.f32 %v3015, %v3015
    %v3511 = vmul.f32 %v3016, %v3016
    %v3512 = vmul.f32 %v3017, %v3017
    %v3513 = vmul.f32 %v3018, %v3018
    %v3514 = vmul.f32 %v3019, %v3019
    %v3515 = vmul.f32 %v3020, %v3020
    %v3516 = vmul.f32 %v3021, %v3021
    %v3517 = vmul.f32 %v3022, %v3022
    %v3518 = vmul.f32 %v3023, %v3023
    %v3519 = vmul.f32 %v3024, %v3024
    %vm3520 = vcmask 261120
    %v3521 = vsel %vm3520, %v3025, 0.0
    %v3522 = vsel %vm3520, %v3030, 0.0
    %v3523 = vadd.f32 %v3521, %v3522
    %v3524 = vsel %vm3520, %v3035, 0.0
    %v3525 = vadd.f32 %v3523, %v3524
    %v3526 = vsel %vm3520, %v3040, 0.0
    %v3527 = vadd.f32 %v3525, %v3526
    %v3528 = vsel %vm3520, %v3045, 0.0
    %v3529 = vadd.f32 %v3527, %v3528
    %v3530 = vsel %vm3520, %v3050, 0.0
    %v3531 = vadd.f32 %v3529, %v3530
    %v3532 = vsel %vm3520, %v3055, 0.0
    %v3533 = vadd.f32 %v3531, %v3532
    %v3534 = vsel %vm3520, %v3060, 0.0
    %v3535 = vadd.f32 %v3533, %v3534
    %v3536 = vsel %vm3520, %v3065, 0.0
    %v3537 = vadd.f32 %v3535, %v3536
    %v3538 = vsel %vm3520, %v3070, 0.0
    %v3539 = vadd.f32 %v3537, %v3538
    %v3540 = vsel %vm3520, %v3075, 0.0
    %v3541 = vadd.f32 %v3539, %v3540
    %v3542 = vsel %vm3520, %v3080, 0.0
    %v3543 = vadd.f32 %v3541, %v3542
    %v3544 = vsel %vm3520, %v3085, 0.0
    %v3545 = vadd.f32 %v3543, %v3544
    %v3546 = vsel %vm3520, %v3090, 0.0
    %v3547 = vadd.f32 %v3545, %v3546
    %v3548 = vsel %vm3520, %v3095, 0.0
    %v3549 = vadd.f32 %v3547, %v3548
    %v3550 = vsel %vm3520, %v3100, 0.0
    %v3551 = vadd.f32 %v3549, %v3550
    %v3552 = vsel %vm3520, %v3105, 0.0
    %v3553 = vadd.f32 %v3551, %v3552
    %v3554 = vsel %vm3520, %v3110, 0.0
    %v3555 = vadd.f32 %v3553, %v3554
    %v3556 = vsel %vm3520, %v3115, 0.0
    %v3557 = vadd.f32 %v3555, %v3556
    %v3558 = vsel %vm3520, %v3120, 0.0
    %v3559 = vadd.f32 %v3557, %v3558
    %v3560 = vsel %vm3520, %v3125, 0.0
    %v3561 = vadd.f32 %v3559, %v3560
    %v3562 = vsel %vm3520, %v3130, 0.0
    %v3563 = vadd.f32 %v3561, %v3562
    %v3564 = vsel %vm3520, %v3135, 0.0
    %v3565 = vadd.f32 %v3563, %v3564
    %v3566 = vsel %vm3520, %v3140, 0.0
    %v3567 = vadd.f32 %v3565, %v3566
    %v3568 = vsel %vm3520, %v3145, 0.0
    %v3569 = vadd.f32 %v3567, %v3568
    %v3570 = vsel %vm3520, %v3150, 0.0
    %v3571 = vadd.f32 %v3569, %v3570
    %v3572 = vsel %vm3520, %v3155, 0.0
    %v3573 = vadd.f32 %v3571, %v3572
    %v3574 = vsel %vm3520, %v3160, 0.0
    %v3575 = vadd.f32 %v3573, %v3574
    %v3576 = vsel %vm3520, %v3165, 0.0
    %v3577 = vadd.f32 %v3575, %v3576
    %v3578 = vsel %vm3520, %v3170, 0.0
    %v3579 = vadd.f32 %v3577, %v3578
    %v3580 = vsel %vm3520, %v3175, 0.0
    %v3581 = vadd.f32 %v3579, %v3580
    %v3582 = vsel %vm3520, %v3180, 0.0
    %v3583 = vadd.f32 %v3581, %v3582
    %v3584 = vsel %vm3520, %v3185, 0.0
    %v3585 = vadd.f32 %v3583, %v3584
    %v3586 = vsel %vm3520, %v3190, 0.0
    %v3587 = vadd.f32 %v3585, %v3586
    %v3588 = vsel %vm3520, %v3195, 0.0
    %v3589 = vadd.f32 %v3587, %v3588
    %v3590 = vsel %vm3520, %v3200, 0.0
    %v3591 = vadd.f32 %v3589, %v3590
    %v3592 = vsel %vm3520, %v3205, 0.0
    %v3593 = vadd.f32 %v3591, %v3592
    %v3594 = vsel %vm3520, %v3210, 0.0
    %v3595 = vadd.f32 %v3593, %v3594
    %v3596 = vsel %vm3520, %v3215, 0.0
    %v3597 = vadd.f32 %v3595, %v3596
    %v3598 = vsel %vm3520, %v3220, 0.0
    %v3599 = vadd.f32 %v3597, %v3598
    %v3600 = vsel %vm3520, %v3225, 0.0
    %v3601 = vadd.f32 %v3599, %v3600
    %v3602 = vsel %vm3520, %v3230, 0.0
    %v3603 = vadd.f32 %v3601, %v3602
    %v3604 = vsel %vm3520, %v3235, 0.0
    %v3605 = vadd.f32 %v3603, %v3604
    %v3606 = vsel %vm3520, %v3240, 0.0
    %v3607 = vadd.f32 %v3605, %v3606
    %v3608 = vsel %vm3520, %v3245, 0.0
    %v3609 = vadd.f32 %v3607, %v3608
    %v3610 = vsel %vm3520, %v3250, 0.0
    %v3611 = vadd.f32 %v3609, %v3610
    %v3612 = vsel %vm3520, %v3255, 0.0
    %v3613 = vadd.f32 %v3611, %v3612
    %v3614 = vsel %vm3520, %v3260, 0.0
    %v3615 = vadd.f32 %v3613, %v3614
    %v3616 = vsel %vm3520, %v3265, 0.0
    %v3617 = vadd.f32 %v3615, %v3616
    %v3618 = vsel %vm3520, %v3270, 0.0
    %v3619 = vadd.f32 %v3617, %v3618
    %v3620 = vsel %vm3520, %v3275, 0.0
    %v3621 = vadd.f32 %v3619, %v3620
    %v3622 = vsel %vm3520, %v3280, 0.0
    %v3623 = vadd.f32 %v3621, %v3622
    %v3624 = vsel %vm3520, %v3285, 0.0
    %v3625 = vadd.f32 %v3623, %v3624
    %v3626 = vsel %vm3520, %v3290, 0.0
    %v3627 = vadd.f32 %v3625, %v3626
    %v3628 = vsel %vm3520, %v3295, 0.0
    %v3629 = vadd.f32 %v3627, %v3628
    %v3630 = vsel %vm3520, %v3300, 0.0
    %v3631 = vadd.f32 %v3629, %v3630
    %v3632 = vsel %vm3520, %v3305, 0.0
    %v3633 = vadd.f32 %v3631, %v3632
    %v3634 = vsel %vm3520, %v3310, 0.0
    %v3635 = vadd.f32 %v3633, %v3634
    %v3636 = vsel %vm3520, %v3315, 0.0
    %v3637 = vadd.f32 %v3635, %v3636
    %v3638 = vsel %vm3520, %v3320, 0.0
    %v3639 = vadd.f32 %v3637, %v3638
    %v3640 = vsel %vm3520, %v3325, 0.0
    %v3641 = vadd.f32 %v3639, %v3640
    %v3642 = vsel %vm3520, %v3330, 0.0
    %v3643 = vadd.f32 %v3641, %v3642
    %v3644 = vsel %vm3520, %v3335, 0.0
    %v3645 = vadd.f32 %v3643, %v3644
    %v3646 = vsel %vm3520, %v3340, 0.0
    %v3647 = vadd.f32 %v3645, %v3646
    %v3648 = vsel %vm3520, %v3345, 0.0
    %v3649 = vadd.f32 %v3647, %v3648
    %v3650 = vsel %vm3520, %v3350, 0.0
    %v3651 = vadd.f32 %v3649, %v3650
    %v3652 = vsel %vm3520, %v3355, 0.0
    %v3653 = vadd.f32 %v3651, %v3652
    %v3654 = vsel %vm3520, %v3360, 0.0
    %v3655 = vadd.f32 %v3653, %v3654
    %v3656 = vsel %vm3520, %v3365, 0.0
    %v3657 = vadd.f32 %v3655, %v3656
    %v3658 = vsel %vm3520, %v3370, 0.0
    %v3659 = vadd.f32 %v3657, %v3658
    %v3660 = vsel %vm3520, %v3375, 0.0
    %v3661 = vadd.f32 %v3659, %v3660
    %v3662 = vsel %vm3520, %v3380, 0.0
    %v3663 = vadd.f32 %v3661, %v3662
    %v3664 = vsel %vm3520, %v3385, 0.0
    %v3665 = vadd.f32 %v3663, %v3664
    %v3666 = vsel %vm3520, %v3390, 0.0
    %v3667 = vadd.f32 %v3665, %v3666
    %v3668 = vsel %vm3520, %v3395, 0.0
    %v3669 = vadd.f32 %v3667, %v3668
    %v3670 = vsel %vm3520, %v3400, 0.0
    %v3671 = vadd.f32 %v3669, %v3670
    %v3672 = vsel %vm3520, %v3405, 0.0
    %v3673 = vadd.f32 %v3671, %v3672
    %v3674 = vsel %vm3520, %v3410, 0.0
    %v3675 = vadd.f32 %v3673, %v3674
    %v3676 = vsel %vm3520, %v3415, 0.0
    %v3677 = vadd.f32 %v3675, %v3676
    %v3678 = vsel %vm3520, %v3420, 0.0
    %v3679 = vadd.f32 %v3677, %v3678
    %v3680 = vsel %vm3520, %v3425, 0.0
    %v3681 = vadd.f32 %v3679, %v3680
    %v3682 = vsel %vm3520, %v3430, 0.0
    %v3683 = vadd.f32 %v3681, %v3682
    %v3684 = vsel %vm3520, %v3435, 0.0
    %v3685 = vadd.f32 %v3683, %v3684
    %v3686 = vsel %vm3520, %v3440, 0.0
    %v3687 = vadd.f32 %v3685, %v3686
    %v3688 = vsel %vm3520, %v3445, 0.0
    %v3689 = vadd.f32 %v3687, %v3688
    %v3690 = vsel %vm3520, %v3450, 0.0
    %v3691 = vadd.f32 %v3689, %v3690
    %v3692 = vsel %vm3520, %v3455, 0.0
    %v3693 = vadd.f32 %v3691, %v3692
    %v3694 = vsel %vm3520, %v3460, 0.0
    %v3695 = vadd.f32 %v3693, %v3694
    %v3696 = vsel %vm3520, %v3465, 0.0
    %v3697 = vadd.f32 %v3695, %v3696
    %v3698 = vsel %vm3520, %v3470, 0.0
    %v3699 = vadd.f32 %v3697, %v3698
    %v3700 = vsel %vm3520, %v3475, 0.0
    %v3701 = vadd.f32 %v3699, %v3700
    %v3702 = vsel %vm3520, %v3480, 0.0
    %v3703 = vadd.f32 %v3701, %v3702
    %v3704 = vsel %vm3520, %v3485, 0.0
    %v3705 = vadd.f32 %v3703, %v3704
    %v3706 = vsel %vm3520, %v3490, 0.0
    %v3707 = vadd.f32 %v3705, %v3706
    %v3708 = vsel %vm3520, %v3495, 0.0
    %v3709 = vadd.f32 %v3707, %v3708
    %v3710 = vsel %vm3520, %v3500, 0.0
    %v3711 = vadd.f32 %v3709, %v3710
    %v3712 = vsel %vm3520, %v3505, 0.0
    %v3713 = vadd.f32 %v3711, %v3712
    %v3714 = vsel %vm3520, %v3510, 0.0
    %v3715 = vadd.f32 %v3713, %v3714
    %v3716 = vsel %vm3520, %v3515, 0.0
    %v3717 = vadd.f32 %v3715, %v3716
    %v3718 = vsel %vm3520, %v3026, 0.0
    %v3719 = vsel %vm3520, %v3031, 0.0
    %v3720 = vadd.f32 %v3718, %v3719
    %v3721 = vsel %vm3520, %v3036, 0.0
    %v3722 = vadd.f32 %v3720, %v3721
    %v3723 = vsel %vm3520, %v3041, 0.0
    %v3724 = vadd.f32 %v3722, %v3723
    %v3725 = vsel %vm3520, %v3046, 0.0
    %v3726 = vadd.f32 %v3724, %v3725
    %v3727 = vsel %vm3520, %v3051, 0.0
    %v3728 = vadd.f32 %v3726, %v3727
    %v3729 = vsel %vm3520, %v3056, 0.0
    %v3730 = vadd.f32 %v3728, %v3729
    %v3731 = vsel %vm3520, %v3061, 0.0
    %v3732 = vadd.f32 %v3730, %v3731
    %v3733 = vsel %vm3520, %v3066, 0.0
    %v3734 = vadd.f32 %v3732, %v3733
    %v3735 = vsel %vm3520, %v3071, 0.0
    %v3736 = vadd.f32 %v3734, %v3735
    %v3737 = vsel %vm3520, %v3076, 0.0
    %v3738 = vadd.f32 %v3736, %v3737
    %v3739 = vsel %vm3520, %v3081, 0.0
    %v3740 = vadd.f32 %v3738, %v3739
    %v3741 = vsel %vm3520, %v3086, 0.0
    %v3742 = vadd.f32 %v3740, %v3741
    %v3743 = vsel %vm3520, %v3091, 0.0
    %v3744 = vadd.f32 %v3742, %v3743
    %v3745 = vsel %vm3520, %v3096, 0.0
    %v3746 = vadd.f32 %v3744, %v3745
    %v3747 = vsel %vm3520, %v3101, 0.0
    %v3748 = vadd.f32 %v3746, %v3747
    %v3749 = vsel %vm3520, %v3106, 0.0
    %v3750 = vadd.f32 %v3748, %v3749
    %v3751 = vsel %vm3520, %v3111, 0.0
    %v3752 = vadd.f32 %v3750, %v3751
    %v3753 = vsel %vm3520, %v3116, 0.0
    %v3754 = vadd.f32 %v3752, %v3753
    %v3755 = vsel %vm3520, %v3121, 0.0
    %v3756 = vadd.f32 %v3754, %v3755
    %v3757 = vsel %vm3520, %v3126, 0.0
    %v3758 = vadd.f32 %v3756, %v3757
    %v3759 = vsel %vm3520, %v3131, 0.0
    %v3760 = vadd.f32 %v3758, %v3759
    %v3761 = vsel %vm3520, %v3136, 0.0
    %v3762 = vadd.f32 %v3760, %v3761
    %v3763 = vsel %vm3520, %v3141, 0.0
    %v3764 = vadd.f32 %v3762, %v3763
    %v3765 = vsel %vm3520, %v3146, 0.0
    %v3766 = vadd.f32 %v3764, %v3765
    %v3767 = vsel %vm3520, %v3151, 0.0
    %v3768 = vadd.f32 %v3766, %v3767
    %v3769 = vsel %vm3520, %v3156, 0.0
    %v3770 = vadd.f32 %v3768, %v3769
    %v3771 = vsel %vm3520, %v3161, 0.0
    %v3772 = vadd.f32 %v3770, %v3771
    %v3773 = vsel %vm3520, %v3166, 0.0
    %v3774 = vadd.f32 %v3772, %v3773
    %v3775 = vsel %vm3520, %v3171, 0.0
    %v3776 = vadd.f32 %v3774, %v3775
    %v3777 = vsel %vm3520, %v3176, 0.0
    %v3778 = vadd.f32 %v3776, %v3777
    %v3779 = vsel %vm3520, %v3181, 0.0
    %v3780 = vadd.f32 %v3778, %v3779
    %v3781 = vsel %vm3520, %v3186, 0.0
    %v3782 = vadd.f32 %v3780, %v3781
    %v3783 = vsel %vm3520, %v3191, 0.0
    %v3784 = vadd.f32 %v3782, %v3783
    %v3785 = vsel %vm3520, %v3196, 0.0
    %v3786 = vadd.f32 %v3784, %v3785
    %v3787 = vsel %vm3520, %v3201, 0.0
    %v3788 = vadd.f32 %v3786, %v3787
    %v3789 = vsel %vm3520, %v3206, 0.0
    %v3790 = vadd.f32 %v3788, %v3789
    %v3791 = vsel %vm3520, %v3211, 0.0
    %v3792 = vadd.f32 %v3790, %v3791
    %v3793 = vsel %vm3520, %v3216, 0.0
    %v3794 = vadd.f32 %v3792, %v3793
    %v3795 = vsel %vm3520, %v3221, 0.0
    %v3796 = vadd.f32 %v3794, %v3795
    %v3797 = vsel %vm3520, %v3226, 0.0
    %v3798 = vadd.f32 %v3796, %v3797
    %v3799 = vsel %vm3520, %v3231, 0.0
    %v3800 = vadd.f32 %v3798, %v3799
    %v3801 = vsel %vm3520, %v3236, 0.0
    %v3802 = vadd.f32 %v3800, %v3801
    %v3803 = vsel %vm3520, %v3241, 0.0
    %v3804 = vadd.f32 %v3802, %v3803
    %v3805 = vsel %vm3520, %v3246, 0.0
    %v3806 = vadd.f32 %v3804, %v3805
    %v3807 = vsel %vm3520, %v3251, 0.0
    %v3808 = vadd.f32 %v3806, %v3807
    %v3809 = vsel %vm3520, %v3256, 0.0
    %v3810 = vadd.f32 %v3808, %v3809
    %v3811 = vsel %vm3520, %v3261, 0.0
    %v3812 = vadd.f32 %v3810, %v3811
    %v3813 = vsel %vm3520, %v3266, 0.0
    %v3814 = vadd.f32 %v3812, %v3813
    %v3815 = vsel %vm3520, %v3271, 0.0
    %v3816 = vadd.f32 %v3814, %v3815
    %v3817 = vsel %vm3520, %v3276, 0.0
    %v3818 = vadd.f32 %v3816, %v3817
    %v3819 = vsel %vm3520, %v3281, 0.0
    %v3820 = vadd.f32 %v3818, %v3819
    %v3821 = vsel %vm3520, %v3286, 0.0
    %v3822 = vadd.f32 %v3820, %v3821
    %v3823 = vsel %vm3520, %v3291, 0.0
    %v3824 = vadd.f32 %v3822, %v3823
    %v3825 = vsel %vm3520, %v3296, 0.0
    %v3826 = vadd.f32 %v3824, %v3825
    %v3827 = vsel %vm3520, %v3301, 0.0
    %v3828 = vadd.f32 %v3826, %v3827
    %v3829 = vsel %vm3520, %v3306, 0.0
    %v3830 = vadd.f32 %v3828, %v3829
    %v3831 = vsel %vm3520, %v3311, 0.0
    %v3832 = vadd.f32 %v3830, %v3831
    %v3833 = vsel %vm3520, %v3316, 0.0
    %v3834 = vadd.f32 %v3832, %v3833
    %v3835 = vsel %vm3520, %v3321, 0.0
    %v3836 = vadd.f32 %v3834, %v3835
    %v3837 = vsel %vm3520, %v3326, 0.0
    %v3838 = vadd.f32 %v3836, %v3837
    %v3839 = vsel %vm3520, %v3331, 0.0
    %v3840 = vadd.f32 %v3838, %v3839
    %v3841 = vsel %vm3520, %v3336, 0.0
    %v3842 = vadd.f32 %v3840, %v3841
    %v3843 = vsel %vm3520, %v3341, 0.0
    %v3844 = vadd.f32 %v3842, %v3843
    %v3845 = vsel %vm3520, %v3346, 0.0
    %v3846 = vadd.f32 %v3844, %v3845
    %v3847 = vsel %vm3520, %v3351, 0.0
    %v3848 = vadd.f32 %v3846, %v3847
    %v3849 = vsel %vm3520, %v3356, 0.0
    %v3850 = vadd.f32 %v3848, %v3849
    %v3851 = vsel %vm3520, %v3361, 0.0
    %v3852 = vadd.f32 %v3850, %v3851
    %v3853 = vsel %vm3520, %v3366, 0.0
    %v3854 = vadd.f32 %v3852, %v3853
    %v3855 = vsel %vm3520, %v3371, 0.0
    %v3856 = vadd.f32 %v3854, %v3855
    %v3857 = vsel %vm3520, %v3376, 0.0
    %v3858 = vadd.f32 %v3856, %v3857
    %v3859 = vsel %vm3520, %v3381, 0.0
    %v3860 = vadd.f32 %v3858, %v3859
    %v3861 = vsel %vm3520, %v3386, 0.0
    %v3862 = vadd.f32 %v3860, %v3861
    %v3863 = vsel %vm3520, %v3391, 0.0
    %v3864 = vadd.f32 %v3862, %v3863
    %v3865 = vsel %vm3520, %v3396, 0.0
    %v3866 = vadd.f32 %v3864, %v3865
    %v3867 = vsel %vm3520, %v3401, 0.0
    %v3868 = vadd.f32 %v3866, %v3867
    %v3869 = vsel %vm3520, %v3406, 0.0
    %v3870 = vadd.f32 %v3868, %v3869
    %v3871 = vsel %vm3520, %v3411, 0.0
    %v3872 = vadd.f32 %v3870, %v3871
    %v3873 = vsel %vm3520, %v3416, 0.0
    %v3874 = vadd.f32 %v3872, %v3873
    %v3875 = vsel %vm3520, %v3421, 0.0
    %v3876 = vadd.f32 %v3874, %v3875
    %v3877 = vsel %vm3520, %v3426, 0.0
    %v3878 = vadd.f32 %v3876, %v3877
    %v3879 = vsel %vm3520, %v3431, 0.0
    %v3880 = vadd.f32 %v3878, %v3879
    %v3881 = vsel %vm3520, %v3436, 0.0
    %v3882 = vadd.f32 %v3880, %v3881
    %v3883 = vsel %vm3520, %v3441, 0.0
    %v3884 = vadd.f32 %v3882, %v3883
    %v3885 = vsel %vm3520, %v3446, 0.0
    %v3886 = vadd.f32 %v3884, %v3885
    %v3887 = vsel %vm3520, %v3451, 0.0
    %v3888 = vadd.f32 %v3886, %v3887
    %v3889 = vsel %vm3520, %v3456, 0.0
    %v3890 = vadd.f32 %v3888, %v3889
    %v3891 = vsel %vm3520, %v3461, 0.0
    %v3892 = vadd.f32 %v3890, %v3891
    %v3893 = vsel %vm3520, %v3466, 0.0
    %v3894 = vadd.f32 %v3892, %v3893
    %v3895 = vsel %vm3520, %v3471, 0.0
    %v3896 = vadd.f32 %v3894, %v3895
    %v3897 = vsel %vm3520, %v3476, 0.0
    %v3898 = vadd.f32 %v3896, %v3897
    %v3899 = vsel %vm3520, %v3481, 0.0
    %v3900 = vadd.f32 %v3898, %v3899
    %v3901 = vsel %vm3520, %v3486, 0.0
    %v3902 = vadd.f32 %v3900, %v3901
    %v3903 = vsel %vm3520, %v3491, 0.0
    %v3904 = vadd.f32 %v3902, %v3903
    %v3905 = vsel %vm3520, %v3496, 0.0
    %v3906 = vadd.f32 %v3904, %v3905
    %v3907 = vsel %vm3520, %v3501, 0.0
    %v3908 = vadd.f32 %v3906, %v3907
    %v3909 = vsel %vm3520, %v3506, 0.0
    %v3910 = vadd.f32 %v3908, %v3909
    %v3911 = vsel %vm3520, %v3511, 0.0
    %v3912 = vadd.f32 %v3910, %v3911
    %v3913 = vsel %vm3520, %v3516, 0.0
    %v3914 = vadd.f32 %v3912, %v3913
    %v3915 = vsel %vm3520, %v3027, 0.0
    %v3916 = vsel %vm3520, %v3032, 0.0
    %v3917 = vadd.f32 %v3915, %v3916
    %v3918 = vsel %vm3520, %v3037, 0.0
    %v3919 = vadd.f32 %v3917, %v3918
    %v3920 = vsel %vm3520, %v3042, 0.0
    %v3921 = vadd.f32 %v3919, %v3920
    %v3922 = vsel %vm3520, %v3047, 0.0
    %v3923 = vadd.f32 %v3921, %v3922
    %v3924 = vsel %vm3520, %v3052, 0.0
    %v3925 = vadd.f32 %v3923, %v3924
    %v3926 = vsel %vm3520, %v3057, 0.0
    %v3927 = vadd.f32 %v3925, %v3926
    %v3928 = vsel %vm3520, %v3062, 0.0
    %v3929 = vadd.f32 %v3927, %v3928
    %v3930 = vsel %vm3520, %v3067, 0.0
    %v3931 = vadd.f32 %v3929, %v3930
    %v3932 = vsel %vm3520, %v3072, 0.0
    %v3933 = vadd.f32 %v3931, %v3932
    %v3934 = vsel %vm3520, %v3077, 0.0
    %v3935 = vadd.f32 %v3933, %v3934
    %v3936 = vsel %vm3520, %v3082, 0.0
    %v3937 = vadd.f32 %v3935, %v3936
    %v3938 = vsel %vm3520, %v3087, 0.0
    %v3939 = vadd.f32 %v3937, %v3938
    %v3940 = vsel %vm3520, %v3092, 0.0
    %v3941 = vadd.f32 %v3939, %v3940
    %v3942 = vsel %vm3520, %v3097, 0.0
    %v3943 = vadd.f32 %v3941, %v3942
    %v3944 = vsel %vm3520, %v3102, 0.0
    %v3945 = vadd.f32 %v3943, %v3944
    %v3946 = vsel %vm3520, %v3107, 0.0
    %v3947 = vadd.f32 %v3945, %v3946
    %v3948 = vsel %vm3520, %v3112, 0.0
    %v3949 = vadd.f32 %v3947, %v3948
    %v3950 = vsel %vm3520, %v3117, 0.0
    %v3951 = vadd.f32 %v3949, %v3950
    %v3952 = vsel %vm3520, %v3122, 0.0
    %v3953 = vadd.f32 %v3951, %v3952
    %v3954 = vsel %vm3520, %v3127, 0.0
    %v3955 = vadd.f32 %v3953, %v3954
    %v3956 = vsel %vm3520, %v3132, 0.0
    %v3957 = vadd.f32 %v3955, %v3956
    %v3958 = vsel %vm3520, %v3137, 0.0
    %v3959 = vadd.f32 %v3957, %v3958
    %v3960 = vsel %vm3520, %v3142, 0.0
    %v3961 = vadd.f32 %v3959, %v3960
    %v3962 = vsel %vm3520, %v3147, 0.0
    %v3963 = vadd.f32 %v3961, %v3962
    %v3964 = vsel %vm3520, %v3152, 0.0
    %v3965 = vadd.f32 %v3963, %v3964
    %v3966 = vsel %vm3520, %v3157, 0.0
    %v3967 = vadd.f32 %v3965, %v3966
    %v3968 = vsel %vm3520, %v3162, 0.0
    %v3969 = vadd.f32 %v3967, %v3968
    %v3970 = vsel %vm3520, %v3167, 0.0
    %v3971 = vadd.f32 %v3969, %v3970
    %v3972 = vsel %vm3520, %v3172, 0.0
    %v3973 = vadd.f32 %v3971, %v3972
    %v3974 = vsel %vm3520, %v3177, 0.0
    %v3975 = vadd.f32 %v3973, %v3974
    %v3976 = vsel %vm3520, %v3182, 0.0
    %v3977 = vadd.f32 %v3975, %v3976
    %v3978 = vsel %vm3520, %v3187, 0.0
    %v3979 = vadd.f32 %v3977, %v3978
    %v3980 = vsel %vm3520, %v3192, 0.0
    %v3981 = vadd.f32 %v3979, %v3980
    %v3982 = vsel %vm3520, %v3197, 0.0
    %v3983 = vadd.f32 %v3981, %v3982
    %v3984 = vsel %vm3520, %v3202, 0.0
    %v3985 = vadd.f32 %v3983, %v3984
    %v3986 = vsel %vm3520, %v3207, 0.0
    %v3987 = vadd.f32 %v3985, %v3986
    %v3988 = vsel %vm3520, %v3212, 0.0
    %v3989 = vadd.f32 %v3987, %v3988
    %v3990 = vsel %vm3520, %v3217, 0.0
    %v3991 = vadd.f32 %v3989, %v3990
    %v3992 = vsel %vm3520, %v3222, 0.0
    %v3993 = vadd.f32 %v3991, %v3992
    %v3994 = vsel %vm3520, %v3227, 0.0
    %v3995 = vadd.f32 %v3993, %v3994
    %v3996 = vsel %vm3520, %v3232, 0.0
    %v3997 = vadd.f32 %v3995, %v3996
    %v3998 = vsel %vm3520, %v3237, 0.0
    %v3999 = vadd.f32 %v3997, %v3998
    %v4000 = vsel %vm3520, %v3242, 0.0
    %v4001 = vadd.f32 %v3999, %v4000
    %v4002 = vsel %vm3520, %v3247, 0.0
    %v4003 = vadd.f32 %v4001, %v4002
    %v4004 = vsel %vm3520, %v3252, 0.0
    %v4005 = vadd.f32 %v4003, %v4004
    %v4006 = vsel %vm3520, %v3257, 0.0
    %v4007 = vadd.f32 %v4005, %v4006
    %v4008 = vsel %vm3520, %v3262, 0.0
    %v4009 = vadd.f32 %v4007, %v4008
    %v4010 = vsel %vm3520, %v3267, 0.0
    %v4011 = vadd.f32 %v4009, %v4010
    %v4012 = vsel %vm3520, %v3272, 0.0
    %v4013 = vadd.f32 %v4011, %v4012
    %v4014 = vsel %vm3520, %v3277, 0.0
    %v4015 = vadd.f32 %v4013, %v4014
    %v4016 = vsel %vm3520, %v3282, 0.0
    %v4017 = vadd.f32 %v4015, %v4016
    %v4018 = vsel %vm3520, %v3287, 0.0
    %v4019 = vadd.f32 %v4017, %v4018
    %v4020 = vsel %vm3520, %v3292, 0.0
    %v4021 = vadd.f32 %v4019, %v4020
    %v4022 = vsel %vm3520, %v3297, 0.0
    %v4023 = vadd.f32 %v4021, %v4022
    %v4024 = vsel %vm3520, %v3302, 0.0
    %v4025 = vadd.f32 %v4023, %v4024
    %v4026 = vsel %vm3520, %v3307, 0.0
    %v4027 = vadd.f32 %v4025, %v4026
    %v4028 = vsel %vm3520, %v3312, 0.0
    %v4029 = vadd.f32 %v4027, %v4028
    %v4030 = vsel %vm3520, %v3317, 0.0
    %v4031 = vadd.f32 %v4029, %v4030
    %v4032 = vsel %vm3520, %v3322, 0.0
    %v4033 = vadd.f32 %v4031, %v4032
    %v4034 = vsel %vm3520, %v3327, 0.0
    %v4035 = vadd.f32 %v4033, %v4034
    %v4036 = vsel %vm3520, %v3332, 0.0
    %v4037 = vadd.f32 %v4035, %v4036
    %v4038 = vsel %vm3520, %v3337, 0.0
    %v4039 = vadd.f32 %v4037, %v4038
    %v4040 = vsel %vm3520, %v3342, 0.0
    %v4041 = vadd.f32 %v4039, %v4040
    %v4042 = vsel %vm3520, %v3347, 0.0
    %v4043 = vadd.f32 %v4041, %v4042
    %v4044 = vsel %vm3520, %v3352, 0.0
    %v4045 = vadd.f32 %v4043, %v4044
    %v4046 = vsel %vm3520, %v3357, 0.0
    %v4047 = vadd.f32 %v4045, %v4046
    %v4048 = vsel %vm3520, %v3362, 0.0
    %v4049 = vadd.f32 %v4047, %v4048
    %v4050 = vsel %vm3520, %v3367, 0.0
    %v4051 = vadd.f32 %v4049, %v4050
    %v4052 = vsel %vm3520, %v3372, 0.0
    %v4053 = vadd.f32 %v4051, %v4052
    %v4054 = vsel %vm3520, %v3377, 0.0
    %v4055 = vadd.f32 %v4053, %v4054
    %v4056 = vsel %vm3520, %v3382, 0.0
    %v4057 = vadd.f32 %v4055, %v4056
    %v4058 = vsel %vm3520, %v3387, 0.0
    %v4059 = vadd.f32 %v4057, %v4058
    %v4060 = vsel %vm3520, %v3392, 0.0
    %v4061 = vadd.f32 %v4059, %v4060
    %v4062 = vsel %vm3520, %v3397, 0.0
    %v4063 = vadd.f32 %v4061, %v4062
    %v4064 = vsel %vm3520, %v3402, 0.0
    %v4065 = vadd.f32 %v4063, %v4064
    %v4066 = vsel %vm3520, %v3407, 0.0
    %v4067 = vadd.f32 %v4065, %v4066
    %v4068 = vsel %vm3520, %v3412, 0.0
    %v4069 = vadd.f32 %v4067, %v4068
    %v4070 = vsel %vm3520, %v3417, 0.0
    %v4071 = vadd.f32 %v4069, %v4070
    %v4072 = vsel %vm3520, %v3422, 0.0
    %v4073 = vadd.f32 %v4071, %v4072
    %v4074 = vsel %vm3520, %v3427, 0.0
    %v4075 = vadd.f32 %v4073, %v4074
    %v4076 = vsel %vm3520, %v3432, 0.0
    %v4077 = vadd.f32 %v4075, %v4076
    %v4078 = vsel %vm3520, %v3437, 0.0
    %v4079 = vadd.f32 %v4077, %v4078
    %v4080 = vsel %vm3520, %v3442, 0.0
    %v4081 = vadd.f32 %v4079, %v4080
    %v4082 = vsel %vm3520, %v3447, 0.0
    %v4083 = vadd.f32 %v4081, %v4082
    %v4084 = vsel %vm3520, %v3452, 0.0
    %v4085 = vadd.f32 %v4083, %v4084
    %v4086 = vsel %vm3520, %v3457, 0.0
    %v4087 = vadd.f32 %v4085, %v4086
    %v4088 = vsel %vm3520, %v3462, 0.0
    %v4089 = vadd.f32 %v4087, %v4088
    %v4090 = vsel %vm3520, %v3467, 0.0
    %v4091 = vadd.f32 %v4089, %v4090
    %v4092 = vsel %vm3520, %v3472, 0.0
    %v4093 = vadd.f32 %v4091, %v4092
    %v4094 = vsel %vm3520, %v3477, 0.0
    %v4095 = vadd.f32 %v4093, %v4094
    %v4096 = vsel %vm3520, %v3482, 0.0
    %v4097 = vadd.f32 %v4095, %v4096
    %v4098 = vsel %vm3520, %v3487, 0.0
    %v4099 = vadd.f32 %v4097, %v4098
    %v4100 = vsel %vm3520, %v3492, 0.0
    %v4101 = vadd.f32 %v4099, %v4100
    %v4102 = vsel %vm3520, %v3497, 0.0
    %v4103 = vadd.f32 %v4101, %v4102
    %v4104 = vsel %vm3520, %v3502, 0.0
    %v4105 = vadd.f32 %v4103, %v4104
    %v4106 = vsel %vm3520, %v3507, 0.0
    %v4107 = vadd.f32 %v4105, %v4106
    %v4108 = vsel %vm3520, %v3512, 0.0
    %v4109 = vadd.f32 %v4107, %v4108
    %v4110 = vsel %vm3520, %v3517, 0.0
    %v4111 = vadd.f32 %v4109, %v4110
    %v4112 = vsel %vm3520, %v3028, 0.0
    %v4113 = vsel %vm3520, %v3033, 0.0
    %v4114 = vadd.f32 %v4112, %v4113
    %v4115 = vsel %vm3520, %v3038, 0.0
    %v4116 = vadd.f32 %v4114, %v4115
    %v4117 = vsel %vm3520, %v3043, 0.0
    %v4118 = vadd.f32 %v4116, %v4117
    %v4119 = vsel %vm3520, %v3048, 0.0
    %v4120 = vadd.f32 %v4118, %v4119
    %v4121 = vsel %vm3520, %v3053, 0.0
    %v4122 = vadd.f32 %v4120, %v4121
    %v4123 = vsel %vm3520, %v3058, 0.0
    %v4124 = vadd.f32 %v4122, %v4123
    %v4125 = vsel %vm3520, %v3063, 0.0
    %v4126 = vadd.f32 %v4124, %v4125
    %v4127 = vsel %vm3520, %v3068, 0.0
    %v4128 = vadd.f32 %v4126, %v4127
    %v4129 = vsel %vm3520, %v3073, 0.0
    %v4130 = vadd.f32 %v4128, %v4129
    %v4131 = vsel %vm3520, %v3078, 0.0
    %v4132 = vadd.f32 %v4130, %v4131
    %v4133 = vsel %vm3520, %v3083, 0.0
    %v4134 = vadd.f32 %v4132, %v4133
    %v4135 = vsel %vm3520, %v3088, 0.0
    %v4136 = vadd.f32 %v4134, %v4135
    %v4137 = vsel %vm3520, %v3093, 0.0
    %v4138 = vadd.f32 %v4136, %v4137
    %v4139 = vsel %vm3520, %v3098, 0.0
    %v4140 = vadd.f32 %v4138, %v4139
    %v4141 = vsel %vm3520, %v3103, 0.0
    %v4142 = vadd.f32 %v4140, %v4141
    %v4143 = vsel %vm3520, %v3108, 0.0
    %v4144 = vadd.f32 %v4142, %v4143
    %v4145 = vsel %vm3520, %v3113, 0.0
    %v4146 = vadd.f32 %v4144, %v4145
    %v4147 = vsel %vm3520, %v3118, 0.0
    %v4148 = vadd.f32 %v4146, %v4147
    %v4149 = vsel %vm3520, %v3123, 0.0
    %v4150 = vadd.f32 %v4148, %v4149
    %v4151 = vsel %vm3520, %v3128, 0.0
    %v4152 = vadd.f32 %v4150, %v4151
    %v4153 = vsel %vm3520, %v3133, 0.0
    %v4154 = vadd.f32 %v4152, %v4153
    %v4155 = vsel %vm3520, %v3138, 0.0
    %v4156 = vadd.f32 %v4154, %v4155
    %v4157 = vsel %vm3520, %v3143, 0.0
    %v4158 = vadd.f32 %v4156, %v4157
    %v4159 = vsel %vm3520, %v3148, 0.0
    %v4160 = vadd.f32 %v4158, %v4159
    %v4161 = vsel %vm3520, %v3153, 0.0
    %v4162 = vadd.f32 %v4160, %v4161
    %v4163 = vsel %vm3520, %v3158, 0.0
    %v4164 = vadd.f32 %v4162, %v4163
    %v4165 = vsel %vm3520, %v3163, 0.0
    %v4166 = vadd.f32 %v4164, %v4165
    %v4167 = vsel %vm3520, %v3168, 0.0
    %v4168 = vadd.f32 %v4166, %v4167
    %v4169 = vsel %vm3520, %v3173, 0.0
    %v4170 = vadd.f32 %v4168, %v4169
    %v4171 = vsel %vm3520, %v3178, 0.0
    %v4172 = vadd.f32 %v4170, %v4171
    %v4173 = vsel %vm3520, %v3183, 0.0
    %v4174 = vadd.f32 %v4172, %v4173
    %v4175 = vsel %vm3520, %v3188, 0.0
    %v4176 = vadd.f32 %v4174, %v4175
    %v4177 = vsel %vm3520, %v3193, 0.0
    %v4178 = vadd.f32 %v4176, %v4177
    %v4179 = vsel %vm3520, %v3198, 0.0
    %v4180 = vadd.f32 %v4178, %v4179
    %v4181 = vsel %vm3520, %v3203, 0.0
    %v4182 = vadd.f32 %v4180, %v4181
    %v4183 = vsel %vm3520, %v3208, 0.0
    %v4184 = vadd.f32 %v4182, %v4183
    %v4185 = vsel %vm3520, %v3213, 0.0
    %v4186 = vadd.f32 %v4184, %v4185
    %v4187 = vsel %vm3520, %v3218, 0.0
    %v4188 = vadd.f32 %v4186, %v4187
    %v4189 = vsel %vm3520, %v3223, 0.0
    %v4190 = vadd.f32 %v4188, %v4189
    %v4191 = vsel %vm3520, %v3228, 0.0
    %v4192 = vadd.f32 %v4190, %v4191
    %v4193 = vsel %vm3520, %v3233, 0.0
    %v4194 = vadd.f32 %v4192, %v4193
    %v4195 = vsel %vm3520, %v3238, 0.0
    %v4196 = vadd.f32 %v4194, %v4195
    %v4197 = vsel %vm3520, %v3243, 0.0
    %v4198 = vadd.f32 %v4196, %v4197
    %v4199 = vsel %vm3520, %v3248, 0.0
    %v4200 = vadd.f32 %v4198, %v4199
    %v4201 = vsel %vm3520, %v3253, 0.0
    %v4202 = vadd.f32 %v4200, %v4201
    %v4203 = vsel %vm3520, %v3258, 0.0
    %v4204 = vadd.f32 %v4202, %v4203
    %v4205 = vsel %vm3520, %v3263, 0.0
    %v4206 = vadd.f32 %v4204, %v4205
    %v4207 = vsel %vm3520, %v3268, 0.0
    %v4208 = vadd.f32 %v4206, %v4207
    %v4209 = vsel %vm3520, %v3273, 0.0
    %v4210 = vadd.f32 %v4208, %v4209
    %v4211 = vsel %vm3520, %v3278, 0.0
    %v4212 = vadd.f32 %v4210, %v4211
    %v4213 = vsel %vm3520, %v3283, 0.0
    %v4214 = vadd.f32 %v4212, %v4213
    %v4215 = vsel %vm3520, %v3288, 0.0
    %v4216 = vadd.f32 %v4214, %v4215
    %v4217 = vsel %vm3520, %v3293, 0.0
    %v4218 = vadd.f32 %v4216, %v4217
    %v4219 = vsel %vm3520, %v3298, 0.0
    %v4220 = vadd.f32 %v4218, %v4219
    %v4221 = vsel %vm3520, %v3303, 0.0
    %v4222 = vadd.f32 %v4220, %v4221
    %v4223 = vsel %vm3520, %v3308, 0.0
    %v4224 = vadd.f32 %v4222, %v4223
    %v4225 = vsel %vm3520, %v3313, 0.0
    %v4226 = vadd.f32 %v4224, %v4225
    %v4227 = vsel %vm3520, %v3318, 0.0
    %v4228 = vadd.f32 %v4226, %v4227
    %v4229 = vsel %vm3520, %v3323, 0.0
    %v4230 = vadd.f32 %v4228, %v4229
    %v4231 = vsel %vm3520, %v3328, 0.0
    %v4232 = vadd.f32 %v4230, %v4231
    %v4233 = vsel %vm3520, %v3333, 0.0
    %v4234 = vadd.f32 %v4232, %v4233
    %v4235 = vsel %vm3520, %v3338, 0.0
    %v4236 = vadd.f32 %v4234, %v4235
    %v4237 = vsel %vm3520, %v3343, 0.0
    %v4238 = vadd.f32 %v4236, %v4237
    %v4239 = vsel %vm3520, %v3348, 0.0
    %v4240 = vadd.f32 %v4238, %v4239
    %v4241 = vsel %vm3520, %v3353, 0.0
    %v4242 = vadd.f32 %v4240, %v4241
    %v4243 = vsel %vm3520, %v3358, 0.0
    %v4244 = vadd.f32 %v4242, %v4243
    %v4245 = vsel %vm3520, %v3363, 0.0
    %v4246 = vadd.f32 %v4244, %v4245
    %v4247 = vsel %vm3520, %v3368, 0.0
    %v4248 = vadd.f32 %v4246, %v4247
    %v4249 = vsel %vm3520, %v3373, 0.0
    %v4250 = vadd.f32 %v4248, %v4249
    %v4251 = vsel %vm3520, %v3378, 0.0
    %v4252 = vadd.f32 %v4250, %v4251
    %v4253 = vsel %vm3520, %v3383, 0.0
    %v4254 = vadd.f32 %v4252, %v4253
    %v4255 = vsel %vm3520, %v3388, 0.0
    %v4256 = vadd.f32 %v4254, %v4255
    %v4257 = vsel %vm3520, %v3393, 0.0
    %v4258 = vadd.f32 %v4256, %v4257
    %v4259 = vsel %vm3520, %v3398, 0.0
    %v4260 = vadd.f32 %v4258, %v4259
    %v4261 = vsel %vm3520, %v3403, 0.0
    %v4262 = vadd.f32 %v4260, %v4261
    %v4263 = vsel %vm3520, %v3408, 0.0
    %v4264 = vadd.f32 %v4262, %v4263
    %v4265 = vsel %vm3520, %v3413, 0.0
    %v4266 = vadd.f32 %v4264, %v4265
    %v4267 = vsel %vm3520, %v3418, 0.0
    %v4268 = vadd.f32 %v4266, %v4267
    %v4269 = vsel %vm3520, %v3423, 0.0
    %v4270 = vadd.f32 %v4268, %v4269
    %v4271 = vsel %vm3520, %v3428, 0.0
    %v4272 = vadd.f32 %v4270, %v4271
    %v4273 = vsel %vm3520, %v3433, 0.0
    %v4274 = vadd.f32 %v4272, %v4273
    %v4275 = vsel %vm3520, %v3438, 0.0
    %v4276 = vadd.f32 %v4274, %v4275
    %v4277 = vsel %vm3520, %v3443, 0.0
    %v4278 = vadd.f32 %v4276, %v4277
    %v4279 = vsel %vm3520, %v3448, 0.0
    %v4280 = vadd.f32 %v4278, %v4279
    %v4281 = vsel %vm3520, %v3453, 0.0
    %v4282 = vadd.f32 %v4280, %v4281
    %v4283 = vsel %vm3520, %v3458, 0.0
    %v4284 = vadd.f32 %v4282, %v4283
    %v4285 = vsel %vm3520, %v3463, 0.0
    %v4286 = vadd.f32 %v4284, %v4285
    %v4287 = vsel %vm3520, %v3468, 0.0
    %v4288 = vadd.f32 %v4286, %v4287
    %v4289 = vsel %vm3520, %v3473, 0.0
    %v4290 = vadd.f32 %v4288, %v4289
    %v4291 = vsel %vm3520, %v3478, 0.0
    %v4292 = vadd.f32 %v4290, %v4291
    %v4293 = vsel %vm3520, %v3483, 0.0
    %v4294 = vadd.f32 %v4292, %v4293
    %v4295 = vsel %vm3520, %v3488, 0.0
    %v4296 = vadd.f32 %v4294, %v4295
    %v4297 = vsel %vm3520, %v3493, 0.0
    %v4298 = vadd.f32 %v4296, %v4297
    %v4299 = vsel %vm3520, %v3498, 0.0
    %v4300 = vadd.f32 %v4298, %v4299
    %v4301 = vsel %vm3520, %v3503, 0.0
    %v4302 = vadd.f32 %v4300, %v4301
    %v4303 = vsel %vm3520, %v3508, 0.0
    %v4304 = vadd.f32 %v4302, %v4303
    %v4305 = vsel %vm3520, %v3513, 0.0
    %v4306 = vadd.f32 %v4304, %v4305
    %v4307 = vsel %vm3520, %v3518, 0.0
    %v4308 = vadd.f32 %v4306, %v4307
    %vm4309 = vcmask 253952
    %v4310 = vsel %vm4309, %v3029, 0.0
    %v4311 = vsel %vm4309, %v3034, 0.0
    %v4312 = vadd.f32 %v4310, %v4311
    %v4313 = vsel %vm4309, %v3039, 0.0
    %v4314 = vadd.f32 %v4312, %v4313
    %v4315 = vsel %vm4309, %v3044, 0.0
    %v4316 = vadd.f32 %v4314, %v4315
    %v4317 = vsel %vm4309, %v3049, 0.0
    %v4318 = vadd.f32 %v4316, %v4317
    %v4319 = vsel %vm4309, %v3054, 0.0
    %v4320 = vadd.f32 %v4318, %v4319
    %v4321 = vsel %vm4309, %v3059, 0.0
    %v4322 = vadd.f32 %v4320, %v4321
    %v4323 = vsel %vm4309, %v3064, 0.0
    %v4324 = vadd.f32 %v4322, %v4323
    %v4325 = vsel %vm4309, %v3069, 0.0
    %v4326 = vadd.f32 %v4324, %v4325
    %v4327 = vsel %vm4309, %v3074, 0.0
    %v4328 = vadd.f32 %v4326, %v4327
    %v4329 = vsel %vm4309, %v3079, 0.0
    %v4330 = vadd.f32 %v4328, %v4329
    %v4331 = vsel %vm4309, %v3084, 0.0
    %v4332 = vadd.f32 %v4330, %v4331
    %v4333 = vsel %vm4309, %v3089, 0.0
    %v4334 = vadd.f32 %v4332, %v4333
    %v4335 = vsel %vm4309, %v3094, 0.0
    %v4336 = vadd.f32 %v4334, %v4335
    %v4337 = vsel %vm4309, %v3099, 0.0
    %v4338 = vadd.f32 %v4336, %v4337
    %v4339 = vsel %vm4309, %v3104, 0.0
    %v4340 = vadd.f32 %v4338, %v4339
    %v4341 = vsel %vm4309, %v3109, 0.0
    %v4342 = vadd.f32 %v4340, %v4341
    %v4343 = vsel %vm4309, %v3114, 0.0
    %v4344 = vadd.f32 %v4342, %v4343
    %v4345 = vsel %vm4309, %v3119, 0.0
    %v4346 = vadd.f32 %v4344, %v4345
    %v4347 = vsel %vm4309, %v3124, 0.0
    %v4348 = vadd.f32 %v4346, %v4347
    %v4349 = vsel %vm4309, %v3129, 0.0
    %v4350 = vadd.f32 %v4348, %v4349
    %v4351 = vsel %vm4309, %v3134, 0.0
    %v4352 = vadd.f32 %v4350, %v4351
    %v4353 = vsel %vm4309, %v3139, 0.0
    %v4354 = vadd.f32 %v4352, %v4353
    %v4355 = vsel %vm4309, %v3144, 0.0
    %v4356 = vadd.f32 %v4354, %v4355
    %v4357 = vsel %vm4309, %v3149, 0.0
    %v4358 = vadd.f32 %v4356, %v4357
    %v4359 = vsel %vm4309, %v3154, 0.0
    %v4360 = vadd.f32 %v4358, %v4359
    %v4361 = vsel %vm4309, %v3159, 0.0
    %v4362 = vadd.f32 %v4360, %v4361
    %v4363 = vsel %vm4309, %v3164, 0.0
    %v4364 = vadd.f32 %v4362, %v4363
    %v4365 = vsel %vm4309, %v3169, 0.0
    %v4366 = vadd.f32 %v4364, %v4365
    %v4367 = vsel %vm4309, %v3174, 0.0
    %v4368 = vadd.f32 %v4366, %v4367
    %v4369 = vsel %vm4309, %v3179, 0.0
    %v4370 = vadd.f32 %v4368, %v4369
    %v4371 = vsel %vm4309, %v3184, 0.0
    %v4372 = vadd.f32 %v4370, %v4371
    %v4373 = vsel %vm4309, %v3189, 0.0
    %v4374 = vadd.f32 %v4372, %v4373
    %v4375 = vsel %vm4309, %v3194, 0.0
    %v4376 = vadd.f32 %v4374, %v4375
    %v4377 = vsel %vm4309, %v3199, 0.0
    %v4378 = vadd.f32 %v4376, %v4377
    %v4379 = vsel %vm4309, %v3204, 0.0
    %v4380 = vadd.f32 %v4378, %v4379
    %v4381 = vsel %vm4309, %v3209, 0.0
    %v4382 = vadd.f32 %v4380, %v4381
    %v4383 = vsel %vm4309, %v3214, 0.0
    %v4384 = vadd.f32 %v4382, %v4383
    %v4385 = vsel %vm4309, %v3219, 0.0
    %v4386 = vadd.f32 %v4384, %v4385
    %v4387 = vsel %vm4309, %v3224, 0.0
    %v4388 = vadd.f32 %v4386, %v4387
    %v4389 = vsel %vm4309, %v3229, 0.0
    %v4390 = vadd.f32 %v4388, %v4389
    %v4391 = vsel %vm4309, %v3234, 0.0
    %v4392 = vadd.f32 %v4390, %v4391
    %v4393 = vsel %vm4309, %v3239, 0.0
    %v4394 = vadd.f32 %v4392, %v4393
    %v4395 = vsel %vm4309, %v3244, 0.0
    %v4396 = vadd.f32 %v4394, %v4395
    %v4397 = vsel %vm4309, %v3249, 0.0
    %v4398 = vadd.f32 %v4396, %v4397
    %v4399 = vsel %vm4309, %v3254, 0.0
    %v4400 = vadd.f32 %v4398, %v4399
    %v4401 = vsel %vm4309, %v3259, 0.0
    %v4402 = vadd.f32 %v4400, %v4401
    %v4403 = vsel %vm4309, %v3264, 0.0
    %v4404 = vadd.f32 %v4402, %v4403
    %v4405 = vsel %vm4309, %v3269, 0.0
    %v4406 = vadd.f32 %v4404, %v4405
    %v4407 = vsel %vm4309, %v3274, 0.0
    %v4408 = vadd.f32 %v4406, %v4407
    %v4409 = vsel %vm4309, %v3279, 0.0
    %v4410 = vadd.f32 %v4408, %v4409
    %v4411 = vsel %vm4309, %v3284, 0.0
    %v4412 = vadd.f32 %v4410, %v4411
    %v4413 = vsel %vm4309, %v3289, 0.0
    %v4414 = vadd.f32 %v4412, %v4413
    %v4415 = vsel %vm4309, %v3294, 0.0
    %v4416 = vadd.f32 %v4414, %v4415
    %v4417 = vsel %vm4309, %v3299, 0.0
    %v4418 = vadd.f32 %v4416, %v4417
    %v4419 = vsel %vm4309, %v3304, 0.0
    %v4420 = vadd.f32 %v4418, %v4419
    %v4421 = vsel %vm4309, %v3309, 0.0
    %v4422 = vadd.f32 %v4420, %v4421
    %v4423 = vsel %vm4309, %v3314, 0.0
    %v4424 = vadd.f32 %v4422, %v4423
    %v4425 = vsel %vm4309, %v3319, 0.0
    %v4426 = vadd.f32 %v4424, %v4425
    %v4427 = vsel %vm4309, %v3324, 0.0
    %v4428 = vadd.f32 %v4426, %v4427
    %v4429 = vsel %vm4309, %v3329, 0.0
    %v4430 = vadd.f32 %v4428, %v4429
    %v4431 = vsel %vm4309, %v3334, 0.0
    %v4432 = vadd.f32 %v4430, %v4431
    %v4433 = vsel %vm4309, %v3339, 0.0
    %v4434 = vadd.f32 %v4432, %v4433
    %v4435 = vsel %vm4309, %v3344, 0.0
    %v4436 = vadd.f32 %v4434, %v4435
    %v4437 = vsel %vm4309, %v3349, 0.0
    %v4438 = vadd.f32 %v4436, %v4437
    %v4439 = vsel %vm4309, %v3354, 0.0
    %v4440 = vadd.f32 %v4438, %v4439
    %v4441 = vsel %vm4309, %v3359, 0.0
    %v4442 = vadd.f32 %v4440, %v4441
    %v4443 = vsel %vm4309, %v3364, 0.0
    %v4444 = vadd.f32 %v4442, %v4443
    %v4445 = vsel %vm4309, %v3369, 0.0
    %v4446 = vadd.f32 %v4444, %v4445
    %v4447 = vsel %vm4309, %v3374, 0.0
    %v4448 = vadd.f32 %v4446, %v4447
    %v4449 = vsel %vm4309, %v3379, 0.0
    %v4450 = vadd.f32 %v4448, %v4449
    %v4451 = vsel %vm4309, %v3384, 0.0
    %v4452 = vadd.f32 %v4450, %v4451
    %v4453 = vsel %vm4309, %v3389, 0.0
    %v4454 = vadd.f32 %v4452, %v4453
    %v4455 = vsel %vm4309, %v3394, 0.0
    %v4456 = vadd.f32 %v4454, %v4455
    %v4457 = vsel %vm4309, %v3399, 0.0
    %v4458 = vadd.f32 %v4456, %v4457
    %v4459 = vsel %vm4309, %v3404, 0.0
    %v4460 = vadd.f32 %v4458, %v4459
    %v4461 = vsel %vm4309, %v3409, 0.0
    %v4462 = vadd.f32 %v4460, %v4461
    %v4463 = vsel %vm4309, %v3414, 0.0
    %v4464 = vadd.f32 %v4462, %v4463
    %v4465 = vsel %vm4309, %v3419, 0.0
    %v4466 = vadd.f32 %v4464, %v4465
    %v4467 = vsel %vm4309, %v3424, 0.0
    %v4468 = vadd.f32 %v4466, %v4467
    %v4469 = vsel %vm4309, %v3429, 0.0
    %v4470 = vadd.f32 %v4468, %v4469
    %v4471 = vsel %vm4309, %v3434, 0.0
    %v4472 = vadd.f32 %v4470, %v4471
    %v4473 = vsel %vm4309, %v3439, 0.0
    %v4474 = vadd.f32 %v4472, %v4473
    %v4475 = vsel %vm4309, %v3444, 0.0
    %v4476 = vadd.f32 %v4474, %v4475
    %v4477 = vsel %vm4309, %v3449, 0.0
    %v4478 = vadd.f32 %v4476, %v4477
    %v4479 = vsel %vm4309, %v3454, 0.0
    %v4480 = vadd.f32 %v4478, %v4479
    %v4481 = vsel %vm4309, %v3459, 0.0
    %v4482 = vadd.f32 %v4480, %v4481
    %v4483 = vsel %vm4309, %v3464, 0.0
    %v4484 = vadd.f32 %v4482, %v4483
    %v4485 = vsel %vm4309, %v3469, 0.0
    %v4486 = vadd.f32 %v4484, %v4485
    %v4487 = vsel %vm4309, %v3474, 0.0
    %v4488 = vadd.f32 %v4486, %v4487
    %v4489 = vsel %vm4309, %v3479, 0.0
    %v4490 = vadd.f32 %v4488, %v4489
    %v4491 = vsel %vm4309, %v3484, 0.0
    %v4492 = vadd.f32 %v4490, %v4491
    %v4493 = vsel %vm4309, %v3489, 0.0
    %v4494 = vadd.f32 %v4492, %v4493
    %v4495 = vsel %vm4309, %v3494, 0.0
    %v4496 = vadd.f32 %v4494, %v4495
    %v4497 = vsel %vm4309, %v3499, 0.0
    %v4498 = vadd.f32 %v4496, %v4497
    %v4499 = vsel %vm4309, %v3504, 0.0
    %v4500 = vadd.f32 %v4498, %v4499
    %v4501 = vsel %vm4309, %v3509, 0.0
    %v4502 = vadd.f32 %v4500, %v4501
    %v4503 = vsel %vm4309, %v3514, 0.0
    %v4504 = vadd.f32 %v4502, %v4503
    %v4505 = vsel %vm4309, %v3519, 0.0
    %v4506 = vadd.f32 %v4504, %v4505
    %v4507 = vmax.f32 %v2530, 0.0
    %v4508 = vmax.f32 %v2531, 0.0
    %v4509 = vmax.f32 %v2532, 0.0
    %v4510 = vmax.f32 %v2533, 0.0
    %v4511 = vmax.f32 %v2534, 0.0
    %v4512 = vmax.f32 %v2535, 0.0
    %v4513 = vmax.f32 %v2536, 0.0
    %v4514 = vmax.f32 %v2537, 0.0
    %v4515 = vmax.f32 %v2538, 0.0
    %v4516 = vmax.f32 %v2539, 0.0
    %v4517 = vmax.f32 %v2540, 0.0
    %v4518 = vmax.f32 %v2541, 0.0
    %v4519 = vmax.f32 %v2542, 0.0
    %v4520 = vmax.f32 %v2543, 0.0
    %v4521 = vmax.f32 %v2544, 0.0
    %v4522 = vmax.f32 %v2545, 0.0
    %v4523 = vmax.f32 %v2546, 0.0
    %v4524 = vmax.f32 %v2547, 0.0
    %v4525 = vmax.f32 %v2548, 0.0
    %v4526 = vmax.f32 %v2549, 0.0
    %v4527 = vmax.f32 %v2550, 0.0
    %v4528 = vmax.f32 %v2551, 0.0
    %v4529 = vmax.f32 %v2552, 0.0
    %v4530 = vmax.f32 %v2553, 0.0
    %v4531 = vmax.f32 %v2554, 0.0
    %v4532 = vmax.f32 %v2555, 0.0
    %v4533 = vmax.f32 %v2556, 0.0
    %v4534 = vmax.f32 %v2557, 0.0
    %v4535 = vmax.f32 %v2558, 0.0
    %v4536 = vmax.f32 %v2559, 0.0
    %v4537 = vmax.f32 %v2560, 0.0
    %v4538 = vmax.f32 %v2561, 0.0
    %v4539 = vmax.f32 %v2562, 0.0
    %v4540 = vmax.f32 %v2563, 0.0
    %v4541 = vmax.f32 %v2564, 0.0
    %v4542 = vmax.f32 %v2565, 0.0
    %v4543 = vmax.f32 %v2566, 0.0
    %v4544 = vmax.f32 %v2567, 0.0
    %v4545 = vmax.f32 %v2568, 0.0
    %v4546 = vmax.f32 %v2569, 0.0
    %v4547 = vmax.f32 %v2570, 0.0
    %v4548 = vmax.f32 %v2571, 0.0
    %v4549 = vmax.f32 %v2572, 0.0
    %v4550 = vmax.f32 %v2573, 0.0
    %v4551 = vmax.f32 %v2574, 0.0
    %v4552 = vmax.f32 %v2575, 0.0
    %v4553 = vmax.f32 %v2576, 0.0
    %v4554 = vmax.f32 %v2577, 0.0
    %v4555 = vmax.f32 %v2578, 0.0
    %v4556 = vmax.f32 %v2579, 0.0
    %v4557 = vmax.f32 %v2580, 0.0
    %v4558 = vmax.f32 %v2581, 0.0
    %v4559 = vmax.f32 %v2582, 0.0
    %v4560 = vmax.f32 %v2583, 0.0
    %v4561 = vmax.f32 %v2584, 0.0
    %v4562 = vmax.f32 %v2585, 0.0
    %v4563 = vmax.f32 %v2586, 0.0
    %v4564 = vmax.f32 %v2587, 0.0
    %v4565 = vmax.f32 %v2588, 0.0
    %v4566 = vmax.f32 %v2589, 0.0
    %v4567 = vmax.f32 %v2590, 0.0
    %v4568 = vmax.f32 %v2591, 0.0
    %v4569 = vmax.f32 %v2592, 0.0
    %v4570 = vmax.f32 %v2593, 0.0
    %v4571 = vmax.f32 %v2594, 0.0
    %v4572 = vmax.f32 %v2595, 0.0
    %v4573 = vmax.f32 %v2596, 0.0
    %v4574 = vmax.f32 %v2597, 0.0
    %v4575 = vmax.f32 %v2598, 0.0
    %v4576 = vmax.f32 %v2599, 0.0
    %v4577 = vmax.f32 %v2600, 0.0
    %v4578 = vmax.f32 %v2601, 0.0
    %v4579 = vmax.f32 %v2602, 0.0
    %v4580 = vmax.f32 %v2603, 0.0
    %v4581 = vmax.f32 %v2604, 0.0
    %v4582 = vmax.f32 %v2605, 0.0
    %v4583 = vmax.f32 %v2606, 0.0
    %v4584 = vmax.f32 %v2607, 0.0
    %v4585 = vmax.f32 %v2608, 0.0
    %v4586 = vmax.f32 %v2609, 0.0
    %v4587 = vmax.f32 %v2610, 0.0
    %v4588 = vmax.f32 %v2611, 0.0
    %v4589 = vmax.f32 %v2612, 0.0
    %v4590 = vmax.f32 %v2613, 0.0
    %v4591 = vmax.f32 %v2614, 0.0
    %v4592 = vmax.f32 %v2615, 0.0
    %v4593 = vmax.f32 %v2616, 0.0
    %v4594 = vmax.f32 %v2617, 0.0
    %v4595 = vmax.f32 %v2618, 0.0
    %v4596 = vmax.f32 %v2619, 0.0
    %v4597 = vmax.f32 %v2620, 0.0
    %v4598 = vmax.f32 %v2621, 0.0
    %v4599 = vmax.f32 %v2622, 0.0
    %v4600 = vmax.f32 %v2623, 0.0
    %v4601 = vmax.f32 %v2624, 0.0
    %v4602 = vmax.f32 %v2625, 0.0
    %v4603 = vmax.f32 %v2626, 0.0
    %v4604 = vmax.f32 %v2627, 0.0
    %v4605 = vmax.f32 %v2628, 0.0
    %v4606 = vmax.f32 %v2629, 0.0
    %v4607 = vmax.f32 %v2630, 0.0
    %v4608 = vmax.f32 %v2631, 0.0
    %v4609 = vmax.f32 %v2632, 0.0
    %v4610 = vmax.f32 %v2633, 0.0
    %v4611 = vmax.f32 %v2634, 0.0
    %v4612 = vmax.f32 %v2635, 0.0
    %v4613 = vmax.f32 %v2636, 0.0
    %v4614 = vmax.f32 %v2637, 0.0
    %v4615 = vmax.f32 %v2638, 0.0
    %v4616 = vmax.f32 %v2639, 0.0
    %v4617 = vmax.f32 %v2640, 0.0
    %v4618 = vmax.f32 %v2641, 0.0
    %v4619 = vmax.f32 %v2642, 0.0
    %v4620 = vmax.f32 %v2643, 0.0
    %v4621 = vmax.f32 %v2644, 0.0
    %v4622 = vmax.f32 %v2645, 0.0
    %v4623 = vmax.f32 %v2646, 0.0
    %v4624 = vmax.f32 %v2647, 0.0
    %v4625 = vmax.f32 %v2648, 0.0
    %v4626 = vmax.f32 %v2649, 0.0
    %v4627 = vmax.f32 %v2650, 0.0
    %v4628 = vmax.f32 %v2651, 0.0
    %v4629 = vmax.f32 %v2652, 0.0
    %v4630 = vmax.f32 %v2653, 0.0
    %v4631 = vmax.f32 %v2654, 0.0
    %v4632 = vmax.f32 %v2655, 0.0
    %v4633 = vmax.f32 %v2656, 0.0
    %v4634 = vmax.f32 %v2657, 0.0
    %v4635 = vmax.f32 %v2658, 0.0
    %v4636 = vmax.f32 %v2659, 0.0
    %v4637 = vmax.f32 %v2660, 0.0
    %v4638 = vmax.f32 %v2661, 0.0
    %v4639 = vmax.f32 %v2662, 0.0
    %v4640 = vmax.f32 %v2663, 0.0
    %v4641 = vmax.f32 %v2664, 0.0
    %v4642 = vmax.f32 %v2665, 0.0
    %v4643 = vmax.f32 %v2666, 0.0
    %v4644 = vmax.f32 %v2667, 0.0
    %v4645 = vmax.f32 %v2668, 0.0
    %v4646 = vmax.f32 %v2669, 0.0
    %v4647 = vmax.f32 %v2670, 0.0
    %v4648 = vmax.f32 %v2671, 0.0
    %v4649 = vmax.f32 %v2672, 0.0
    %v4650 = vmax.f32 %v2673, 0.0
    %v4651 = vmax.f32 %v2674, 0.0
    %v4652 = vmax.f32 %v2675, 0.0
    %v4653 = vmax.f32 %v2676, 0.0
    %v4654 = vmax.f32 %v2677, 0.0
    %v4655 = vmax.f32 %v2678, 0.0
    %v4656 = vmax.f32 %v2679, 0.0
    %v4657 = vmax.f32 %v2680, 0.0
    %v4658 = vmax.f32 %v2681, 0.0
    %v4659 = vmax.f32 %v2682, 0.0
    %v4660 = vmax.f32 %v2683, 0.0
    %v4661 = vmax.f32 %v2684, 0.0
    %v4662 = vmax.f32 %v2685, 0.0
    %v4663 = vmax.f32 %v2686, 0.0
    %v4664 = vmax.f32 %v2687, 0.0
    %v4665 = vmax.f32 %v2688, 0.0
    %v4666 = vmax.f32 %v2689, 0.0
    %v4667 = vmax.f32 %v2690, 0.0
    %v4668 = vmax.f32 %v2691, 0.0
    %v4669 = vmax.f32 %v2692, 0.0
    %v4670 = vmax.f32 %v2693, 0.0
    %v4671 = vmax.f32 %v2694, 0.0
    %v4672 = vmax.f32 %v2695, 0.0
    %v4673 = vmax.f32 %v2696, 0.0
    %v4674 = vmax.f32 %v2697, 0.0
    %v4675 = vmax.f32 %v2698, 0.0
    %v4676 = vmax.f32 %v2699, 0.0
    %v4677 = vmax.f32 %v2700, 0.0
    %v4678 = vmax.f32 %v2701, 0.0
    %v4679 = vmax.f32 %v2702, 0.0
    %v4680 = vmax.f32 %v2703, 0.0
    %v4681 = vmax.f32 %v2704, 0.0
    %v4682 = vmax.f32 %v2705, 0.0
    %v4683 = vmax.f32 %v2706, 0.0
    %v4684 = vmax.f32 %v2707, 0.0
    %v4685 = vmax.f32 %v2708, 0.0
    %v4686 = vmax.f32 %v2709, 0.0
    %v4687 = vmax.f32 %v2710, 0.0
    %v4688 = vmax.f32 %v2711, 0.0
    %v4689 = vmax.f32 %v2712, 0.0
    %v4690 = vmax.f32 %v2713, 0.0
    %v4691 = vmax.f32 %v2714, 0.0
    %v4692 = vmax.f32 %v2715, 0.0
    %v4693 = vmax.f32 %v2716, 0.0
    %v4694 = vmax.f32 %v2717, 0.0
    %v4695 = vmax.f32 %v2718, 0.0
    %v4696 = vmax.f32 %v2719, 0.0
    %v4697 = vmax.f32 %v2720, 0.0
    %v4698 = vmax.f32 %v2721, 0.0
    %v4699 = vmax.f32 %v2722, 0.0
    %v4700 = vmax.f32 %v2723, 0.0
    %v4701 = vmax.f32 %v2724, 0.0
    %v4702 = vmax.f32 %v2725, 0.0
    %v4703 = vmax.f32 %v2726, 0.0
    %v4704 = vmax.f32 %v2727, 0.0
    %v4705 = vmax.f32 %v2728, 0.0
    %v4706 = vmax.f32 %v2729, 0.0
    %v4707 = vmax.f32 %v2730, 0.0
    %v4708 = vmax.f32 %v2731, 0.0
    %v4709 = vmax.f32 %v2732, 0.0
    %v4710 = vmax.f32 %v2733, 0.0
    %v4711 = vmax.f32 %v2734, 0.0
    %v4712 = vmax.f32 %v2735, 0.0
    %v4713 = vmax.f32 %v2736, 0.0
    %v4714 = vmax.f32 %v2737, 0.0
    %v4715 = vmax.f32 %v2738, 0.0
    %v4716 = vmax.f32 %v2739, 0.0
    %v4717 = vmax.f32 %v2740, 0.0
    %v4718 = vmax.f32 %v2741, 0.0
    %v4719 = vmax.f32 %v2742, 0.0
    %v4720 = vmax.f32 %v2743, 0.0
    %v4721 = vmax.f32 %v2744, 0.0
    %v4722 = vmax.f32 %v2745, 0.0
    %v4723 = vmax.f32 %v2746, 0.0
    %v4724 = vmax.f32 %v2747, 0.0
    %v4725 = vmax.f32 %v2748, 0.0
    %v4726 = vmax.f32 %v2749, 0.0
    %v4727 = vmax.f32 %v2750, 0.0
    %v4728 = vmax.f32 %v2751, 0.0
    %v4729 = vmax.f32 %v2752, 0.0
    %v4730 = vmax.f32 %v2753, 0.0
    %v4731 = vmax.f32 %v2754, 0.0
    %v4732 = vmax.f32 %v2755, 0.0
    %v4733 = vmax.f32 %v2756, 0.0
    %v4734 = vmax.f32 %v2757, 0.0
    %v4735 = vmax.f32 %v2758, 0.0
    %v4736 = vmax.f32 %v2759, 0.0
    %v4737 = vmax.f32 %v2760, 0.0
    %v4738 = vmax.f32 %v2761, 0.0
    %v4739 = vmax.f32 %v2762, 0.0
    %v4740 = vmax.f32 %v2763, 0.0
    %v4741 = vmax.f32 %v2764, 0.0
    %v4742 = vmax.f32 %v2765, 0.0
    %v4743 = vmax.f32 %v2766, 0.0
    %v4744 = vmax.f32 %v2767, 0.0
    %v4745 = vmax.f32 %v2768, 0.0
    %v4746 = vmax.f32 %v2769, 0.0
    %v4747 = vmax.f32 %v2770, 0.0
    %v4748 = vmax.f32 %v2771, 0.0
    %v4749 = vmax.f32 %v2772, 0.0
    %v4750 = vmax.f32 %v2773, 0.0
    %v4751 = vmax.f32 %v2774, 0.0
    %v4752 = vmax.f32 %v2775, 0.0
    %v4753 = vmax.f32 %v2776, 0.0
    %v4754 = vmax.f32 %v2777, 0.0
    %v4755 = vmax.f32 %v2778, 0.0
    %v4756 = vmax.f32 %v2779, 0.0
    %v4757 = vmax.f32 %v2780, 0.0
    %v4758 = vmax.f32 %v2781, 0.0
    %v4759 = vmax.f32 %v2782, 0.0
    %v4760 = vmax.f32 %v2783, 0.0
    %v4761 = vmax.f32 %v2784, 0.0
    %v4762 = vmax.f32 %v2785, 0.0
    %v4763 = vmax.f32 %v2786, 0.0
    %v4764 = vmax.f32 %v2787, 0.0
    %v4765 = vmax.f32 %v2788, 0.0
    %v4766 = vmax.f32 %v2789, 0.0
    %v4767 = vmax.f32 %v2790, 0.0
    %v4768 = vmax.f32 %v2791, 0.0
    %v4769 = vmax.f32 %v2792, 0.0
    %v4770 = vmax.f32 %v2793, 0.0
    %v4771 = vmax.f32 %v2794, 0.0
    %v4772 = vmax.f32 %v2795, 0.0
    %v4773 = vmax.f32 %v2796, 0.0
    %v4774 = vmax.f32 %v2797, 0.0
    %v4775 = vmax.f32 %v2798, 0.0
    %v4776 = vmax.f32 %v2799, 0.0
    %v4777 = vmax.f32 %v2800, 0.0
    %v4778 = vmax.f32 %v2801, 0.0
    %v4779 = vmax.f32 %v2802, 0.0
    %v4780 = vmax.f32 %v2803, 0.0
    %v4781 = vmax.f32 %v2804, 0.0
    %v4782 = vmax.f32 %v2805, 0.0
    %v4783 = vmax.f32 %v2806, 0.0
    %v4784 = vmax.f32 %v2807, 0.0
    %v4785 = vmax.f32 %v2808, 0.0
    %v4786 = vmax.f32 %v2809, 0.0
    %v4787 = vmax.f32 %v2810, 0.0
    %v4788 = vmax.f32 %v2811, 0.0
    %v4789 = vmax.f32 %v2812, 0.0
    %v4790 = vmax.f32 %v2813, 0.0
    %v4791 = vmax.f32 %v2814, 0.0
    %v4792 = vmax.f32 %v2815, 0.0
    %v4793 = vmax.f32 %v2816, 0.0
    %v4794 = vmax.f32 %v2817, 0.0
    %v4795 = vmax.f32 %v2818, 0.0
    %v4796 = vmax.f32 %v2819, 0.0
    %v4797 = vmax.f32 %v2820, 0.0
    %v4798 = vmax.f32 %v2821, 0.0
    %v4799 = vmax.f32 %v2822, 0.0
    %v4800 = vmax.f32 %v2823, 0.0
    %v4801 = vmax.f32 %v2824, 0.0
    %v4802 = vmax.f32 %v2825, 0.0
    %v4803 = vmax.f32 %v2826, 0.0
    %v4804 = vmax.f32 %v2827, 0.0
    %v4805 = vmax.f32 %v2828, 0.0
    %v4806 = vmax.f32 %v2829, 0.0
    %v4807 = vmax.f32 %v2830, 0.0
    %v4808 = vmax.f32 %v2831, 0.0
    %v4809 = vmax.f32 %v2832, 0.0
    %v4810 = vmax.f32 %v2833, 0.0
    %v4811 = vmax.f32 %v2834, 0.0
    %v4812 = vmax.f32 %v2835, 0.0
    %v4813 = vmax.f32 %v2836, 0.0
    %v4814 = vmax.f32 %v2837, 0.0
    %v4815 = vmax.f32 %v2838, 0.0
    %v4816 = vmax.f32 %v2839, 0.0
    %v4817 = vmax.f32 %v2840, 0.0
    %v4818 = vmax.f32 %v2841, 0.0
    %v4819 = vmax.f32 %v2842, 0.0
    %v4820 = vmax.f32 %v2843, 0.0
    %v4821 = vmax.f32 %v2844, 0.0
    %v4822 = vmax.f32 %v2845, 0.0
    %v4823 = vmax.f32 %v2846, 0.0
    %v4824 = vmax.f32 %v2847, 0.0
    %v4825 = vmax.f32 %v2848, 0.0
    %v4826 = vmax.f32 %v2849, 0.0
    %v4827 = vmax.f32 %v2850, 0.0
    %v4828 = vmax.f32 %v2851, 0.0
    %v4829 = vmax.f32 %v2852, 0.0
    %v4830 = vmax.f32 %v2853, 0.0
    %v4831 = vmax.f32 %v2854, 0.0
    %v4832 = vmax.f32 %v2855, 0.0
    %v4833 = vmax.f32 %v2856, 0.0
    %v4834 = vmax.f32 %v2857, 0.0
    %v4835 = vmax.f32 %v2858, 0.0
    %v4836 = vmax.f32 %v2859, 0.0
    %v4837 = vmax.f32 %v2860, 0.0
    %v4838 = vmax.f32 %v2861, 0.0
    %v4839 = vmax.f32 %v2862, 0.0
    %v4840 = vmax.f32 %v2863, 0.0
    %v4841 = vmax.f32 %v2864, 0.0
    %v4842 = vmax.f32 %v2865, 0.0
    %v4843 = vmax.f32 %v2866, 0.0
    %v4844 = vmax.f32 %v2867, 0.0
    %v4845 = vmax.f32 %v2868, 0.0
    %v4846 = vmax.f32 %v2869, 0.0
    %v4847 = vmax.f32 %v2870, 0.0
    %v4848 = vmax.f32 %v2871, 0.0
    %v4849 = vmax.f32 %v2872, 0.0
    %v4850 = vmax.f32 %v2873, 0.0
    %v4851 = vmax.f32 %v2874, 0.0
    %v4852 = vmax.f32 %v2875, 0.0
    %v4853 = vmax.f32 %v2876, 0.0
    %v4854 = vmax.f32 %v2877, 0.0
    %v4855 = vmax.f32 %v2878, 0.0
    %v4856 = vmax.f32 %v2879, 0.0
    %v4857 = vmax.f32 %v2880, 0.0
    %v4858 = vmax.f32 %v2881, 0.0
    %v4859 = vmax.f32 %v2882, 0.0
    %v4860 = vmax.f32 %v2883, 0.0
    %v4861 = vmax.f32 %v2884, 0.0
    %v4862 = vmax.f32 %v2885, 0.0
    %v4863 = vmax.f32 %v2886, 0.0
    %v4864 = vmax.f32 %v2887, 0.0
    %v4865 = vmax.f32 %v2888, 0.0
    %v4866 = vmax.f32 %v2889, 0.0
    %v4867 = vmax.f32 %v2890, 0.0
    %v4868 = vmax.f32 %v2891, 0.0
    %v4869 = vmax.f32 %v2892, 0.0
    %v4870 = vmax.f32 %v2893, 0.0
    %v4871 = vmax.f32 %v2894, 0.0
    %v4872 = vmax.f32 %v2895, 0.0
    %v4873 = vmax.f32 %v2896, 0.0
    %v4874 = vmax.f32 %v2897, 0.0
    %v4875 = vmax.f32 %v2898, 0.0
    %v4876 = vmax.f32 %v2899, 0.0
    %v4877 = vmax.f32 %v2900, 0.0
    %v4878 = vmax.f32 %v2901, 0.0
    %v4879 = vmax.f32 %v2902, 0.0
    %v4880 = vmax.f32 %v2903, 0.0
    %v4881 = vmax.f32 %v2904, 0.0
    %v4882 = vmax.f32 %v2905, 0.0
    %v4883 = vmax.f32 %v2906, 0.0
    %v4884 = vmax.f32 %v2907, 0.0
    %v4885 = vmax.f32 %v2908, 0.0
    %v4886 = vmax.f32 %v2909, 0.0
    %v4887 = vmax.f32 %v2910, 0.0
    %v4888 = vmax.f32 %v2911, 0.0
    %v4889 = vmax.f32 %v2912, 0.0
    %v4890 = vmax.f32 %v2913, 0.0
    %v4891 = vmax.f32 %v2914, 0.0
    %v4892 = vmax.f32 %v2915, 0.0
    %v4893 = vmax.f32 %v2916, 0.0
    %v4894 = vmax.f32 %v2917, 0.0
    %v4895 = vmax.f32 %v2918, 0.0
    %v4896 = vmax.f32 %v2919, 0.0
    %v4897 = vmax.f32 %v2920, 0.0
    %v4898 = vmax.f32 %v2921, 0.0
    %v4899 = vmax.f32 %v2922, 0.0
    %v4900 = vmax.f32 %v2923, 0.0
    %v4901 = vmax.f32 %v2924, 0.0
    %v4902 = vmax.f32 %v2925, 0.0
    %v4903 = vmax.f32 %v2926, 0.0
    %v4904 = vmax.f32 %v2927, 0.0
    %v4905 = vmax.f32 %v2928, 0.0
    %v4906 = vmax.f32 %v2929, 0.0
    %v4907 = vmax.f32 %v2930, 0.0
    %v4908 = vmax.f32 %v2931, 0.0
    %v4909 = vmax.f32 %v2932, 0.0
    %v4910 = vmax.f32 %v2933, 0.0
    %v4911 = vmax.f32 %v2934, 0.0
    %v4912 = vmax.f32 %v2935, 0.0
    %v4913 = vmax.f32 %v2936, 0.0
    %v4914 = vmax.f32 %v2937, 0.0
    %v4915 = vmax.f32 %v2938, 0.0
    %v4916 = vmax.f32 %v2939, 0.0
    %v4917 = vmax.f32 %v2940, 0.0
    %v4918 = vmax.f32 %v2941, 0.0
    %v4919 = vmax.f32 %v2942, 0.0
    %v4920 = vmax.f32 %v2943, 0.0
    %v4921 = vmax.f32 %v2944, 0.0
    %v4922 = vmax.f32 %v2945, 0.0
    %v4923 = vmax.f32 %v2946, 0.0
    %v4924 = vmax.f32 %v2947, 0.0
    %v4925 = vmax.f32 %v2948, 0.0
    %v4926 = vmax.f32 %v2949, 0.0
    %v4927 = vmax.f32 %v2950, 0.0
    %v4928 = vmax.f32 %v2951, 0.0
    %v4929 = vmax.f32 %v2952, 0.0
    %v4930 = vmax.f32 %v2953, 0.0
    %v4931 = vmax.f32 %v2954, 0.0
    %v4932 = vmax.f32 %v2955, 0.0
    %v4933 = vmax.f32 %v2956, 0.0
    %v4934 = vmax.f32 %v2957, 0.0
    %v4935 = vmax.f32 %v2958, 0.0
    %v4936 = vmax.f32 %v2959, 0.0
    %v4937 = vmax.f32 %v2960, 0.0
    %v4938 = vmax.f32 %v2961, 0.0
    %v4939 = vmax.f32 %v2962, 0.0
    %v4940 = vmax.f32 %v2963, 0.0
    %v4941 = vmax.f32 %v2964, 0.0
    %v4942 = vmax.f32 %v2965, 0.0
    %v4943 = vmax.f32 %v2966, 0.0
    %v4944 = vmax.f32 %v2967, 0.0
    %v4945 = vmax.f32 %v2968, 0.0
    %v4946 = vmax.f32 %v2969, 0.0
    %v4947 = vmax.f32 %v2970, 0.0
    %v4948 = vmax.f32 %v2971, 0.0
    %v4949 = vmax.f32 %v2972, 0.0
    %v4950 = vmax.f32 %v2973, 0.0
    %v4951 = vmax.f32 %v2974, 0.0
    %v4952 = vmax.f32 %v2975, 0.0
    %v4953 = vmax.f32 %v2976, 0.0
    %v4954 = vmax.f32 %v2977, 0.0
    %v4955 = vmax.f32 %v2978, 0.0
    %v4956 = vmax.f32 %v2979, 0.0
    %v4957 = vmax.f32 %v2980, 0.0
    %v4958 = vmax.f32 %v2981, 0.0
    %v4959 = vmax.f32 %v2982, 0.0
    %v4960 = vmax.f32 %v2983, 0.0
    %v4961 = vmax.f32 %v2984, 0.0
    %v4962 = vmax.f32 %v2985, 0.0
    %v4963 = vmax.f32 %v2986, 0.0
    %v4964 = vmax.f32 %v2987, 0.0
    %v4965 = vmax.f32 %v2988, 0.0
    %v4966 = vmax.f32 %v2989, 0.0
    %v4967 = vmax.f32 %v2990, 0.0
    %v4968 = vmax.f32 %v2991, 0.0
    %v4969 = vmax.f32 %v2992, 0.0
    %v4970 = vmax.f32 %v2993, 0.0
    %v4971 = vmax.f32 %v2994, 0.0
    %v4972 = vmax.f32 %v2995, 0.0
    %v4973 = vmax.f32 %v2996, 0.0
    %v4974 = vmax.f32 %v2997, 0.0
    %v4975 = vmax.f32 %v2998, 0.0
    %v4976 = vmax.f32 %v2999, 0.0
    %v4977 = vmax.f32 %v3000, 0.0
    %v4978 = vmax.f32 %v3001, 0.0
    %v4979 = vmax.f32 %v3002, 0.0
    %v4980 = vmax.f32 %v3003, 0.0
    %v4981 = vmax.f32 %v3004, 0.0
    %v4982 = vmax.f32 %v3005, 0.0
    %v4983 = vmax.f32 %v3006, 0.0
    %v4984 = vmax.f32 %v3007, 0.0
    %v4985 = vmax.f32 %v3008, 0.0
    %v4986 = vmax.f32 %v3009, 0.0
    %v4987 = vmax.f32 %v3010, 0.0
    %v4988 = vmax.f32 %v3011, 0.0
    %v4989 = vmax.f32 %v3012, 0.0
    %v4990 = vmax.f32 %v3013, 0.0
    %v4991 = vmax.f32 %v3014, 0.0
    %v4992 = vmax.f32 %v3015, 0.0
    %v4993 = vmax.f32 %v3016, 0.0
    %v4994 = vmax.f32 %v3017, 0.0
    %v4995 = vmax.f32 %v3018, 0.0
    %v4996 = vmax.f32 %v3019, 0.0
    %v4997 = vmax.f32 %v3020, 0.0
    %v4998 = vmax.f32 %v3021, 0.0
    %v4999 = vmax.f32 %v3022, 0.0
    %v5000 = vmax.f32 %v3023, 0.0
    %v5001 = vmax.f32 %v3024, 0.0
    %v5002 = vsel %vm3520, %v4507, 0.0
    %v5003 = vsel %vm3520, %v4512, 0.0
    %v5004 = vadd.f32 %v5002, %v5003
    %v5005 = vsel %vm3520, %v4517, 0.0
    %v5006 = vadd.f32 %v5004, %v5005
    %v5007 = vsel %vm3520, %v4522, 0.0
    %v5008 = vadd.f32 %v5006, %v5007
    %v5009 = vsel %vm3520, %v4527, 0.0
    %v5010 = vadd.f32 %v5008, %v5009
    %v5011 = vsel %vm3520, %v4532, 0.0
    %v5012 = vadd.f32 %v5010, %v5011
    %v5013 = vsel %vm3520, %v4537, 0.0
    %v5014 = vadd.f32 %v5012, %v5013
    %v5015 = vsel %vm3520, %v4542, 0.0
    %v5016 = vadd.f32 %v5014, %v5015
    %v5017 = vsel %vm3520, %v4547, 0.0
    %v5018 = vadd.f32 %v5016, %v5017
    %v5019 = vsel %vm3520, %v4552, 0.0
    %v5020 = vadd.f32 %v5018, %v5019
    %v5021 = vsel %vm3520, %v4557, 0.0
    %v5022 = vadd.f32 %v5020, %v5021
    %v5023 = vsel %vm3520, %v4562, 0.0
    %v5024 = vadd.f32 %v5022, %v5023
    %v5025 = vsel %vm3520, %v4567, 0.0
    %v5026 = vadd.f32 %v5024, %v5025
    %v5027 = vsel %vm3520, %v4572, 0.0
    %v5028 = vadd.f32 %v5026, %v5027
    %v5029 = vsel %vm3520, %v4577, 0.0
    %v5030 = vadd.f32 %v5028, %v5029
    %v5031 = vsel %vm3520, %v4582, 0.0
    %v5032 = vadd.f32 %v5030, %v5031
    %v5033 = vsel %vm3520, %v4587, 0.0
    %v5034 = vadd.f32 %v5032, %v5033
    %v5035 = vsel %vm3520, %v4592, 0.0
    %v5036 = vadd.f32 %v5034, %v5035
    %v5037 = vsel %vm3520, %v4597, 0.0
    %v5038 = vadd.f32 %v5036, %v5037
    %v5039 = vsel %vm3520, %v4602, 0.0
    %v5040 = vadd.f32 %v5038, %v5039
    %v5041 = vsel %vm3520, %v4607, 0.0
    %v5042 = vadd.f32 %v5040, %v5041
    %v5043 = vsel %vm3520, %v4612, 0.0
    %v5044 = vadd.f32 %v5042, %v5043
    %v5045 = vsel %vm3520, %v4617, 0.0
    %v5046 = vadd.f32 %v5044, %v5045
    %v5047 = vsel %vm3520, %v4622, 0.0
    %v5048 = vadd.f32 %v5046, %v5047
    %v5049 = vsel %vm3520, %v4627, 0.0
    %v5050 = vadd.f32 %v5048, %v5049
    %v5051 = vsel %vm3520, %v4632, 0.0
    %v5052 = vadd.f32 %v5050, %v5051
    %v5053 = vsel %vm3520, %v4637, 0.0
    %v5054 = vadd.f32 %v5052, %v5053
    %v5055 = vsel %vm3520, %v4642, 0.0
    %v5056 = vadd.f32 %v5054, %v5055
    %v5057 = vsel %vm3520, %v4647, 0.0
    %v5058 = vadd.f32 %v5056, %v5057
    %v5059 = vsel %vm3520, %v4652, 0.0
    %v5060 = vadd.f32 %v5058, %v5059
    %v5061 = vsel %vm3520, %v4657, 0.0
    %v5062 = vadd.f32 %v5060, %v5061
    %v5063 = vsel %vm3520, %v4662, 0.0
    %v5064 = vadd.f32 %v5062, %v5063
    %v5065 = vsel %vm3520, %v4667, 0.0
    %v5066 = vadd.f32 %v5064, %v5065
    %v5067 = vsel %vm3520, %v4672, 0.0
    %v5068 = vadd.f32 %v5066, %v5067
    %v5069 = vsel %vm3520, %v4677, 0.0
    %v5070 = vadd.f32 %v5068, %v5069
    %v5071 = vsel %vm3520, %v4682, 0.0
    %v5072 = vadd.f32 %v5070, %v5071
    %v5073 = vsel %vm3520, %v4687, 0.0
    %v5074 = vadd.f32 %v5072, %v5073
    %v5075 = vsel %vm3520, %v4692, 0.0
    %v5076 = vadd.f32 %v5074, %v5075
    %v5077 = vsel %vm3520, %v4697, 0.0
    %v5078 = vadd.f32 %v5076, %v5077
    %v5079 = vsel %vm3520, %v4702, 0.0
    %v5080 = vadd.f32 %v5078, %v5079
    %v5081 = vsel %vm3520, %v4707, 0.0
    %v5082 = vadd.f32 %v5080, %v5081
    %v5083 = vsel %vm3520, %v4712, 0.0
    %v5084 = vadd.f32 %v5082, %v5083
    %v5085 = vsel %vm3520, %v4717, 0.0
    %v5086 = vadd.f32 %v5084, %v5085
    %v5087 = vsel %vm3520, %v4722, 0.0
    %v5088 = vadd.f32 %v5086, %v5087
    %v5089 = vsel %vm3520, %v4727, 0.0
    %v5090 = vadd.f32 %v5088, %v5089
    %v5091 = vsel %vm3520, %v4732, 0.0
    %v5092 = vadd.f32 %v5090, %v5091
    %v5093 = vsel %vm3520, %v4737, 0.0
    %v5094 = vadd.f32 %v5092, %v5093
    %v5095 = vsel %vm3520, %v4742, 0.0
    %v5096 = vadd.f32 %v5094, %v5095
    %v5097 = vsel %vm3520, %v4747, 0.0
    %v5098 = vadd.f32 %v5096, %v5097
    %v5099 = vsel %vm3520, %v4752, 0.0
    %v5100 = vadd.f32 %v5098, %v5099
    %v5101 = vsel %vm3520, %v4757, 0.0
    %v5102 = vadd.f32 %v5100, %v5101
    %v5103 = vsel %vm3520, %v4762, 0.0
    %v5104 = vadd.f32 %v5102, %v5103
    %v5105 = vsel %vm3520, %v4767, 0.0
    %v5106 = vadd.f32 %v5104, %v5105
    %v5107 = vsel %vm3520, %v4772, 0.0
    %v5108 = vadd.f32 %v5106, %v5107
    %v5109 = vsel %vm3520, %v4777, 0.0
    %v5110 = vadd.f32 %v5108, %v5109
    %v5111 = vsel %vm3520, %v4782, 0.0
    %v5112 = vadd.f32 %v5110, %v5111
    %v5113 = vsel %vm3520, %v4787, 0.0
    %v5114 = vadd.f32 %v5112, %v5113
    %v5115 = vsel %vm3520, %v4792, 0.0
    %v5116 = vadd.f32 %v5114, %v5115
    %v5117 = vsel %vm3520, %v4797, 0.0
    %v5118 = vadd.f32 %v5116, %v5117
    %v5119 = vsel %vm3520, %v4802, 0.0
    %v5120 = vadd.f32 %v5118, %v5119
    %v5121 = vsel %vm3520, %v4807, 0.0
    %v5122 = vadd.f32 %v5120, %v5121
    %v5123 = vsel %vm3520, %v4812, 0.0
    %v5124 = vadd.f32 %v5122, %v5123
    %v5125 = vsel %vm3520, %v4817, 0.0
    %v5126 = vadd.f32 %v5124, %v5125
    %v5127 = vsel %vm3520, %v4822, 0.0
    %v5128 = vadd.f32 %v5126, %v5127
    %v5129 = vsel %vm3520, %v4827, 0.0
    %v5130 = vadd.f32 %v5128, %v5129
    %v5131 = vsel %vm3520, %v4832, 0.0
    %v5132 = vadd.f32 %v5130, %v5131
    %v5133 = vsel %vm3520, %v4837, 0.0
    %v5134 = vadd.f32 %v5132, %v5133
    %v5135 = vsel %vm3520, %v4842, 0.0
    %v5136 = vadd.f32 %v5134, %v5135
    %v5137 = vsel %vm3520, %v4847, 0.0
    %v5138 = vadd.f32 %v5136, %v5137
    %v5139 = vsel %vm3520, %v4852, 0.0
    %v5140 = vadd.f32 %v5138, %v5139
    %v5141 = vsel %vm3520, %v4857, 0.0
    %v5142 = vadd.f32 %v5140, %v5141
    %v5143 = vsel %vm3520, %v4862, 0.0
    %v5144 = vadd.f32 %v5142, %v5143
    %v5145 = vsel %vm3520, %v4867, 0.0
    %v5146 = vadd.f32 %v5144, %v5145
    %v5147 = vsel %vm3520, %v4872, 0.0
    %v5148 = vadd.f32 %v5146, %v5147
    %v5149 = vsel %vm3520, %v4877, 0.0
    %v5150 = vadd.f32 %v5148, %v5149
    %v5151 = vsel %vm3520, %v4882, 0.0
    %v5152 = vadd.f32 %v5150, %v5151
    %v5153 = vsel %vm3520, %v4887, 0.0
    %v5154 = vadd.f32 %v5152, %v5153
    %v5155 = vsel %vm3520, %v4892, 0.0
    %v5156 = vadd.f32 %v5154, %v5155
    %v5157 = vsel %vm3520, %v4897, 0.0
    %v5158 = vadd.f32 %v5156, %v5157
    %v5159 = vsel %vm3520, %v4902, 0.0
    %v5160 = vadd.f32 %v5158, %v5159
    %v5161 = vsel %vm3520, %v4907, 0.0
    %v5162 = vadd.f32 %v5160, %v5161
    %v5163 = vsel %vm3520, %v4912, 0.0
    %v5164 = vadd.f32 %v5162, %v5163
    %v5165 = vsel %vm3520, %v4917, 0.0
    %v5166 = vadd.f32 %v5164, %v5165
    %v5167 = vsel %vm3520, %v4922, 0.0
    %v5168 = vadd.f32 %v5166, %v5167
    %v5169 = vsel %vm3520, %v4927, 0.0
    %v5170 = vadd.f32 %v5168, %v5169
    %v5171 = vsel %vm3520, %v4932, 0.0
    %v5172 = vadd.f32 %v5170, %v5171
    %v5173 = vsel %vm3520, %v4937, 0.0
    %v5174 = vadd.f32 %v5172, %v5173
    %v5175 = vsel %vm3520, %v4942, 0.0
    %v5176 = vadd.f32 %v5174, %v5175
    %v5177 = vsel %vm3520, %v4947, 0.0
    %v5178 = vadd.f32 %v5176, %v5177
    %v5179 = vsel %vm3520, %v4952, 0.0
    %v5180 = vadd.f32 %v5178, %v5179
    %v5181 = vsel %vm3520, %v4957, 0.0
    %v5182 = vadd.f32 %v5180, %v5181
    %v5183 = vsel %vm3520, %v4962, 0.0
    %v5184 = vadd.f32 %v5182, %v5183
    %v5185 = vsel %vm3520, %v4967, 0.0
    %v5186 = vadd.f32 %v5184, %v5185
    %v5187 = vsel %vm3520, %v4972, 0.0
    %v5188 = vadd.f32 %v5186, %v5187
    %v5189 = vsel %vm3520, %v4977, 0.0
    %v5190 = vadd.f32 %v5188, %v5189
    %v5191 = vsel %vm3520, %v4982, 0.0
    %v5192 = vadd.f32 %v5190, %v5191
    %v5193 = vsel %vm3520, %v4987, 0.0
    %v5194 = vadd.f32 %v5192, %v5193
    %v5195 = vsel %vm3520, %v4992, 0.0
    %v5196 = vadd.f32 %v5194, %v5195
    %v5197 = vsel %vm3520, %v4997, 0.0
    %v5198 = vadd.f32 %v5196, %v5197
    %v5199 = vsel %vm3520, %v4508, 0.0
    %v5200 = vsel %vm3520, %v4513, 0.0
    %v5201 = vadd.f32 %v5199, %v5200
    %v5202 = vsel %vm3520, %v4518, 0.0
    %v5203 = vadd.f32 %v5201, %v5202
    %v5204 = vsel %vm3520, %v4523, 0.0
    %v5205 = vadd.f32 %v5203, %v5204
    %v5206 = vsel %vm3520, %v4528, 0.0
    %v5207 = vadd.f32 %v5205, %v5206
    %v5208 = vsel %vm3520, %v4533, 0.0
    %v5209 = vadd.f32 %v5207, %v5208
    %v5210 = vsel %vm3520, %v4538, 0.0
    %v5211 = vadd.f32 %v5209, %v5210
    %v5212 = vsel %vm3520, %v4543, 0.0
    %v5213 = vadd.f32 %v5211, %v5212
    %v5214 = vsel %vm3520, %v4548, 0.0
    %v5215 = vadd.f32 %v5213, %v5214
    %v5216 = vsel %vm3520, %v4553, 0.0
    %v5217 = vadd.f32 %v5215, %v5216
    %v5218 = vsel %vm3520, %v4558, 0.0
    %v5219 = vadd.f32 %v5217, %v5218
    %v5220 = vsel %vm3520, %v4563, 0.0
    %v5221 = vadd.f32 %v5219, %v5220
    %v5222 = vsel %vm3520, %v4568, 0.0
    %v5223 = vadd.f32 %v5221, %v5222
    %v5224 = vsel %vm3520, %v4573, 0.0
    %v5225 = vadd.f32 %v5223, %v5224
    %v5226 = vsel %vm3520, %v4578, 0.0
    %v5227 = vadd.f32 %v5225, %v5226
    %v5228 = vsel %vm3520, %v4583, 0.0
    %v5229 = vadd.f32 %v5227, %v5228
    %v5230 = vsel %vm3520, %v4588, 0.0
    %v5231 = vadd.f32 %v5229, %v5230
    %v5232 = vsel %vm3520, %v4593, 0.0
    %v5233 = vadd.f32 %v5231, %v5232
    %v5234 = vsel %vm3520, %v4598, 0.0
    %v5235 = vadd.f32 %v5233, %v5234
    %v5236 = vsel %vm3520, %v4603, 0.0
    %v5237 = vadd.f32 %v5235, %v5236
    %v5238 = vsel %vm3520, %v4608, 0.0
    %v5239 = vadd.f32 %v5237, %v5238
    %v5240 = vsel %vm3520, %v4613, 0.0
    %v5241 = vadd.f32 %v5239, %v5240
    %v5242 = vsel %vm3520, %v4618, 0.0
    %v5243 = vadd.f32 %v5241, %v5242
    %v5244 = vsel %vm3520, %v4623, 0.0
    %v5245 = vadd.f32 %v5243, %v5244
    %v5246 = vsel %vm3520, %v4628, 0.0
    %v5247 = vadd.f32 %v5245, %v5246
    %v5248 = vsel %vm3520, %v4633, 0.0
    %v5249 = vadd.f32 %v5247, %v5248
    %v5250 = vsel %vm3520, %v4638, 0.0
    %v5251 = vadd.f32 %v5249, %v5250
    %v5252 = vsel %vm3520, %v4643, 0.0
    %v5253 = vadd.f32 %v5251, %v5252
    %v5254 = vsel %vm3520, %v4648, 0.0
    %v5255 = vadd.f32 %v5253, %v5254
    %v5256 = vsel %vm3520, %v4653, 0.0
    %v5257 = vadd.f32 %v5255, %v5256
    %v5258 = vsel %vm3520, %v4658, 0.0
    %v5259 = vadd.f32 %v5257, %v5258
    %v5260 = vsel %vm3520, %v4663, 0.0
    %v5261 = vadd.f32 %v5259, %v5260
    %v5262 = vsel %vm3520, %v4668, 0.0
    %v5263 = vadd.f32 %v5261, %v5262
    %v5264 = vsel %vm3520, %v4673, 0.0
    %v5265 = vadd.f32 %v5263, %v5264
    %v5266 = vsel %vm3520, %v4678, 0.0
    %v5267 = vadd.f32 %v5265, %v5266
    %v5268 = vsel %vm3520, %v4683, 0.0
    %v5269 = vadd.f32 %v5267, %v5268
    %v5270 = vsel %vm3520, %v4688, 0.0
    %v5271 = vadd.f32 %v5269, %v5270
    %v5272 = vsel %vm3520, %v4693, 0.0
    %v5273 = vadd.f32 %v5271, %v5272
    %v5274 = vsel %vm3520, %v4698, 0.0
    %v5275 = vadd.f32 %v5273, %v5274
    %v5276 = vsel %vm3520, %v4703, 0.0
    %v5277 = vadd.f32 %v5275, %v5276
    %v5278 = vsel %vm3520, %v4708, 0.0
    %v5279 = vadd.f32 %v5277, %v5278
    %v5280 = vsel %vm3520, %v4713, 0.0
    %v5281 = vadd.f32 %v5279, %v5280
    %v5282 = vsel %vm3520, %v4718, 0.0
    %v5283 = vadd.f32 %v5281, %v5282
    %v5284 = vsel %vm3520, %v4723, 0.0
    %v5285 = vadd.f32 %v5283, %v5284
    %v5286 = vsel %vm3520, %v4728, 0.0
    %v5287 = vadd.f32 %v5285, %v5286
    %v5288 = vsel %vm3520, %v4733, 0.0
    %v5289 = vadd.f32 %v5287, %v5288
    %v5290 = vsel %vm3520, %v4738, 0.0
    %v5291 = vadd.f32 %v5289, %v5290
    %v5292 = vsel %vm3520, %v4743, 0.0
    %v5293 = vadd.f32 %v5291, %v5292
    %v5294 = vsel %vm3520, %v4748, 0.0
    %v5295 = vadd.f32 %v5293, %v5294
    %v5296 = vsel %vm3520, %v4753, 0.0
    %v5297 = vadd.f32 %v5295, %v5296
    %v5298 = vsel %vm3520, %v4758, 0.0
    %v5299 = vadd.f32 %v5297, %v5298
    %v5300 = vsel %vm3520, %v4763, 0.0
    %v5301 = vadd.f32 %v5299, %v5300
    %v5302 = vsel %vm3520, %v4768, 0.0
    %v5303 = vadd.f32 %v5301, %v5302
    %v5304 = vsel %vm3520, %v4773, 0.0
    %v5305 = vadd.f32 %v5303, %v5304
    %v5306 = vsel %vm3520, %v4778, 0.0
    %v5307 = vadd.f32 %v5305, %v5306
    %v5308 = vsel %vm3520, %v4783, 0.0
    %v5309 = vadd.f32 %v5307, %v5308
    %v5310 = vsel %vm3520, %v4788, 0.0
    %v5311 = vadd.f32 %v5309, %v5310
    %v5312 = vsel %vm3520, %v4793, 0.0
    %v5313 = vadd.f32 %v5311, %v5312
    %v5314 = vsel %vm3520, %v4798, 0.0
    %v5315 = vadd.f32 %v5313, %v5314
    %v5316 = vsel %vm3520, %v4803, 0.0
    %v5317 = vadd.f32 %v5315, %v5316
    %v5318 = vsel %vm3520, %v4808, 0.0
    %v5319 = vadd.f32 %v5317, %v5318
    %v5320 = vsel %vm3520, %v4813, 0.0
    %v5321 = vadd.f32 %v5319, %v5320
    %v5322 = vsel %vm3520, %v4818, 0.0
    %v5323 = vadd.f32 %v5321, %v5322
    %v5324 = vsel %vm3520, %v4823, 0.0
    %v5325 = vadd.f32 %v5323, %v5324
    %v5326 = vsel %vm3520, %v4828, 0.0
    %v5327 = vadd.f32 %v5325, %v5326
    %v5328 = vsel %vm3520, %v4833, 0.0
    %v5329 = vadd.f32 %v5327, %v5328
    %v5330 = vsel %vm3520, %v4838, 0.0
    %v5331 = vadd.f32 %v5329, %v5330
    %v5332 = vsel %vm3520, %v4843, 0.0
    %v5333 = vadd.f32 %v5331, %v5332
    %v5334 = vsel %vm3520, %v4848, 0.0
    %v5335 = vadd.f32 %v5333, %v5334
    %v5336 = vsel %vm3520, %v4853, 0.0
    %v5337 = vadd.f32 %v5335, %v5336
    %v5338 = vsel %vm3520, %v4858, 0.0
    %v5339 = vadd.f32 %v5337, %v5338
    %v5340 = vsel %vm3520, %v4863, 0.0
    %v5341 = vadd.f32 %v5339, %v5340
    %v5342 = vsel %vm3520, %v4868, 0.0
    %v5343 = vadd.f32 %v5341, %v5342
    %v5344 = vsel %vm3520, %v4873, 0.0
    %v5345 = vadd.f32 %v5343, %v5344
    %v5346 = vsel %vm3520, %v4878, 0.0
    %v5347 = vadd.f32 %v5345, %v5346
    %v5348 = vsel %vm3520, %v4883, 0.0
    %v5349 = vadd.f32 %v5347, %v5348
    %v5350 = vsel %vm3520, %v4888, 0.0
    %v5351 = vadd.f32 %v5349, %v5350
    %v5352 = vsel %vm3520, %v4893, 0.0
    %v5353 = vadd.f32 %v5351, %v5352
    %v5354 = vsel %vm3520, %v4898, 0.0
    %v5355 = vadd.f32 %v5353, %v5354
    %v5356 = vsel %vm3520, %v4903, 0.0
    %v5357 = vadd.f32 %v5355, %v5356
    %v5358 = vsel %vm3520, %v4908, 0.0
    %v5359 = vadd.f32 %v5357, %v5358
    %v5360 = vsel %vm3520, %v4913, 0.0
    %v5361 = vadd.f32 %v5359, %v5360
    %v5362 = vsel %vm3520, %v4918, 0.0
    %v5363 = vadd.f32 %v5361, %v5362
    %v5364 = vsel %vm3520, %v4923, 0.0
    %v5365 = vadd.f32 %v5363, %v5364
    %v5366 = vsel %vm3520, %v4928, 0.0
    %v5367 = vadd.f32 %v5365, %v5366
    %v5368 = vsel %vm3520, %v4933, 0.0
    %v5369 = vadd.f32 %v5367, %v5368
    %v5370 = vsel %vm3520, %v4938, 0.0
    %v5371 = vadd.f32 %v5369, %v5370
    %v5372 = vsel %vm3520, %v4943, 0.0
    %v5373 = vadd.f32 %v5371, %v5372
    %v5374 = vsel %vm3520, %v4948, 0.0
    %v5375 = vadd.f32 %v5373, %v5374
    %v5376 = vsel %vm3520, %v4953, 0.0
    %v5377 = vadd.f32 %v5375, %v5376
    %v5378 = vsel %vm3520, %v4958, 0.0
    %v5379 = vadd.f32 %v5377, %v5378
    %v5380 = vsel %vm3520, %v4963, 0.0
    %v5381 = vadd.f32 %v5379, %v5380
    %v5382 = vsel %vm3520, %v4968, 0.0
    %v5383 = vadd.f32 %v5381, %v5382
    %v5384 = vsel %vm3520, %v4973, 0.0
    %v5385 = vadd.f32 %v5383, %v5384
    %v5386 = vsel %vm3520, %v4978, 0.0
    %v5387 = vadd.f32 %v5385, %v5386
    %v5388 = vsel %vm3520, %v4983, 0.0
    %v5389 = vadd.f32 %v5387, %v5388
    %v5390 = vsel %vm3520, %v4988, 0.0
    %v5391 = vadd.f32 %v5389, %v5390
    %v5392 = vsel %vm3520, %v4993, 0.0
    %v5393 = vadd.f32 %v5391, %v5392
    %v5394 = vsel %vm3520, %v4998, 0.0
    %v5395 = vadd.f32 %v5393, %v5394
    %v5396 = vsel %vm3520, %v4509, 0.0
    %v5397 = vsel %vm3520, %v4514, 0.0
    %v5398 = vadd.f32 %v5396, %v5397
    %v5399 = vsel %vm3520, %v4519, 0.0
    %v5400 = vadd.f32 %v5398, %v5399
    %v5401 = vsel %vm3520, %v4524, 0.0
    %v5402 = vadd.f32 %v5400, %v5401
    %v5403 = vsel %vm3520, %v4529, 0.0
    %v5404 = vadd.f32 %v5402, %v5403
    %v5405 = vsel %vm3520, %v4534, 0.0
    %v5406 = vadd.f32 %v5404, %v5405
    %v5407 = vsel %vm3520, %v4539, 0.0
    %v5408 = vadd.f32 %v5406, %v5407
    %v5409 = vsel %vm3520, %v4544, 0.0
    %v5410 = vadd.f32 %v5408, %v5409
    %v5411 = vsel %vm3520, %v4549, 0.0
    %v5412 = vadd.f32 %v5410, %v5411
    %v5413 = vsel %vm3520, %v4554, 0.0
    %v5414 = vadd.f32 %v5412, %v5413
    %v5415 = vsel %vm3520, %v4559, 0.0
    %v5416 = vadd.f32 %v5414, %v5415
    %v5417 = vsel %vm3520, %v4564, 0.0
    %v5418 = vadd.f32 %v5416, %v5417
    %v5419 = vsel %vm3520, %v4569, 0.0
    %v5420 = vadd.f32 %v5418, %v5419
    %v5421 = vsel %vm3520, %v4574, 0.0
    %v5422 = vadd.f32 %v5420, %v5421
    %v5423 = vsel %vm3520, %v4579, 0.0
    %v5424 = vadd.f32 %v5422, %v5423
    %v5425 = vsel %vm3520, %v4584, 0.0
    %v5426 = vadd.f32 %v5424, %v5425
    %v5427 = vsel %vm3520, %v4589, 0.0
    %v5428 = vadd.f32 %v5426, %v5427
    %v5429 = vsel %vm3520, %v4594, 0.0
    %v5430 = vadd.f32 %v5428, %v5429
    %v5431 = vsel %vm3520, %v4599, 0.0
    %v5432 = vadd.f32 %v5430, %v5431
    %v5433 = vsel %vm3520, %v4604, 0.0
    %v5434 = vadd.f32 %v5432, %v5433
    %v5435 = vsel %vm3520, %v4609, 0.0
    %v5436 = vadd.f32 %v5434, %v5435
    %v5437 = vsel %vm3520, %v4614, 0.0
    %v5438 = vadd.f32 %v5436, %v5437
    %v5439 = vsel %vm3520, %v4619, 0.0
    %v5440 = vadd.f32 %v5438, %v5439
    %v5441 = vsel %vm3520, %v4624, 0.0
    %v5442 = vadd.f32 %v5440, %v5441
    %v5443 = vsel %vm3520, %v4629, 0.0
    %v5444 = vadd.f32 %v5442, %v5443
    %v5445 = vsel %vm3520, %v4634, 0.0
    %v5446 = vadd.f32 %v5444, %v5445
    %v5447 = vsel %vm3520, %v4639, 0.0
    %v5448 = vadd.f32 %v5446, %v5447
    %v5449 = vsel %vm3520, %v4644, 0.0
    %v5450 = vadd.f32 %v5448, %v5449
    %v5451 = vsel %vm3520, %v4649, 0.0
    %v5452 = vadd.f32 %v5450, %v5451
    %v5453 = vsel %vm3520, %v4654, 0.0
    %v5454 = vadd.f32 %v5452, %v5453
    %v5455 = vsel %vm3520, %v4659, 0.0
    %v5456 = vadd.f32 %v5454, %v5455
    %v5457 = vsel %vm3520, %v4664, 0.0
    %v5458 = vadd.f32 %v5456, %v5457
    %v5459 = vsel %vm3520, %v4669, 0.0
    %v5460 = vadd.f32 %v5458, %v5459
    %v5461 = vsel %vm3520, %v4674, 0.0
    %v5462 = vadd.f32 %v5460, %v5461
    %v5463 = vsel %vm3520, %v4679, 0.0
    %v5464 = vadd.f32 %v5462, %v5463
    %v5465 = vsel %vm3520, %v4684, 0.0
    %v5466 = vadd.f32 %v5464, %v5465
    %v5467 = vsel %vm3520, %v4689, 0.0
    %v5468 = vadd.f32 %v5466, %v5467
    %v5469 = vsel %vm3520, %v4694, 0.0
    %v5470 = vadd.f32 %v5468, %v5469
    %v5471 = vsel %vm3520, %v4699, 0.0
    %v5472 = vadd.f32 %v5470, %v5471
    %v5473 = vsel %vm3520, %v4704, 0.0
    %v5474 = vadd.f32 %v5472, %v5473
    %v5475 = vsel %vm3520, %v4709, 0.0
    %v5476 = vadd.f32 %v5474, %v5475
    %v5477 = vsel %vm3520, %v4714, 0.0
    %v5478 = vadd.f32 %v5476, %v5477
    %v5479 = vsel %vm3520, %v4719, 0.0
    %v5480 = vadd.f32 %v5478, %v5479
    %v5481 = vsel %vm3520, %v4724, 0.0
    %v5482 = vadd.f32 %v5480, %v5481
    %v5483 = vsel %vm3520, %v4729, 0.0
    %v5484 = vadd.f32 %v5482, %v5483
    %v5485 = vsel %vm3520, %v4734, 0.0
    %v5486 = vadd.f32 %v5484, %v5485
    %v5487 = vsel %vm3520, %v4739, 0.0
    %v5488 = vadd.f32 %v5486, %v5487
    %v5489 = vsel %vm3520, %v4744, 0.0
    %v5490 = vadd.f32 %v5488, %v5489
    %v5491 = vsel %vm3520, %v4749, 0.0
    %v5492 = vadd.f32 %v5490, %v5491
    %v5493 = vsel %vm3520, %v4754, 0.0
    %v5494 = vadd.f32 %v5492, %v5493
    %v5495 = vsel %vm3520, %v4759, 0.0
    %v5496 = vadd.f32 %v5494, %v5495
    %v5497 = vsel %vm3520, %v4764, 0.0
    %v5498 = vadd.f32 %v5496, %v5497
    %v5499 = vsel %vm3520, %v4769, 0.0
    %v5500 = vadd.f32 %v5498, %v5499
    %v5501 = vsel %vm3520, %v4774, 0.0
    %v5502 = vadd.f32 %v5500, %v5501
    %v5503 = vsel %vm3520, %v4779, 0.0
    %v5504 = vadd.f32 %v5502, %v5503
    %v5505 = vsel %vm3520, %v4784, 0.0
    %v5506 = vadd.f32 %v5504, %v5505
    %v5507 = vsel %vm3520, %v4789, 0.0
    %v5508 = vadd.f32 %v5506, %v5507
    %v5509 = vsel %vm3520, %v4794, 0.0
    %v5510 = vadd.f32 %v5508, %v5509
    %v5511 = vsel %vm3520, %v4799, 0.0
    %v5512 = vadd.f32 %v5510, %v5511
    %v5513 = vsel %vm3520, %v4804, 0.0
    %v5514 = vadd.f32 %v5512, %v5513
    %v5515 = vsel %vm3520, %v4809, 0.0
    %v5516 = vadd.f32 %v5514, %v5515
    %v5517 = vsel %vm3520, %v4814, 0.0
    %v5518 = vadd.f32 %v5516, %v5517
    %v5519 = vsel %vm3520, %v4819, 0.0
    %v5520 = vadd.f32 %v5518, %v5519
    %v5521 = vsel %vm3520, %v4824, 0.0
    %v5522 = vadd.f32 %v5520, %v5521
    %v5523 = vsel %vm3520, %v4829, 0.0
    %v5524 = vadd.f32 %v5522, %v5523
    %v5525 = vsel %vm3520, %v4834, 0.0
    %v5526 = vadd.f32 %v5524, %v5525
    %v5527 = vsel %vm3520, %v4839, 0.0
    %v5528 = vadd.f32 %v5526, %v5527
    %v5529 = vsel %vm3520, %v4844, 0.0
    %v5530 = vadd.f32 %v5528, %v5529
    %v5531 = vsel %vm3520, %v4849, 0.0
    %v5532 = vadd.f32 %v5530, %v5531
    %v5533 = vsel %vm3520, %v4854, 0.0
    %v5534 = vadd.f32 %v5532, %v5533
    %v5535 = vsel %vm3520, %v4859, 0.0
    %v5536 = vadd.f32 %v5534, %v5535
    %v5537 = vsel %vm3520, %v4864, 0.0
    %v5538 = vadd.f32 %v5536, %v5537
    %v5539 = vsel %vm3520, %v4869, 0.0
    %v5540 = vadd.f32 %v5538, %v5539
    %v5541 = vsel %vm3520, %v4874, 0.0
    %v5542 = vadd.f32 %v5540, %v5541
    %v5543 = vsel %vm3520, %v4879, 0.0
    %v5544 = vadd.f32 %v5542, %v5543
    %v5545 = vsel %vm3520, %v4884, 0.0
    %v5546 = vadd.f32 %v5544, %v5545
    %v5547 = vsel %vm3520, %v4889, 0.0
    %v5548 = vadd.f32 %v5546, %v5547
    %v5549 = vsel %vm3520, %v4894, 0.0
    %v5550 = vadd.f32 %v5548, %v5549
    %v5551 = vsel %vm3520, %v4899, 0.0
    %v5552 = vadd.f32 %v5550, %v5551
    %v5553 = vsel %vm3520, %v4904, 0.0
    %v5554 = vadd.f32 %v5552, %v5553
    %v5555 = vsel %vm3520, %v4909, 0.0
    %v5556 = vadd.f32 %v5554, %v5555
    %v5557 = vsel %vm3520, %v4914, 0.0
    %v5558 = vadd.f32 %v5556, %v5557
    %v5559 = vsel %vm3520, %v4919, 0.0
    %v5560 = vadd.f32 %v5558, %v5559
    %v5561 = vsel %vm3520, %v4924, 0.0
    %v5562 = vadd.f32 %v5560, %v5561
    %v5563 = vsel %vm3520, %v4929, 0.0
    %v5564 = vadd.f32 %v5562, %v5563
    %v5565 = vsel %vm3520, %v4934, 0.0
    %v5566 = vadd.f32 %v5564, %v5565
    %v5567 = vsel %vm3520, %v4939, 0.0
    %v5568 = vadd.f32 %v5566, %v5567
    %v5569 = vsel %vm3520, %v4944, 0.0
    %v5570 = vadd.f32 %v5568, %v5569
    %v5571 = vsel %vm3520, %v4949, 0.0
    %v5572 = vadd.f32 %v5570, %v5571
    %v5573 = vsel %vm3520, %v4954, 0.0
    %v5574 = vadd.f32 %v5572, %v5573
    %v5575 = vsel %vm3520, %v4959, 0.0
    %v5576 = vadd.f32 %v5574, %v5575
    %v5577 = vsel %vm3520, %v4964, 0.0
    %v5578 = vadd.f32 %v5576, %v5577
    %v5579 = vsel %vm3520, %v4969, 0.0
    %v5580 = vadd.f32 %v5578, %v5579
    %v5581 = vsel %vm3520, %v4974, 0.0
    %v5582 = vadd.f32 %v5580, %v5581
    %v5583 = vsel %vm3520, %v4979, 0.0
    %v5584 = vadd.f32 %v5582, %v5583
    %v5585 = vsel %vm3520, %v4984, 0.0
    %v5586 = vadd.f32 %v5584, %v5585
    %v5587 = vsel %vm3520, %v4989, 0.0
    %v5588 = vadd.f32 %v5586, %v5587
    %v5589 = vsel %vm3520, %v4994, 0.0
    %v5590 = vadd.f32 %v5588, %v5589
    %v5591 = vsel %vm3520, %v4999, 0.0
    %v5592 = vadd.f32 %v5590, %v5591
    %v5593 = vsel %vm3520, %v4510, 0.0
    %v5594 = vsel %vm3520, %v4515, 0.0
    %v5595 = vadd.f32 %v5593, %v5594
    %v5596 = vsel %vm3520, %v4520, 0.0
    %v5597 = vadd.f32 %v5595, %v5596
    %v5598 = vsel %vm3520, %v4525, 0.0
    %v5599 = vadd.f32 %v5597, %v5598
    %v5600 = vsel %vm3520, %v4530, 0.0
    %v5601 = vadd.f32 %v5599, %v5600
    %v5602 = vsel %vm3520, %v4535, 0.0
    %v5603 = vadd.f32 %v5601, %v5602
    %v5604 = vsel %vm3520, %v4540, 0.0
    %v5605 = vadd.f32 %v5603, %v5604
    %v5606 = vsel %vm3520, %v4545, 0.0
    %v5607 = vadd.f32 %v5605, %v5606
    %v5608 = vsel %vm3520, %v4550, 0.0
    %v5609 = vadd.f32 %v5607, %v5608
    %v5610 = vsel %vm3520, %v4555, 0.0
    %v5611 = vadd.f32 %v5609, %v5610
    %v5612 = vsel %vm3520, %v4560, 0.0
    %v5613 = vadd.f32 %v5611, %v5612
    %v5614 = vsel %vm3520, %v4565, 0.0
    %v5615 = vadd.f32 %v5613, %v5614
    %v5616 = vsel %vm3520, %v4570, 0.0
    %v5617 = vadd.f32 %v5615, %v5616
    %v5618 = vsel %vm3520, %v4575, 0.0
    %v5619 = vadd.f32 %v5617, %v5618
    %v5620 = vsel %vm3520, %v4580, 0.0
    %v5621 = vadd.f32 %v5619, %v5620
    %v5622 = vsel %vm3520, %v4585, 0.0
    %v5623 = vadd.f32 %v5621, %v5622
    %v5624 = vsel %vm3520, %v4590, 0.0
    %v5625 = vadd.f32 %v5623, %v5624
    %v5626 = vsel %vm3520, %v4595, 0.0
    %v5627 = vadd.f32 %v5625, %v5626
    %v5628 = vsel %vm3520, %v4600, 0.0
    %v5629 = vadd.f32 %v5627, %v5628
    %v5630 = vsel %vm3520, %v4605, 0.0
    %v5631 = vadd.f32 %v5629, %v5630
    %v5632 = vsel %vm3520, %v4610, 0.0
    %v5633 = vadd.f32 %v5631, %v5632
    %v5634 = vsel %vm3520, %v4615, 0.0
    %v5635 = vadd.f32 %v5633, %v5634
    %v5636 = vsel %vm3520, %v4620, 0.0
    %v5637 = vadd.f32 %v5635, %v5636
    %v5638 = vsel %vm3520, %v4625, 0.0
    %v5639 = vadd.f32 %v5637, %v5638
    %v5640 = vsel %vm3520, %v4630, 0.0
    %v5641 = vadd.f32 %v5639, %v5640
    %v5642 = vsel %vm3520, %v4635, 0.0
    %v5643 = vadd.f32 %v5641, %v5642
    %v5644 = vsel %vm3520, %v4640, 0.0
    %v5645 = vadd.f32 %v5643, %v5644
    %v5646 = vsel %vm3520, %v4645, 0.0
    %v5647 = vadd.f32 %v5645, %v5646
    %v5648 = vsel %vm3520, %v4650, 0.0
    %v5649 = vadd.f32 %v5647, %v5648
    %v5650 = vsel %vm3520, %v4655, 0.0
    %v5651 = vadd.f32 %v5649, %v5650
    %v5652 = vsel %vm3520, %v4660, 0.0
    %v5653 = vadd.f32 %v5651, %v5652
    %v5654 = vsel %vm3520, %v4665, 0.0
    %v5655 = vadd.f32 %v5653, %v5654
    %v5656 = vsel %vm3520, %v4670, 0.0
    %v5657 = vadd.f32 %v5655, %v5656
    %v5658 = vsel %vm3520, %v4675, 0.0
    %v5659 = vadd.f32 %v5657, %v5658
    %v5660 = vsel %vm3520, %v4680, 0.0
    %v5661 = vadd.f32 %v5659, %v5660
    %v5662 = vsel %vm3520, %v4685, 0.0
    %v5663 = vadd.f32 %v5661, %v5662
    %v5664 = vsel %vm3520, %v4690, 0.0
    %v5665 = vadd.f32 %v5663, %v5664
    %v5666 = vsel %vm3520, %v4695, 0.0
    %v5667 = vadd.f32 %v5665, %v5666
    %v5668 = vsel %vm3520, %v4700, 0.0
    %v5669 = vadd.f32 %v5667, %v5668
    %v5670 = vsel %vm3520, %v4705, 0.0
    %v5671 = vadd.f32 %v5669, %v5670
    %v5672 = vsel %vm3520, %v4710, 0.0
    %v5673 = vadd.f32 %v5671, %v5672
    %v5674 = vsel %vm3520, %v4715, 0.0
    %v5675 = vadd.f32 %v5673, %v5674
    %v5676 = vsel %vm3520, %v4720, 0.0
    %v5677 = vadd.f32 %v5675, %v5676
    %v5678 = vsel %vm3520, %v4725, 0.0
    %v5679 = vadd.f32 %v5677, %v5678
    %v5680 = vsel %vm3520, %v4730, 0.0
    %v5681 = vadd.f32 %v5679, %v5680
    %v5682 = vsel %vm3520, %v4735, 0.0
    %v5683 = vadd.f32 %v5681, %v5682
    %v5684 = vsel %vm3520, %v4740, 0.0
    %v5685 = vadd.f32 %v5683, %v5684
    %v5686 = vsel %vm3520, %v4745, 0.0
    %v5687 = vadd.f32 %v5685, %v5686
    %v5688 = vsel %vm3520, %v4750, 0.0
    %v5689 = vadd.f32 %v5687, %v5688
    %v5690 = vsel %vm3520, %v4755, 0.0
    %v5691 = vadd.f32 %v5689, %v5690
    %v5692 = vsel %vm3520, %v4760, 0.0
    %v5693 = vadd.f32 %v5691, %v5692
    %v5694 = vsel %vm3520, %v4765, 0.0
    %v5695 = vadd.f32 %v5693, %v5694
    %v5696 = vsel %vm3520, %v4770, 0.0
    %v5697 = vadd.f32 %v5695, %v5696
    %v5698 = vsel %vm3520, %v4775, 0.0
    %v5699 = vadd.f32 %v5697, %v5698
    %v5700 = vsel %vm3520, %v4780, 0.0
    %v5701 = vadd.f32 %v5699, %v5700
    %v5702 = vsel %vm3520, %v4785, 0.0
    %v5703 = vadd.f32 %v5701, %v5702
    %v5704 = vsel %vm3520, %v4790, 0.0
    %v5705 = vadd.f32 %v5703, %v5704
    %v5706 = vsel %vm3520, %v4795, 0.0
    %v5707 = vadd.f32 %v5705, %v5706
    %v5708 = vsel %vm3520, %v4800, 0.0
    %v5709 = vadd.f32 %v5707, %v5708
    %v5710 = vsel %vm3520, %v4805, 0.0
    %v5711 = vadd.f32 %v5709, %v5710
    %v5712 = vsel %vm3520, %v4810, 0.0
    %v5713 = vadd.f32 %v5711, %v5712
    %v5714 = vsel %vm3520, %v4815, 0.0
    %v5715 = vadd.f32 %v5713, %v5714
    %v5716 = vsel %vm3520, %v4820, 0.0
    %v5717 = vadd.f32 %v5715, %v5716
    %v5718 = vsel %vm3520, %v4825, 0.0
    %v5719 = vadd.f32 %v5717, %v5718
    %v5720 = vsel %vm3520, %v4830, 0.0
    %v5721 = vadd.f32 %v5719, %v5720
    %v5722 = vsel %vm3520, %v4835, 0.0
    %v5723 = vadd.f32 %v5721, %v5722
    %v5724 = vsel %vm3520, %v4840, 0.0
    %v5725 = vadd.f32 %v5723, %v5724
    %v5726 = vsel %vm3520, %v4845, 0.0
    %v5727 = vadd.f32 %v5725, %v5726
    %v5728 = vsel %vm3520, %v4850, 0.0
    %v5729 = vadd.f32 %v5727, %v5728
    %v5730 = vsel %vm3520, %v4855, 0.0
    %v5731 = vadd.f32 %v5729, %v5730
    %v5732 = vsel %vm3520, %v4860, 0.0
    %v5733 = vadd.f32 %v5731, %v5732
    %v5734 = vsel %vm3520, %v4865, 0.0
    %v5735 = vadd.f32 %v5733, %v5734
    %v5736 = vsel %vm3520, %v4870, 0.0
    %v5737 = vadd.f32 %v5735, %v5736
    %v5738 = vsel %vm3520, %v4875, 0.0
    %v5739 = vadd.f32 %v5737, %v5738
    %v5740 = vsel %vm3520, %v4880, 0.0
    %v5741 = vadd.f32 %v5739, %v5740
    %v5742 = vsel %vm3520, %v4885, 0.0
    %v5743 = vadd.f32 %v5741, %v5742
    %v5744 = vsel %vm3520, %v4890, 0.0
    %v5745 = vadd.f32 %v5743, %v5744
    %v5746 = vsel %vm3520, %v4895, 0.0
    %v5747 = vadd.f32 %v5745, %v5746
    %v5748 = vsel %vm3520, %v4900, 0.0
    %v5749 = vadd.f32 %v5747, %v5748
    %v5750 = vsel %vm3520, %v4905, 0.0
    %v5751 = vadd.f32 %v5749, %v5750
    %v5752 = vsel %vm3520, %v4910, 0.0
    %v5753 = vadd.f32 %v5751, %v5752
    %v5754 = vsel %vm3520, %v4915, 0.0
    %v5755 = vadd.f32 %v5753, %v5754
    %v5756 = vsel %vm3520, %v4920, 0.0
    %v5757 = vadd.f32 %v5755, %v5756
    %v5758 = vsel %vm3520, %v4925, 0.0
    %v5759 = vadd.f32 %v5757, %v5758
    %v5760 = vsel %vm3520, %v4930, 0.0
    %v5761 = vadd.f32 %v5759, %v5760
    %v5762 = vsel %vm3520, %v4935, 0.0
    %v5763 = vadd.f32 %v5761, %v5762
    %v5764 = vsel %vm3520, %v4940, 0.0
    %v5765 = vadd.f32 %v5763, %v5764
    %v5766 = vsel %vm3520, %v4945, 0.0
    %v5767 = vadd.f32 %v5765, %v5766
    %v5768 = vsel %vm3520, %v4950, 0.0
    %v5769 = vadd.f32 %v5767, %v5768
    %v5770 = vsel %vm3520, %v4955, 0.0
    %v5771 = vadd.f32 %v5769, %v5770
    %v5772 = vsel %vm3520, %v4960, 0.0
    %v5773 = vadd.f32 %v5771, %v5772
    %v5774 = vsel %vm3520, %v4965, 0.0
    %v5775 = vadd.f32 %v5773, %v5774
    %v5776 = vsel %vm3520, %v4970, 0.0
    %v5777 = vadd.f32 %v5775, %v5776
    %v5778 = vsel %vm3520, %v4975, 0.0
    %v5779 = vadd.f32 %v5777, %v5778
    %v5780 = vsel %vm3520, %v4980, 0.0
    %v5781 = vadd.f32 %v5779, %v5780
    %v5782 = vsel %vm3520, %v4985, 0.0
    %v5783 = vadd.f32 %v5781, %v5782
    %v5784 = vsel %vm3520, %v4990, 0.0
    %v5785 = vadd.f32 %v5783, %v5784
    %v5786 = vsel %vm3520, %v4995, 0.0
    %v5787 = vadd.f32 %v5785, %v5786
    %v5788 = vsel %vm3520, %v5000, 0.0
    %v5789 = vadd.f32 %v5787, %v5788
    %v5790 = vsel %vm4309, %v4511, 0.0
    %v5791 = vsel %vm4309, %v4516, 0.0
    %v5792 = vadd.f32 %v5790, %v5791
    %v5793 = vsel %vm4309, %v4521, 0.0
    %v5794 = vadd.f32 %v5792, %v5793
    %v5795 = vsel %vm4309, %v4526, 0.0
    %v5796 = vadd.f32 %v5794, %v5795
    %v5797 = vsel %vm4309, %v4531, 0.0
    %v5798 = vadd.f32 %v5796, %v5797
    %v5799 = vsel %vm4309, %v4536, 0.0
    %v5800 = vadd.f32 %v5798, %v5799
    %v5801 = vsel %vm4309, %v4541, 0.0
    %v5802 = vadd.f32 %v5800, %v5801
    %v5803 = vsel %vm4309, %v4546, 0.0
    %v5804 = vadd.f32 %v5802, %v5803
    %v5805 = vsel %vm4309, %v4551, 0.0
    %v5806 = vadd.f32 %v5804, %v5805
    %v5807 = vsel %vm4309, %v4556, 0.0
    %v5808 = vadd.f32 %v5806, %v5807
    %v5809 = vsel %vm4309, %v4561, 0.0
    %v5810 = vadd.f32 %v5808, %v5809
    %v5811 = vsel %vm4309, %v4566, 0.0
    %v5812 = vadd.f32 %v5810, %v5811
    %v5813 = vsel %vm4309, %v4571, 0.0
    %v5814 = vadd.f32 %v5812, %v5813
    %v5815 = vsel %vm4309, %v4576, 0.0
    %v5816 = vadd.f32 %v5814, %v5815
    %v5817 = vsel %vm4309, %v4581, 0.0
    %v5818 = vadd.f32 %v5816, %v5817
    %v5819 = vsel %vm4309, %v4586, 0.0
    %v5820 = vadd.f32 %v5818, %v5819
    %v5821 = vsel %vm4309, %v4591, 0.0
    %v5822 = vadd.f32 %v5820, %v5821
    %v5823 = vsel %vm4309, %v4596, 0.0
    %v5824 = vadd.f32 %v5822, %v5823
    %v5825 = vsel %vm4309, %v4601, 0.0
    %v5826 = vadd.f32 %v5824, %v5825
    %v5827 = vsel %vm4309, %v4606, 0.0
    %v5828 = vadd.f32 %v5826, %v5827
    %v5829 = vsel %vm4309, %v4611, 0.0
    %v5830 = vadd.f32 %v5828, %v5829
    %v5831 = vsel %vm4309, %v4616, 0.0
    %v5832 = vadd.f32 %v5830, %v5831
    %v5833 = vsel %vm4309, %v4621, 0.0
    %v5834 = vadd.f32 %v5832, %v5833
    %v5835 = vsel %vm4309, %v4626, 0.0
    %v5836 = vadd.f32 %v5834, %v5835
    %v5837 = vsel %vm4309, %v4631, 0.0
    %v5838 = vadd.f32 %v5836, %v5837
    %v5839 = vsel %vm4309, %v4636, 0.0
    %v5840 = vadd.f32 %v5838, %v5839
    %v5841 = vsel %vm4309, %v4641, 0.0
    %v5842 = vadd.f32 %v5840, %v5841
    %v5843 = vsel %vm4309, %v4646, 0.0
    %v5844 = vadd.f32 %v5842, %v5843
    %v5845 = vsel %vm4309, %v4651, 0.0
    %v5846 = vadd.f32 %v5844, %v5845
    %v5847 = vsel %vm4309, %v4656, 0.0
    %v5848 = vadd.f32 %v5846, %v5847
    %v5849 = vsel %vm4309, %v4661, 0.0
    %v5850 = vadd.f32 %v5848, %v5849
    %v5851 = vsel %vm4309, %v4666, 0.0
    %v5852 = vadd.f32 %v5850, %v5851
    %v5853 = vsel %vm4309, %v4671, 0.0
    %v5854 = vadd.f32 %v5852, %v5853
    %v5855 = vsel %vm4309, %v4676, 0.0
    %v5856 = vadd.f32 %v5854, %v5855
    %v5857 = vsel %vm4309, %v4681, 0.0
    %v5858 = vadd.f32 %v5856, %v5857
    %v5859 = vsel %vm4309, %v4686, 0.0
    %v5860 = vadd.f32 %v5858, %v5859
    %v5861 = vsel %vm4309, %v4691, 0.0
    %v5862 = vadd.f32 %v5860, %v5861
    %v5863 = vsel %vm4309, %v4696, 0.0
    %v5864 = vadd.f32 %v5862, %v5863
    %v5865 = vsel %vm4309, %v4701, 0.0
    %v5866 = vadd.f32 %v5864, %v5865
    %v5867 = vsel %vm4309, %v4706, 0.0
    %v5868 = vadd.f32 %v5866, %v5867
    %v5869 = vsel %vm4309, %v4711, 0.0
    %v5870 = vadd.f32 %v5868, %v5869
    %v5871 = vsel %vm4309, %v4716, 0.0
    %v5872 = vadd.f32 %v5870, %v5871
    %v5873 = vsel %vm4309, %v4721, 0.0
    %v5874 = vadd.f32 %v5872, %v5873
    %v5875 = vsel %vm4309, %v4726, 0.0
    %v5876 = vadd.f32 %v5874, %v5875
    %v5877 = vsel %vm4309, %v4731, 0.0
    %v5878 = vadd.f32 %v5876, %v5877
    %v5879 = vsel %vm4309, %v4736, 0.0
    %v5880 = vadd.f32 %v5878, %v5879
    %v5881 = vsel %vm4309, %v4741, 0.0
    %v5882 = vadd.f32 %v5880, %v5881
    %v5883 = vsel %vm4309, %v4746, 0.0
    %v5884 = vadd.f32 %v5882, %v5883
    %v5885 = vsel %vm4309, %v4751, 0.0
    %v5886 = vadd.f32 %v5884, %v5885
    %v5887 = vsel %vm4309, %v4756, 0.0
    %v5888 = vadd.f32 %v5886, %v5887
    %v5889 = vsel %vm4309, %v4761, 0.0
    %v5890 = vadd.f32 %v5888, %v5889
    %v5891 = vsel %vm4309, %v4766, 0.0
    %v5892 = vadd.f32 %v5890, %v5891
    %v5893 = vsel %vm4309, %v4771, 0.0
    %v5894 = vadd.f32 %v5892, %v5893
    %v5895 = vsel %vm4309, %v4776, 0.0
    %v5896 = vadd.f32 %v5894, %v5895
    %v5897 = vsel %vm4309, %v4781, 0.0
    %v5898 = vadd.f32 %v5896, %v5897
    %v5899 = vsel %vm4309, %v4786, 0.0
    %v5900 = vadd.f32 %v5898, %v5899
    %v5901 = vsel %vm4309, %v4791, 0.0
    %v5902 = vadd.f32 %v5900, %v5901
    %v5903 = vsel %vm4309, %v4796, 0.0
    %v5904 = vadd.f32 %v5902, %v5903
    %v5905 = vsel %vm4309, %v4801, 0.0
    %v5906 = vadd.f32 %v5904, %v5905
    %v5907 = vsel %vm4309, %v4806, 0.0
    %v5908 = vadd.f32 %v5906, %v5907
    %v5909 = vsel %vm4309, %v4811, 0.0
    %v5910 = vadd.f32 %v5908, %v5909
    %v5911 = vsel %vm4309, %v4816, 0.0
    %v5912 = vadd.f32 %v5910, %v5911
    %v5913 = vsel %vm4309, %v4821, 0.0
    %v5914 = vadd.f32 %v5912, %v5913
    %v5915 = vsel %vm4309, %v4826, 0.0
    %v5916 = vadd.f32 %v5914, %v5915
    %v5917 = vsel %vm4309, %v4831, 0.0
    %v5918 = vadd.f32 %v5916, %v5917
    %v5919 = vsel %vm4309, %v4836, 0.0
    %v5920 = vadd.f32 %v5918, %v5919
    %v5921 = vsel %vm4309, %v4841, 0.0
    %v5922 = vadd.f32 %v5920, %v5921
    %v5923 = vsel %vm4309, %v4846, 0.0
    %v5924 = vadd.f32 %v5922, %v5923
    %v5925 = vsel %vm4309, %v4851, 0.0
    %v5926 = vadd.f32 %v5924, %v5925
    %v5927 = vsel %vm4309, %v4856, 0.0
    %v5928 = vadd.f32 %v5926, %v5927
    %v5929 = vsel %vm4309, %v4861, 0.0
    %v5930 = vadd.f32 %v5928, %v5929
    %v5931 = vsel %vm4309, %v4866, 0.0
    %v5932 = vadd.f32 %v5930, %v5931
    %v5933 = vsel %vm4309, %v4871, 0.0
    %v5934 = vadd.f32 %v5932, %v5933
    %v5935 = vsel %vm4309, %v4876, 0.0
    %v5936 = vadd.f32 %v5934, %v5935
    %v5937 = vsel %vm4309, %v4881, 0.0
    %v5938 = vadd.f32 %v5936, %v5937
    %v5939 = vsel %vm4309, %v4886, 0.0
    %v5940 = vadd.f32 %v5938, %v5939
    %v5941 = vsel %vm4309, %v4891, 0.0
    %v5942 = vadd.f32 %v5940, %v5941
    %v5943 = vsel %vm4309, %v4896, 0.0
    %v5944 = vadd.f32 %v5942, %v5943
    %v5945 = vsel %vm4309, %v4901, 0.0
    %v5946 = vadd.f32 %v5944, %v5945
    %v5947 = vsel %vm4309, %v4906, 0.0
    %v5948 = vadd.f32 %v5946, %v5947
    %v5949 = vsel %vm4309, %v4911, 0.0
    %v5950 = vadd.f32 %v5948, %v5949
    %v5951 = vsel %vm4309, %v4916, 0.0
    %v5952 = vadd.f32 %v5950, %v5951
    %v5953 = vsel %vm4309, %v4921, 0.0
    %v5954 = vadd.f32 %v5952, %v5953
    %v5955 = vsel %vm4309, %v4926, 0.0
    %v5956 = vadd.f32 %v5954, %v5955
    %v5957 = vsel %vm4309, %v4931, 0.0
    %v5958 = vadd.f32 %v5956, %v5957
    %v5959 = vsel %vm4309, %v4936, 0.0
    %v5960 = vadd.f32 %v5958, %v5959
    %v5961 = vsel %vm4309, %v4941, 0.0
    %v5962 = vadd.f32 %v5960, %v5961
    %v5963 = vsel %vm4309, %v4946, 0.0
    %v5964 = vadd.f32 %v5962, %v5963
    %v5965 = vsel %vm4309, %v4951, 0.0
    %v5966 = vadd.f32 %v5964, %v5965
    %v5967 = vsel %vm4309, %v4956, 0.0
    %v5968 = vadd.f32 %v5966, %v5967
    %v5969 = vsel %vm4309, %v4961, 0.0
    %v5970 = vadd.f32 %v5968, %v5969
    %v5971 = vsel %vm4309, %v4966, 0.0
    %v5972 = vadd.f32 %v5970, %v5971
    %v5973 = vsel %vm4309, %v4971, 0.0
    %v5974 = vadd.f32 %v5972, %v5973
    %v5975 = vsel %vm4309, %v4976, 0.0
    %v5976 = vadd.f32 %v5974, %v5975
    %v5977 = vsel %vm4309, %v4981, 0.0
    %v5978 = vadd.f32 %v5976, %v5977
    %v5979 = vsel %vm4309, %v4986, 0.0
    %v5980 = vadd.f32 %v5978, %v5979
    %v5981 = vsel %vm4309, %v4991, 0.0
    %v5982 = vadd.f32 %v5980, %v5981
    %v5983 = vsel %vm4309, %v4996, 0.0
    %v5984 = vadd.f32 %v5982, %v5983
    %v5985 = vsel %vm4309, %v5001, 0.0
    %v5986 = vadd.f32 %v5984, %v5985
    %vm5987 = vcmask 1046528
    %v5988 = vrot.slane %v28, 1
    %v5989 = vrot.slane %v29, 1
    %v5990 = vsel %vm5987, %v5988, %v5989
    %v5991 = vrot.slane %v30, 1
    %v5992 = vsel %vm5987, %v5989, %v5991
    %v5993 = vrot.slane %v31, 1
    %v5994 = vsel %vm5987, %v5991, %v5993
    %v5995 = vrot.slane %v32, 1
    %v5996 = vsel %vm5987, %v5993, %v5995
    %v5997 = vrot.slane %v33, 1
    %v5998 = vrot.slane %v34, 1
    %v5999 = vsel %vm5987, %v5997, %v5998
    %v6000 = vrot.slane %v35, 1
    %v6001 = vsel %vm5987, %v5998, %v6000
    %v6002 = vrot.slane %v36, 1
    %v6003 = vsel %vm5987, %v6000, %v6002
    %v6004 = vrot.slane %v37, 1
    %v6005 = vsel %vm5987, %v6002, %v6004
    %v6006 = vrot.slane %v38, 1
    %v6007 = vrot.slane %v39, 1
    %v6008 = vsel %vm5987, %v6006, %v6007
    %v6009 = vrot.slane %v40, 1
    %v6010 = vsel %vm5987, %v6007, %v6009
    %v6011 = vrot.slane %v41, 1
    %v6012 = vsel %vm5987, %v6009, %v6011
    %v6013 = vrot.slane %v42, 1
    %v6014 = vsel %vm5987, %v6011, %v6013
    %v6015 = vrot.slane %v43, 1
    %v6016 = vrot.slane %v44, 1
    %v6017 = vsel %vm5987, %v6015, %v6016
    %v6018 = vrot.slane %v45, 1
    %v6019 = vsel %vm5987, %v6016, %v6018
    %v6020 = vrot.slane %v46, 1
    %v6021 = vsel %vm5987, %v6018, %v6020
    %v6022 = vrot.slane %v47, 1
    %v6023 = vsel %vm5987, %v6020, %v6022
    %v6024 = vrot.slane %v48, 1
    %v6025 = vrot.slane %v49, 1
    %v6026 = vsel %vm5987, %v6024, %v6025
    %v6027 = vrot.slane %v50, 1
    %v6028 = vsel %vm5987, %v6025, %v6027
    %v6029 = vrot.slane %v51, 1
    %v6030 = vsel %vm5987, %v6027, %v6029
    %v6031 = vrot.slane %v52, 1
    %v6032 = vsel %vm5987, %v6029, %v6031
    %v6033 = vrot.slane %v53, 1
    %v6034 = vrot.slane %v54, 1
    %v6035 = vsel %vm5987, %v6033, %v6034
    %v6036 = vrot.slane %v55, 1
    %v6037 = vsel %vm5987, %v6034, %v6036
    %v6038 = vrot.slane %v56, 1
    %v6039 = vsel %vm5987, %v6036, %v6038
    %v6040 = vrot.slane %v57, 1
    %v6041 = vsel %vm5987, %v6038, %v6040
    %v6042 = vrot.slane %v58, 1
    %v6043 = vrot.slane %v59, 1
    %v6044 = vsel %vm5987, %v6042, %v6043
    %v6045 = vrot.slane %v60, 1
    %v6046 = vsel %vm5987, %v6043, %v6045
    %v6047 = vrot.slane %v61, 1
    %v6048 = vsel %vm5987, %v6045, %v6047
    %v6049 = vrot.slane %v62, 1
    %v6050 = vsel %vm5987, %v6047, %v6049
    %v6051 = vrot.slane %v63, 1
    %v6052 = vrot.slane %v64, 1
    %v6053 = vsel %vm5987, %v6051, %v6052
    %v6054 = vrot.slane %v65, 1
    %v6055 = vsel %vm5987, %v6052, %v6054
    %v6056 = vrot.slane %v66, 1
    %v6057 = vsel %vm5987, %v6054, %v6056
    %v6058 = vrot.slane %v67, 1
    %v6059 = vsel %vm5987, %v6056, %v6058
    %v6060 = vrot.slane %v68, 1
    %v6061 = vrot.slane %v69, 1
    %v6062 = vsel %vm5987, %v6060, %v6061
    %v6063 = vrot.slane %v70, 1
    %v6064 = vsel %vm5987, %v6061, %v6063
    %v6065 = vrot.slane %v71, 1
    %v6066 = vsel %vm5987, %v6063, %v6065
    %v6067 = vrot.slane %v72, 1
    %v6068 = vsel %vm5987, %v6065, %v6067
    %v6069 = vrot.slane %v73, 1
    %v6070 = vrot.slane %v74, 1
    %v6071 = vsel %vm5987, %v6069, %v6070
    %v6072 = vrot.slane %v75, 1
    %v6073 = vsel %vm5987, %v6070, %v6072
    %v6074 = vrot.slane %v76, 1
    %v6075 = vsel %vm5987, %v6072, %v6074
    %v6076 = vrot.slane %v77, 1
    %v6077 = vsel %vm5987, %v6074, %v6076
    %v6078 = vrot.slane %v78, 1
    %v6079 = vrot.slane %v79, 1
    %v6080 = vsel %vm5987, %v6078, %v6079
    %v6081 = vrot.slane %v80, 1
    %v6082 = vsel %vm5987, %v6079, %v6081
    %v6083 = vrot.slane %v81, 1
    %v6084 = vsel %vm5987, %v6081, %v6083
    %v6085 = vrot.slane %v82, 1
    %v6086 = vsel %vm5987, %v6083, %v6085
    %v6087 = vrot.slane %v83, 1
    %v6088 = vrot.slane %v84, 1
    %v6089 = vsel %vm5987, %v6087, %v6088
    %v6090 = vrot.slane %v85, 1
    %v6091 = vsel %vm5987, %v6088, %v6090
    %v6092 = vrot.slane %v86, 1
    %v6093 = vsel %vm5987, %v6090, %v6092
    %v6094 = vrot.slane %v87, 1
    %v6095 = vsel %vm5987, %v6092, %v6094
    %v6096 = vrot.slane %v88, 1
    %v6097 = vrot.slane %v89, 1
    %v6098 = vsel %vm5987, %v6096, %v6097
    %v6099 = vrot.slane %v90, 1
    %v6100 = vsel %vm5987, %v6097, %v6099
    %v6101 = vrot.slane %v91, 1
    %v6102 = vsel %vm5987, %v6099, %v6101
    %v6103 = vrot.slane %v92, 1
    %v6104 = vsel %vm5987, %v6101, %v6103
    %v6105 = vrot.slane %v93, 1
    %v6106 = vrot.slane %v94, 1
    %v6107 = vsel %vm5987, %v6105, %v6106
    %v6108 = vrot.slane %v95, 1
    %v6109 = vsel %vm5987, %v6106, %v6108
    %v6110 = vrot.slane %v96, 1
    %v6111 = vsel %vm5987, %v6108, %v6110
    %v6112 = vrot.slane %v97, 1
    %v6113 = vsel %vm5987, %v6110, %v6112
    %v6114 = vrot.slane %v98, 1
    %v6115 = vrot.slane %v99, 1
    %v6116 = vsel %vm5987, %v6114, %v6115
    %v6117 = vrot.slane %v100, 1
    %v6118 = vsel %vm5987, %v6115, %v6117
    %v6119 = vrot.slane %v101, 1
    %v6120 = vsel %vm5987, %v6117, %v6119
    %v6121 = vrot.slane %v102, 1
    %v6122 = vsel %vm5987, %v6119, %v6121
    %v6123 = vrot.slane %v103, 1
    %v6124 = vrot.slane %v104, 1
    %v6125 = vsel %vm5987, %v6123, %v6124
    %v6126 = vrot.slane %v105, 1
    %v6127 = vsel %vm5987, %v6124, %v6126
    %v6128 = vrot.slane %v106, 1
    %v6129 = vsel %vm5987, %v6126, %v6128
    %v6130 = vrot.slane %v107, 1
    %v6131 = vsel %vm5987, %v6128, %v6130
    %v6132 = vrot.slane %v108, 1
    %v6133 = vrot.slane %v109, 1
    %v6134 = vsel %vm5987, %v6132, %v6133
    %v6135 = vrot.slane %v110, 1
    %v6136 = vsel %vm5987, %v6133, %v6135
    %v6137 = vrot.slane %v111, 1
    %v6138 = vsel %vm5987, %v6135, %v6137
    %v6139 = vrot.slane %v112, 1
    %v6140 = vsel %vm5987, %v6137, %v6139
    %v6141 = vrot.slane %v113, 1
    %v6142 = vrot.slane %v114, 1
    %v6143 = vsel %vm5987, %v6141, %v6142
    %v6144 = vrot.slane %v115, 1
    %v6145 = vsel %vm5987, %v6142, %v6144
    %v6146 = vrot.slane %v116, 1
    %v6147 = vsel %vm5987, %v6144, %v6146
    %v6148 = vrot.slane %v117, 1
    %v6149 = vsel %vm5987, %v6146, %v6148
    %v6150 = vrot.slane %v118, 1
    %v6151 = vrot.slane %v119, 1
    %v6152 = vsel %vm5987, %v6150, %v6151
    %v6153 = vrot.slane %v120, 1
    %v6154 = vsel %vm5987, %v6151, %v6153
    %v6155 = vrot.slane %v121, 1
    %v6156 = vsel %vm5987, %v6153, %v6155
    %v6157 = vrot.slane %v122, 1
    %v6158 = vsel %vm5987, %v6155, %v6157
    %v6159 = vrot.slane %v123, 1
    %v6160 = vrot.slane %v124, 1
    %v6161 = vsel %vm5987, %v6159, %v6160
    %v6162 = vrot.slane %v125, 1
    %v6163 = vsel %vm5987, %v6160, %v6162
    %v6164 = vrot.slane %v126, 1
    %v6165 = vsel %vm5987, %v6162, %v6164
    %v6166 = vrot.slane %v127, 1
    %v6167 = vsel %vm5987, %v6164, %v6166
    %v6168 = vrot.slane %v128, 1
    %v6169 = vrot.slane %v129, 1
    %v6170 = vsel %vm5987, %v6168, %v6169
    %v6171 = vrot.slane %v130, 1
    %v6172 = vsel %vm5987, %v6169, %v6171
    %v6173 = vrot.slane %v131, 1
    %v6174 = vsel %vm5987, %v6171, %v6173
    %v6175 = vrot.slane %v132, 1
    %v6176 = vsel %vm5987, %v6173, %v6175
    %v6177 = vrot.slane %v133, 1
    %v6178 = vrot.slane %v134, 1
    %v6179 = vsel %vm5987, %v6177, %v6178
    %v6180 = vrot.slane %v135, 1
    %v6181 = vsel %vm5987, %v6178, %v6180
    %v6182 = vrot.slane %v136, 1
    %v6183 = vsel %vm5987, %v6180, %v6182
    %v6184 = vrot.slane %v137, 1
    %v6185 = vsel %vm5987, %v6182, %v6184
    %v6186 = vrot.slane %v138, 1
    %v6187 = vrot.slane %v139, 1
    %v6188 = vsel %vm5987, %v6186, %v6187
    %v6189 = vrot.slane %v140, 1
    %v6190 = vsel %vm5987, %v6187, %v6189
    %v6191 = vrot.slane %v141, 1
    %v6192 = vsel %vm5987, %v6189, %v6191
    %v6193 = vrot.slane %v142, 1
    %v6194 = vsel %vm5987, %v6191, %v6193
    %v6195 = vrot.slane %v143, 1
    %v6196 = vrot.slane %v144, 1
    %v6197 = vsel %vm5987, %v6195, %v6196
    %v6198 = vrot.slane %v145, 1
    %v6199 = vsel %vm5987, %v6196, %v6198
    %v6200 = vrot.slane %v146, 1
    %v6201 = vsel %vm5987, %v6198, %v6200
    %v6202 = vrot.slane %v147, 1
    %v6203 = vsel %vm5987, %v6200, %v6202
    %v6204 = vrot.slane %v148, 1
    %v6205 = vrot.slane %v149, 1
    %v6206 = vsel %vm5987, %v6204, %v6205
    %v6207 = vrot.slane %v150, 1
    %v6208 = vsel %vm5987, %v6205, %v6207
    %v6209 = vrot.slane %v151, 1
    %v6210 = vsel %vm5987, %v6207, %v6209
    %v6211 = vrot.slane %v152, 1
    %v6212 = vsel %vm5987, %v6209, %v6211
    %v6213 = vrot.slane %v153, 1
    %v6214 = vrot.slane %v154, 1
    %v6215 = vsel %vm5987, %v6213, %v6214
    %v6216 = vrot.slane %v155, 1
    %v6217 = vsel %vm5987, %v6214, %v6216
    %v6218 = vrot.slane %v156, 1
    %v6219 = vsel %vm5987, %v6216, %v6218
    %v6220 = vrot.slane %v157, 1
    %v6221 = vsel %vm5987, %v6218, %v6220
    %v6222 = vrot.slane %v158, 1
    %v6223 = vrot.slane %v159, 1
    %v6224 = vsel %vm5987, %v6222, %v6223
    %v6225 = vrot.slane %v160, 1
    %v6226 = vsel %vm5987, %v6223, %v6225
    %v6227 = vrot.slane %v161, 1
    %v6228 = vsel %vm5987, %v6225, %v6227
    %v6229 = vrot.slane %v162, 1
    %v6230 = vsel %vm5987, %v6227, %v6229
    %v6231 = vrot.slane %v163, 1
    %v6232 = vrot.slane %v164, 1
    %v6233 = vsel %vm5987, %v6231, %v6232
    %v6234 = vrot.slane %v165, 1
    %v6235 = vsel %vm5987, %v6232, %v6234
    %v6236 = vrot.slane %v166, 1
    %v6237 = vsel %vm5987, %v6234, %v6236
    %v6238 = vrot.slane %v167, 1
    %v6239 = vsel %vm5987, %v6236, %v6238
    %v6240 = vrot.slane %v168, 1
    %v6241 = vrot.slane %v169, 1
    %v6242 = vsel %vm5987, %v6240, %v6241
    %v6243 = vrot.slane %v170, 1
    %v6244 = vsel %vm5987, %v6241, %v6243
    %v6245 = vrot.slane %v171, 1
    %v6246 = vsel %vm5987, %v6243, %v6245
    %v6247 = vrot.slane %v172, 1
    %v6248 = vsel %vm5987, %v6245, %v6247
    %v6249 = vrot.slane %v173, 1
    %v6250 = vrot.slane %v174, 1
    %v6251 = vsel %vm5987, %v6249, %v6250
    %v6252 = vrot.slane %v175, 1
    %v6253 = vsel %vm5987, %v6250, %v6252
    %v6254 = vrot.slane %v176, 1
    %v6255 = vsel %vm5987, %v6252, %v6254
    %v6256 = vrot.slane %v177, 1
    %v6257 = vsel %vm5987, %v6254, %v6256
    %v6258 = vrot.slane %v178, 1
    %v6259 = vrot.slane %v179, 1
    %v6260 = vsel %vm5987, %v6258, %v6259
    %v6261 = vrot.slane %v180, 1
    %v6262 = vsel %vm5987, %v6259, %v6261
    %v6263 = vrot.slane %v181, 1
    %v6264 = vsel %vm5987, %v6261, %v6263
    %v6265 = vrot.slane %v182, 1
    %v6266 = vsel %vm5987, %v6263, %v6265
    %v6267 = vrot.slane %v183, 1
    %v6268 = vrot.slane %v184, 1
    %v6269 = vsel %vm5987, %v6267, %v6268
    %v6270 = vrot.slane %v185, 1
    %v6271 = vsel %vm5987, %v6268, %v6270
    %v6272 = vrot.slane %v186, 1
    %v6273 = vsel %vm5987, %v6270, %v6272
    %v6274 = vrot.slane %v187, 1
    %v6275 = vsel %vm5987, %v6272, %v6274
    %v6276 = vrot.slane %v188, 1
    %v6277 = vrot.slane %v189, 1
    %v6278 = vsel %vm5987, %v6276, %v6277
    %v6279 = vrot.slane %v190, 1
    %v6280 = vsel %vm5987, %v6277, %v6279
    %v6281 = vrot.slane %v191, 1
    %v6282 = vsel %vm5987, %v6279, %v6281
    %v6283 = vrot.slane %v192, 1
    %v6284 = vsel %vm5987, %v6281, %v6283
    %v6285 = vrot.slane %v193, 1
    %v6286 = vrot.slane %v194, 1
    %v6287 = vsel %vm5987, %v6285, %v6286
    %v6288 = vrot.slane %v195, 1
    %v6289 = vsel %vm5987, %v6286, %v6288
    %v6290 = vrot.slane %v196, 1
    %v6291 = vsel %vm5987, %v6288, %v6290
    %v6292 = vrot.slane %v197, 1
    %v6293 = vsel %vm5987, %v6290, %v6292
    %v6294 = vrot.slane %v198, 1
    %v6295 = vrot.slane %v199, 1
    %v6296 = vsel %vm5987, %v6294, %v6295
    %v6297 = vrot.slane %v200, 1
    %v6298 = vsel %vm5987, %v6295, %v6297
    %v6299 = vrot.slane %v201, 1
    %v6300 = vsel %vm5987, %v6297, %v6299
    %v6301 = vrot.slane %v202, 1
    %v6302 = vsel %vm5987, %v6299, %v6301
    %v6303 = vrot.slane %v203, 1
    %v6304 = vrot.slane %v204, 1
    %v6305 = vsel %vm5987, %v6303, %v6304
    %v6306 = vrot.slane %v205, 1
    %v6307 = vsel %vm5987, %v6304, %v6306
    %v6308 = vrot.slane %v206, 1
    %v6309 = vsel %vm5987, %v6306, %v6308
    %v6310 = vrot.slane %v207, 1
    %v6311 = vsel %vm5987, %v6308, %v6310
    %v6312 = vrot.slane %v208, 1
    %v6313 = vrot.slane %v209, 1
    %v6314 = vsel %vm5987, %v6312, %v6313
    %v6315 = vrot.slane %v210, 1
    %v6316 = vsel %vm5987, %v6313, %v6315
    %v6317 = vrot.slane %v211, 1
    %v6318 = vsel %vm5987, %v6315, %v6317
    %v6319 = vrot.slane %v212, 1
    %v6320 = vsel %vm5987, %v6317, %v6319
    %v6321 = vrot.slane %v213, 1
    %v6322 = vrot.slane %v214, 1
    %v6323 = vsel %vm5987, %v6321, %v6322
    %v6324 = vrot.slane %v215, 1
    %v6325 = vsel %vm5987, %v6322, %v6324
    %v6326 = vrot.slane %v216, 1
    %v6327 = vsel %vm5987, %v6324, %v6326
    %v6328 = vrot.slane %v217, 1
    %v6329 = vsel %vm5987, %v6326, %v6328
    %v6330 = vrot.slane %v218, 1
    %v6331 = vrot.slane %v219, 1
    %v6332 = vsel %vm5987, %v6330, %v6331
    %v6333 = vrot.slane %v220, 1
    %v6334 = vsel %vm5987, %v6331, %v6333
    %v6335 = vrot.slane %v221, 1
    %v6336 = vsel %vm5987, %v6333, %v6335
    %v6337 = vrot.slane %v222, 1
    %v6338 = vsel %vm5987, %v6335, %v6337
    %v6339 = vrot.slane %v223, 1
    %v6340 = vrot.slane %v224, 1
    %v6341 = vsel %vm5987, %v6339, %v6340
    %v6342 = vrot.slane %v225, 1
    %v6343 = vsel %vm5987, %v6340, %v6342
    %v6344 = vrot.slane %v226, 1
    %v6345 = vsel %vm5987, %v6342, %v6344
    %v6346 = vrot.slane %v227, 1
    %v6347 = vsel %vm5987, %v6344, %v6346
    %v6348 = vrot.slane %v228, 1
    %v6349 = vrot.slane %v229, 1
    %v6350 = vsel %vm5987, %v6348, %v6349
    %v6351 = vrot.slane %v230, 1
    %v6352 = vsel %vm5987, %v6349, %v6351
    %v6353 = vrot.slane %v231, 1
    %v6354 = vsel %vm5987, %v6351, %v6353
    %v6355 = vrot.slane %v232, 1
    %v6356 = vsel %vm5987, %v6353, %v6355
    %v6357 = vrot.slane %v233, 1
    %v6358 = vrot.slane %v234, 1
    %v6359 = vsel %vm5987, %v6357, %v6358
    %v6360 = vrot.slane %v235, 1
    %v6361 = vsel %vm5987, %v6358, %v6360
    %v6362 = vrot.slane %v236, 1
    %v6363 = vsel %vm5987, %v6360, %v6362
    %v6364 = vrot.slane %v237, 1
    %v6365 = vsel %vm5987, %v6362, %v6364
    %v6366 = vrot.slane %v238, 1
    %v6367 = vrot.slane %v239, 1
    %v6368 = vsel %vm5987, %v6366, %v6367
    %v6369 = vrot.slane %v240, 1
    %v6370 = vsel %vm5987, %v6367, %v6369
    %v6371 = vrot.slane %v241, 1
    %v6372 = vsel %vm5987, %v6369, %v6371
    %v6373 = vrot.slane %v242, 1
    %v6374 = vsel %vm5987, %v6371, %v6373
    %v6375 = vrot.slane %v243, 1
    %v6376 = vrot.slane %v244, 1
    %v6377 = vsel %vm5987, %v6375, %v6376
    %v6378 = vrot.slane %v245, 1
    %v6379 = vsel %vm5987, %v6376, %v6378
    %v6380 = vrot.slane %v246, 1
    %v6381 = vsel %vm5987, %v6378, %v6380
    %v6382 = vrot.slane %v247, 1
    %v6383 = vsel %vm5987, %v6380, %v6382
    %v6384 = vrot.slane %v248, 1
    %v6385 = vrot.slane %v249, 1
    %v6386 = vsel %vm5987, %v6384, %v6385
    %v6387 = vrot.slane %v250, 1
    %v6388 = vsel %vm5987, %v6385, %v6387
    %v6389 = vrot.slane %v251, 1
    %v6390 = vsel %vm5987, %v6387, %v6389
    %v6391 = vrot.slane %v252, 1
    %v6392 = vsel %vm5987, %v6389, %v6391
    %v6393 = vrot.slane %v253, 1
    %v6394 = vrot.slane %v254, 1
    %v6395 = vsel %vm5987, %v6393, %v6394
    %v6396 = vrot.slane %v255, 1
    %v6397 = vsel %vm5987, %v6394, %v6396
    %v6398 = vrot.slane %v256, 1
    %v6399 = vsel %vm5987, %v6396, %v6398
    %v6400 = vrot.slane %v257, 1
    %v6401 = vsel %vm5987, %v6398, %v6400
    %v6402 = vrot.slane %v258, 1
    %v6403 = vrot.slane %v259, 1
    %v6404 = vsel %vm5987, %v6402, %v6403
    %v6405 = vrot.slane %v260, 1
    %v6406 = vsel %vm5987, %v6403, %v6405
    %v6407 = vrot.slane %v261, 1
    %v6408 = vsel %vm5987, %v6405, %v6407
    %v6409 = vrot.slane %v262, 1
    %v6410 = vsel %vm5987, %v6407, %v6409
    %v6411 = vrot.slane %v263, 1
    %v6412 = vrot.slane %v264, 1
    %v6413 = vsel %vm5987, %v6411, %v6412
    %v6414 = vrot.slane %v265, 1
    %v6415 = vsel %vm5987, %v6412, %v6414
    %v6416 = vrot.slane %v266, 1
    %v6417 = vsel %vm5987, %v6414, %v6416
    %v6418 = vrot.slane %v267, 1
    %v6419 = vsel %vm5987, %v6416, %v6418
    %v6420 = vrot.slane %v268, 1
    %v6421 = vrot.slane %v269, 1
    %v6422 = vsel %vm5987, %v6420, %v6421
    %v6423 = vrot.slane %v270, 1
    %v6424 = vsel %vm5987, %v6421, %v6423
    %v6425 = vrot.slane %v271, 1
    %v6426 = vsel %vm5987, %v6423, %v6425
    %v6427 = vrot.slane %v272, 1
    %v6428 = vsel %vm5987, %v6425, %v6427
    %v6429 = vrot.slane %v273, 1
    %v6430 = vrot.slane %v274, 1
    %v6431 = vsel %vm5987, %v6429, %v6430
    %v6432 = vrot.slane %v275, 1
    %v6433 = vsel %vm5987, %v6430, %v6432
    %v6434 = vrot.slane %v276, 1
    %v6435 = vsel %vm5987, %v6432, %v6434
    %v6436 = vrot.slane %v277, 1
    %v6437 = vsel %vm5987, %v6434, %v6436
    %v6438 = vrot.slane %v278, 1
    %v6439 = vrot.slane %v279, 1
    %v6440 = vsel %vm5987, %v6438, %v6439
    %v6441 = vrot.slane %v280, 1
    %v6442 = vsel %vm5987, %v6439, %v6441
    %v6443 = vrot.slane %v281, 1
    %v6444 = vsel %vm5987, %v6441, %v6443
    %v6445 = vrot.slane %v282, 1
    %v6446 = vsel %vm5987, %v6443, %v6445
    %v6447 = vrot.slane %v283, 1
    %v6448 = vrot.slane %v284, 1
    %v6449 = vsel %vm5987, %v6447, %v6448
    %v6450 = vrot.slane %v285, 1
    %v6451 = vsel %vm5987, %v6448, %v6450
    %v6452 = vrot.slane %v286, 1
    %v6453 = vsel %vm5987, %v6450, %v6452
    %v6454 = vrot.slane %v287, 1
    %v6455 = vsel %vm5987, %v6452, %v6454
    %v6456 = vrot.slane %v288, 1
    %v6457 = vrot.slane %v289, 1
    %v6458 = vsel %vm5987, %v6456, %v6457
    %v6459 = vrot.slane %v290, 1
    %v6460 = vsel %vm5987, %v6457, %v6459
    %v6461 = vrot.slane %v291, 1
    %v6462 = vsel %vm5987, %v6459, %v6461
    %v6463 = vrot.slane %v292, 1
    %v6464 = vsel %vm5987, %v6461, %v6463
    %v6465 = vrot.slane %v293, 1
    %v6466 = vrot.slane %v294, 1
    %v6467 = vsel %vm5987, %v6465, %v6466
    %v6468 = vrot.slane %v295, 1
    %v6469 = vsel %vm5987, %v6466, %v6468
    %v6470 = vrot.slane %v296, 1
    %v6471 = vsel %vm5987, %v6468, %v6470
    %v6472 = vrot.slane %v297, 1
    %v6473 = vsel %vm5987, %v6470, %v6472
    %v6474 = vrot.slane %v298, 1
    %v6475 = vrot.slane %v299, 1
    %v6476 = vsel %vm5987, %v6474, %v6475
    %v6477 = vrot.slane %v300, 1
    %v6478 = vsel %vm5987, %v6475, %v6477
    %v6479 = vrot.slane %v301, 1
    %v6480 = vsel %vm5987, %v6477, %v6479
    %v6481 = vrot.slane %v302, 1
    %v6482 = vsel %vm5987, %v6479, %v6481
    %v6483 = vrot.slane %v303, 1
    %v6484 = vrot.slane %v304, 1
    %v6485 = vsel %vm5987, %v6483, %v6484
    %v6486 = vrot.slane %v305, 1
    %v6487 = vsel %vm5987, %v6484, %v6486
    %v6488 = vrot.slane %v306, 1
    %v6489 = vsel %vm5987, %v6486, %v6488
    %v6490 = vrot.slane %v307, 1
    %v6491 = vsel %vm5987, %v6488, %v6490
    %v6492 = vrot.slane %v308, 1
    %v6493 = vrot.slane %v309, 1
    %v6494 = vsel %vm5987, %v6492, %v6493
    %v6495 = vrot.slane %v310, 1
    %v6496 = vsel %vm5987, %v6493, %v6495
    %v6497 = vrot.slane %v311, 1
    %v6498 = vsel %vm5987, %v6495, %v6497
    %v6499 = vrot.slane %v312, 1
    %v6500 = vsel %vm5987, %v6497, %v6499
    %v6501 = vrot.slane %v313, 1
    %v6502 = vrot.slane %v314, 1
    %v6503 = vsel %vm5987, %v6501, %v6502
    %v6504 = vrot.slane %v315, 1
    %v6505 = vsel %vm5987, %v6502, %v6504
    %v6506 = vrot.slane %v316, 1
    %v6507 = vsel %vm5987, %v6504, %v6506
    %v6508 = vrot.slane %v317, 1
    %v6509 = vsel %vm5987, %v6506, %v6508
    %v6510 = vrot.slane %v318, 1
    %v6511 = vrot.slane %v319, 1
    %v6512 = vsel %vm5987, %v6510, %v6511
    %v6513 = vrot.slane %v320, 1
    %v6514 = vsel %vm5987, %v6511, %v6513
    %v6515 = vrot.slane %v321, 1
    %v6516 = vsel %vm5987, %v6513, %v6515
    %v6517 = vrot.slane %v322, 1
    %v6518 = vsel %vm5987, %v6515, %v6517
    %v6519 = vrot.slane %v323, 1
    %v6520 = vrot.slane %v324, 1
    %v6521 = vsel %vm5987, %v6519, %v6520
    %v6522 = vrot.slane %v325, 1
    %v6523 = vsel %vm5987, %v6520, %v6522
    %v6524 = vrot.slane %v326, 1
    %v6525 = vsel %vm5987, %v6522, %v6524
    %v6526 = vrot.slane %v327, 1
    %v6527 = vsel %vm5987, %v6524, %v6526
    %v6528 = vrot.slane %v328, 1
    %v6529 = vrot.slane %v329, 1
    %v6530 = vsel %vm5987, %v6528, %v6529
    %v6531 = vrot.slane %v330, 1
    %v6532 = vsel %vm5987, %v6529, %v6531
    %v6533 = vrot.slane %v331, 1
    %v6534 = vsel %vm5987, %v6531, %v6533
    %v6535 = vrot.slane %v332, 1
    %v6536 = vsel %vm5987, %v6533, %v6535
    %v6537 = vrot.slane %v333, 1
    %v6538 = vrot.slane %v334, 1
    %v6539 = vsel %vm5987, %v6537, %v6538
    %v6540 = vrot.slane %v335, 1
    %v6541 = vsel %vm5987, %v6538, %v6540
    %v6542 = vrot.slane %v336, 1
    %v6543 = vsel %vm5987, %v6540, %v6542
    %v6544 = vrot.slane %v337, 1
    %v6545 = vsel %vm5987, %v6542, %v6544
    %v6546 = vrot.slane %v338, 1
    %v6547 = vrot.slane %v339, 1
    %v6548 = vsel %vm5987, %v6546, %v6547
    %v6549 = vrot.slane %v340, 1
    %v6550 = vsel %vm5987, %v6547, %v6549
    %v6551 = vrot.slane %v341, 1
    %v6552 = vsel %vm5987, %v6549, %v6551
    %v6553 = vrot.slane %v342, 1
    %v6554 = vsel %vm5987, %v6551, %v6553
    %v6555 = vrot.slane %v343, 1
    %v6556 = vrot.slane %v344, 1
    %v6557 = vsel %vm5987, %v6555, %v6556
    %v6558 = vrot.slane %v345, 1
    %v6559 = vsel %vm5987, %v6556, %v6558
    %v6560 = vrot.slane %v346, 1
    %v6561 = vsel %vm5987, %v6558, %v6560
    %v6562 = vrot.slane %v347, 1
    %v6563 = vsel %vm5987, %v6560, %v6562
    %v6564 = vrot.slane %v348, 1
    %v6565 = vrot.slane %v349, 1
    %v6566 = vsel %vm5987, %v6564, %v6565
    %v6567 = vrot.slane %v350, 1
    %v6568 = vsel %vm5987, %v6565, %v6567
    %v6569 = vrot.slane %v351, 1
    %v6570 = vsel %vm5987, %v6567, %v6569
    %v6571 = vrot.slane %v352, 1
    %v6572 = vsel %vm5987, %v6569, %v6571
    %v6573 = vrot.slane %v353, 1
    %v6574 = vrot.slane %v354, 1
    %v6575 = vsel %vm5987, %v6573, %v6574
    %v6576 = vrot.slane %v355, 1
    %v6577 = vsel %vm5987, %v6574, %v6576
    %v6578 = vrot.slane %v356, 1
    %v6579 = vsel %vm5987, %v6576, %v6578
    %v6580 = vrot.slane %v357, 1
    %v6581 = vsel %vm5987, %v6578, %v6580
    %v6582 = vrot.slane %v358, 1
    %v6583 = vrot.slane %v359, 1
    %v6584 = vsel %vm5987, %v6582, %v6583
    %v6585 = vrot.slane %v360, 1
    %v6586 = vsel %vm5987, %v6583, %v6585
    %v6587 = vrot.slane %v361, 1
    %v6588 = vsel %vm5987, %v6585, %v6587
    %v6589 = vrot.slane %v362, 1
    %v6590 = vsel %vm5987, %v6587, %v6589
    %v6591 = vrot.slane %v363, 1
    %v6592 = vrot.slane %v364, 1
    %v6593 = vsel %vm5987, %v6591, %v6592
    %v6594 = vrot.slane %v365, 1
    %v6595 = vsel %vm5987, %v6592, %v6594
    %v6596 = vrot.slane %v366, 1
    %v6597 = vsel %vm5987, %v6594, %v6596
    %v6598 = vrot.slane %v367, 1
    %v6599 = vsel %vm5987, %v6596, %v6598
    %v6600 = vrot.slane %v368, 1
    %v6601 = vrot.slane %v369, 1
    %v6602 = vsel %vm5987, %v6600, %v6601
    %v6603 = vrot.slane %v370, 1
    %v6604 = vsel %vm5987, %v6601, %v6603
    %v6605 = vrot.slane %v371, 1
    %v6606 = vsel %vm5987, %v6603, %v6605
    %v6607 = vrot.slane %v372, 1
    %v6608 = vsel %vm5987, %v6605, %v6607
    %v6609 = vrot.slane %v373, 1
    %v6610 = vrot.slane %v374, 1
    %v6611 = vsel %vm5987, %v6609, %v6610
    %v6612 = vrot.slane %v375, 1
    %v6613 = vsel %vm5987, %v6610, %v6612
    %v6614 = vrot.slane %v376, 1
    %v6615 = vsel %vm5987, %v6612, %v6614
    %v6616 = vrot.slane %v377, 1
    %v6617 = vsel %vm5987, %v6614, %v6616
    %v6618 = vrot.slane %v378, 1
    %v6619 = vrot.slane %v379, 1
    %v6620 = vsel %vm5987, %v6618, %v6619
    %v6621 = vrot.slane %v380, 1
    %v6622 = vsel %vm5987, %v6619, %v6621
    %v6623 = vrot.slane %v381, 1
    %v6624 = vsel %vm5987, %v6621, %v6623
    %v6625 = vrot.slane %v382, 1
    %v6626 = vsel %vm5987, %v6623, %v6625
    %v6627 = vrot.slane %v383, 1
    %v6628 = vrot.slane %v384, 1
    %v6629 = vsel %vm5987, %v6627, %v6628
    %v6630 = vrot.slane %v385, 1
    %v6631 = vsel %vm5987, %v6628, %v6630
    %v6632 = vrot.slane %v386, 1
    %v6633 = vsel %vm5987, %v6630, %v6632
    %v6634 = vrot.slane %v387, 1
    %v6635 = vsel %vm5987, %v6632, %v6634
    %v6636 = vrot.slane %v388, 1
    %v6637 = vrot.slane %v389, 1
    %v6638 = vsel %vm5987, %v6636, %v6637
    %v6639 = vrot.slane %v390, 1
    %v6640 = vsel %vm5987, %v6637, %v6639
    %v6641 = vrot.slane %v391, 1
    %v6642 = vsel %vm5987, %v6639, %v6641
    %v6643 = vrot.slane %v392, 1
    %v6644 = vsel %vm5987, %v6641, %v6643
    %v6645 = vrot.slane %v393, 1
    %v6646 = vrot.slane %v394, 1
    %v6647 = vsel %vm5987, %v6645, %v6646
    %v6648 = vrot.slane %v395, 1
    %v6649 = vsel %vm5987, %v6646, %v6648
    %v6650 = vrot.slane %v396, 1
    %v6651 = vsel %vm5987, %v6648, %v6650
    %v6652 = vrot.slane %v397, 1
    %v6653 = vsel %vm5987, %v6650, %v6652
    %v6654 = vrot.slane %v398, 1
    %v6655 = vrot.slane %v399, 1
    %v6656 = vsel %vm5987, %v6654, %v6655
    %v6657 = vrot.slane %v400, 1
    %v6658 = vsel %vm5987, %v6655, %v6657
    %v6659 = vrot.slane %v401, 1
    %v6660 = vsel %vm5987, %v6657, %v6659
    %v6661 = vrot.slane %v402, 1
    %v6662 = vsel %vm5987, %v6659, %v6661
    %v6663 = vrot.slane %v403, 1
    %v6664 = vrot.slane %v404, 1
    %v6665 = vsel %vm5987, %v6663, %v6664
    %v6666 = vrot.slane %v405, 1
    %v6667 = vsel %vm5987, %v6664, %v6666
    %v6668 = vrot.slane %v406, 1
    %v6669 = vsel %vm5987, %v6666, %v6668
    %v6670 = vrot.slane %v407, 1
    %v6671 = vsel %vm5987, %v6668, %v6670
    %v6672 = vrot.slane %v408, 1
    %v6673 = vrot.slane %v409, 1
    %v6674 = vsel %vm5987, %v6672, %v6673
    %v6675 = vrot.slane %v410, 1
    %v6676 = vsel %vm5987, %v6673, %v6675
    %v6677 = vrot.slane %v411, 1
    %v6678 = vsel %vm5987, %v6675, %v6677
    %v6679 = vrot.slane %v412, 1
    %v6680 = vsel %vm5987, %v6677, %v6679
    %v6681 = vrot.slane %v413, 1
    %v6682 = vrot.slane %v414, 1
    %v6683 = vsel %vm5987, %v6681, %v6682
    %v6684 = vrot.slane %v415, 1
    %v6685 = vsel %vm5987, %v6682, %v6684
    %v6686 = vrot.slane %v416, 1
    %v6687 = vsel %vm5987, %v6684, %v6686
    %v6688 = vrot.slane %v417, 1
    %v6689 = vsel %vm5987, %v6686, %v6688
    %v6690 = vrot.slane %v418, 1
    %v6691 = vrot.slane %v419, 1
    %v6692 = vsel %vm5987, %v6690, %v6691
    %v6693 = vrot.slane %v420, 1
    %v6694 = vsel %vm5987, %v6691, %v6693
    %v6695 = vrot.slane %v421, 1
    %v6696 = vsel %vm5987, %v6693, %v6695
    %v6697 = vrot.slane %v422, 1
    %v6698 = vsel %vm5987, %v6695, %v6697
    %v6699 = vrot.slane %v423, 1
    %v6700 = vrot.slane %v424, 1
    %v6701 = vsel %vm5987, %v6699, %v6700
    %v6702 = vrot.slane %v425, 1
    %v6703 = vsel %vm5987, %v6700, %v6702
    %v6704 = vrot.slane %v426, 1
    %v6705 = vsel %vm5987, %v6702, %v6704
    %v6706 = vrot.slane %v427, 1
    %v6707 = vsel %vm5987, %v6704, %v6706
    %v6708 = vrot.slane %v428, 1
    %v6709 = vrot.slane %v429, 1
    %v6710 = vsel %vm5987, %v6708, %v6709
    %v6711 = vrot.slane %v430, 1
    %v6712 = vsel %vm5987, %v6709, %v6711
    %v6713 = vrot.slane %v431, 1
    %v6714 = vsel %vm5987, %v6711, %v6713
    %v6715 = vrot.slane %v432, 1
    %v6716 = vsel %vm5987, %v6713, %v6715
    %v6717 = vrot.slane %v433, 1
    %v6718 = vrot.slane %v434, 1
    %v6719 = vsel %vm5987, %v6717, %v6718
    %v6720 = vrot.slane %v435, 1
    %v6721 = vsel %vm5987, %v6718, %v6720
    %v6722 = vrot.slane %v436, 1
    %v6723 = vsel %vm5987, %v6720, %v6722
    %v6724 = vrot.slane %v437, 1
    %v6725 = vsel %vm5987, %v6722, %v6724
    %v6726 = vrot.slane %v438, 1
    %v6727 = vrot.slane %v439, 1
    %v6728 = vsel %vm5987, %v6726, %v6727
    %v6729 = vrot.slane %v440, 1
    %v6730 = vsel %vm5987, %v6727, %v6729
    %v6731 = vrot.slane %v441, 1
    %v6732 = vsel %vm5987, %v6729, %v6731
    %v6733 = vrot.slane %v442, 1
    %v6734 = vsel %vm5987, %v6731, %v6733
    %v6735 = vrot.slane %v443, 1
    %v6736 = vrot.slane %v444, 1
    %v6737 = vsel %vm5987, %v6735, %v6736
    %v6738 = vrot.slane %v445, 1
    %v6739 = vsel %vm5987, %v6736, %v6738
    %v6740 = vrot.slane %v446, 1
    %v6741 = vsel %vm5987, %v6738, %v6740
    %v6742 = vrot.slane %v447, 1
    %v6743 = vsel %vm5987, %v6740, %v6742
    %v6744 = vrot.slane %v448, 1
    %v6745 = vrot.slane %v449, 1
    %v6746 = vsel %vm5987, %v6744, %v6745
    %v6747 = vrot.slane %v450, 1
    %v6748 = vsel %vm5987, %v6745, %v6747
    %v6749 = vrot.slane %v451, 1
    %v6750 = vsel %vm5987, %v6747, %v6749
    %v6751 = vrot.slane %v452, 1
    %v6752 = vsel %vm5987, %v6749, %v6751
    %v6753 = vrot.slane %v453, 1
    %v6754 = vrot.slane %v454, 1
    %v6755 = vsel %vm5987, %v6753, %v6754
    %v6756 = vrot.slane %v455, 1
    %v6757 = vsel %vm5987, %v6754, %v6756
    %v6758 = vrot.slane %v456, 1
    %v6759 = vsel %vm5987, %v6756, %v6758
    %v6760 = vrot.slane %v457, 1
    %v6761 = vsel %vm5987, %v6758, %v6760
    %v6762 = vrot.slane %v458, 1
    %v6763 = vrot.slane %v459, 1
    %v6764 = vsel %vm5987, %v6762, %v6763
    %v6765 = vrot.slane %v460, 1
    %v6766 = vsel %vm5987, %v6763, %v6765
    %v6767 = vrot.slane %v461, 1
    %v6768 = vsel %vm5987, %v6765, %v6767
    %v6769 = vrot.slane %v462, 1
    %v6770 = vsel %vm5987, %v6767, %v6769
    %v6771 = vrot.slane %v463, 1
    %v6772 = vrot.slane %v464, 1
    %v6773 = vsel %vm5987, %v6771, %v6772
    %v6774 = vrot.slane %v465, 1
    %v6775 = vsel %vm5987, %v6772, %v6774
    %v6776 = vrot.slane %v466, 1
    %v6777 = vsel %vm5987, %v6774, %v6776
    %v6778 = vrot.slane %v467, 1
    %v6779 = vsel %vm5987, %v6776, %v6778
    %v6780 = vrot.slane %v468, 1
    %v6781 = vrot.slane %v469, 1
    %v6782 = vsel %vm5987, %v6780, %v6781
    %v6783 = vrot.slane %v470, 1
    %v6784 = vsel %vm5987, %v6781, %v6783
    %v6785 = vrot.slane %v471, 1
    %v6786 = vsel %vm5987, %v6783, %v6785
    %v6787 = vrot.slane %v472, 1
    %v6788 = vsel %vm5987, %v6785, %v6787
    %v6789 = vrot.slane %v473, 1
    %v6790 = vrot.slane %v474, 1
    %v6791 = vsel %vm5987, %v6789, %v6790
    %v6792 = vrot.slane %v475, 1
    %v6793 = vsel %vm5987, %v6790, %v6792
    %v6794 = vrot.slane %v476, 1
    %v6795 = vsel %vm5987, %v6792, %v6794
    %v6796 = vrot.slane %v477, 1
    %v6797 = vsel %vm5987, %v6794, %v6796
    %v6798 = vrot.slane %v478, 1
    %v6799 = vrot.slane %v479, 1
    %v6800 = vsel %vm5987, %v6798, %v6799
    %v6801 = vrot.slane %v480, 1
    %v6802 = vsel %vm5987, %v6799, %v6801
    %v6803 = vrot.slane %v481, 1
    %v6804 = vsel %vm5987, %v6801, %v6803
    %v6805 = vrot.slane %v482, 1
    %v6806 = vsel %vm5987, %v6803, %v6805
    %v6807 = vrot.slane %v483, 1
    %v6808 = vrot.slane %v484, 1
    %v6809 = vsel %vm5987, %v6807, %v6808
    %v6810 = vrot.slane %v485, 1
    %v6811 = vsel %vm5987, %v6808, %v6810
    %v6812 = vrot.slane %v486, 1
    %v6813 = vsel %vm5987, %v6810, %v6812
    %v6814 = vrot.slane %v487, 1
    %v6815 = vsel %vm5987, %v6812, %v6814
    %v6816 = vrot.slane %v488, 1
    %v6817 = vrot.slane %v489, 1
    %v6818 = vsel %vm5987, %v6816, %v6817
    %v6819 = vrot.slane %v490, 1
    %v6820 = vsel %vm5987, %v6817, %v6819
    %v6821 = vrot.slane %v491, 1
    %v6822 = vsel %vm5987, %v6819, %v6821
    %v6823 = vrot.slane %v492, 1
    %v6824 = vsel %vm5987, %v6821, %v6823
    %v6825 = vrot.slane %v493, 1
    %v6826 = vrot.slane %v494, 1
    %v6827 = vsel %vm5987, %v6825, %v6826
    %v6828 = vrot.slane %v495, 1
    %v6829 = vsel %vm5987, %v6826, %v6828
    %v6830 = vrot.slane %v496, 1
    %v6831 = vsel %vm5987, %v6828, %v6830
    %v6832 = vrot.slane %v497, 1
    %v6833 = vsel %vm5987, %v6830, %v6832
    %v6834 = vrot.slane %v498, 1
    %v6835 = vrot.slane %v499, 1
    %v6836 = vsel %vm5987, %v6834, %v6835
    %v6837 = vrot.slane %v500, 1
    %v6838 = vsel %vm5987, %v6835, %v6837
    %v6839 = vrot.slane %v501, 1
    %v6840 = vsel %vm5987, %v6837, %v6839
    %v6841 = vrot.slane %v502, 1
    %v6842 = vsel %vm5987, %v6839, %v6841
    %v6843 = vrot.slane %v503, 1
    %v6844 = vrot.slane %v504, 1
    %v6845 = vsel %vm5987, %v6843, %v6844
    %v6846 = vrot.slane %v505, 1
    %v6847 = vsel %vm5987, %v6844, %v6846
    %v6848 = vrot.slane %v506, 1
    %v6849 = vsel %vm5987, %v6846, %v6848
    %v6850 = vrot.slane %v507, 1
    %v6851 = vsel %vm5987, %v6848, %v6850
    %v6852 = vrot.slane %v508, 1
    %v6853 = vrot.slane %v509, 1
    %v6854 = vsel %vm5987, %v6852, %v6853
    %v6855 = vrot.slane %v510, 1
    %v6856 = vsel %vm5987, %v6853, %v6855
    %v6857 = vrot.slane %v511, 1
    %v6858 = vsel %vm5987, %v6855, %v6857
    %v6859 = vrot.slane %v512, 1
    %v6860 = vsel %vm5987, %v6857, %v6859
    %v6861 = vrot.slane %v513, 1
    %v6862 = vrot.slane %v514, 1
    %v6863 = vsel %vm5987, %v6861, %v6862
    %v6864 = vrot.slane %v515, 1
    %v6865 = vsel %vm5987, %v6862, %v6864
    %v6866 = vrot.slane %v516, 1
    %v6867 = vsel %vm5987, %v6864, %v6866
    %v6868 = vrot.slane %v517, 1
    %v6869 = vsel %vm5987, %v6866, %v6868
    %v6870 = vrot.slane %v518, 1
    %v6871 = vrot.slane %v519, 1
    %v6872 = vsel %vm5987, %v6870, %v6871
    %v6873 = vrot.slane %v520, 1
    %v6874 = vsel %vm5987, %v6871, %v6873
    %v6875 = vrot.slane %v521, 1
    %v6876 = vsel %vm5987, %v6873, %v6875
    %v6877 = vrot.slane %v522, 1
    %v6878 = vsel %vm5987, %v6875, %v6877
    %v7275 = vsub.f32 %v28, %v5990
    %v7276 = vsub.f32 %v29, %v5992
    %v7277 = vsub.f32 %v30, %v5994
    %v7278 = vsub.f32 %v31, %v5996
    %v7279 = vsub.f32 %v33, %v5999
    %v7280 = vsub.f32 %v34, %v6001
    %v7281 = vsub.f32 %v35, %v6003
    %v7282 = vsub.f32 %v36, %v6005
    %v7283 = vsub.f32 %v38, %v6008
    %v7284 = vsub.f32 %v39, %v6010
    %v7285 = vsub.f32 %v40, %v6012
    %v7286 = vsub.f32 %v41, %v6014
    %v7287 = vsub.f32 %v43, %v6017
    %v7288 = vsub.f32 %v44, %v6019
    %v7289 = vsub.f32 %v45, %v6021
    %v7290 = vsub.f32 %v46, %v6023
    %v7291 = vsub.f32 %v48, %v6026
    %v7292 = vsub.f32 %v49, %v6028
    %v7293 = vsub.f32 %v50, %v6030
    %v7294 = vsub.f32 %v51, %v6032
    %v7295 = vsub.f32 %v53, %v6035
    %v7296 = vsub.f32 %v54, %v6037
    %v7297 = vsub.f32 %v55, %v6039
    %v7298 = vsub.f32 %v56, %v6041
    %v7299 = vsub.f32 %v58, %v6044
    %v7300 = vsub.f32 %v59, %v6046
    %v7301 = vsub.f32 %v60, %v6048
    %v7302 = vsub.f32 %v61, %v6050
    %v7303 = vsub.f32 %v63, %v6053
    %v7304 = vsub.f32 %v64, %v6055
    %v7305 = vsub.f32 %v65, %v6057
    %v7306 = vsub.f32 %v66, %v6059
    %v7307 = vsub.f32 %v68, %v6062
    %v7308 = vsub.f32 %v69, %v6064
    %v7309 = vsub.f32 %v70, %v6066
    %v7310 = vsub.f32 %v71, %v6068
    %v7311 = vsub.f32 %v73, %v6071
    %v7312 = vsub.f32 %v74, %v6073
    %v7313 = vsub.f32 %v75, %v6075
    %v7314 = vsub.f32 %v76, %v6077
    %v7315 = vsub.f32 %v78, %v6080
    %v7316 = vsub.f32 %v79, %v6082
    %v7317 = vsub.f32 %v80, %v6084
    %v7318 = vsub.f32 %v81, %v6086
    %v7319 = vsub.f32 %v83, %v6089
    %v7320 = vsub.f32 %v84, %v6091
    %v7321 = vsub.f32 %v85, %v6093
    %v7322 = vsub.f32 %v86, %v6095
    %v7323 = vsub.f32 %v88, %v6098
    %v7324 = vsub.f32 %v89, %v6100
    %v7325 = vsub.f32 %v90, %v6102
    %v7326 = vsub.f32 %v91, %v6104
    %v7327 = vsub.f32 %v93, %v6107
    %v7328 = vsub.f32 %v94, %v6109
    %v7329 = vsub.f32 %v95, %v6111
    %v7330 = vsub.f32 %v96, %v6113
    %v7331 = vsub.f32 %v98, %v6116
    %v7332 = vsub.f32 %v99, %v6118
    %v7333 = vsub.f32 %v100, %v6120
    %v7334 = vsub.f32 %v101, %v6122
    %v7335 = vsub.f32 %v103, %v6125
    %v7336 = vsub.f32 %v104, %v6127
    %v7337 = vsub.f32 %v105, %v6129
    %v7338 = vsub.f32 %v106, %v6131
    %v7339 = vsub.f32 %v108, %v6134
    %v7340 = vsub.f32 %v109, %v6136
    %v7341 = vsub.f32 %v110, %v6138
    %v7342 = vsub.f32 %v111, %v6140
    %v7343 = vsub.f32 %v113, %v6143
    %v7344 = vsub.f32 %v114, %v6145
    %v7345 = vsub.f32 %v115, %v6147
    %v7346 = vsub.f32 %v116, %v6149
    %v7347 = vsub.f32 %v118, %v6152
    %v7348 = vsub.f32 %v119, %v6154
    %v7349 = vsub.f32 %v120, %v6156
    %v7350 = vsub.f32 %v121, %v6158
    %v7351 = vsub.f32 %v123, %v6161
    %v7352 = vsub.f32 %v124, %v6163
    %v7353 = vsub.f32 %v125, %v6165
    %v7354 = vsub.f32 %v126, %v6167
    %v7355 = vsub.f32 %v128, %v6170
    %v7356 = vsub.f32 %v129, %v6172
    %v7357 = vsub.f32 %v130, %v6174
    %v7358 = vsub.f32 %v131, %v6176
    %v7359 = vsub.f32 %v133, %v6179
    %v7360 = vsub.f32 %v134, %v6181
    %v7361 = vsub.f32 %v135, %v6183
    %v7362 = vsub.f32 %v136, %v6185
    %v7363 = vsub.f32 %v138, %v6188
    %v7364 = vsub.f32 %v139, %v6190
    %v7365 = vsub.f32 %v140, %v6192
    %v7366 = vsub.f32 %v141, %v6194
    %v7367 = vsub.f32 %v143, %v6197
    %v7368 = vsub.f32 %v144, %v6199
    %v7369 = vsub.f32 %v145, %v6201
    %v7370 = vsub.f32 %v146, %v6203
    %v7371 = vsub.f32 %v148, %v6206
    %v7372 = vsub.f32 %v149, %v6208
    %v7373 = vsub.f32 %v150, %v6210
    %v7374 = vsub.f32 %v151, %v6212
    %v7375 = vsub.f32 %v153, %v6215
    %v7376 = vsub.f32 %v154, %v6217
    %v7377 = vsub.f32 %v155, %v6219
    %v7378 = vsub.f32 %v156, %v6221
    %v7379 = vsub.f32 %v158, %v6224
    %v7380 = vsub.f32 %v159, %v6226
    %v7381 = vsub.f32 %v160, %v6228
    %v7382 = vsub.f32 %v161, %v6230
    %v7383 = vsub.f32 %v163, %v6233
    %v7384 = vsub.f32 %v164, %v6235
    %v7385 = vsub.f32 %v165, %v6237
    %v7386 = vsub.f32 %v166, %v6239
    %v7387 = vsub.f32 %v168, %v6242
    %v7388 = vsub.f32 %v169, %v6244
    %v7389 = vsub.f32 %v170, %v6246
    %v7390 = vsub.f32 %v171, %v6248
    %v7391 = vsub.f32 %v173, %v6251
    %v7392 = vsub.f32 %v174, %v6253
    %v7393 = vsub.f32 %v175, %v6255
    %v7394 = vsub.f32 %v176, %v6257
    %v7395 = vsub.f32 %v178, %v6260
    %v7396 = vsub.f32 %v179, %v6262
    %v7397 = vsub.f32 %v180, %v6264
    %v7398 = vsub.f32 %v181, %v6266
    %v7399 = vsub.f32 %v183, %v6269
    %v7400 = vsub.f32 %v184, %v6271
    %v7401 = vsub.f32 %v185, %v6273
    %v7402 = vsub.f32 %v186, %v6275
    %v7403 = vsub.f32 %v188, %v6278
    %v7404 = vsub.f32 %v189, %v6280
    %v7405 = vsub.f32 %v190, %v6282
    %v7406 = vsub.f32 %v191, %v6284
    %v7407 = vsub.f32 %v193, %v6287
    %v7408 = vsub.f32 %v194, %v6289
    %v7409 = vsub.f32 %v195, %v6291
    %v7410 = vsub.f32 %v196, %v6293
    %v7411 = vsub.f32 %v198, %v6296
    %v7412 = vsub.f32 %v199, %v6298
    %v7413 = vsub.f32 %v200, %v6300
    %v7414 = vsub.f32 %v201, %v6302
    %v7415 = vsub.f32 %v203, %v6305
    %v7416 = vsub.f32 %v204, %v6307
    %v7417 = vsub.f32 %v205, %v6309
    %v7418 = vsub.f32 %v206, %v6311
    %v7419 = vsub.f32 %v208, %v6314
    %v7420 = vsub.f32 %v209, %v6316
    %v7421 = vsub.f32 %v210, %v6318
    %v7422 = vsub.f32 %v211, %v6320
    %v7423 = vsub.f32 %v213, %v6323
    %v7424 = vsub.f32 %v214, %v6325
    %v7425 = vsub.f32 %v215, %v6327
    %v7426 = vsub.f32 %v216, %v6329
    %v7427 = vsub.f32 %v218, %v6332
    %v7428 = vsub.f32 %v219, %v6334
    %v7429 = vsub.f32 %v220, %v6336
    %v7430 = vsub.f32 %v221, %v6338
    %v7431 = vsub.f32 %v223, %v6341
    %v7432 = vsub.f32 %v224, %v6343
    %v7433 = vsub.f32 %v225, %v6345
    %v7434 = vsub.f32 %v226, %v6347
    %v7435 = vsub.f32 %v228, %v6350
    %v7436 = vsub.f32 %v229, %v6352
    %v7437 = vsub.f32 %v230, %v6354
    %v7438 = vsub.f32 %v231, %v6356
    %v7439 = vsub.f32 %v233, %v6359
    %v7440 = vsub.f32 %v234, %v6361
    %v7441 = vsub.f32 %v235, %v6363
    %v7442 = vsub.f32 %v236, %v6365
    %v7443 = vsub.f32 %v238, %v6368
    %v7444 = vsub.f32 %v239, %v6370
    %v7445 = vsub.f32 %v240, %v6372
    %v7446 = vsub.f32 %v241, %v6374
    %v7447 = vsub.f32 %v243, %v6377
    %v7448 = vsub.f32 %v244, %v6379
    %v7449 = vsub.f32 %v245, %v6381
    %v7450 = vsub.f32 %v246, %v6383
    %v7451 = vsub.f32 %v248, %v6386
    %v7452 = vsub.f32 %v249, %v6388
    %v7453 = vsub.f32 %v250, %v6390
    %v7454 = vsub.f32 %v251, %v6392
    %v7455 = vsub.f32 %v253, %v6395
    %v7456 = vsub.f32 %v254, %v6397
    %v7457 = vsub.f32 %v255, %v6399
    %v7458 = vsub.f32 %v256, %v6401
    %v7459 = vsub.f32 %v258, %v6404
    %v7460 = vsub.f32 %v259, %v6406
    %v7461 = vsub.f32 %v260, %v6408
    %v7462 = vsub.f32 %v261, %v6410
    %v7463 = vsub.f32 %v263, %v6413
    %v7464 = vsub.f32 %v264, %v6415
    %v7465 = vsub.f32 %v265, %v6417
    %v7466 = vsub.f32 %v266, %v6419
    %v7467 = vsub.f32 %v268, %v6422
    %v7468 = vsub.f32 %v269, %v6424
    %v7469 = vsub.f32 %v270, %v6426
    %v7470 = vsub.f32 %v271, %v6428
    %v7471 = vsub.f32 %v273, %v6431
    %v7472 = vsub.f32 %v274, %v6433
    %v7473 = vsub.f32 %v275, %v6435
    %v7474 = vsub.f32 %v276, %v6437
    %v7475 = vsub.f32 %v278, %v6440
    %v7476 = vsub.f32 %v279, %v6442
    %v7477 = vsub.f32 %v280, %v6444
    %v7478 = vsub.f32 %v281, %v6446
    %v7479 = vsub.f32 %v283, %v6449
    %v7480 = vsub.f32 %v284, %v6451
    %v7481 = vsub.f32 %v285, %v6453
    %v7482 = vsub.f32 %v286, %v6455
    %v7483 = vsub.f32 %v288, %v6458
    %v7484 = vsub.f32 %v289, %v6460
    %v7485 = vsub.f32 %v290, %v6462
    %v7486 = vsub.f32 %v291, %v6464
    %v7487 = vsub.f32 %v293, %v6467
    %v7488 = vsub.f32 %v294, %v6469
    %v7489 = vsub.f32 %v295, %v6471
    %v7490 = vsub.f32 %v296, %v6473
    %v7491 = vsub.f32 %v298, %v6476
    %v7492 = vsub.f32 %v299, %v6478
    %v7493 = vsub.f32 %v300, %v6480
    %v7494 = vsub.f32 %v301, %v6482
    %v7495 = vsub.f32 %v303, %v6485
    %v7496 = vsub.f32 %v304, %v6487
    %v7497 = vsub.f32 %v305, %v6489
    %v7498 = vsub.f32 %v306, %v6491
    %v7499 = vsub.f32 %v308, %v6494
    %v7500 = vsub.f32 %v309, %v6496
    %v7501 = vsub.f32 %v310, %v6498
    %v7502 = vsub.f32 %v311, %v6500
    %v7503 = vsub.f32 %v313, %v6503
    %v7504 = vsub.f32 %v314, %v6505
    %v7505 = vsub.f32 %v315, %v6507
    %v7506 = vsub.f32 %v316, %v6509
    %v7507 = vsub.f32 %v318, %v6512
    %v7508 = vsub.f32 %v319, %v6514
    %v7509 = vsub.f32 %v320, %v6516
    %v7510 = vsub.f32 %v321, %v6518
    %v7511 = vsub.f32 %v323, %v6521
    %v7512 = vsub.f32 %v324, %v6523
    %v7513 = vsub.f32 %v325, %v6525
    %v7514 = vsub.f32 %v326, %v6527
    %v7515 = vsub.f32 %v328, %v6530
    %v7516 = vsub.f32 %v329, %v6532
    %v7517 = vsub.f32 %v330, %v6534
    %v7518 = vsub.f32 %v331, %v6536
    %v7519 = vsub.f32 %v333, %v6539
    %v7520 = vsub.f32 %v334, %v6541
    %v7521 = vsub.f32 %v335, %v6543
    %v7522 = vsub.f32 %v336, %v6545
    %v7523 = vsub.f32 %v338, %v6548
    %v7524 = vsub.f32 %v339, %v6550
    %v7525 = vsub.f32 %v340, %v6552
    %v7526 = vsub.f32 %v341, %v6554
    %v7527 = vsub.f32 %v343, %v6557
    %v7528 = vsub.f32 %v344, %v6559
    %v7529 = vsub.f32 %v345, %v6561
    %v7530 = vsub.f32 %v346, %v6563
    %v7531 = vsub.f32 %v348, %v6566
    %v7532 = vsub.f32 %v349, %v6568
    %v7533 = vsub.f32 %v350, %v6570
    %v7534 = vsub.f32 %v351, %v6572
    %v7535 = vsub.f32 %v353, %v6575
    %v7536 = vsub.f32 %v354, %v6577
    %v7537 = vsub.f32 %v355, %v6579
    %v7538 = vsub.f32 %v356, %v6581
    %v7539 = vsub.f32 %v358, %v6584
    %v7540 = vsub.f32 %v359, %v6586
    %v7541 = vsub.f32 %v360, %v6588
    %v7542 = vsub.f32 %v361, %v6590
    %v7543 = vsub.f32 %v363, %v6593
    %v7544 = vsub.f32 %v364, %v6595
    %v7545 = vsub.f32 %v365, %v6597
    %v7546 = vsub.f32 %v366, %v6599
    %v7547 = vsub.f32 %v368, %v6602
    %v7548 = vsub.f32 %v369, %v6604
    %v7549 = vsub.f32 %v370, %v6606
    %v7550 = vsub.f32 %v371, %v6608
    %v7551 = vsub.f32 %v373, %v6611
    %v7552 = vsub.f32 %v374, %v6613
    %v7553 = vsub.f32 %v375, %v6615
    %v7554 = vsub.f32 %v376, %v6617
    %v7555 = vsub.f32 %v378, %v6620
    %v7556 = vsub.f32 %v379, %v6622
    %v7557 = vsub.f32 %v380, %v6624
    %v7558 = vsub.f32 %v381, %v6626
    %v7559 = vsub.f32 %v383, %v6629
    %v7560 = vsub.f32 %v384, %v6631
    %v7561 = vsub.f32 %v385, %v6633
    %v7562 = vsub.f32 %v386, %v6635
    %v7563 = vsub.f32 %v388, %v6638
    %v7564 = vsub.f32 %v389, %v6640
    %v7565 = vsub.f32 %v390, %v6642
    %v7566 = vsub.f32 %v391, %v6644
    %v7567 = vsub.f32 %v393, %v6647
    %v7568 = vsub.f32 %v394, %v6649
    %v7569 = vsub.f32 %v395, %v6651
    %v7570 = vsub.f32 %v396, %v6653
    %v7571 = vsub.f32 %v398, %v6656
    %v7572 = vsub.f32 %v399, %v6658
    %v7573 = vsub.f32 %v400, %v6660
    %v7574 = vsub.f32 %v401, %v6662
    %v7575 = vsub.f32 %v403, %v6665
    %v7576 = vsub.f32 %v404, %v6667
    %v7577 = vsub.f32 %v405, %v6669
    %v7578 = vsub.f32 %v406, %v6671
    %v7579 = vsub.f32 %v408, %v6674
    %v7580 = vsub.f32 %v409, %v6676
    %v7581 = vsub.f32 %v410, %v6678
    %v7582 = vsub.f32 %v411, %v6680
    %v7583 = vsub.f32 %v413, %v6683
    %v7584 = vsub.f32 %v414, %v6685
    %v7585 = vsub.f32 %v415, %v6687
    %v7586 = vsub.f32 %v416, %v6689
    %v7587 = vsub.f32 %v418, %v6692
    %v7588 = vsub.f32 %v419, %v6694
    %v7589 = vsub.f32 %v420, %v6696
    %v7590 = vsub.f32 %v421, %v6698
    %v7591 = vsub.f32 %v423, %v6701
    %v7592 = vsub.f32 %v424, %v6703
    %v7593 = vsub.f32 %v425, %v6705
    %v7594 = vsub.f32 %v426, %v6707
    %v7595 = vsub.f32 %v428, %v6710
    %v7596 = vsub.f32 %v429, %v6712
    %v7597 = vsub.f32 %v430, %v6714
    %v7598 = vsub.f32 %v431, %v6716
    %v7599 = vsub.f32 %v433, %v6719
    %v7600 = vsub.f32 %v434, %v6721
    %v7601 = vsub.f32 %v435, %v6723
    %v7602 = vsub.f32 %v436, %v6725
    %v7603 = vsub.f32 %v438, %v6728
    %v7604 = vsub.f32 %v439, %v6730
    %v7605 = vsub.f32 %v440, %v6732
    %v7606 = vsub.f32 %v441, %v6734
    %v7607 = vsub.f32 %v443, %v6737
    %v7608 = vsub.f32 %v444, %v6739
    %v7609 = vsub.f32 %v445, %v6741
    %v7610 = vsub.f32 %v446, %v6743
    %v7611 = vsub.f32 %v448, %v6746
    %v7612 = vsub.f32 %v449, %v6748
    %v7613 = vsub.f32 %v450, %v6750
    %v7614 = vsub.f32 %v451, %v6752
    %v7615 = vsub.f32 %v453, %v6755
    %v7616 = vsub.f32 %v454, %v6757
    %v7617 = vsub.f32 %v455, %v6759
    %v7618 = vsub.f32 %v456, %v6761
    %v7619 = vsub.f32 %v458, %v6764
    %v7620 = vsub.f32 %v459, %v6766
    %v7621 = vsub.f32 %v460, %v6768
    %v7622 = vsub.f32 %v461, %v6770
    %v7623 = vsub.f32 %v463, %v6773
    %v7624 = vsub.f32 %v464, %v6775
    %v7625 = vsub.f32 %v465, %v6777
    %v7626 = vsub.f32 %v466, %v6779
    %v7627 = vsub.f32 %v468, %v6782
    %v7628 = vsub.f32 %v469, %v6784
    %v7629 = vsub.f32 %v470, %v6786
    %v7630 = vsub.f32 %v471, %v6788
    %v7631 = vsub.f32 %v473, %v6791
    %v7632 = vsub.f32 %v474, %v6793
    %v7633 = vsub.f32 %v475, %v6795
    %v7634 = vsub.f32 %v476, %v6797
    %v7635 = vsub.f32 %v478, %v6800
    %v7636 = vsub.f32 %v479, %v6802
    %v7637 = vsub.f32 %v480, %v6804
    %v7638 = vsub.f32 %v481, %v6806
    %v7639 = vsub.f32 %v483, %v6809
    %v7640 = vsub.f32 %v484, %v6811
    %v7641 = vsub.f32 %v485, %v6813
    %v7642 = vsub.f32 %v486, %v6815
    %v7643 = vsub.f32 %v488, %v6818
    %v7644 = vsub.f32 %v489, %v6820
    %v7645 = vsub.f32 %v490, %v6822
    %v7646 = vsub.f32 %v491, %v6824
    %v7647 = vsub.f32 %v493, %v6827
    %v7648 = vsub.f32 %v494, %v6829
    %v7649 = vsub.f32 %v495, %v6831
    %v7650 = vsub.f32 %v496, %v6833
    %v7651 = vsub.f32 %v498, %v6836
    %v7652 = vsub.f32 %v499, %v6838
    %v7653 = vsub.f32 %v500, %v6840
    %v7654 = vsub.f32 %v501, %v6842
    %v7655 = vsub.f32 %v503, %v6845
    %v7656 = vsub.f32 %v504, %v6847
    %v7657 = vsub.f32 %v505, %v6849
    %v7658 = vsub.f32 %v506, %v6851
    %v7659 = vsub.f32 %v508, %v6854
    %v7660 = vsub.f32 %v509, %v6856
    %v7661 = vsub.f32 %v510, %v6858
    %v7662 = vsub.f32 %v511, %v6860
    %v7663 = vsub.f32 %v513, %v6863
    %v7664 = vsub.f32 %v514, %v6865
    %v7665 = vsub.f32 %v515, %v6867
    %v7666 = vsub.f32 %v516, %v6869
    %v7667 = vsub.f32 %v518, %v6872
    %v7668 = vsub.f32 %v519, %v6874
    %v7669 = vsub.f32 %v520, %v6876
    %v7670 = vsub.f32 %v521, %v6878
    %v7671 = vmul.f32 %v7275, %v7275
    %v7672 = vmul.f32 %v7276, %v7276
    %v7673 = vmul.f32 %v7277, %v7277
    %v7674 = vmul.f32 %v7278, %v7278
    %v7675 = vmul.f32 %v7279, %v7279
    %v7676 = vmul.f32 %v7280, %v7280
    %v7677 = vmul.f32 %v7281, %v7281
    %v7678 = vmul.f32 %v7282, %v7282
    %v7679 = vmul.f32 %v7283, %v7283
    %v7680 = vmul.f32 %v7284, %v7284
    %v7681 = vmul.f32 %v7285, %v7285
    %v7682 = vmul.f32 %v7286, %v7286
    %v7683 = vmul.f32 %v7287, %v7287
    %v7684 = vmul.f32 %v7288, %v7288
    %v7685 = vmul.f32 %v7289, %v7289
    %v7686 = vmul.f32 %v7290, %v7290
    %v7687 = vmul.f32 %v7291, %v7291
    %v7688 = vmul.f32 %v7292, %v7292
    %v7689 = vmul.f32 %v7293, %v7293
    %v7690 = vmul.f32 %v7294, %v7294
    %v7691 = vmul.f32 %v7295, %v7295
    %v7692 = vmul.f32 %v7296, %v7296
    %v7693 = vmul.f32 %v7297, %v7297
    %v7694 = vmul.f32 %v7298, %v7298
    %v7695 = vmul.f32 %v7299, %v7299
    %v7696 = vmul.f32 %v7300, %v7300
    %v7697 = vmul.f32 %v7301, %v7301
    %v7698 = vmul.f32 %v7302, %v7302
    %v7699 = vmul.f32 %v7303, %v7303
    %v7700 = vmul.f32 %v7304, %v7304
    %v7701 = vmul.f32 %v7305, %v7305
    %v7702 = vmul.f32 %v7306, %v7306
    %v7703 = vmul.f32 %v7307, %v7307
    %v7704 = vmul.f32 %v7308, %v7308
    %v7705 = vmul.f32 %v7309, %v7309
    %v7706 = vmul.f32 %v7310, %v7310
    %v7707 = vmul.f32 %v7311, %v7311
    %v7708 = vmul.f32 %v7312, %v7312
    %v7709 = vmul.f32 %v7313, %v7313
    %v7710 = vmul.f32 %v7314, %v7314
    %v7711 = vmul.f32 %v7315, %v7315
    %v7712 = vmul.f32 %v7316, %v7316
    %v7713 = vmul.f32 %v7317, %v7317
    %v7714 = vmul.f32 %v7318, %v7318
    %v7715 = vmul.f32 %v7319, %v7319
    %v7716 = vmul.f32 %v7320, %v7320
    %v7717 = vmul.f32 %v7321, %v7321
    %v7718 = vmul.f32 %v7322, %v7322
    %v7719 = vmul.f32 %v7323, %v7323
    %v7720 = vmul.f32 %v7324, %v7324
    %v7721 = vmul.f32 %v7325, %v7325
    %v7722 = vmul.f32 %v7326, %v7326
    %v7723 = vmul.f32 %v7327, %v7327
    %v7724 = vmul.f32 %v7328, %v7328
    %v7725 = vmul.f32 %v7329, %v7329
    %v7726 = vmul.f32 %v7330, %v7330
    %v7727 = vmul.f32 %v7331, %v7331
    %v7728 = vmul.f32 %v7332, %v7332
    %v7729 = vmul.f32 %v7333, %v7333
    %v7730 = vmul.f32 %v7334, %v7334
    %v7731 = vmul.f32 %v7335, %v7335
    %v7732 = vmul.f32 %v7336, %v7336
    %v7733 = vmul.f32 %v7337, %v7337
    %v7734 = vmul.f32 %v7338, %v7338
    %v7735 = vmul.f32 %v7339, %v7339
    %v7736 = vmul.f32 %v7340, %v7340
    %v7737 = vmul.f32 %v7341, %v7341
    %v7738 = vmul.f32 %v7342, %v7342
    %v7739 = vmul.f32 %v7343, %v7343
    %v7740 = vmul.f32 %v7344, %v7344
    %v7741 = vmul.f32 %v7345, %v7345
    %v7742 = vmul.f32 %v7346, %v7346
    %v7743 = vmul.f32 %v7347, %v7347
    %v7744 = vmul.f32 %v7348, %v7348
    %v7745 = vmul.f32 %v7349, %v7349
    %v7746 = vmul.f32 %v7350, %v7350
    %v7747 = vmul.f32 %v7351, %v7351
    %v7748 = vmul.f32 %v7352, %v7352
    %v7749 = vmul.f32 %v7353, %v7353
    %v7750 = vmul.f32 %v7354, %v7354
    %v7751 = vmul.f32 %v7355, %v7355
    %v7752 = vmul.f32 %v7356, %v7356
    %v7753 = vmul.f32 %v7357, %v7357
    %v7754 = vmul.f32 %v7358, %v7358
    %v7755 = vmul.f32 %v7359, %v7359
    %v7756 = vmul.f32 %v7360, %v7360
    %v7757 = vmul.f32 %v7361, %v7361
    %v7758 = vmul.f32 %v7362, %v7362
    %v7759 = vmul.f32 %v7363, %v7363
    %v7760 = vmul.f32 %v7364, %v7364
    %v7761 = vmul.f32 %v7365, %v7365
    %v7762 = vmul.f32 %v7366, %v7366
    %v7763 = vmul.f32 %v7367, %v7367
    %v7764 = vmul.f32 %v7368, %v7368
    %v7765 = vmul.f32 %v7369, %v7369
    %v7766 = vmul.f32 %v7370, %v7370
    %v7767 = vmul.f32 %v7371, %v7371
    %v7768 = vmul.f32 %v7372, %v7372
    %v7769 = vmul.f32 %v7373, %v7373
    %v7770 = vmul.f32 %v7374, %v7374
    %v7771 = vmul.f32 %v7375, %v7375
    %v7772 = vmul.f32 %v7376, %v7376
    %v7773 = vmul.f32 %v7377, %v7377
    %v7774 = vmul.f32 %v7378, %v7378
    %v7775 = vmul.f32 %v7379, %v7379
    %v7776 = vmul.f32 %v7380, %v7380
    %v7777 = vmul.f32 %v7381, %v7381
    %v7778 = vmul.f32 %v7382, %v7382
    %v7779 = vmul.f32 %v7383, %v7383
    %v7780 = vmul.f32 %v7384, %v7384
    %v7781 = vmul.f32 %v7385, %v7385
    %v7782 = vmul.f32 %v7386, %v7386
    %v7783 = vmul.f32 %v7387, %v7387
    %v7784 = vmul.f32 %v7388, %v7388
    %v7785 = vmul.f32 %v7389, %v7389
    %v7786 = vmul.f32 %v7390, %v7390
    %v7787 = vmul.f32 %v7391, %v7391
    %v7788 = vmul.f32 %v7392, %v7392
    %v7789 = vmul.f32 %v7393, %v7393
    %v7790 = vmul.f32 %v7394, %v7394
    %v7791 = vmul.f32 %v7395, %v7395
    %v7792 = vmul.f32 %v7396, %v7396
    %v7793 = vmul.f32 %v7397, %v7397
    %v7794 = vmul.f32 %v7398, %v7398
    %v7795 = vmul.f32 %v7399, %v7399
    %v7796 = vmul.f32 %v7400, %v7400
    %v7797 = vmul.f32 %v7401, %v7401
    %v7798 = vmul.f32 %v7402, %v7402
    %v7799 = vmul.f32 %v7403, %v7403
    %v7800 = vmul.f32 %v7404, %v7404
    %v7801 = vmul.f32 %v7405, %v7405
    %v7802 = vmul.f32 %v7406, %v7406
    %v7803 = vmul.f32 %v7407, %v7407
    %v7804 = vmul.f32 %v7408, %v7408
    %v7805 = vmul.f32 %v7409, %v7409
    %v7806 = vmul.f32 %v7410, %v7410
    %v7807 = vmul.f32 %v7411, %v7411
    %v7808 = vmul.f32 %v7412, %v7412
    %v7809 = vmul.f32 %v7413, %v7413
    %v7810 = vmul.f32 %v7414, %v7414
    %v7811 = vmul.f32 %v7415, %v7415
    %v7812 = vmul.f32 %v7416, %v7416
    %v7813 = vmul.f32 %v7417, %v7417
    %v7814 = vmul.f32 %v7418, %v7418
    %v7815 = vmul.f32 %v7419, %v7419
    %v7816 = vmul.f32 %v7420, %v7420
    %v7817 = vmul.f32 %v7421, %v7421
    %v7818 = vmul.f32 %v7422, %v7422
    %v7819 = vmul.f32 %v7423, %v7423
    %v7820 = vmul.f32 %v7424, %v7424
    %v7821 = vmul.f32 %v7425, %v7425
    %v7822 = vmul.f32 %v7426, %v7426
    %v7823 = vmul.f32 %v7427, %v7427
    %v7824 = vmul.f32 %v7428, %v7428
    %v7825 = vmul.f32 %v7429, %v7429
    %v7826 = vmul.f32 %v7430, %v7430
    %v7827 = vmul.f32 %v7431, %v7431
    %v7828 = vmul.f32 %v7432, %v7432
    %v7829 = vmul.f32 %v7433, %v7433
    %v7830 = vmul.f32 %v7434, %v7434
    %v7831 = vmul.f32 %v7435, %v7435
    %v7832 = vmul.f32 %v7436, %v7436
    %v7833 = vmul.f32 %v7437, %v7437
    %v7834 = vmul.f32 %v7438, %v7438
    %v7835 = vmul.f32 %v7439, %v7439
    %v7836 = vmul.f32 %v7440, %v7440
    %v7837 = vmul.f32 %v7441, %v7441
    %v7838 = vmul.f32 %v7442, %v7442
    %v7839 = vmul.f32 %v7443, %v7443
    %v7840 = vmul.f32 %v7444, %v7444
    %v7841 = vmul.f32 %v7445, %v7445
    %v7842 = vmul.f32 %v7446, %v7446
    %v7843 = vmul.f32 %v7447, %v7447
    %v7844 = vmul.f32 %v7448, %v7448
    %v7845 = vmul.f32 %v7449, %v7449
    %v7846 = vmul.f32 %v7450, %v7450
    %v7847 = vmul.f32 %v7451, %v7451
    %v7848 = vmul.f32 %v7452, %v7452
    %v7849 = vmul.f32 %v7453, %v7453
    %v7850 = vmul.f32 %v7454, %v7454
    %v7851 = vmul.f32 %v7455, %v7455
    %v7852 = vmul.f32 %v7456, %v7456
    %v7853 = vmul.f32 %v7457, %v7457
    %v7854 = vmul.f32 %v7458, %v7458
    %v7855 = vmul.f32 %v7459, %v7459
    %v7856 = vmul.f32 %v7460, %v7460
    %v7857 = vmul.f32 %v7461, %v7461
    %v7858 = vmul.f32 %v7462, %v7462
    %v7859 = vmul.f32 %v7463, %v7463
    %v7860 = vmul.f32 %v7464, %v7464
    %v7861 = vmul.f32 %v7465, %v7465
    %v7862 = vmul.f32 %v7466, %v7466
    %v7863 = vmul.f32 %v7467, %v7467
    %v7864 = vmul.f32 %v7468, %v7468
    %v7865 = vmul.f32 %v7469, %v7469
    %v7866 = vmul.f32 %v7470, %v7470
    %v7867 = vmul.f32 %v7471, %v7471
    %v7868 = vmul.f32 %v7472, %v7472
    %v7869 = vmul.f32 %v7473, %v7473
    %v7870 = vmul.f32 %v7474, %v7474
    %v7871 = vmul.f32 %v7475, %v7475
    %v7872 = vmul.f32 %v7476, %v7476
    %v7873 = vmul.f32 %v7477, %v7477
    %v7874 = vmul.f32 %v7478, %v7478
    %v7875 = vmul.f32 %v7479, %v7479
    %v7876 = vmul.f32 %v7480, %v7480
    %v7877 = vmul.f32 %v7481, %v7481
    %v7878 = vmul.f32 %v7482, %v7482
    %v7879 = vmul.f32 %v7483, %v7483
    %v7880 = vmul.f32 %v7484, %v7484
    %v7881 = vmul.f32 %v7485, %v7485
    %v7882 = vmul.f32 %v7486, %v7486
    %v7883 = vmul.f32 %v7487, %v7487
    %v7884 = vmul.f32 %v7488, %v7488
    %v7885 = vmul.f32 %v7489, %v7489
    %v7886 = vmul.f32 %v7490, %v7490
    %v7887 = vmul.f32 %v7491, %v7491
    %v7888 = vmul.f32 %v7492, %v7492
    %v7889 = vmul.f32 %v7493, %v7493
    %v7890 = vmul.f32 %v7494, %v7494
    %v7891 = vmul.f32 %v7495, %v7495
    %v7892 = vmul.f32 %v7496, %v7496
    %v7893 = vmul.f32 %v7497, %v7497
    %v7894 = vmul.f32 %v7498, %v7498
    %v7895 = vmul.f32 %v7499, %v7499
    %v7896 = vmul.f32 %v7500, %v7500
    %v7897 = vmul.f32 %v7501, %v7501
    %v7898 = vmul.f32 %v7502, %v7502
    %v7899 = vmul.f32 %v7503, %v7503
    %v7900 = vmul.f32 %v7504, %v7504
    %v7901 = vmul.f32 %v7505, %v7505
    %v7902 = vmul.f32 %v7506, %v7506
    %v7903 = vmul.f32 %v7507, %v7507
    %v7904 = vmul.f32 %v7508, %v7508
    %v7905 = vmul.f32 %v7509, %v7509
    %v7906 = vmul.f32 %v7510, %v7510
    %v7907 = vmul.f32 %v7511, %v7511
    %v7908 = vmul.f32 %v7512, %v7512
    %v7909 = vmul.f32 %v7513, %v7513
    %v7910 = vmul.f32 %v7514, %v7514
    %v7911 = vmul.f32 %v7515, %v7515
    %v7912 = vmul.f32 %v7516, %v7516
    %v7913 = vmul.f32 %v7517, %v7517
    %v7914 = vmul.f32 %v7518, %v7518
    %v7915 = vmul.f32 %v7519, %v7519
    %v7916 = vmul.f32 %v7520, %v7520
    %v7917 = vmul.f32 %v7521, %v7521
    %v7918 = vmul.f32 %v7522, %v7522
    %v7919 = vmul.f32 %v7523, %v7523
    %v7920 = vmul.f32 %v7524, %v7524
    %v7921 = vmul.f32 %v7525, %v7525
    %v7922 = vmul.f32 %v7526, %v7526
    %v7923 = vmul.f32 %v7527, %v7527
    %v7924 = vmul.f32 %v7528, %v7528
    %v7925 = vmul.f32 %v7529, %v7529
    %v7926 = vmul.f32 %v7530, %v7530
    %v7927 = vmul.f32 %v7531, %v7531
    %v7928 = vmul.f32 %v7532, %v7532
    %v7929 = vmul.f32 %v7533, %v7533
    %v7930 = vmul.f32 %v7534, %v7534
    %v7931 = vmul.f32 %v7535, %v7535
    %v7932 = vmul.f32 %v7536, %v7536
    %v7933 = vmul.f32 %v7537, %v7537
    %v7934 = vmul.f32 %v7538, %v7538
    %v7935 = vmul.f32 %v7539, %v7539
    %v7936 = vmul.f32 %v7540, %v7540
    %v7937 = vmul.f32 %v7541, %v7541
    %v7938 = vmul.f32 %v7542, %v7542
    %v7939 = vmul.f32 %v7543, %v7543
    %v7940 = vmul.f32 %v7544, %v7544
    %v7941 = vmul.f32 %v7545, %v7545
    %v7942 = vmul.f32 %v7546, %v7546
    %v7943 = vmul.f32 %v7547, %v7547
    %v7944 = vmul.f32 %v7548, %v7548
    %v7945 = vmul.f32 %v7549, %v7549
    %v7946 = vmul.f32 %v7550, %v7550
    %v7947 = vmul.f32 %v7551, %v7551
    %v7948 = vmul.f32 %v7552, %v7552
    %v7949 = vmul.f32 %v7553, %v7553
    %v7950 = vmul.f32 %v7554, %v7554
    %v7951 = vmul.f32 %v7555, %v7555
    %v7952 = vmul.f32 %v7556, %v7556
    %v7953 = vmul.f32 %v7557, %v7557
    %v7954 = vmul.f32 %v7558, %v7558
    %v7955 = vmul.f32 %v7559, %v7559
    %v7956 = vmul.f32 %v7560, %v7560
    %v7957 = vmul.f32 %v7561, %v7561
    %v7958 = vmul.f32 %v7562, %v7562
    %v7959 = vmul.f32 %v7563, %v7563
    %v7960 = vmul.f32 %v7564, %v7564
    %v7961 = vmul.f32 %v7565, %v7565
    %v7962 = vmul.f32 %v7566, %v7566
    %v7963 = vmul.f32 %v7567, %v7567
    %v7964 = vmul.f32 %v7568, %v7568
    %v7965 = vmul.f32 %v7569, %v7569
    %v7966 = vmul.f32 %v7570, %v7570
    %v7967 = vmul.f32 %v7571, %v7571
    %v7968 = vmul.f32 %v7572, %v7572
    %v7969 = vmul.f32 %v7573, %v7573
    %v7970 = vmul.f32 %v7574, %v7574
    %v7971 = vmul.f32 %v7575, %v7575
    %v7972 = vmul.f32 %v7576, %v7576
    %v7973 = vmul.f32 %v7577, %v7577
    %v7974 = vmul.f32 %v7578, %v7578
    %v7975 = vmul.f32 %v7579, %v7579
    %v7976 = vmul.f32 %v7580, %v7580
    %v7977 = vmul.f32 %v7581, %v7581
    %v7978 = vmul.f32 %v7582, %v7582
    %v7979 = vmul.f32 %v7583, %v7583
    %v7980 = vmul.f32 %v7584, %v7584
    %v7981 = vmul.f32 %v7585, %v7585
    %v7982 = vmul.f32 %v7586, %v7586
    %v7983 = vmul.f32 %v7587, %v7587
    %v7984 = vmul.f32 %v7588, %v7588
    %v7985 = vmul.f32 %v7589, %v7589
    %v7986 = vmul.f32 %v7590, %v7590
    %v7987 = vmul.f32 %v7591, %v7591
    %v7988 = vmul.f32 %v7592, %v7592
    %v7989 = vmul.f32 %v7593, %v7593
    %v7990 = vmul.f32 %v7594, %v7594
    %v7991 = vmul.f32 %v7595, %v7595
    %v7992 = vmul.f32 %v7596, %v7596
    %v7993 = vmul.f32 %v7597, %v7597
    %v7994 = vmul.f32 %v7598, %v7598
    %v7995 = vmul.f32 %v7599, %v7599
    %v7996 = vmul.f32 %v7600, %v7600
    %v7997 = vmul.f32 %v7601, %v7601
    %v7998 = vmul.f32 %v7602, %v7602
    %v7999 = vmul.f32 %v7603, %v7603
    %v8000 = vmul.f32 %v7604, %v7604
    %v8001 = vmul.f32 %v7605, %v7605
    %v8002 = vmul.f32 %v7606, %v7606
    %v8003 = vmul.f32 %v7607, %v7607
    %v8004 = vmul.f32 %v7608, %v7608
    %v8005 = vmul.f32 %v7609, %v7609
    %v8006 = vmul.f32 %v7610, %v7610
    %v8007 = vmul.f32 %v7611, %v7611
    %v8008 = vmul.f32 %v7612, %v7612
    %v8009 = vmul.f32 %v7613, %v7613
    %v8010 = vmul.f32 %v7614, %v7614
    %v8011 = vmul.f32 %v7615, %v7615
    %v8012 = vmul.f32 %v7616, %v7616
    %v8013 = vmul.f32 %v7617, %v7617
    %v8014 = vmul.f32 %v7618, %v7618
    %v8015 = vmul.f32 %v7619, %v7619
    %v8016 = vmul.f32 %v7620, %v7620
    %v8017 = vmul.f32 %v7621, %v7621
    %v8018 = vmul.f32 %v7622, %v7622
    %v8019 = vmul.f32 %v7623, %v7623
    %v8020 = vmul.f32 %v7624, %v7624
    %v8021 = vmul.f32 %v7625, %v7625
    %v8022 = vmul.f32 %v7626, %v7626
    %v8023 = vmul.f32 %v7627, %v7627
    %v8024 = vmul.f32 %v7628, %v7628
    %v8025 = vmul.f32 %v7629, %v7629
    %v8026 = vmul.f32 %v7630, %v7630
    %v8027 = vmul.f32 %v7631, %v7631
    %v8028 = vmul.f32 %v7632, %v7632
    %v8029 = vmul.f32 %v7633, %v7633
    %v8030 = vmul.f32 %v7634, %v7634
    %v8031 = vmul.f32 %v7635, %v7635
    %v8032 = vmul.f32 %v7636, %v7636
    %v8033 = vmul.f32 %v7637, %v7637
    %v8034 = vmul.f32 %v7638, %v7638
    %v8035 = vmul.f32 %v7639, %v7639
    %v8036 = vmul.f32 %v7640, %v7640
    %v8037 = vmul.f32 %v7641, %v7641
    %v8038 = vmul.f32 %v7642, %v7642
    %v8039 = vmul.f32 %v7643, %v7643
    %v8040 = vmul.f32 %v7644, %v7644
    %v8041 = vmul.f32 %v7645, %v7645
    %v8042 = vmul.f32 %v7646, %v7646
    %v8043 = vmul.f32 %v7647, %v7647
    %v8044 = vmul.f32 %v7648, %v7648
    %v8045 = vmul.f32 %v7649, %v7649
    %v8046 = vmul.f32 %v7650, %v7650
    %v8047 = vmul.f32 %v7651, %v7651
    %v8048 = vmul.f32 %v7652, %v7652
    %v8049 = vmul.f32 %v7653, %v7653
    %v8050 = vmul.f32 %v7654, %v7654
    %v8051 = vmul.f32 %v7655, %v7655
    %v8052 = vmul.f32 %v7656, %v7656
    %v8053 = vmul.f32 %v7657, %v7657
    %v8054 = vmul.f32 %v7658, %v7658
    %v8055 = vmul.f32 %v7659, %v7659
    %v8056 = vmul.f32 %v7660, %v7660
    %v8057 = vmul.f32 %v7661, %v7661
    %v8058 = vmul.f32 %v7662, %v7662
    %v8059 = vmul.f32 %v7663, %v7663
    %v8060 = vmul.f32 %v7664, %v7664
    %v8061 = vmul.f32 %v7665, %v7665
    %v8062 = vmul.f32 %v7666, %v7666
    %v8063 = vmul.f32 %v7667, %v7667
    %v8064 = vmul.f32 %v7668, %v7668
    %v8065 = vmul.f32 %v7669, %v7669
    %v8066 = vmul.f32 %v7670, %v7670
    %vm8067 = vcmask 269312
    %v8068 = vsel %vm8067, %v7671, 0.0
    %v8069 = vsel %vm8067, %v7675, 0.0
    %v8070 = vadd.f32 %v8068, %v8069
    %v8071 = vsel %vm8067, %v7679, 0.0
    %v8072 = vadd.f32 %v8070, %v8071
    %v8073 = vsel %vm8067, %v7683, 0.0
    %v8074 = vadd.f32 %v8072, %v8073
    %v8075 = vsel %vm8067, %v7687, 0.0
    %v8076 = vadd.f32 %v8074, %v8075
    %v8077 = vsel %vm8067, %v7691, 0.0
    %v8078 = vadd.f32 %v8076, %v8077
    %v8079 = vsel %vm8067, %v7695, 0.0
    %v8080 = vadd.f32 %v8078, %v8079
    %v8081 = vsel %vm8067, %v7699, 0.0
    %v8082 = vadd.f32 %v8080, %v8081
    %v8083 = vsel %vm8067, %v7703, 0.0
    %v8084 = vadd.f32 %v8082, %v8083
    %v8085 = vsel %vm8067, %v7707, 0.0
    %v8086 = vadd.f32 %v8084, %v8085
    %v8087 = vsel %vm8067, %v7711, 0.0
    %v8088 = vadd.f32 %v8086, %v8087
    %v8089 = vsel %vm8067, %v7715, 0.0
    %v8090 = vadd.f32 %v8088, %v8089
    %v8091 = vsel %vm8067, %v7719, 0.0
    %v8092 = vadd.f32 %v8090, %v8091
    %v8093 = vsel %vm8067, %v7723, 0.0
    %v8094 = vadd.f32 %v8092, %v8093
    %v8095 = vsel %vm8067, %v7727, 0.0
    %v8096 = vadd.f32 %v8094, %v8095
    %v8097 = vsel %vm8067, %v7731, 0.0
    %v8098 = vadd.f32 %v8096, %v8097
    %v8099 = vsel %vm8067, %v7735, 0.0
    %v8100 = vadd.f32 %v8098, %v8099
    %v8101 = vsel %vm8067, %v7739, 0.0
    %v8102 = vadd.f32 %v8100, %v8101
    %v8103 = vsel %vm8067, %v7743, 0.0
    %v8104 = vadd.f32 %v8102, %v8103
    %v8105 = vsel %vm8067, %v7747, 0.0
    %v8106 = vadd.f32 %v8104, %v8105
    %v8107 = vsel %vm8067, %v7751, 0.0
    %v8108 = vadd.f32 %v8106, %v8107
    %v8109 = vsel %vm8067, %v7755, 0.0
    %v8110 = vadd.f32 %v8108, %v8109
    %v8111 = vsel %vm8067, %v7759, 0.0
    %v8112 = vadd.f32 %v8110, %v8111
    %v8113 = vsel %vm8067, %v7763, 0.0
    %v8114 = vadd.f32 %v8112, %v8113
    %v8115 = vsel %vm8067, %v7767, 0.0
    %v8116 = vadd.f32 %v8114, %v8115
    %v8117 = vsel %vm8067, %v7771, 0.0
    %v8118 = vadd.f32 %v8116, %v8117
    %v8119 = vsel %vm8067, %v7775, 0.0
    %v8120 = vadd.f32 %v8118, %v8119
    %v8121 = vsel %vm8067, %v7779, 0.0
    %v8122 = vadd.f32 %v8120, %v8121
    %v8123 = vsel %vm8067, %v7783, 0.0
    %v8124 = vadd.f32 %v8122, %v8123
    %v8125 = vsel %vm8067, %v7787, 0.0
    %v8126 = vadd.f32 %v8124, %v8125
    %v8127 = vsel %vm8067, %v7791, 0.0
    %v8128 = vadd.f32 %v8126, %v8127
    %v8129 = vsel %vm8067, %v7795, 0.0
    %v8130 = vadd.f32 %v8128, %v8129
    %v8131 = vsel %vm8067, %v7799, 0.0
    %v8132 = vadd.f32 %v8130, %v8131
    %v8133 = vsel %vm8067, %v7803, 0.0
    %v8134 = vadd.f32 %v8132, %v8133
    %v8135 = vsel %vm8067, %v7807, 0.0
    %v8136 = vadd.f32 %v8134, %v8135
    %v8137 = vsel %vm8067, %v7811, 0.0
    %v8138 = vadd.f32 %v8136, %v8137
    %v8139 = vsel %vm8067, %v7815, 0.0
    %v8140 = vadd.f32 %v8138, %v8139
    %v8141 = vsel %vm8067, %v7819, 0.0
    %v8142 = vadd.f32 %v8140, %v8141
    %v8143 = vsel %vm8067, %v7823, 0.0
    %v8144 = vadd.f32 %v8142, %v8143
    %v8145 = vsel %vm8067, %v7827, 0.0
    %v8146 = vadd.f32 %v8144, %v8145
    %v8147 = vsel %vm8067, %v7831, 0.0
    %v8148 = vadd.f32 %v8146, %v8147
    %v8149 = vsel %vm8067, %v7835, 0.0
    %v8150 = vadd.f32 %v8148, %v8149
    %v8151 = vsel %vm8067, %v7839, 0.0
    %v8152 = vadd.f32 %v8150, %v8151
    %v8153 = vsel %vm8067, %v7843, 0.0
    %v8154 = vadd.f32 %v8152, %v8153
    %v8155 = vsel %vm8067, %v7847, 0.0
    %v8156 = vadd.f32 %v8154, %v8155
    %v8157 = vsel %vm8067, %v7851, 0.0
    %v8158 = vadd.f32 %v8156, %v8157
    %v8159 = vsel %vm8067, %v7855, 0.0
    %v8160 = vadd.f32 %v8158, %v8159
    %v8161 = vsel %vm8067, %v7859, 0.0
    %v8162 = vadd.f32 %v8160, %v8161
    %v8163 = vsel %vm8067, %v7863, 0.0
    %v8164 = vadd.f32 %v8162, %v8163
    %v8165 = vsel %vm8067, %v7867, 0.0
    %v8166 = vadd.f32 %v8164, %v8165
    %v8167 = vsel %vm8067, %v7871, 0.0
    %v8168 = vadd.f32 %v8166, %v8167
    %v8169 = vsel %vm8067, %v7875, 0.0
    %v8170 = vadd.f32 %v8168, %v8169
    %v8171 = vsel %vm8067, %v7879, 0.0
    %v8172 = vadd.f32 %v8170, %v8171
    %v8173 = vsel %vm8067, %v7883, 0.0
    %v8174 = vadd.f32 %v8172, %v8173
    %v8175 = vsel %vm8067, %v7887, 0.0
    %v8176 = vadd.f32 %v8174, %v8175
    %v8177 = vsel %vm8067, %v7891, 0.0
    %v8178 = vadd.f32 %v8176, %v8177
    %v8179 = vsel %vm8067, %v7895, 0.0
    %v8180 = vadd.f32 %v8178, %v8179
    %v8181 = vsel %vm8067, %v7899, 0.0
    %v8182 = vadd.f32 %v8180, %v8181
    %v8183 = vsel %vm8067, %v7903, 0.0
    %v8184 = vadd.f32 %v8182, %v8183
    %v8185 = vsel %vm8067, %v7907, 0.0
    %v8186 = vadd.f32 %v8184, %v8185
    %v8187 = vsel %vm8067, %v7911, 0.0
    %v8188 = vadd.f32 %v8186, %v8187
    %v8189 = vsel %vm8067, %v7915, 0.0
    %v8190 = vadd.f32 %v8188, %v8189
    %v8191 = vsel %vm8067, %v7919, 0.0
    %v8192 = vadd.f32 %v8190, %v8191
    %v8193 = vsel %vm8067, %v7923, 0.0
    %v8194 = vadd.f32 %v8192, %v8193
    %v8195 = vsel %vm8067, %v7927, 0.0
    %v8196 = vadd.f32 %v8194, %v8195
    %v8197 = vsel %vm8067, %v7931, 0.0
    %v8198 = vadd.f32 %v8196, %v8197
    %v8199 = vsel %vm8067, %v7935, 0.0
    %v8200 = vadd.f32 %v8198, %v8199
    %v8201 = vsel %vm8067, %v7939, 0.0
    %v8202 = vadd.f32 %v8200, %v8201
    %v8203 = vsel %vm8067, %v7943, 0.0
    %v8204 = vadd.f32 %v8202, %v8203
    %v8205 = vsel %vm8067, %v7947, 0.0
    %v8206 = vadd.f32 %v8204, %v8205
    %v8207 = vsel %vm8067, %v7951, 0.0
    %v8208 = vadd.f32 %v8206, %v8207
    %v8209 = vsel %vm8067, %v7955, 0.0
    %v8210 = vadd.f32 %v8208, %v8209
    %v8211 = vsel %vm8067, %v7959, 0.0
    %v8212 = vadd.f32 %v8210, %v8211
    %v8213 = vsel %vm8067, %v7963, 0.0
    %v8214 = vadd.f32 %v8212, %v8213
    %v8215 = vsel %vm8067, %v7967, 0.0
    %v8216 = vadd.f32 %v8214, %v8215
    %v8217 = vsel %vm8067, %v7971, 0.0
    %v8218 = vadd.f32 %v8216, %v8217
    %v8219 = vsel %vm8067, %v7975, 0.0
    %v8220 = vadd.f32 %v8218, %v8219
    %v8221 = vsel %vm8067, %v7979, 0.0
    %v8222 = vadd.f32 %v8220, %v8221
    %v8223 = vsel %vm8067, %v7983, 0.0
    %v8224 = vadd.f32 %v8222, %v8223
    %v8225 = vsel %vm8067, %v7987, 0.0
    %v8226 = vadd.f32 %v8224, %v8225
    %v8227 = vsel %vm8067, %v7991, 0.0
    %v8228 = vadd.f32 %v8226, %v8227
    %v8229 = vsel %vm8067, %v7995, 0.0
    %v8230 = vadd.f32 %v8228, %v8229
    %v8231 = vsel %vm8067, %v7999, 0.0
    %v8232 = vadd.f32 %v8230, %v8231
    %v8233 = vsel %vm8067, %v8003, 0.0
    %v8234 = vadd.f32 %v8232, %v8233
    %v8235 = vsel %vm8067, %v8007, 0.0
    %v8236 = vadd.f32 %v8234, %v8235
    %v8237 = vsel %vm8067, %v8011, 0.0
    %v8238 = vadd.f32 %v8236, %v8237
    %v8239 = vsel %vm8067, %v8015, 0.0
    %v8240 = vadd.f32 %v8238, %v8239
    %v8241 = vsel %vm8067, %v8019, 0.0
    %v8242 = vadd.f32 %v8240, %v8241
    %v8243 = vsel %vm8067, %v8023, 0.0
    %v8244 = vadd.f32 %v8242, %v8243
    %v8245 = vsel %vm8067, %v8027, 0.0
    %v8246 = vadd.f32 %v8244, %v8245
    %v8247 = vsel %vm8067, %v8031, 0.0
    %v8248 = vadd.f32 %v8246, %v8247
    %v8249 = vsel %vm8067, %v8035, 0.0
    %v8250 = vadd.f32 %v8248, %v8249
    %v8251 = vsel %vm8067, %v8039, 0.0
    %v8252 = vadd.f32 %v8250, %v8251
    %v8253 = vsel %vm8067, %v8043, 0.0
    %v8254 = vadd.f32 %v8252, %v8253
    %v8255 = vsel %vm8067, %v8047, 0.0
    %v8256 = vadd.f32 %v8254, %v8255
    %v8257 = vsel %vm8067, %v8051, 0.0
    %v8258 = vadd.f32 %v8256, %v8257
    %v8259 = vsel %vm8067, %v8055, 0.0
    %v8260 = vadd.f32 %v8258, %v8259
    %v8261 = vsel %vm8067, %v8059, 0.0
    %v8262 = vadd.f32 %v8260, %v8261
    %v8263 = vsel %vm8067, %v8063, 0.0
    %v8264 = vadd.f32 %v8262, %v8263
    %v8265 = vsel %vm8067, %v7672, 0.0
    %v8266 = vsel %vm8067, %v7676, 0.0
    %v8267 = vadd.f32 %v8265, %v8266
    %v8268 = vsel %vm8067, %v7680, 0.0
    %v8269 = vadd.f32 %v8267, %v8268
    %v8270 = vsel %vm8067, %v7684, 0.0
    %v8271 = vadd.f32 %v8269, %v8270
    %v8272 = vsel %vm8067, %v7688, 0.0
    %v8273 = vadd.f32 %v8271, %v8272
    %v8274 = vsel %vm8067, %v7692, 0.0
    %v8275 = vadd.f32 %v8273, %v8274
    %v8276 = vsel %vm8067, %v7696, 0.0
    %v8277 = vadd.f32 %v8275, %v8276
    %v8278 = vsel %vm8067, %v7700, 0.0
    %v8279 = vadd.f32 %v8277, %v8278
    %v8280 = vsel %vm8067, %v7704, 0.0
    %v8281 = vadd.f32 %v8279, %v8280
    %v8282 = vsel %vm8067, %v7708, 0.0
    %v8283 = vadd.f32 %v8281, %v8282
    %v8284 = vsel %vm8067, %v7712, 0.0
    %v8285 = vadd.f32 %v8283, %v8284
    %v8286 = vsel %vm8067, %v7716, 0.0
    %v8287 = vadd.f32 %v8285, %v8286
    %v8288 = vsel %vm8067, %v7720, 0.0
    %v8289 = vadd.f32 %v8287, %v8288
    %v8290 = vsel %vm8067, %v7724, 0.0
    %v8291 = vadd.f32 %v8289, %v8290
    %v8292 = vsel %vm8067, %v7728, 0.0
    %v8293 = vadd.f32 %v8291, %v8292
    %v8294 = vsel %vm8067, %v7732, 0.0
    %v8295 = vadd.f32 %v8293, %v8294
    %v8296 = vsel %vm8067, %v7736, 0.0
    %v8297 = vadd.f32 %v8295, %v8296
    %v8298 = vsel %vm8067, %v7740, 0.0
    %v8299 = vadd.f32 %v8297, %v8298
    %v8300 = vsel %vm8067, %v7744, 0.0
    %v8301 = vadd.f32 %v8299, %v8300
    %v8302 = vsel %vm8067, %v7748, 0.0
    %v8303 = vadd.f32 %v8301, %v8302
    %v8304 = vsel %vm8067, %v7752, 0.0
    %v8305 = vadd.f32 %v8303, %v8304
    %v8306 = vsel %vm8067, %v7756, 0.0
    %v8307 = vadd.f32 %v8305, %v8306
    %v8308 = vsel %vm8067, %v7760, 0.0
    %v8309 = vadd.f32 %v8307, %v8308
    %v8310 = vsel %vm8067, %v7764, 0.0
    %v8311 = vadd.f32 %v8309, %v8310
    %v8312 = vsel %vm8067, %v7768, 0.0
    %v8313 = vadd.f32 %v8311, %v8312
    %v8314 = vsel %vm8067, %v7772, 0.0
    %v8315 = vadd.f32 %v8313, %v8314
    %v8316 = vsel %vm8067, %v7776, 0.0
    %v8317 = vadd.f32 %v8315, %v8316
    %v8318 = vsel %vm8067, %v7780, 0.0
    %v8319 = vadd.f32 %v8317, %v8318
    %v8320 = vsel %vm8067, %v7784, 0.0
    %v8321 = vadd.f32 %v8319, %v8320
    %v8322 = vsel %vm8067, %v7788, 0.0
    %v8323 = vadd.f32 %v8321, %v8322
    %v8324 = vsel %vm8067, %v7792, 0.0
    %v8325 = vadd.f32 %v8323, %v8324
    %v8326 = vsel %vm8067, %v7796, 0.0
    %v8327 = vadd.f32 %v8325, %v8326
    %v8328 = vsel %vm8067, %v7800, 0.0
    %v8329 = vadd.f32 %v8327, %v8328
    %v8330 = vsel %vm8067, %v7804, 0.0
    %v8331 = vadd.f32 %v8329, %v8330
    %v8332 = vsel %vm8067, %v7808, 0.0
    %v8333 = vadd.f32 %v8331, %v8332
    %v8334 = vsel %vm8067, %v7812, 0.0
    %v8335 = vadd.f32 %v8333, %v8334
    %v8336 = vsel %vm8067, %v7816, 0.0
    %v8337 = vadd.f32 %v8335, %v8336
    %v8338 = vsel %vm8067, %v7820, 0.0
    %v8339 = vadd.f32 %v8337, %v8338
    %v8340 = vsel %vm8067, %v7824, 0.0
    %v8341 = vadd.f32 %v8339, %v8340
    %v8342 = vsel %vm8067, %v7828, 0.0
    %v8343 = vadd.f32 %v8341, %v8342
    %v8344 = vsel %vm8067, %v7832, 0.0
    %v8345 = vadd.f32 %v8343, %v8344
    %v8346 = vsel %vm8067, %v7836, 0.0
    %v8347 = vadd.f32 %v8345, %v8346
    %v8348 = vsel %vm8067, %v7840, 0.0
    %v8349 = vadd.f32 %v8347, %v8348
    %v8350 = vsel %vm8067, %v7844, 0.0
    %v8351 = vadd.f32 %v8349, %v8350
    %v8352 = vsel %vm8067, %v7848, 0.0
    %v8353 = vadd.f32 %v8351, %v8352
    %v8354 = vsel %vm8067, %v7852, 0.0
    %v8355 = vadd.f32 %v8353, %v8354
    %v8356 = vsel %vm8067, %v7856, 0.0
    %v8357 = vadd.f32 %v8355, %v8356
    %v8358 = vsel %vm8067, %v7860, 0.0
    %v8359 = vadd.f32 %v8357, %v8358
    %v8360 = vsel %vm8067, %v7864, 0.0
    %v8361 = vadd.f32 %v8359, %v8360
    %v8362 = vsel %vm8067, %v7868, 0.0
    %v8363 = vadd.f32 %v8361, %v8362
    %v8364 = vsel %vm8067, %v7872, 0.0
    %v8365 = vadd.f32 %v8363, %v8364
    %v8366 = vsel %vm8067, %v7876, 0.0
    %v8367 = vadd.f32 %v8365, %v8366
    %v8368 = vsel %vm8067, %v7880, 0.0
    %v8369 = vadd.f32 %v8367, %v8368
    %v8370 = vsel %vm8067, %v7884, 0.0
    %v8371 = vadd.f32 %v8369, %v8370
    %v8372 = vsel %vm8067, %v7888, 0.0
    %v8373 = vadd.f32 %v8371, %v8372
    %v8374 = vsel %vm8067, %v7892, 0.0
    %v8375 = vadd.f32 %v8373, %v8374
    %v8376 = vsel %vm8067, %v7896, 0.0
    %v8377 = vadd.f32 %v8375, %v8376
    %v8378 = vsel %vm8067, %v7900, 0.0
    %v8379 = vadd.f32 %v8377, %v8378
    %v8380 = vsel %vm8067, %v7904, 0.0
    %v8381 = vadd.f32 %v8379, %v8380
    %v8382 = vsel %vm8067, %v7908, 0.0
    %v8383 = vadd.f32 %v8381, %v8382
    %v8384 = vsel %vm8067, %v7912, 0.0
    %v8385 = vadd.f32 %v8383, %v8384
    %v8386 = vsel %vm8067, %v7916, 0.0
    %v8387 = vadd.f32 %v8385, %v8386
    %v8388 = vsel %vm8067, %v7920, 0.0
    %v8389 = vadd.f32 %v8387, %v8388
    %v8390 = vsel %vm8067, %v7924, 0.0
    %v8391 = vadd.f32 %v8389, %v8390
    %v8392 = vsel %vm8067, %v7928, 0.0
    %v8393 = vadd.f32 %v8391, %v8392
    %v8394 = vsel %vm8067, %v7932, 0.0
    %v8395 = vadd.f32 %v8393, %v8394
    %v8396 = vsel %vm8067, %v7936, 0.0
    %v8397 = vadd.f32 %v8395, %v8396
    %v8398 = vsel %vm8067, %v7940, 0.0
    %v8399 = vadd.f32 %v8397, %v8398
    %v8400 = vsel %vm8067, %v7944, 0.0
    %v8401 = vadd.f32 %v8399, %v8400
    %v8402 = vsel %vm8067, %v7948, 0.0
    %v8403 = vadd.f32 %v8401, %v8402
    %v8404 = vsel %vm8067, %v7952, 0.0
    %v8405 = vadd.f32 %v8403, %v8404
    %v8406 = vsel %vm8067, %v7956, 0.0
    %v8407 = vadd.f32 %v8405, %v8406
    %v8408 = vsel %vm8067, %v7960, 0.0
    %v8409 = vadd.f32 %v8407, %v8408
    %v8410 = vsel %vm8067, %v7964, 0.0
    %v8411 = vadd.f32 %v8409, %v8410
    %v8412 = vsel %vm8067, %v7968, 0.0
    %v8413 = vadd.f32 %v8411, %v8412
    %v8414 = vsel %vm8067, %v7972, 0.0
    %v8415 = vadd.f32 %v8413, %v8414
    %v8416 = vsel %vm8067, %v7976, 0.0
    %v8417 = vadd.f32 %v8415, %v8416
    %v8418 = vsel %vm8067, %v7980, 0.0
    %v8419 = vadd.f32 %v8417, %v8418
    %v8420 = vsel %vm8067, %v7984, 0.0
    %v8421 = vadd.f32 %v8419, %v8420
    %v8422 = vsel %vm8067, %v7988, 0.0
    %v8423 = vadd.f32 %v8421, %v8422
    %v8424 = vsel %vm8067, %v7992, 0.0
    %v8425 = vadd.f32 %v8423, %v8424
    %v8426 = vsel %vm8067, %v7996, 0.0
    %v8427 = vadd.f32 %v8425, %v8426
    %v8428 = vsel %vm8067, %v8000, 0.0
    %v8429 = vadd.f32 %v8427, %v8428
    %v8430 = vsel %vm8067, %v8004, 0.0
    %v8431 = vadd.f32 %v8429, %v8430
    %v8432 = vsel %vm8067, %v8008, 0.0
    %v8433 = vadd.f32 %v8431, %v8432
    %v8434 = vsel %vm8067, %v8012, 0.0
    %v8435 = vadd.f32 %v8433, %v8434
    %v8436 = vsel %vm8067, %v8016, 0.0
    %v8437 = vadd.f32 %v8435, %v8436
    %v8438 = vsel %vm8067, %v8020, 0.0
    %v8439 = vadd.f32 %v8437, %v8438
    %v8440 = vsel %vm8067, %v8024, 0.0
    %v8441 = vadd.f32 %v8439, %v8440
    %v8442 = vsel %vm8067, %v8028, 0.0
    %v8443 = vadd.f32 %v8441, %v8442
    %v8444 = vsel %vm8067, %v8032, 0.0
    %v8445 = vadd.f32 %v8443, %v8444
    %v8446 = vsel %vm8067, %v8036, 0.0
    %v8447 = vadd.f32 %v8445, %v8446
    %v8448 = vsel %vm8067, %v8040, 0.0
    %v8449 = vadd.f32 %v8447, %v8448
    %v8450 = vsel %vm8067, %v8044, 0.0
    %v8451 = vadd.f32 %v8449, %v8450
    %v8452 = vsel %vm8067, %v8048, 0.0
    %v8453 = vadd.f32 %v8451, %v8452
    %v8454 = vsel %vm8067, %v8052, 0.0
    %v8455 = vadd.f32 %v8453, %v8454
    %v8456 = vsel %vm8067, %v8056, 0.0
    %v8457 = vadd.f32 %v8455, %v8456
    %v8458 = vsel %vm8067, %v8060, 0.0
    %v8459 = vadd.f32 %v8457, %v8458
    %v8460 = vsel %vm8067, %v8064, 0.0
    %v8461 = vadd.f32 %v8459, %v8460
    %v8462 = vsel %vm8067, %v7673, 0.0
    %v8463 = vsel %vm8067, %v7677, 0.0
    %v8464 = vadd.f32 %v8462, %v8463
    %v8465 = vsel %vm8067, %v7681, 0.0
    %v8466 = vadd.f32 %v8464, %v8465
    %v8467 = vsel %vm8067, %v7685, 0.0
    %v8468 = vadd.f32 %v8466, %v8467
    %v8469 = vsel %vm8067, %v7689, 0.0
    %v8470 = vadd.f32 %v8468, %v8469
    %v8471 = vsel %vm8067, %v7693, 0.0
    %v8472 = vadd.f32 %v8470, %v8471
    %v8473 = vsel %vm8067, %v7697, 0.0
    %v8474 = vadd.f32 %v8472, %v8473
    %v8475 = vsel %vm8067, %v7701, 0.0
    %v8476 = vadd.f32 %v8474, %v8475
    %v8477 = vsel %vm8067, %v7705, 0.0
    %v8478 = vadd.f32 %v8476, %v8477
    %v8479 = vsel %vm8067, %v7709, 0.0
    %v8480 = vadd.f32 %v8478, %v8479
    %v8481 = vsel %vm8067, %v7713, 0.0
    %v8482 = vadd.f32 %v8480, %v8481
    %v8483 = vsel %vm8067, %v7717, 0.0
    %v8484 = vadd.f32 %v8482, %v8483
    %v8485 = vsel %vm8067, %v7721, 0.0
    %v8486 = vadd.f32 %v8484, %v8485
    %v8487 = vsel %vm8067, %v7725, 0.0
    %v8488 = vadd.f32 %v8486, %v8487
    %v8489 = vsel %vm8067, %v7729, 0.0
    %v8490 = vadd.f32 %v8488, %v8489
    %v8491 = vsel %vm8067, %v7733, 0.0
    %v8492 = vadd.f32 %v8490, %v8491
    %v8493 = vsel %vm8067, %v7737, 0.0
    %v8494 = vadd.f32 %v8492, %v8493
    %v8495 = vsel %vm8067, %v7741, 0.0
    %v8496 = vadd.f32 %v8494, %v8495
    %v8497 = vsel %vm8067, %v7745, 0.0
    %v8498 = vadd.f32 %v8496, %v8497
    %v8499 = vsel %vm8067, %v7749, 0.0
    %v8500 = vadd.f32 %v8498, %v8499
    %v8501 = vsel %vm8067, %v7753, 0.0
    %v8502 = vadd.f32 %v8500, %v8501
    %v8503 = vsel %vm8067, %v7757, 0.0
    %v8504 = vadd.f32 %v8502, %v8503
    %v8505 = vsel %vm8067, %v7761, 0.0
    %v8506 = vadd.f32 %v8504, %v8505
    %v8507 = vsel %vm8067, %v7765, 0.0
    %v8508 = vadd.f32 %v8506, %v8507
    %v8509 = vsel %vm8067, %v7769, 0.0
    %v8510 = vadd.f32 %v8508, %v8509
    %v8511 = vsel %vm8067, %v7773, 0.0
    %v8512 = vadd.f32 %v8510, %v8511
    %v8513 = vsel %vm8067, %v7777, 0.0
    %v8514 = vadd.f32 %v8512, %v8513
    %v8515 = vsel %vm8067, %v7781, 0.0
    %v8516 = vadd.f32 %v8514, %v8515
    %v8517 = vsel %vm8067, %v7785, 0.0
    %v8518 = vadd.f32 %v8516, %v8517
    %v8519 = vsel %vm8067, %v7789, 0.0
    %v8520 = vadd.f32 %v8518, %v8519
    %v8521 = vsel %vm8067, %v7793, 0.0
    %v8522 = vadd.f32 %v8520, %v8521
    %v8523 = vsel %vm8067, %v7797, 0.0
    %v8524 = vadd.f32 %v8522, %v8523
    %v8525 = vsel %vm8067, %v7801, 0.0
    %v8526 = vadd.f32 %v8524, %v8525
    %v8527 = vsel %vm8067, %v7805, 0.0
    %v8528 = vadd.f32 %v8526, %v8527
    %v8529 = vsel %vm8067, %v7809, 0.0
    %v8530 = vadd.f32 %v8528, %v8529
    %v8531 = vsel %vm8067, %v7813, 0.0
    %v8532 = vadd.f32 %v8530, %v8531
    %v8533 = vsel %vm8067, %v7817, 0.0
    %v8534 = vadd.f32 %v8532, %v8533
    %v8535 = vsel %vm8067, %v7821, 0.0
    %v8536 = vadd.f32 %v8534, %v8535
    %v8537 = vsel %vm8067, %v7825, 0.0
    %v8538 = vadd.f32 %v8536, %v8537
    %v8539 = vsel %vm8067, %v7829, 0.0
    %v8540 = vadd.f32 %v8538, %v8539
    %v8541 = vsel %vm8067, %v7833, 0.0
    %v8542 = vadd.f32 %v8540, %v8541
    %v8543 = vsel %vm8067, %v7837, 0.0
    %v8544 = vadd.f32 %v8542, %v8543
    %v8545 = vsel %vm8067, %v7841, 0.0
    %v8546 = vadd.f32 %v8544, %v8545
    %v8547 = vsel %vm8067, %v7845, 0.0
    %v8548 = vadd.f32 %v8546, %v8547
    %v8549 = vsel %vm8067, %v7849, 0.0
    %v8550 = vadd.f32 %v8548, %v8549
    %v8551 = vsel %vm8067, %v7853, 0.0
    %v8552 = vadd.f32 %v8550, %v8551
    %v8553 = vsel %vm8067, %v7857, 0.0
    %v8554 = vadd.f32 %v8552, %v8553
    %v8555 = vsel %vm8067, %v7861, 0.0
    %v8556 = vadd.f32 %v8554, %v8555
    %v8557 = vsel %vm8067, %v7865, 0.0
    %v8558 = vadd.f32 %v8556, %v8557
    %v8559 = vsel %vm8067, %v7869, 0.0
    %v8560 = vadd.f32 %v8558, %v8559
    %v8561 = vsel %vm8067, %v7873, 0.0
    %v8562 = vadd.f32 %v8560, %v8561
    %v8563 = vsel %vm8067, %v7877, 0.0
    %v8564 = vadd.f32 %v8562, %v8563
    %v8565 = vsel %vm8067, %v7881, 0.0
    %v8566 = vadd.f32 %v8564, %v8565
    %v8567 = vsel %vm8067, %v7885, 0.0
    %v8568 = vadd.f32 %v8566, %v8567
    %v8569 = vsel %vm8067, %v7889, 0.0
    %v8570 = vadd.f32 %v8568, %v8569
    %v8571 = vsel %vm8067, %v7893, 0.0
    %v8572 = vadd.f32 %v8570, %v8571
    %v8573 = vsel %vm8067, %v7897, 0.0
    %v8574 = vadd.f32 %v8572, %v8573
    %v8575 = vsel %vm8067, %v7901, 0.0
    %v8576 = vadd.f32 %v8574, %v8575
    %v8577 = vsel %vm8067, %v7905, 0.0
    %v8578 = vadd.f32 %v8576, %v8577
    %v8579 = vsel %vm8067, %v7909, 0.0
    %v8580 = vadd.f32 %v8578, %v8579
    %v8581 = vsel %vm8067, %v7913, 0.0
    %v8582 = vadd.f32 %v8580, %v8581
    %v8583 = vsel %vm8067, %v7917, 0.0
    %v8584 = vadd.f32 %v8582, %v8583
    %v8585 = vsel %vm8067, %v7921, 0.0
    %v8586 = vadd.f32 %v8584, %v8585
    %v8587 = vsel %vm8067, %v7925, 0.0
    %v8588 = vadd.f32 %v8586, %v8587
    %v8589 = vsel %vm8067, %v7929, 0.0
    %v8590 = vadd.f32 %v8588, %v8589
    %v8591 = vsel %vm8067, %v7933, 0.0
    %v8592 = vadd.f32 %v8590, %v8591
    %v8593 = vsel %vm8067, %v7937, 0.0
    %v8594 = vadd.f32 %v8592, %v8593
    %v8595 = vsel %vm8067, %v7941, 0.0
    %v8596 = vadd.f32 %v8594, %v8595
    %v8597 = vsel %vm8067, %v7945, 0.0
    %v8598 = vadd.f32 %v8596, %v8597
    %v8599 = vsel %vm8067, %v7949, 0.0
    %v8600 = vadd.f32 %v8598, %v8599
    %v8601 = vsel %vm8067, %v7953, 0.0
    %v8602 = vadd.f32 %v8600, %v8601
    %v8603 = vsel %vm8067, %v7957, 0.0
    %v8604 = vadd.f32 %v8602, %v8603
    %v8605 = vsel %vm8067, %v7961, 0.0
    %v8606 = vadd.f32 %v8604, %v8605
    %v8607 = vsel %vm8067, %v7965, 0.0
    %v8608 = vadd.f32 %v8606, %v8607
    %v8609 = vsel %vm8067, %v7969, 0.0
    %v8610 = vadd.f32 %v8608, %v8609
    %v8611 = vsel %vm8067, %v7973, 0.0
    %v8612 = vadd.f32 %v8610, %v8611
    %v8613 = vsel %vm8067, %v7977, 0.0
    %v8614 = vadd.f32 %v8612, %v8613
    %v8615 = vsel %vm8067, %v7981, 0.0
    %v8616 = vadd.f32 %v8614, %v8615
    %v8617 = vsel %vm8067, %v7985, 0.0
    %v8618 = vadd.f32 %v8616, %v8617
    %v8619 = vsel %vm8067, %v7989, 0.0
    %v8620 = vadd.f32 %v8618, %v8619
    %v8621 = vsel %vm8067, %v7993, 0.0
    %v8622 = vadd.f32 %v8620, %v8621
    %v8623 = vsel %vm8067, %v7997, 0.0
    %v8624 = vadd.f32 %v8622, %v8623
    %v8625 = vsel %vm8067, %v8001, 0.0
    %v8626 = vadd.f32 %v8624, %v8625
    %v8627 = vsel %vm8067, %v8005, 0.0
    %v8628 = vadd.f32 %v8626, %v8627
    %v8629 = vsel %vm8067, %v8009, 0.0
    %v8630 = vadd.f32 %v8628, %v8629
    %v8631 = vsel %vm8067, %v8013, 0.0
    %v8632 = vadd.f32 %v8630, %v8631
    %v8633 = vsel %vm8067, %v8017, 0.0
    %v8634 = vadd.f32 %v8632, %v8633
    %v8635 = vsel %vm8067, %v8021, 0.0
    %v8636 = vadd.f32 %v8634, %v8635
    %v8637 = vsel %vm8067, %v8025, 0.0
    %v8638 = vadd.f32 %v8636, %v8637
    %v8639 = vsel %vm8067, %v8029, 0.0
    %v8640 = vadd.f32 %v8638, %v8639
    %v8641 = vsel %vm8067, %v8033, 0.0
    %v8642 = vadd.f32 %v8640, %v8641
    %v8643 = vsel %vm8067, %v8037, 0.0
    %v8644 = vadd.f32 %v8642, %v8643
    %v8645 = vsel %vm8067, %v8041, 0.0
    %v8646 = vadd.f32 %v8644, %v8645
    %v8647 = vsel %vm8067, %v8045, 0.0
    %v8648 = vadd.f32 %v8646, %v8647
    %v8649 = vsel %vm8067, %v8049, 0.0
    %v8650 = vadd.f32 %v8648, %v8649
    %v8651 = vsel %vm8067, %v8053, 0.0
    %v8652 = vadd.f32 %v8650, %v8651
    %v8653 = vsel %vm8067, %v8057, 0.0
    %v8654 = vadd.f32 %v8652, %v8653
    %v8655 = vsel %vm8067, %v8061, 0.0
    %v8656 = vadd.f32 %v8654, %v8655
    %v8657 = vsel %vm8067, %v8065, 0.0
    %v8658 = vadd.f32 %v8656, %v8657
    %v8659 = vsel %vm8067, %v7674, 0.0
    %v8660 = vsel %vm8067, %v7678, 0.0
    %v8661 = vadd.f32 %v8659, %v8660
    %v8662 = vsel %vm8067, %v7682, 0.0
    %v8663 = vadd.f32 %v8661, %v8662
    %v8664 = vsel %vm8067, %v7686, 0.0
    %v8665 = vadd.f32 %v8663, %v8664
    %v8666 = vsel %vm8067, %v7690, 0.0
    %v8667 = vadd.f32 %v8665, %v8666
    %v8668 = vsel %vm8067, %v7694, 0.0
    %v8669 = vadd.f32 %v8667, %v8668
    %v8670 = vsel %vm8067, %v7698, 0.0
    %v8671 = vadd.f32 %v8669, %v8670
    %v8672 = vsel %vm8067, %v7702, 0.0
    %v8673 = vadd.f32 %v8671, %v8672
    %v8674 = vsel %vm8067, %v7706, 0.0
    %v8675 = vadd.f32 %v8673, %v8674
    %v8676 = vsel %vm8067, %v7710, 0.0
    %v8677 = vadd.f32 %v8675, %v8676
    %v8678 = vsel %vm8067, %v7714, 0.0
    %v8679 = vadd.f32 %v8677, %v8678
    %v8680 = vsel %vm8067, %v7718, 0.0
    %v8681 = vadd.f32 %v8679, %v8680
    %v8682 = vsel %vm8067, %v7722, 0.0
    %v8683 = vadd.f32 %v8681, %v8682
    %v8684 = vsel %vm8067, %v7726, 0.0
    %v8685 = vadd.f32 %v8683, %v8684
    %v8686 = vsel %vm8067, %v7730, 0.0
    %v8687 = vadd.f32 %v8685, %v8686
    %v8688 = vsel %vm8067, %v7734, 0.0
    %v8689 = vadd.f32 %v8687, %v8688
    %v8690 = vsel %vm8067, %v7738, 0.0
    %v8691 = vadd.f32 %v8689, %v8690
    %v8692 = vsel %vm8067, %v7742, 0.0
    %v8693 = vadd.f32 %v8691, %v8692
    %v8694 = vsel %vm8067, %v7746, 0.0
    %v8695 = vadd.f32 %v8693, %v8694
    %v8696 = vsel %vm8067, %v7750, 0.0
    %v8697 = vadd.f32 %v8695, %v8696
    %v8698 = vsel %vm8067, %v7754, 0.0
    %v8699 = vadd.f32 %v8697, %v8698
    %v8700 = vsel %vm8067, %v7758, 0.0
    %v8701 = vadd.f32 %v8699, %v8700
    %v8702 = vsel %vm8067, %v7762, 0.0
    %v8703 = vadd.f32 %v8701, %v8702
    %v8704 = vsel %vm8067, %v7766, 0.0
    %v8705 = vadd.f32 %v8703, %v8704
    %v8706 = vsel %vm8067, %v7770, 0.0
    %v8707 = vadd.f32 %v8705, %v8706
    %v8708 = vsel %vm8067, %v7774, 0.0
    %v8709 = vadd.f32 %v8707, %v8708
    %v8710 = vsel %vm8067, %v7778, 0.0
    %v8711 = vadd.f32 %v8709, %v8710
    %v8712 = vsel %vm8067, %v7782, 0.0
    %v8713 = vadd.f32 %v8711, %v8712
    %v8714 = vsel %vm8067, %v7786, 0.0
    %v8715 = vadd.f32 %v8713, %v8714
    %v8716 = vsel %vm8067, %v7790, 0.0
    %v8717 = vadd.f32 %v8715, %v8716
    %v8718 = vsel %vm8067, %v7794, 0.0
    %v8719 = vadd.f32 %v8717, %v8718
    %v8720 = vsel %vm8067, %v7798, 0.0
    %v8721 = vadd.f32 %v8719, %v8720
    %v8722 = vsel %vm8067, %v7802, 0.0
    %v8723 = vadd.f32 %v8721, %v8722
    %v8724 = vsel %vm8067, %v7806, 0.0
    %v8725 = vadd.f32 %v8723, %v8724
    %v8726 = vsel %vm8067, %v7810, 0.0
    %v8727 = vadd.f32 %v8725, %v8726
    %v8728 = vsel %vm8067, %v7814, 0.0
    %v8729 = vadd.f32 %v8727, %v8728
    %v8730 = vsel %vm8067, %v7818, 0.0
    %v8731 = vadd.f32 %v8729, %v8730
    %v8732 = vsel %vm8067, %v7822, 0.0
    %v8733 = vadd.f32 %v8731, %v8732
    %v8734 = vsel %vm8067, %v7826, 0.0
    %v8735 = vadd.f32 %v8733, %v8734
    %v8736 = vsel %vm8067, %v7830, 0.0
    %v8737 = vadd.f32 %v8735, %v8736
    %v8738 = vsel %vm8067, %v7834, 0.0
    %v8739 = vadd.f32 %v8737, %v8738
    %v8740 = vsel %vm8067, %v7838, 0.0
    %v8741 = vadd.f32 %v8739, %v8740
    %v8742 = vsel %vm8067, %v7842, 0.0
    %v8743 = vadd.f32 %v8741, %v8742
    %v8744 = vsel %vm8067, %v7846, 0.0
    %v8745 = vadd.f32 %v8743, %v8744
    %v8746 = vsel %vm8067, %v7850, 0.0
    %v8747 = vadd.f32 %v8745, %v8746
    %v8748 = vsel %vm8067, %v7854, 0.0
    %v8749 = vadd.f32 %v8747, %v8748
    %v8750 = vsel %vm8067, %v7858, 0.0
    %v8751 = vadd.f32 %v8749, %v8750
    %v8752 = vsel %vm8067, %v7862, 0.0
    %v8753 = vadd.f32 %v8751, %v8752
    %v8754 = vsel %vm8067, %v7866, 0.0
    %v8755 = vadd.f32 %v8753, %v8754
    %v8756 = vsel %vm8067, %v7870, 0.0
    %v8757 = vadd.f32 %v8755, %v8756
    %v8758 = vsel %vm8067, %v7874, 0.0
    %v8759 = vadd.f32 %v8757, %v8758
    %v8760 = vsel %vm8067, %v7878, 0.0
    %v8761 = vadd.f32 %v8759, %v8760
    %v8762 = vsel %vm8067, %v7882, 0.0
    %v8763 = vadd.f32 %v8761, %v8762
    %v8764 = vsel %vm8067, %v7886, 0.0
    %v8765 = vadd.f32 %v8763, %v8764
    %v8766 = vsel %vm8067, %v7890, 0.0
    %v8767 = vadd.f32 %v8765, %v8766
    %v8768 = vsel %vm8067, %v7894, 0.0
    %v8769 = vadd.f32 %v8767, %v8768
    %v8770 = vsel %vm8067, %v7898, 0.0
    %v8771 = vadd.f32 %v8769, %v8770
    %v8772 = vsel %vm8067, %v7902, 0.0
    %v8773 = vadd.f32 %v8771, %v8772
    %v8774 = vsel %vm8067, %v7906, 0.0
    %v8775 = vadd.f32 %v8773, %v8774
    %v8776 = vsel %vm8067, %v7910, 0.0
    %v8777 = vadd.f32 %v8775, %v8776
    %v8778 = vsel %vm8067, %v7914, 0.0
    %v8779 = vadd.f32 %v8777, %v8778
    %v8780 = vsel %vm8067, %v7918, 0.0
    %v8781 = vadd.f32 %v8779, %v8780
    %v8782 = vsel %vm8067, %v7922, 0.0
    %v8783 = vadd.f32 %v8781, %v8782
    %v8784 = vsel %vm8067, %v7926, 0.0
    %v8785 = vadd.f32 %v8783, %v8784
    %v8786 = vsel %vm8067, %v7930, 0.0
    %v8787 = vadd.f32 %v8785, %v8786
    %v8788 = vsel %vm8067, %v7934, 0.0
    %v8789 = vadd.f32 %v8787, %v8788
    %v8790 = vsel %vm8067, %v7938, 0.0
    %v8791 = vadd.f32 %v8789, %v8790
    %v8792 = vsel %vm8067, %v7942, 0.0
    %v8793 = vadd.f32 %v8791, %v8792
    %v8794 = vsel %vm8067, %v7946, 0.0
    %v8795 = vadd.f32 %v8793, %v8794
    %v8796 = vsel %vm8067, %v7950, 0.0
    %v8797 = vadd.f32 %v8795, %v8796
    %v8798 = vsel %vm8067, %v7954, 0.0
    %v8799 = vadd.f32 %v8797, %v8798
    %v8800 = vsel %vm8067, %v7958, 0.0
    %v8801 = vadd.f32 %v8799, %v8800
    %v8802 = vsel %vm8067, %v7962, 0.0
    %v8803 = vadd.f32 %v8801, %v8802
    %v8804 = vsel %vm8067, %v7966, 0.0
    %v8805 = vadd.f32 %v8803, %v8804
    %v8806 = vsel %vm8067, %v7970, 0.0
    %v8807 = vadd.f32 %v8805, %v8806
    %v8808 = vsel %vm8067, %v7974, 0.0
    %v8809 = vadd.f32 %v8807, %v8808
    %v8810 = vsel %vm8067, %v7978, 0.0
    %v8811 = vadd.f32 %v8809, %v8810
    %v8812 = vsel %vm8067, %v7982, 0.0
    %v8813 = vadd.f32 %v8811, %v8812
    %v8814 = vsel %vm8067, %v7986, 0.0
    %v8815 = vadd.f32 %v8813, %v8814
    %v8816 = vsel %vm8067, %v7990, 0.0
    %v8817 = vadd.f32 %v8815, %v8816
    %v8818 = vsel %vm8067, %v7994, 0.0
    %v8819 = vadd.f32 %v8817, %v8818
    %v8820 = vsel %vm8067, %v7998, 0.0
    %v8821 = vadd.f32 %v8819, %v8820
    %v8822 = vsel %vm8067, %v8002, 0.0
    %v8823 = vadd.f32 %v8821, %v8822
    %v8824 = vsel %vm8067, %v8006, 0.0
    %v8825 = vadd.f32 %v8823, %v8824
    %v8826 = vsel %vm8067, %v8010, 0.0
    %v8827 = vadd.f32 %v8825, %v8826
    %v8828 = vsel %vm8067, %v8014, 0.0
    %v8829 = vadd.f32 %v8827, %v8828
    %v8830 = vsel %vm8067, %v8018, 0.0
    %v8831 = vadd.f32 %v8829, %v8830
    %v8832 = vsel %vm8067, %v8022, 0.0
    %v8833 = vadd.f32 %v8831, %v8832
    %v8834 = vsel %vm8067, %v8026, 0.0
    %v8835 = vadd.f32 %v8833, %v8834
    %v8836 = vsel %vm8067, %v8030, 0.0
    %v8837 = vadd.f32 %v8835, %v8836
    %v8838 = vsel %vm8067, %v8034, 0.0
    %v8839 = vadd.f32 %v8837, %v8838
    %v8840 = vsel %vm8067, %v8038, 0.0
    %v8841 = vadd.f32 %v8839, %v8840
    %v8842 = vsel %vm8067, %v8042, 0.0
    %v8843 = vadd.f32 %v8841, %v8842
    %v8844 = vsel %vm8067, %v8046, 0.0
    %v8845 = vadd.f32 %v8843, %v8844
    %v8846 = vsel %vm8067, %v8050, 0.0
    %v8847 = vadd.f32 %v8845, %v8846
    %v8848 = vsel %vm8067, %v8054, 0.0
    %v8849 = vadd.f32 %v8847, %v8848
    %v8850 = vsel %vm8067, %v8058, 0.0
    %v8851 = vadd.f32 %v8849, %v8850
    %v8852 = vsel %vm8067, %v8062, 0.0
    %v8853 = vadd.f32 %v8851, %v8852
    %v8854 = vsel %vm8067, %v8066, 0.0
    %v8855 = vadd.f32 %v8853, %v8854
    %v8856 = vmax.f32 %v7275, 0.0
    %v8857 = vmax.f32 %v7276, 0.0
    %v8858 = vmax.f32 %v7277, 0.0
    %v8859 = vmax.f32 %v7278, 0.0
    %v8860 = vmax.f32 %v7279, 0.0
    %v8861 = vmax.f32 %v7280, 0.0
    %v8862 = vmax.f32 %v7281, 0.0
    %v8863 = vmax.f32 %v7282, 0.0
    %v8864 = vmax.f32 %v7283, 0.0
    %v8865 = vmax.f32 %v7284, 0.0
    %v8866 = vmax.f32 %v7285, 0.0
    %v8867 = vmax.f32 %v7286, 0.0
    %v8868 = vmax.f32 %v7287, 0.0
    %v8869 = vmax.f32 %v7288, 0.0
    %v8870 = vmax.f32 %v7289, 0.0
    %v8871 = vmax.f32 %v7290, 0.0
    %v8872 = vmax.f32 %v7291, 0.0
    %v8873 = vmax.f32 %v7292, 0.0
    %v8874 = vmax.f32 %v7293, 0.0
    %v8875 = vmax.f32 %v7294, 0.0
    %v8876 = vmax.f32 %v7295, 0.0
    %v8877 = vmax.f32 %v7296, 0.0
    %v8878 = vmax.f32 %v7297, 0.0
    %v8879 = vmax.f32 %v7298, 0.0
    %v8880 = vmax.f32 %v7299, 0.0
    %v8881 = vmax.f32 %v7300, 0.0
    %v8882 = vmax.f32 %v7301, 0.0
    %v8883 = vmax.f32 %v7302, 0.0
    %v8884 = vmax.f32 %v7303, 0.0
    %v8885 = vmax.f32 %v7304, 0.0
    %v8886 = vmax.f32 %v7305, 0.0
    %v8887 = vmax.f32 %v7306, 0.0
    %v8888 = vmax.f32 %v7307, 0.0
    %v8889 = vmax.f32 %v7308, 0.0
    %v8890 = vmax.f32 %v7309, 0.0
    %v8891 = vmax.f32 %v7310, 0.0
    %v8892 = vmax.f32 %v7311, 0.0
    %v8893 = vmax.f32 %v7312, 0.0
    %v8894 = vmax.f32 %v7313, 0.0
    %v8895 = vmax.f32 %v7314, 0.0
    %v8896 = vmax.f32 %v7315, 0.0
    %v8897 = vmax.f32 %v7316, 0.0
    %v8898 = vmax.f32 %v7317, 0.0
    %v8899 = vmax.f32 %v7318, 0.0
    %v8900 = vmax.f32 %v7319, 0.0
    %v8901 = vmax.f32 %v7320, 0.0
    %v8902 = vmax.f32 %v7321, 0.0
    %v8903 = vmax.f32 %v7322, 0.0
    %v8904 = vmax.f32 %v7323, 0.0
    %v8905 = vmax.f32 %v7324, 0.0
    %v8906 = vmax.f32 %v7325, 0.0
    %v8907 = vmax.f32 %v7326, 0.0
    %v8908 = vmax.f32 %v7327, 0.0
    %v8909 = vmax.f32 %v7328, 0.0
    %v8910 = vmax.f32 %v7329, 0.0
    %v8911 = vmax.f32 %v7330, 0.0
    %v8912 = vmax.f32 %v7331, 0.0
    %v8913 = vmax.f32 %v7332, 0.0
    %v8914 = vmax.f32 %v7333, 0.0
    %v8915 = vmax.f32 %v7334, 0.0
    %v8916 = vmax.f32 %v7335, 0.0
    %v8917 = vmax.f32 %v7336, 0.0
    %v8918 = vmax.f32 %v7337, 0.0
    %v8919 = vmax.f32 %v7338, 0.0
    %v8920 = vmax.f32 %v7339, 0.0
    %v8921 = vmax.f32 %v7340, 0.0
    %v8922 = vmax.f32 %v7341, 0.0
    %v8923 = vmax.f32 %v7342, 0.0
    %v8924 = vmax.f32 %v7343, 0.0
    %v8925 = vmax.f32 %v7344, 0.0
    %v8926 = vmax.f32 %v7345, 0.0
    %v8927 = vmax.f32 %v7346, 0.0
    %v8928 = vmax.f32 %v7347, 0.0
    %v8929 = vmax.f32 %v7348, 0.0
    %v8930 = vmax.f32 %v7349, 0.0
    %v8931 = vmax.f32 %v7350, 0.0
    %v8932 = vmax.f32 %v7351, 0.0
    %v8933 = vmax.f32 %v7352, 0.0
    %v8934 = vmax.f32 %v7353, 0.0
    %v8935 = vmax.f32 %v7354, 0.0
    %v8936 = vmax.f32 %v7355, 0.0
    %v8937 = vmax.f32 %v7356, 0.0
    %v8938 = vmax.f32 %v7357, 0.0
    %v8939 = vmax.f32 %v7358, 0.0
    %v8940 = vmax.f32 %v7359, 0.0
    %v8941 = vmax.f32 %v7360, 0.0
    %v8942 = vmax.f32 %v7361, 0.0
    %v8943 = vmax.f32 %v7362, 0.0
    %v8944 = vmax.f32 %v7363, 0.0
    %v8945 = vmax.f32 %v7364, 0.0
    %v8946 = vmax.f32 %v7365, 0.0
    %v8947 = vmax.f32 %v7366, 0.0
    %v8948 = vmax.f32 %v7367, 0.0
    %v8949 = vmax.f32 %v7368, 0.0
    %v8950 = vmax.f32 %v7369, 0.0
    %v8951 = vmax.f32 %v7370, 0.0
    %v8952 = vmax.f32 %v7371, 0.0
    %v8953 = vmax.f32 %v7372, 0.0
    %v8954 = vmax.f32 %v7373, 0.0
    %v8955 = vmax.f32 %v7374, 0.0
    %v8956 = vmax.f32 %v7375, 0.0
    %v8957 = vmax.f32 %v7376, 0.0
    %v8958 = vmax.f32 %v7377, 0.0
    %v8959 = vmax.f32 %v7378, 0.0
    %v8960 = vmax.f32 %v7379, 0.0
    %v8961 = vmax.f32 %v7380, 0.0
    %v8962 = vmax.f32 %v7381, 0.0
    %v8963 = vmax.f32 %v7382, 0.0
    %v8964 = vmax.f32 %v7383, 0.0
    %v8965 = vmax.f32 %v7384, 0.0
    %v8966 = vmax.f32 %v7385, 0.0
    %v8967 = vmax.f32 %v7386, 0.0
    %v8968 = vmax.f32 %v7387, 0.0
    %v8969 = vmax.f32 %v7388, 0.0
    %v8970 = vmax.f32 %v7389, 0.0
    %v8971 = vmax.f32 %v7390, 0.0
    %v8972 = vmax.f32 %v7391, 0.0
    %v8973 = vmax.f32 %v7392, 0.0
    %v8974 = vmax.f32 %v7393, 0.0
    %v8975 = vmax.f32 %v7394, 0.0
    %v8976 = vmax.f32 %v7395, 0.0
    %v8977 = vmax.f32 %v7396, 0.0
    %v8978 = vmax.f32 %v7397, 0.0
    %v8979 = vmax.f32 %v7398, 0.0
    %v8980 = vmax.f32 %v7399, 0.0
    %v8981 = vmax.f32 %v7400, 0.0
    %v8982 = vmax.f32 %v7401, 0.0
    %v8983 = vmax.f32 %v7402, 0.0
    %v8984 = vmax.f32 %v7403, 0.0
    %v8985 = vmax.f32 %v7404, 0.0
    %v8986 = vmax.f32 %v7405, 0.0
    %v8987 = vmax.f32 %v7406, 0.0
    %v8988 = vmax.f32 %v7407, 0.0
    %v8989 = vmax.f32 %v7408, 0.0
    %v8990 = vmax.f32 %v7409, 0.0
    %v8991 = vmax.f32 %v7410, 0.0
    %v8992 = vmax.f32 %v7411, 0.0
    %v8993 = vmax.f32 %v7412, 0.0
    %v8994 = vmax.f32 %v7413, 0.0
    %v8995 = vmax.f32 %v7414, 0.0
    %v8996 = vmax.f32 %v7415, 0.0
    %v8997 = vmax.f32 %v7416, 0.0
    %v8998 = vmax.f32 %v7417, 0.0
    %v8999 = vmax.f32 %v7418, 0.0
    %v9000 = vmax.f32 %v7419, 0.0
    %v9001 = vmax.f32 %v7420, 0.0
    %v9002 = vmax.f32 %v7421, 0.0
    %v9003 = vmax.f32 %v7422, 0.0
    %v9004 = vmax.f32 %v7423, 0.0
    %v9005 = vmax.f32 %v7424, 0.0
    %v9006 = vmax.f32 %v7425, 0.0
    %v9007 = vmax.f32 %v7426, 0.0
    %v9008 = vmax.f32 %v7427, 0.0
    %v9009 = vmax.f32 %v7428, 0.0
    %v9010 = vmax.f32 %v7429, 0.0
    %v9011 = vmax.f32 %v7430, 0.0
    %v9012 = vmax.f32 %v7431, 0.0
    %v9013 = vmax.f32 %v7432, 0.0
    %v9014 = vmax.f32 %v7433, 0.0
    %v9015 = vmax.f32 %v7434, 0.0
    %v9016 = vmax.f32 %v7435, 0.0
    %v9017 = vmax.f32 %v7436, 0.0
    %v9018 = vmax.f32 %v7437, 0.0
    %v9019 = vmax.f32 %v7438, 0.0
    %v9020 = vmax.f32 %v7439, 0.0
    %v9021 = vmax.f32 %v7440, 0.0
    %v9022 = vmax.f32 %v7441, 0.0
    %v9023 = vmax.f32 %v7442, 0.0
    %v9024 = vmax.f32 %v7443, 0.0
    %v9025 = vmax.f32 %v7444, 0.0
    %v9026 = vmax.f32 %v7445, 0.0
    %v9027 = vmax.f32 %v7446, 0.0
    %v9028 = vmax.f32 %v7447, 0.0
    %v9029 = vmax.f32 %v7448, 0.0
    %v9030 = vmax.f32 %v7449, 0.0
    %v9031 = vmax.f32 %v7450, 0.0
    %v9032 = vmax.f32 %v7451, 0.0
    %v9033 = vmax.f32 %v7452, 0.0
    %v9034 = vmax.f32 %v7453, 0.0
    %v9035 = vmax.f32 %v7454, 0.0
    %v9036 = vmax.f32 %v7455, 0.0
    %v9037 = vmax.f32 %v7456, 0.0
    %v9038 = vmax.f32 %v7457, 0.0
    %v9039 = vmax.f32 %v7458, 0.0
    %v9040 = vmax.f32 %v7459, 0.0
    %v9041 = vmax.f32 %v7460, 0.0
    %v9042 = vmax.f32 %v7461, 0.0
    %v9043 = vmax.f32 %v7462, 0.0
    %v9044 = vmax.f32 %v7463, 0.0
    %v9045 = vmax.f32 %v7464, 0.0
    %v9046 = vmax.f32 %v7465, 0.0
    %v9047 = vmax.f32 %v7466, 0.0
    %v9048 = vmax.f32 %v7467, 0.0
    %v9049 = vmax.f32 %v7468, 0.0
    %v9050 = vmax.f32 %v7469, 0.0
    %v9051 = vmax.f32 %v7470, 0.0
    %v9052 = vmax.f32 %v7471, 0.0
    %v9053 = vmax.f32 %v7472, 0.0
    %v9054 = vmax.f32 %v7473, 0.0
    %v9055 = vmax.f32 %v7474, 0.0
    %v9056 = vmax.f32 %v7475, 0.0
    %v9057 = vmax.f32 %v7476, 0.0
    %v9058 = vmax.f32 %v7477, 0.0
    %v9059 = vmax.f32 %v7478, 0.0
    %v9060 = vmax.f32 %v7479, 0.0
    %v9061 = vmax.f32 %v7480, 0.0
    %v9062 = vmax.f32 %v7481, 0.0
    %v9063 = vmax.f32 %v7482, 0.0
    %v9064 = vmax.f32 %v7483, 0.0
    %v9065 = vmax.f32 %v7484, 0.0
    %v9066 = vmax.f32 %v7485, 0.0
    %v9067 = vmax.f32 %v7486, 0.0
    %v9068 = vmax.f32 %v7487, 0.0
    %v9069 = vmax.f32 %v7488, 0.0
    %v9070 = vmax.f32 %v7489, 0.0
    %v9071 = vmax.f32 %v7490, 0.0
    %v9072 = vmax.f32 %v7491, 0.0
    %v9073 = vmax.f32 %v7492, 0.0
    %v9074 = vmax.f32 %v7493, 0.0
    %v9075 = vmax.f32 %v7494, 0.0
    %v9076 = vmax.f32 %v7495, 0.0
    %v9077 = vmax.f32 %v7496, 0.0
    %v9078 = vmax.f32 %v7497, 0.0
    %v9079 = vmax.f32 %v7498, 0.0
    %v9080 = vmax.f32 %v7499, 0.0
    %v9081 = vmax.f32 %v7500, 0.0
    %v9082 = vmax.f32 %v7501, 0.0
    %v9083 = vmax.f32 %v7502, 0.0
    %v9084 = vmax.f32 %v7503, 0.0
    %v9085 = vmax.f32 %v7504, 0.0
    %v9086 = vmax.f32 %v7505, 0.0
    %v9087 = vmax.f32 %v7506, 0.0
    %v9088 = vmax.f32 %v7507, 0.0
    %v9089 = vmax.f32 %v7508, 0.0
    %v9090 = vmax.f32 %v7509, 0.0
    %v9091 = vmax.f32 %v7510, 0.0
    %v9092 = vmax.f32 %v7511, 0.0
    %v9093 = vmax.f32 %v7512, 0.0
    %v9094 = vmax.f32 %v7513, 0.0
    %v9095 = vmax.f32 %v7514, 0.0
    %v9096 = vmax.f32 %v7515, 0.0
    %v9097 = vmax.f32 %v7516, 0.0
    %v9098 = vmax.f32 %v7517, 0.0
    %v9099 = vmax.f32 %v7518, 0.0
    %v9100 = vmax.f32 %v7519, 0.0
    %v9101 = vmax.f32 %v7520, 0.0
    %v9102 = vmax.f32 %v7521, 0.0
    %v9103 = vmax.f32 %v7522, 0.0
    %v9104 = vmax.f32 %v7523, 0.0
    %v9105 = vmax.f32 %v7524, 0.0
    %v9106 = vmax.f32 %v7525, 0.0
    %v9107 = vmax.f32 %v7526, 0.0
    %v9108 = vmax.f32 %v7527, 0.0
    %v9109 = vmax.f32 %v7528, 0.0
    %v9110 = vmax.f32 %v7529, 0.0
    %v9111 = vmax.f32 %v7530, 0.0
    %v9112 = vmax.f32 %v7531, 0.0
    %v9113 = vmax.f32 %v7532, 0.0
    %v9114 = vmax.f32 %v7533, 0.0
    %v9115 = vmax.f32 %v7534, 0.0
    %v9116 = vmax.f32 %v7535, 0.0
    %v9117 = vmax.f32 %v7536, 0.0
    %v9118 = vmax.f32 %v7537, 0.0
    %v9119 = vmax.f32 %v7538, 0.0
    %v9120 = vmax.f32 %v7539, 0.0
    %v9121 = vmax.f32 %v7540, 0.0
    %v9122 = vmax.f32 %v7541, 0.0
    %v9123 = vmax.f32 %v7542, 0.0
    %v9124 = vmax.f32 %v7543, 0.0
    %v9125 = vmax.f32 %v7544, 0.0
    %v9126 = vmax.f32 %v7545, 0.0
    %v9127 = vmax.f32 %v7546, 0.0
    %v9128 = vmax.f32 %v7547, 0.0
    %v9129 = vmax.f32 %v7548, 0.0
    %v9130 = vmax.f32 %v7549, 0.0
    %v9131 = vmax.f32 %v7550, 0.0
    %v9132 = vmax.f32 %v7551, 0.0
    %v9133 = vmax.f32 %v7552, 0.0
    %v9134 = vmax.f32 %v7553, 0.0
    %v9135 = vmax.f32 %v7554, 0.0
    %v9136 = vmax.f32 %v7555, 0.0
    %v9137 = vmax.f32 %v7556, 0.0
    %v9138 = vmax.f32 %v7557, 0.0
    %v9139 = vmax.f32 %v7558, 0.0
    %v9140 = vmax.f32 %v7559, 0.0
    %v9141 = vmax.f32 %v7560, 0.0
    %v9142 = vmax.f32 %v7561, 0.0
    %v9143 = vmax.f32 %v7562, 0.0
    %v9144 = vmax.f32 %v7563, 0.0
    %v9145 = vmax.f32 %v7564, 0.0
    %v9146 = vmax.f32 %v7565, 0.0
    %v9147 = vmax.f32 %v7566, 0.0
    %v9148 = vmax.f32 %v7567, 0.0
    %v9149 = vmax.f32 %v7568, 0.0
    %v9150 = vmax.f32 %v7569, 0.0
    %v9151 = vmax.f32 %v7570, 0.0
    %v9152 = vmax.f32 %v7571, 0.0
    %v9153 = vmax.f32 %v7572, 0.0
    %v9154 = vmax.f32 %v7573, 0.0
    %v9155 = vmax.f32 %v7574, 0.0
    %v9156 = vmax.f32 %v7575, 0.0
    %v9157 = vmax.f32 %v7576, 0.0
    %v9158 = vmax.f32 %v7577, 0.0
    %v9159 = vmax.f32 %v7578, 0.0
    %v9160 = vmax.f32 %v7579, 0.0
    %v9161 = vmax.f32 %v7580, 0.0
    %v9162 = vmax.f32 %v7581, 0.0
    %v9163 = vmax.f32 %v7582, 0.0
    %v9164 = vmax.f32 %v7583, 0.0
    %v9165 = vmax.f32 %v7584, 0.0
    %v9166 = vmax.f32 %v7585, 0.0
    %v9167 = vmax.f32 %v7586, 0.0
    %v9168 = vmax.f32 %v7587, 0.0
    %v9169 = vmax.f32 %v7588, 0.0
    %v9170 = vmax.f32 %v7589, 0.0
    %v9171 = vmax.f32 %v7590, 0.0
    %v9172 = vmax.f32 %v7591, 0.0
    %v9173 = vmax.f32 %v7592, 0.0
    %v9174 = vmax.f32 %v7593, 0.0
    %v9175 = vmax.f32 %v7594, 0.0
    %v9176 = vmax.f32 %v7595, 0.0
    %v9177 = vmax.f32 %v7596, 0.0
    %v9178 = vmax.f32 %v7597, 0.0
    %v9179 = vmax.f32 %v7598, 0.0
    %v9180 = vmax.f32 %v7599, 0.0
    %v9181 = vmax.f32 %v7600, 0.0
    %v9182 = vmax.f32 %v7601, 0.0
    %v9183 = vmax.f32 %v7602, 0.0
    %v9184 = vmax.f32 %v7603, 0.0
    %v9185 = vmax.f32 %v7604, 0.0
    %v9186 = vmax.f32 %v7605, 0.0
    %v9187 = vmax.f32 %v7606, 0.0
    %v9188 = vmax.f32 %v7607, 0.0
    %v9189 = vmax.f32 %v7608, 0.0
    %v9190 = vmax.f32 %v7609, 0.0
    %v9191 = vmax.f32 %v7610, 0.0
    %v9192 = vmax.f32 %v7611, 0.0
    %v9193 = vmax.f32 %v7612, 0.0
    %v9194 = vmax.f32 %v7613, 0.0
    %v9195 = vmax.f32 %v7614, 0.0
    %v9196 = vmax.f32 %v7615, 0.0
    %v9197 = vmax.f32 %v7616, 0.0
    %v9198 = vmax.f32 %v7617, 0.0
    %v9199 = vmax.f32 %v7618, 0.0
    %v9200 = vmax.f32 %v7619, 0.0
    %v9201 = vmax.f32 %v7620, 0.0
    %v9202 = vmax.f32 %v7621, 0.0
    %v9203 = vmax.f32 %v7622, 0.0
    %v9204 = vmax.f32 %v7623, 0.0
    %v9205 = vmax.f32 %v7624, 0.0
    %v9206 = vmax.f32 %v7625, 0.0
    %v9207 = vmax.f32 %v7626, 0.0
    %v9208 = vmax.f32 %v7627, 0.0
    %v9209 = vmax.f32 %v7628, 0.0
    %v9210 = vmax.f32 %v7629, 0.0
    %v9211 = vmax.f32 %v7630, 0.0
    %v9212 = vmax.f32 %v7631, 0.0
    %v9213 = vmax.f32 %v7632, 0.0
    %v9214 = vmax.f32 %v7633, 0.0
    %v9215 = vmax.f32 %v7634, 0.0
    %v9216 = vmax.f32 %v7635, 0.0
    %v9217 = vmax.f32 %v7636, 0.0
    %v9218 = vmax.f32 %v7637, 0.0
    %v9219 = vmax.f32 %v7638, 0.0
    %v9220 = vmax.f32 %v7639, 0.0
    %v9221 = vmax.f32 %v7640, 0.0
    %v9222 = vmax.f32 %v7641, 0.0
    %v9223 = vmax.f32 %v7642, 0.0
    %v9224 = vmax.f32 %v7643, 0.0
    %v9225 = vmax.f32 %v7644, 0.0
    %v9226 = vmax.f32 %v7645, 0.0
    %v9227 = vmax.f32 %v7646, 0.0
    %v9228 = vmax.f32 %v7647, 0.0
    %v9229 = vmax.f32 %v7648, 0.0
    %v9230 = vmax.f32 %v7649, 0.0
    %v9231 = vmax.f32 %v7650, 0.0
    %v9232 = vmax.f32 %v7651, 0.0
    %v9233 = vmax.f32 %v7652, 0.0
    %v9234 = vmax.f32 %v7653, 0.0
    %v9235 = vmax.f32 %v7654, 0.0
    %v9236 = vmax.f32 %v7655, 0.0
    %v9237 = vmax.f32 %v7656, 0.0
    %v9238 = vmax.f32 %v7657, 0.0
    %v9239 = vmax.f32 %v7658, 0.0
    %v9240 = vmax.f32 %v7659, 0.0
    %v9241 = vmax.f32 %v7660, 0.0
    %v9242 = vmax.f32 %v7661, 0.0
    %v9243 = vmax.f32 %v7662, 0.0
    %v9244 = vmax.f32 %v7663, 0.0
    %v9245 = vmax.f32 %v7664, 0.0
    %v9246 = vmax.f32 %v7665, 0.0
    %v9247 = vmax.f32 %v7666, 0.0
    %v9248 = vmax.f32 %v7667, 0.0
    %v9249 = vmax.f32 %v7668, 0.0
    %v9250 = vmax.f32 %v7669, 0.0
    %v9251 = vmax.f32 %v7670, 0.0
    %v9252 = vsel %vm8067, %v8856, 0.0
    %v9253 = vsel %vm8067, %v8860, 0.0
    %v9254 = vadd.f32 %v9252, %v9253
    %v9255 = vsel %vm8067, %v8864, 0.0
    %v9256 = vadd.f32 %v9254, %v9255
    %v9257 = vsel %vm8067, %v8868, 0.0
    %v9258 = vadd.f32 %v9256, %v9257
    %v9259 = vsel %vm8067, %v8872, 0.0
    %v9260 = vadd.f32 %v9258, %v9259
    %v9261 = vsel %vm8067, %v8876, 0.0
    %v9262 = vadd.f32 %v9260, %v9261
    %v9263 = vsel %vm8067, %v8880, 0.0
    %v9264 = vadd.f32 %v9262, %v9263
    %v9265 = vsel %vm8067, %v8884, 0.0
    %v9266 = vadd.f32 %v9264, %v9265
    %v9267 = vsel %vm8067, %v8888, 0.0
    %v9268 = vadd.f32 %v9266, %v9267
    %v9269 = vsel %vm8067, %v8892, 0.0
    %v9270 = vadd.f32 %v9268, %v9269
    %v9271 = vsel %vm8067, %v8896, 0.0
    %v9272 = vadd.f32 %v9270, %v9271
    %v9273 = vsel %vm8067, %v8900, 0.0
    %v9274 = vadd.f32 %v9272, %v9273
    %v9275 = vsel %vm8067, %v8904, 0.0
    %v9276 = vadd.f32 %v9274, %v9275
    %v9277 = vsel %vm8067, %v8908, 0.0
    %v9278 = vadd.f32 %v9276, %v9277
    %v9279 = vsel %vm8067, %v8912, 0.0
    %v9280 = vadd.f32 %v9278, %v9279
    %v9281 = vsel %vm8067, %v8916, 0.0
    %v9282 = vadd.f32 %v9280, %v9281
    %v9283 = vsel %vm8067, %v8920, 0.0
    %v9284 = vadd.f32 %v9282, %v9283
    %v9285 = vsel %vm8067, %v8924, 0.0
    %v9286 = vadd.f32 %v9284, %v9285
    %v9287 = vsel %vm8067, %v8928, 0.0
    %v9288 = vadd.f32 %v9286, %v9287
    %v9289 = vsel %vm8067, %v8932, 0.0
    %v9290 = vadd.f32 %v9288, %v9289
    %v9291 = vsel %vm8067, %v8936, 0.0
    %v9292 = vadd.f32 %v9290, %v9291
    %v9293 = vsel %vm8067, %v8940, 0.0
    %v9294 = vadd.f32 %v9292, %v9293
    %v9295 = vsel %vm8067, %v8944, 0.0
    %v9296 = vadd.f32 %v9294, %v9295
    %v9297 = vsel %vm8067, %v8948, 0.0
    %v9298 = vadd.f32 %v9296, %v9297
    %v9299 = vsel %vm8067, %v8952, 0.0
    %v9300 = vadd.f32 %v9298, %v9299
    %v9301 = vsel %vm8067, %v8956, 0.0
    %v9302 = vadd.f32 %v9300, %v9301
    %v9303 = vsel %vm8067, %v8960, 0.0
    %v9304 = vadd.f32 %v9302, %v9303
    %v9305 = vsel %vm8067, %v8964, 0.0
    %v9306 = vadd.f32 %v9304, %v9305
    %v9307 = vsel %vm8067, %v8968, 0.0
    %v9308 = vadd.f32 %v9306, %v9307
    %v9309 = vsel %vm8067, %v8972, 0.0
    %v9310 = vadd.f32 %v9308, %v9309
    %v9311 = vsel %vm8067, %v8976, 0.0
    %v9312 = vadd.f32 %v9310, %v9311
    %v9313 = vsel %vm8067, %v8980, 0.0
    %v9314 = vadd.f32 %v9312, %v9313
    %v9315 = vsel %vm8067, %v8984, 0.0
    %v9316 = vadd.f32 %v9314, %v9315
    %v9317 = vsel %vm8067, %v8988, 0.0
    %v9318 = vadd.f32 %v9316, %v9317
    %v9319 = vsel %vm8067, %v8992, 0.0
    %v9320 = vadd.f32 %v9318, %v9319
    %v9321 = vsel %vm8067, %v8996, 0.0
    %v9322 = vadd.f32 %v9320, %v9321
    %v9323 = vsel %vm8067, %v9000, 0.0
    %v9324 = vadd.f32 %v9322, %v9323
    %v9325 = vsel %vm8067, %v9004, 0.0
    %v9326 = vadd.f32 %v9324, %v9325
    %v9327 = vsel %vm8067, %v9008, 0.0
    %v9328 = vadd.f32 %v9326, %v9327
    %v9329 = vsel %vm8067, %v9012, 0.0
    %v9330 = vadd.f32 %v9328, %v9329
    %v9331 = vsel %vm8067, %v9016, 0.0
    %v9332 = vadd.f32 %v9330, %v9331
    %v9333 = vsel %vm8067, %v9020, 0.0
    %v9334 = vadd.f32 %v9332, %v9333
    %v9335 = vsel %vm8067, %v9024, 0.0
    %v9336 = vadd.f32 %v9334, %v9335
    %v9337 = vsel %vm8067, %v9028, 0.0
    %v9338 = vadd.f32 %v9336, %v9337
    %v9339 = vsel %vm8067, %v9032, 0.0
    %v9340 = vadd.f32 %v9338, %v9339
    %v9341 = vsel %vm8067, %v9036, 0.0
    %v9342 = vadd.f32 %v9340, %v9341
    %v9343 = vsel %vm8067, %v9040, 0.0
    %v9344 = vadd.f32 %v9342, %v9343
    %v9345 = vsel %vm8067, %v9044, 0.0
    %v9346 = vadd.f32 %v9344, %v9345
    %v9347 = vsel %vm8067, %v9048, 0.0
    %v9348 = vadd.f32 %v9346, %v9347
    %v9349 = vsel %vm8067, %v9052, 0.0
    %v9350 = vadd.f32 %v9348, %v9349
    %v9351 = vsel %vm8067, %v9056, 0.0
    %v9352 = vadd.f32 %v9350, %v9351
    %v9353 = vsel %vm8067, %v9060, 0.0
    %v9354 = vadd.f32 %v9352, %v9353
    %v9355 = vsel %vm8067, %v9064, 0.0
    %v9356 = vadd.f32 %v9354, %v9355
    %v9357 = vsel %vm8067, %v9068, 0.0
    %v9358 = vadd.f32 %v9356, %v9357
    %v9359 = vsel %vm8067, %v9072, 0.0
    %v9360 = vadd.f32 %v9358, %v9359
    %v9361 = vsel %vm8067, %v9076, 0.0
    %v9362 = vadd.f32 %v9360, %v9361
    %v9363 = vsel %vm8067, %v9080, 0.0
    %v9364 = vadd.f32 %v9362, %v9363
    %v9365 = vsel %vm8067, %v9084, 0.0
    %v9366 = vadd.f32 %v9364, %v9365
    %v9367 = vsel %vm8067, %v9088, 0.0
    %v9368 = vadd.f32 %v9366, %v9367
    %v9369 = vsel %vm8067, %v9092, 0.0
    %v9370 = vadd.f32 %v9368, %v9369
    %v9371 = vsel %vm8067, %v9096, 0.0
    %v9372 = vadd.f32 %v9370, %v9371
    %v9373 = vsel %vm8067, %v9100, 0.0
    %v9374 = vadd.f32 %v9372, %v9373
    %v9375 = vsel %vm8067, %v9104, 0.0
    %v9376 = vadd.f32 %v9374, %v9375
    %v9377 = vsel %vm8067, %v9108, 0.0
    %v9378 = vadd.f32 %v9376, %v9377
    %v9379 = vsel %vm8067, %v9112, 0.0
    %v9380 = vadd.f32 %v9378, %v9379
    %v9381 = vsel %vm8067, %v9116, 0.0
    %v9382 = vadd.f32 %v9380, %v9381
    %v9383 = vsel %vm8067, %v9120, 0.0
    %v9384 = vadd.f32 %v9382, %v9383
    %v9385 = vsel %vm8067, %v9124, 0.0
    %v9386 = vadd.f32 %v9384, %v9385
    %v9387 = vsel %vm8067, %v9128, 0.0
    %v9388 = vadd.f32 %v9386, %v9387
    %v9389 = vsel %vm8067, %v9132, 0.0
    %v9390 = vadd.f32 %v9388, %v9389
    %v9391 = vsel %vm8067, %v9136, 0.0
    %v9392 = vadd.f32 %v9390, %v9391
    %v9393 = vsel %vm8067, %v9140, 0.0
    %v9394 = vadd.f32 %v9392, %v9393
    %v9395 = vsel %vm8067, %v9144, 0.0
    %v9396 = vadd.f32 %v9394, %v9395
    %v9397 = vsel %vm8067, %v9148, 0.0
    %v9398 = vadd.f32 %v9396, %v9397
    %v9399 = vsel %vm8067, %v9152, 0.0
    %v9400 = vadd.f32 %v9398, %v9399
    %v9401 = vsel %vm8067, %v9156, 0.0
    %v9402 = vadd.f32 %v9400, %v9401
    %v9403 = vsel %vm8067, %v9160, 0.0
    %v9404 = vadd.f32 %v9402, %v9403
    %v9405 = vsel %vm8067, %v9164, 0.0
    %v9406 = vadd.f32 %v9404, %v9405
    %v9407 = vsel %vm8067, %v9168, 0.0
    %v9408 = vadd.f32 %v9406, %v9407
    %v9409 = vsel %vm8067, %v9172, 0.0
    %v9410 = vadd.f32 %v9408, %v9409
    %v9411 = vsel %vm8067, %v9176, 0.0
    %v9412 = vadd.f32 %v9410, %v9411
    %v9413 = vsel %vm8067, %v9180, 0.0
    %v9414 = vadd.f32 %v9412, %v9413
    %v9415 = vsel %vm8067, %v9184, 0.0
    %v9416 = vadd.f32 %v9414, %v9415
    %v9417 = vsel %vm8067, %v9188, 0.0
    %v9418 = vadd.f32 %v9416, %v9417
    %v9419 = vsel %vm8067, %v9192, 0.0
    %v9420 = vadd.f32 %v9418, %v9419
    %v9421 = vsel %vm8067, %v9196, 0.0
    %v9422 = vadd.f32 %v9420, %v9421
    %v9423 = vsel %vm8067, %v9200, 0.0
    %v9424 = vadd.f32 %v9422, %v9423
    %v9425 = vsel %vm8067, %v9204, 0.0
    %v9426 = vadd.f32 %v9424, %v9425
    %v9427 = vsel %vm8067, %v9208, 0.0
    %v9428 = vadd.f32 %v9426, %v9427
    %v9429 = vsel %vm8067, %v9212, 0.0
    %v9430 = vadd.f32 %v9428, %v9429
    %v9431 = vsel %vm8067, %v9216, 0.0
    %v9432 = vadd.f32 %v9430, %v9431
    %v9433 = vsel %vm8067, %v9220, 0.0
    %v9434 = vadd.f32 %v9432, %v9433
    %v9435 = vsel %vm8067, %v9224, 0.0
    %v9436 = vadd.f32 %v9434, %v9435
    %v9437 = vsel %vm8067, %v9228, 0.0
    %v9438 = vadd.f32 %v9436, %v9437
    %v9439 = vsel %vm8067, %v9232, 0.0
    %v9440 = vadd.f32 %v9438, %v9439
    %v9441 = vsel %vm8067, %v9236, 0.0
    %v9442 = vadd.f32 %v9440, %v9441
    %v9443 = vsel %vm8067, %v9240, 0.0
    %v9444 = vadd.f32 %v9442, %v9443
    %v9445 = vsel %vm8067, %v9244, 0.0
    %v9446 = vadd.f32 %v9444, %v9445
    %v9447 = vsel %vm8067, %v9248, 0.0
    %v9448 = vadd.f32 %v9446, %v9447
    %v9449 = vsel %vm8067, %v8857, 0.0
    %v9450 = vsel %vm8067, %v8861, 0.0
    %v9451 = vadd.f32 %v9449, %v9450
    %v9452 = vsel %vm8067, %v8865, 0.0
    %v9453 = vadd.f32 %v9451, %v9452
    %v9454 = vsel %vm8067, %v8869, 0.0
    %v9455 = vadd.f32 %v9453, %v9454
    %v9456 = vsel %vm8067, %v8873, 0.0
    %v9457 = vadd.f32 %v9455, %v9456
    %v9458 = vsel %vm8067, %v8877, 0.0
    %v9459 = vadd.f32 %v9457, %v9458
    %v9460 = vsel %vm8067, %v8881, 0.0
    %v9461 = vadd.f32 %v9459, %v9460
    %v9462 = vsel %vm8067, %v8885, 0.0
    %v9463 = vadd.f32 %v9461, %v9462
    %v9464 = vsel %vm8067, %v8889, 0.0
    %v9465 = vadd.f32 %v9463, %v9464
    %v9466 = vsel %vm8067, %v8893, 0.0
    %v9467 = vadd.f32 %v9465, %v9466
    %v9468 = vsel %vm8067, %v8897, 0.0
    %v9469 = vadd.f32 %v9467, %v9468
    %v9470 = vsel %vm8067, %v8901, 0.0
    %v9471 = vadd.f32 %v9469, %v9470
    %v9472 = vsel %vm8067, %v8905, 0.0
    %v9473 = vadd.f32 %v9471, %v9472
    %v9474 = vsel %vm8067, %v8909, 0.0
    %v9475 = vadd.f32 %v9473, %v9474
    %v9476 = vsel %vm8067, %v8913, 0.0
    %v9477 = vadd.f32 %v9475, %v9476
    %v9478 = vsel %vm8067, %v8917, 0.0
    %v9479 = vadd.f32 %v9477, %v9478
    %v9480 = vsel %vm8067, %v8921, 0.0
    %v9481 = vadd.f32 %v9479, %v9480
    %v9482 = vsel %vm8067, %v8925, 0.0
    %v9483 = vadd.f32 %v9481, %v9482
    %v9484 = vsel %vm8067, %v8929, 0.0
    %v9485 = vadd.f32 %v9483, %v9484
    %v9486 = vsel %vm8067, %v8933, 0.0
    %v9487 = vadd.f32 %v9485, %v9486
    %v9488 = vsel %vm8067, %v8937, 0.0
    %v9489 = vadd.f32 %v9487, %v9488
    %v9490 = vsel %vm8067, %v8941, 0.0
    %v9491 = vadd.f32 %v9489, %v9490
    %v9492 = vsel %vm8067, %v8945, 0.0
    %v9493 = vadd.f32 %v9491, %v9492
    %v9494 = vsel %vm8067, %v8949, 0.0
    %v9495 = vadd.f32 %v9493, %v9494
    %v9496 = vsel %vm8067, %v8953, 0.0
    %v9497 = vadd.f32 %v9495, %v9496
    %v9498 = vsel %vm8067, %v8957, 0.0
    %v9499 = vadd.f32 %v9497, %v9498
    %v9500 = vsel %vm8067, %v8961, 0.0
    %v9501 = vadd.f32 %v9499, %v9500
    %v9502 = vsel %vm8067, %v8965, 0.0
    %v9503 = vadd.f32 %v9501, %v9502
    %v9504 = vsel %vm8067, %v8969, 0.0
    %v9505 = vadd.f32 %v9503, %v9504
    %v9506 = vsel %vm8067, %v8973, 0.0
    %v9507 = vadd.f32 %v9505, %v9506
    %v9508 = vsel %vm8067, %v8977, 0.0
    %v9509 = vadd.f32 %v9507, %v9508
    %v9510 = vsel %vm8067, %v8981, 0.0
    %v9511 = vadd.f32 %v9509, %v9510
    %v9512 = vsel %vm8067, %v8985, 0.0
    %v9513 = vadd.f32 %v9511, %v9512
    %v9514 = vsel %vm8067, %v8989, 0.0
    %v9515 = vadd.f32 %v9513, %v9514
    %v9516 = vsel %vm8067, %v8993, 0.0
    %v9517 = vadd.f32 %v9515, %v9516
    %v9518 = vsel %vm8067, %v8997, 0.0
    %v9519 = vadd.f32 %v9517, %v9518
    %v9520 = vsel %vm8067, %v9001, 0.0
    %v9521 = vadd.f32 %v9519, %v9520
    %v9522 = vsel %vm8067, %v9005, 0.0
    %v9523 = vadd.f32 %v9521, %v9522
    %v9524 = vsel %vm8067, %v9009, 0.0
    %v9525 = vadd.f32 %v9523, %v9524
    %v9526 = vsel %vm8067, %v9013, 0.0
    %v9527 = vadd.f32 %v9525, %v9526
    %v9528 = vsel %vm8067, %v9017, 0.0
    %v9529 = vadd.f32 %v9527, %v9528
    %v9530 = vsel %vm8067, %v9021, 0.0
    %v9531 = vadd.f32 %v9529, %v9530
    %v9532 = vsel %vm8067, %v9025, 0.0
    %v9533 = vadd.f32 %v9531, %v9532
    %v9534 = vsel %vm8067, %v9029, 0.0
    %v9535 = vadd.f32 %v9533, %v9534
    %v9536 = vsel %vm8067, %v9033, 0.0
    %v9537 = vadd.f32 %v9535, %v9536
    %v9538 = vsel %vm8067, %v9037, 0.0
    %v9539 = vadd.f32 %v9537, %v9538
    %v9540 = vsel %vm8067, %v9041, 0.0
    %v9541 = vadd.f32 %v9539, %v9540
    %v9542 = vsel %vm8067, %v9045, 0.0
    %v9543 = vadd.f32 %v9541, %v9542
    %v9544 = vsel %vm8067, %v9049, 0.0
    %v9545 = vadd.f32 %v9543, %v9544
    %v9546 = vsel %vm8067, %v9053, 0.0
    %v9547 = vadd.f32 %v9545, %v9546
    %v9548 = vsel %vm8067, %v9057, 0.0
    %v9549 = vadd.f32 %v9547, %v9548
    %v9550 = vsel %vm8067, %v9061, 0.0
    %v9551 = vadd.f32 %v9549, %v9550
    %v9552 = vsel %vm8067, %v9065, 0.0
    %v9553 = vadd.f32 %v9551, %v9552
    %v9554 = vsel %vm8067, %v9069, 0.0
    %v9555 = vadd.f32 %v9553, %v9554
    %v9556 = vsel %vm8067, %v9073, 0.0
    %v9557 = vadd.f32 %v9555, %v9556
    %v9558 = vsel %vm8067, %v9077, 0.0
    %v9559 = vadd.f32 %v9557, %v9558
    %v9560 = vsel %vm8067, %v9081, 0.0
    %v9561 = vadd.f32 %v9559, %v9560
    %v9562 = vsel %vm8067, %v9085, 0.0
    %v9563 = vadd.f32 %v9561, %v9562
    %v9564 = vsel %vm8067, %v9089, 0.0
    %v9565 = vadd.f32 %v9563, %v9564
    %v9566 = vsel %vm8067, %v9093, 0.0
    %v9567 = vadd.f32 %v9565, %v9566
    %v9568 = vsel %vm8067, %v9097, 0.0
    %v9569 = vadd.f32 %v9567, %v9568
    %v9570 = vsel %vm8067, %v9101, 0.0
    %v9571 = vadd.f32 %v9569, %v9570
    %v9572 = vsel %vm8067, %v9105, 0.0
    %v9573 = vadd.f32 %v9571, %v9572
    %v9574 = vsel %vm8067, %v9109, 0.0
    %v9575 = vadd.f32 %v9573, %v9574
    %v9576 = vsel %vm8067, %v9113, 0.0
    %v9577 = vadd.f32 %v9575, %v9576
    %v9578 = vsel %vm8067, %v9117, 0.0
    %v9579 = vadd.f32 %v9577, %v9578
    %v9580 = vsel %vm8067, %v9121, 0.0
    %v9581 = vadd.f32 %v9579, %v9580
    %v9582 = vsel %vm8067, %v9125, 0.0
    %v9583 = vadd.f32 %v9581, %v9582
    %v9584 = vsel %vm8067, %v9129, 0.0
    %v9585 = vadd.f32 %v9583, %v9584
    %v9586 = vsel %vm8067, %v9133, 0.0
    %v9587 = vadd.f32 %v9585, %v9586
    %v9588 = vsel %vm8067, %v9137, 0.0
    %v9589 = vadd.f32 %v9587, %v9588
    %v9590 = vsel %vm8067, %v9141, 0.0
    %v9591 = vadd.f32 %v9589, %v9590
    %v9592 = vsel %vm8067, %v9145, 0.0
    %v9593 = vadd.f32 %v9591, %v9592
    %v9594 = vsel %vm8067, %v9149, 0.0
    %v9595 = vadd.f32 %v9593, %v9594
    %v9596 = vsel %vm8067, %v9153, 0.0
    %v9597 = vadd.f32 %v9595, %v9596
    %v9598 = vsel %vm8067, %v9157, 0.0
    %v9599 = vadd.f32 %v9597, %v9598
    %v9600 = vsel %vm8067, %v9161, 0.0
    %v9601 = vadd.f32 %v9599, %v9600
    %v9602 = vsel %vm8067, %v9165, 0.0
    %v9603 = vadd.f32 %v9601, %v9602
    %v9604 = vsel %vm8067, %v9169, 0.0
    %v9605 = vadd.f32 %v9603, %v9604
    %v9606 = vsel %vm8067, %v9173, 0.0
    %v9607 = vadd.f32 %v9605, %v9606
    %v9608 = vsel %vm8067, %v9177, 0.0
    %v9609 = vadd.f32 %v9607, %v9608
    %v9610 = vsel %vm8067, %v9181, 0.0
    %v9611 = vadd.f32 %v9609, %v9610
    %v9612 = vsel %vm8067, %v9185, 0.0
    %v9613 = vadd.f32 %v9611, %v9612
    %v9614 = vsel %vm8067, %v9189, 0.0
    %v9615 = vadd.f32 %v9613, %v9614
    %v9616 = vsel %vm8067, %v9193, 0.0
    %v9617 = vadd.f32 %v9615, %v9616
    %v9618 = vsel %vm8067, %v9197, 0.0
    %v9619 = vadd.f32 %v9617, %v9618
    %v9620 = vsel %vm8067, %v9201, 0.0
    %v9621 = vadd.f32 %v9619, %v9620
    %v9622 = vsel %vm8067, %v9205, 0.0
    %v9623 = vadd.f32 %v9621, %v9622
    %v9624 = vsel %vm8067, %v9209, 0.0
    %v9625 = vadd.f32 %v9623, %v9624
    %v9626 = vsel %vm8067, %v9213, 0.0
    %v9627 = vadd.f32 %v9625, %v9626
    %v9628 = vsel %vm8067, %v9217, 0.0
    %v9629 = vadd.f32 %v9627, %v9628
    %v9630 = vsel %vm8067, %v9221, 0.0
    %v9631 = vadd.f32 %v9629, %v9630
    %v9632 = vsel %vm8067, %v9225, 0.0
    %v9633 = vadd.f32 %v9631, %v9632
    %v9634 = vsel %vm8067, %v9229, 0.0
    %v9635 = vadd.f32 %v9633, %v9634
    %v9636 = vsel %vm8067, %v9233, 0.0
    %v9637 = vadd.f32 %v9635, %v9636
    %v9638 = vsel %vm8067, %v9237, 0.0
    %v9639 = vadd.f32 %v9637, %v9638
    %v9640 = vsel %vm8067, %v9241, 0.0
    %v9641 = vadd.f32 %v9639, %v9640
    %v9642 = vsel %vm8067, %v9245, 0.0
    %v9643 = vadd.f32 %v9641, %v9642
    %v9644 = vsel %vm8067, %v9249, 0.0
    %v9645 = vadd.f32 %v9643, %v9644
    %v9646 = vsel %vm8067, %v8858, 0.0
    %v9647 = vsel %vm8067, %v8862, 0.0
    %v9648 = vadd.f32 %v9646, %v9647
    %v9649 = vsel %vm8067, %v8866, 0.0
    %v9650 = vadd.f32 %v9648, %v9649
    %v9651 = vsel %vm8067, %v8870, 0.0
    %v9652 = vadd.f32 %v9650, %v9651
    %v9653 = vsel %vm8067, %v8874, 0.0
    %v9654 = vadd.f32 %v9652, %v9653
    %v9655 = vsel %vm8067, %v8878, 0.0
    %v9656 = vadd.f32 %v9654, %v9655
    %v9657 = vsel %vm8067, %v8882, 0.0
    %v9658 = vadd.f32 %v9656, %v9657
    %v9659 = vsel %vm8067, %v8886, 0.0
    %v9660 = vadd.f32 %v9658, %v9659
    %v9661 = vsel %vm8067, %v8890, 0.0
    %v9662 = vadd.f32 %v9660, %v9661
    %v9663 = vsel %vm8067, %v8894, 0.0
    %v9664 = vadd.f32 %v9662, %v9663
    %v9665 = vsel %vm8067, %v8898, 0.0
    %v9666 = vadd.f32 %v9664, %v9665
    %v9667 = vsel %vm8067, %v8902, 0.0
    %v9668 = vadd.f32 %v9666, %v9667
    %v9669 = vsel %vm8067, %v8906, 0.0
    %v9670 = vadd.f32 %v9668, %v9669
    %v9671 = vsel %vm8067, %v8910, 0.0
    %v9672 = vadd.f32 %v9670, %v9671
    %v9673 = vsel %vm8067, %v8914, 0.0
    %v9674 = vadd.f32 %v9672, %v9673
    %v9675 = vsel %vm8067, %v8918, 0.0
    %v9676 = vadd.f32 %v9674, %v9675
    %v9677 = vsel %vm8067, %v8922, 0.0
    %v9678 = vadd.f32 %v9676, %v9677
    %v9679 = vsel %vm8067, %v8926, 0.0
    %v9680 = vadd.f32 %v9678, %v9679
    %v9681 = vsel %vm8067, %v8930, 0.0
    %v9682 = vadd.f32 %v9680, %v9681
    %v9683 = vsel %vm8067, %v8934, 0.0
    %v9684 = vadd.f32 %v9682, %v9683
    %v9685 = vsel %vm8067, %v8938, 0.0
    %v9686 = vadd.f32 %v9684, %v9685
    %v9687 = vsel %vm8067, %v8942, 0.0
    %v9688 = vadd.f32 %v9686, %v9687
    %v9689 = vsel %vm8067, %v8946, 0.0
    %v9690 = vadd.f32 %v9688, %v9689
    %v9691 = vsel %vm8067, %v8950, 0.0
    %v9692 = vadd.f32 %v9690, %v9691
    %v9693 = vsel %vm8067, %v8954, 0.0
    %v9694 = vadd.f32 %v9692, %v9693
    %v9695 = vsel %vm8067, %v8958, 0.0
    %v9696 = vadd.f32 %v9694, %v9695
    %v9697 = vsel %vm8067, %v8962, 0.0
    %v9698 = vadd.f32 %v9696, %v9697
    %v9699 = vsel %vm8067, %v8966, 0.0
    %v9700 = vadd.f32 %v9698, %v9699
    %v9701 = vsel %vm8067, %v8970, 0.0
    %v9702 = vadd.f32 %v9700, %v9701
    %v9703 = vsel %vm8067, %v8974, 0.0
    %v9704 = vadd.f32 %v9702, %v9703
    %v9705 = vsel %vm8067, %v8978, 0.0
    %v9706 = vadd.f32 %v9704, %v9705
    %v9707 = vsel %vm8067, %v8982, 0.0
    %v9708 = vadd.f32 %v9706, %v9707
    %v9709 = vsel %vm8067, %v8986, 0.0
    %v9710 = vadd.f32 %v9708, %v9709
    %v9711 = vsel %vm8067, %v8990, 0.0
    %v9712 = vadd.f32 %v9710, %v9711
    %v9713 = vsel %vm8067, %v8994, 0.0
    %v9714 = vadd.f32 %v9712, %v9713
    %v9715 = vsel %vm8067, %v8998, 0.0
    %v9716 = vadd.f32 %v9714, %v9715
    %v9717 = vsel %vm8067, %v9002, 0.0
    %v9718 = vadd.f32 %v9716, %v9717
    %v9719 = vsel %vm8067, %v9006, 0.0
    %v9720 = vadd.f32 %v9718, %v9719
    %v9721 = vsel %vm8067, %v9010, 0.0
    %v9722 = vadd.f32 %v9720, %v9721
    %v9723 = vsel %vm8067, %v9014, 0.0
    %v9724 = vadd.f32 %v9722, %v9723
    %v9725 = vsel %vm8067, %v9018, 0.0
    %v9726 = vadd.f32 %v9724, %v9725
    %v9727 = vsel %vm8067, %v9022, 0.0
    %v9728 = vadd.f32 %v9726, %v9727
    %v9729 = vsel %vm8067, %v9026, 0.0
    %v9730 = vadd.f32 %v9728, %v9729
    %v9731 = vsel %vm8067, %v9030, 0.0
    %v9732 = vadd.f32 %v9730, %v9731
    %v9733 = vsel %vm8067, %v9034, 0.0
    %v9734 = vadd.f32 %v9732, %v9733
    %v9735 = vsel %vm8067, %v9038, 0.0
    %v9736 = vadd.f32 %v9734, %v9735
    %v9737 = vsel %vm8067, %v9042, 0.0
    %v9738 = vadd.f32 %v9736, %v9737
    %v9739 = vsel %vm8067, %v9046, 0.0
    %v9740 = vadd.f32 %v9738, %v9739
    %v9741 = vsel %vm8067, %v9050, 0.0
    %v9742 = vadd.f32 %v9740, %v9741
    %v9743 = vsel %vm8067, %v9054, 0.0
    %v9744 = vadd.f32 %v9742, %v9743
    %v9745 = vsel %vm8067, %v9058, 0.0
    %v9746 = vadd.f32 %v9744, %v9745
    %v9747 = vsel %vm8067, %v9062, 0.0
    %v9748 = vadd.f32 %v9746, %v9747
    %v9749 = vsel %vm8067, %v9066, 0.0
    %v9750 = vadd.f32 %v9748, %v9749
    %v9751 = vsel %vm8067, %v9070, 0.0
    %v9752 = vadd.f32 %v9750, %v9751
    %v9753 = vsel %vm8067, %v9074, 0.0
    %v9754 = vadd.f32 %v9752, %v9753
    %v9755 = vsel %vm8067, %v9078, 0.0
    %v9756 = vadd.f32 %v9754, %v9755
    %v9757 = vsel %vm8067, %v9082, 0.0
    %v9758 = vadd.f32 %v9756, %v9757
    %v9759 = vsel %vm8067, %v9086, 0.0
    %v9760 = vadd.f32 %v9758, %v9759
    %v9761 = vsel %vm8067, %v9090, 0.0
    %v9762 = vadd.f32 %v9760, %v9761
    %v9763 = vsel %vm8067, %v9094, 0.0
    %v9764 = vadd.f32 %v9762, %v9763
    %v9765 = vsel %vm8067, %v9098, 0.0
    %v9766 = vadd.f32 %v9764, %v9765
    %v9767 = vsel %vm8067, %v9102, 0.0
    %v9768 = vadd.f32 %v9766, %v9767
    %v9769 = vsel %vm8067, %v9106, 0.0
    %v9770 = vadd.f32 %v9768, %v9769
    %v9771 = vsel %vm8067, %v9110, 0.0
    %v9772 = vadd.f32 %v9770, %v9771
    %v9773 = vsel %vm8067, %v9114, 0.0
    %v9774 = vadd.f32 %v9772, %v9773
    %v9775 = vsel %vm8067, %v9118, 0.0
    %v9776 = vadd.f32 %v9774, %v9775
    %v9777 = vsel %vm8067, %v9122, 0.0
    %v9778 = vadd.f32 %v9776, %v9777
    %v9779 = vsel %vm8067, %v9126, 0.0
    %v9780 = vadd.f32 %v9778, %v9779
    %v9781 = vsel %vm8067, %v9130, 0.0
    %v9782 = vadd.f32 %v9780, %v9781
    %v9783 = vsel %vm8067, %v9134, 0.0
    %v9784 = vadd.f32 %v9782, %v9783
    %v9785 = vsel %vm8067, %v9138, 0.0
    %v9786 = vadd.f32 %v9784, %v9785
    %v9787 = vsel %vm8067, %v9142, 0.0
    %v9788 = vadd.f32 %v9786, %v9787
    %v9789 = vsel %vm8067, %v9146, 0.0
    %v9790 = vadd.f32 %v9788, %v9789
    %v9791 = vsel %vm8067, %v9150, 0.0
    %v9792 = vadd.f32 %v9790, %v9791
    %v9793 = vsel %vm8067, %v9154, 0.0
    %v9794 = vadd.f32 %v9792, %v9793
    %v9795 = vsel %vm8067, %v9158, 0.0
    %v9796 = vadd.f32 %v9794, %v9795
    %v9797 = vsel %vm8067, %v9162, 0.0
    %v9798 = vadd.f32 %v9796, %v9797
    %v9799 = vsel %vm8067, %v9166, 0.0
    %v9800 = vadd.f32 %v9798, %v9799
    %v9801 = vsel %vm8067, %v9170, 0.0
    %v9802 = vadd.f32 %v9800, %v9801
    %v9803 = vsel %vm8067, %v9174, 0.0
    %v9804 = vadd.f32 %v9802, %v9803
    %v9805 = vsel %vm8067, %v9178, 0.0
    %v9806 = vadd.f32 %v9804, %v9805
    %v9807 = vsel %vm8067, %v9182, 0.0
    %v9808 = vadd.f32 %v9806, %v9807
    %v9809 = vsel %vm8067, %v9186, 0.0
    %v9810 = vadd.f32 %v9808, %v9809
    %v9811 = vsel %vm8067, %v9190, 0.0
    %v9812 = vadd.f32 %v9810, %v9811
    %v9813 = vsel %vm8067, %v9194, 0.0
    %v9814 = vadd.f32 %v9812, %v9813
    %v9815 = vsel %vm8067, %v9198, 0.0
    %v9816 = vadd.f32 %v9814, %v9815
    %v9817 = vsel %vm8067, %v9202, 0.0
    %v9818 = vadd.f32 %v9816, %v9817
    %v9819 = vsel %vm8067, %v9206, 0.0
    %v9820 = vadd.f32 %v9818, %v9819
    %v9821 = vsel %vm8067, %v9210, 0.0
    %v9822 = vadd.f32 %v9820, %v9821
    %v9823 = vsel %vm8067, %v9214, 0.0
    %v9824 = vadd.f32 %v9822, %v9823
    %v9825 = vsel %vm8067, %v9218, 0.0
    %v9826 = vadd.f32 %v9824, %v9825
    %v9827 = vsel %vm8067, %v9222, 0.0
    %v9828 = vadd.f32 %v9826, %v9827
    %v9829 = vsel %vm8067, %v9226, 0.0
    %v9830 = vadd.f32 %v9828, %v9829
    %v9831 = vsel %vm8067, %v9230, 0.0
    %v9832 = vadd.f32 %v9830, %v9831
    %v9833 = vsel %vm8067, %v9234, 0.0
    %v9834 = vadd.f32 %v9832, %v9833
    %v9835 = vsel %vm8067, %v9238, 0.0
    %v9836 = vadd.f32 %v9834, %v9835
    %v9837 = vsel %vm8067, %v9242, 0.0
    %v9838 = vadd.f32 %v9836, %v9837
    %v9839 = vsel %vm8067, %v9246, 0.0
    %v9840 = vadd.f32 %v9838, %v9839
    %v9841 = vsel %vm8067, %v9250, 0.0
    %v9842 = vadd.f32 %v9840, %v9841
    %v9843 = vsel %vm8067, %v8859, 0.0
    %v9844 = vsel %vm8067, %v8863, 0.0
    %v9845 = vadd.f32 %v9843, %v9844
    %v9846 = vsel %vm8067, %v8867, 0.0
    %v9847 = vadd.f32 %v9845, %v9846
    %v9848 = vsel %vm8067, %v8871, 0.0
    %v9849 = vadd.f32 %v9847, %v9848
    %v9850 = vsel %vm8067, %v8875, 0.0
    %v9851 = vadd.f32 %v9849, %v9850
    %v9852 = vsel %vm8067, %v8879, 0.0
    %v9853 = vadd.f32 %v9851, %v9852
    %v9854 = vsel %vm8067, %v8883, 0.0
    %v9855 = vadd.f32 %v9853, %v9854
    %v9856 = vsel %vm8067, %v8887, 0.0
    %v9857 = vadd.f32 %v9855, %v9856
    %v9858 = vsel %vm8067, %v8891, 0.0
    %v9859 = vadd.f32 %v9857, %v9858
    %v9860 = vsel %vm8067, %v8895, 0.0
    %v9861 = vadd.f32 %v9859, %v9860
    %v9862 = vsel %vm8067, %v8899, 0.0
    %v9863 = vadd.f32 %v9861, %v9862
    %v9864 = vsel %vm8067, %v8903, 0.0
    %v9865 = vadd.f32 %v9863, %v9864
    %v9866 = vsel %vm8067, %v8907, 0.0
    %v9867 = vadd.f32 %v9865, %v9866
    %v9868 = vsel %vm8067, %v8911, 0.0
    %v9869 = vadd.f32 %v9867, %v9868
    %v9870 = vsel %vm8067, %v8915, 0.0
    %v9871 = vadd.f32 %v9869, %v9870
    %v9872 = vsel %vm8067, %v8919, 0.0
    %v9873 = vadd.f32 %v9871, %v9872
    %v9874 = vsel %vm8067, %v8923, 0.0
    %v9875 = vadd.f32 %v9873, %v9874
    %v9876 = vsel %vm8067, %v8927, 0.0
    %v9877 = vadd.f32 %v9875, %v9876
    %v9878 = vsel %vm8067, %v8931, 0.0
    %v9879 = vadd.f32 %v9877, %v9878
    %v9880 = vsel %vm8067, %v8935, 0.0
    %v9881 = vadd.f32 %v9879, %v9880
    %v9882 = vsel %vm8067, %v8939, 0.0
    %v9883 = vadd.f32 %v9881, %v9882
    %v9884 = vsel %vm8067, %v8943, 0.0
    %v9885 = vadd.f32 %v9883, %v9884
    %v9886 = vsel %vm8067, %v8947, 0.0
    %v9887 = vadd.f32 %v9885, %v9886
    %v9888 = vsel %vm8067, %v8951, 0.0
    %v9889 = vadd.f32 %v9887, %v9888
    %v9890 = vsel %vm8067, %v8955, 0.0
    %v9891 = vadd.f32 %v9889, %v9890
    %v9892 = vsel %vm8067, %v8959, 0.0
    %v9893 = vadd.f32 %v9891, %v9892
    %v9894 = vsel %vm8067, %v8963, 0.0
    %v9895 = vadd.f32 %v9893, %v9894
    %v9896 = vsel %vm8067, %v8967, 0.0
    %v9897 = vadd.f32 %v9895, %v9896
    %v9898 = vsel %vm8067, %v8971, 0.0
    %v9899 = vadd.f32 %v9897, %v9898
    %v9900 = vsel %vm8067, %v8975, 0.0
    %v9901 = vadd.f32 %v9899, %v9900
    %v9902 = vsel %vm8067, %v8979, 0.0
    %v9903 = vadd.f32 %v9901, %v9902
    %v9904 = vsel %vm8067, %v8983, 0.0
    %v9905 = vadd.f32 %v9903, %v9904
    %v9906 = vsel %vm8067, %v8987, 0.0
    %v9907 = vadd.f32 %v9905, %v9906
    %v9908 = vsel %vm8067, %v8991, 0.0
    %v9909 = vadd.f32 %v9907, %v9908
    %v9910 = vsel %vm8067, %v8995, 0.0
    %v9911 = vadd.f32 %v9909, %v9910
    %v9912 = vsel %vm8067, %v8999, 0.0
    %v9913 = vadd.f32 %v9911, %v9912
    %v9914 = vsel %vm8067, %v9003, 0.0
    %v9915 = vadd.f32 %v9913, %v9914
    %v9916 = vsel %vm8067, %v9007, 0.0
    %v9917 = vadd.f32 %v9915, %v9916
    %v9918 = vsel %vm8067, %v9011, 0.0
    %v9919 = vadd.f32 %v9917, %v9918
    %v9920 = vsel %vm8067, %v9015, 0.0
    %v9921 = vadd.f32 %v9919, %v9920
    %v9922 = vsel %vm8067, %v9019, 0.0
    %v9923 = vadd.f32 %v9921, %v9922
    %v9924 = vsel %vm8067, %v9023, 0.0
    %v9925 = vadd.f32 %v9923, %v9924
    %v9926 = vsel %vm8067, %v9027, 0.0
    %v9927 = vadd.f32 %v9925, %v9926
    %v9928 = vsel %vm8067, %v9031, 0.0
    %v9929 = vadd.f32 %v9927, %v9928
    %v9930 = vsel %vm8067, %v9035, 0.0
    %v9931 = vadd.f32 %v9929, %v9930
    %v9932 = vsel %vm8067, %v9039, 0.0
    %v9933 = vadd.f32 %v9931, %v9932
    %v9934 = vsel %vm8067, %v9043, 0.0
    %v9935 = vadd.f32 %v9933, %v9934
    %v9936 = vsel %vm8067, %v9047, 0.0
    %v9937 = vadd.f32 %v9935, %v9936
    %v9938 = vsel %vm8067, %v9051, 0.0
    %v9939 = vadd.f32 %v9937, %v9938
    %v9940 = vsel %vm8067, %v9055, 0.0
    %v9941 = vadd.f32 %v9939, %v9940
    %v9942 = vsel %vm8067, %v9059, 0.0
    %v9943 = vadd.f32 %v9941, %v9942
    %v9944 = vsel %vm8067, %v9063, 0.0
    %v9945 = vadd.f32 %v9943, %v9944
    %v9946 = vsel %vm8067, %v9067, 0.0
    %v9947 = vadd.f32 %v9945, %v9946
    %v9948 = vsel %vm8067, %v9071, 0.0
    %v9949 = vadd.f32 %v9947, %v9948
    %v9950 = vsel %vm8067, %v9075, 0.0
    %v9951 = vadd.f32 %v9949, %v9950
    %v9952 = vsel %vm8067, %v9079, 0.0
    %v9953 = vadd.f32 %v9951, %v9952
    %v9954 = vsel %vm8067, %v9083, 0.0
    %v9955 = vadd.f32 %v9953, %v9954
    %v9956 = vsel %vm8067, %v9087, 0.0
    %v9957 = vadd.f32 %v9955, %v9956
    %v9958 = vsel %vm8067, %v9091, 0.0
    %v9959 = vadd.f32 %v9957, %v9958
    %v9960 = vsel %vm8067, %v9095, 0.0
    %v9961 = vadd.f32 %v9959, %v9960
    %v9962 = vsel %vm8067, %v9099, 0.0
    %v9963 = vadd.f32 %v9961, %v9962
    %v9964 = vsel %vm8067, %v9103, 0.0
    %v9965 = vadd.f32 %v9963, %v9964
    %v9966 = vsel %vm8067, %v9107, 0.0
    %v9967 = vadd.f32 %v9965, %v9966
    %v9968 = vsel %vm8067, %v9111, 0.0
    %v9969 = vadd.f32 %v9967, %v9968
    %v9970 = vsel %vm8067, %v9115, 0.0
    %v9971 = vadd.f32 %v9969, %v9970
    %v9972 = vsel %vm8067, %v9119, 0.0
    %v9973 = vadd.f32 %v9971, %v9972
    %v9974 = vsel %vm8067, %v9123, 0.0
    %v9975 = vadd.f32 %v9973, %v9974
    %v9976 = vsel %vm8067, %v9127, 0.0
    %v9977 = vadd.f32 %v9975, %v9976
    %v9978 = vsel %vm8067, %v9131, 0.0
    %v9979 = vadd.f32 %v9977, %v9978
    %v9980 = vsel %vm8067, %v9135, 0.0
    %v9981 = vadd.f32 %v9979, %v9980
    %v9982 = vsel %vm8067, %v9139, 0.0
    %v9983 = vadd.f32 %v9981, %v9982
    %v9984 = vsel %vm8067, %v9143, 0.0
    %v9985 = vadd.f32 %v9983, %v9984
    %v9986 = vsel %vm8067, %v9147, 0.0
    %v9987 = vadd.f32 %v9985, %v9986
    %v9988 = vsel %vm8067, %v9151, 0.0
    %v9989 = vadd.f32 %v9987, %v9988
    %v9990 = vsel %vm8067, %v9155, 0.0
    %v9991 = vadd.f32 %v9989, %v9990
    %v9992 = vsel %vm8067, %v9159, 0.0
    %v9993 = vadd.f32 %v9991, %v9992
    %v9994 = vsel %vm8067, %v9163, 0.0
    %v9995 = vadd.f32 %v9993, %v9994
    %v9996 = vsel %vm8067, %v9167, 0.0
    %v9997 = vadd.f32 %v9995, %v9996
    %v9998 = vsel %vm8067, %v9171, 0.0
    %v9999 = vadd.f32 %v9997, %v9998
    %v10000 = vsel %vm8067, %v9175, 0.0
    %v10001 = vadd.f32 %v9999, %v10000
    %v10002 = vsel %vm8067, %v9179, 0.0
    %v10003 = vadd.f32 %v10001, %v10002
    %v10004 = vsel %vm8067, %v9183, 0.0
    %v10005 = vadd.f32 %v10003, %v10004
    %v10006 = vsel %vm8067, %v9187, 0.0
    %v10007 = vadd.f32 %v10005, %v10006
    %v10008 = vsel %vm8067, %v9191, 0.0
    %v10009 = vadd.f32 %v10007, %v10008
    %v10010 = vsel %vm8067, %v9195, 0.0
    %v10011 = vadd.f32 %v10009, %v10010
    %v10012 = vsel %vm8067, %v9199, 0.0
    %v10013 = vadd.f32 %v10011, %v10012
    %v10014 = vsel %vm8067, %v9203, 0.0
    %v10015 = vadd.f32 %v10013, %v10014
    %v10016 = vsel %vm8067, %v9207, 0.0
    %v10017 = vadd.f32 %v10015, %v10016
    %v10018 = vsel %vm8067, %v9211, 0.0
    %v10019 = vadd.f32 %v10017, %v10018
    %v10020 = vsel %vm8067, %v9215, 0.0
    %v10021 = vadd.f32 %v10019, %v10020
    %v10022 = vsel %vm8067, %v9219, 0.0
    %v10023 = vadd.f32 %v10021, %v10022
    %v10024 = vsel %vm8067, %v9223, 0.0
    %v10025 = vadd.f32 %v10023, %v10024
    %v10026 = vsel %vm8067, %v9227, 0.0
    %v10027 = vadd.f32 %v10025, %v10026
    %v10028 = vsel %vm8067, %v9231, 0.0
    %v10029 = vadd.f32 %v10027, %v10028
    %v10030 = vsel %vm8067, %v9235, 0.0
    %v10031 = vadd.f32 %v10029, %v10030
    %v10032 = vsel %vm8067, %v9239, 0.0
    %v10033 = vadd.f32 %v10031, %v10032
    %v10034 = vsel %vm8067, %v9243, 0.0
    %v10035 = vadd.f32 %v10033, %v10034
    %v10036 = vsel %vm8067, %v9247, 0.0
    %v10037 = vadd.f32 %v10035, %v10036
    %v10038 = vsel %vm8067, %v9251, 0.0
    %v10039 = vadd.f32 %v10037, %v10038
    %v10040 = vsub.f32 %v28, %v33
    %v10041 = vsub.f32 %v29, %v34
    %v10042 = vsub.f32 %v30, %v35
    %v10043 = vsub.f32 %v31, %v36
    %v10044 = vsub.f32 %v32, %v37
    %v10045 = vsub.f32 %v33, %v38
    %v10046 = vsub.f32 %v34, %v39
    %v10047 = vsub.f32 %v35, %v40
    %v10048 = vsub.f32 %v36, %v41
    %v10049 = vsub.f32 %v37, %v42
    %v10050 = vsub.f32 %v38, %v43
    %v10051 = vsub.f32 %v39, %v44
    %v10052 = vsub.f32 %v40, %v45
    %v10053 = vsub.f32 %v41, %v46
    %v10054 = vsub.f32 %v42, %v47
    %v10055 = vsub.f32 %v43, %v48
    %v10056 = vsub.f32 %v44, %v49
    %v10057 = vsub.f32 %v45, %v50
    %v10058 = vsub.f32 %v46, %v51
    %v10059 = vsub.f32 %v47, %v52
    %v10060 = vsub.f32 %v48, %v53
    %v10061 = vsub.f32 %v49, %v54
    %v10062 = vsub.f32 %v50, %v55
    %v10063 = vsub.f32 %v51, %v56
    %v10064 = vsub.f32 %v52, %v57
    %v10065 = vsub.f32 %v53, %v58
    %v10066 = vsub.f32 %v54, %v59
    %v10067 = vsub.f32 %v55, %v60
    %v10068 = vsub.f32 %v56, %v61
    %v10069 = vsub.f32 %v57, %v62
    %v10070 = vsub.f32 %v58, %v63
    %v10071 = vsub.f32 %v59, %v64
    %v10072 = vsub.f32 %v60, %v65
    %v10073 = vsub.f32 %v61, %v66
    %v10074 = vsub.f32 %v62, %v67
    %v10075 = vsub.f32 %v63, %v68
    %v10076 = vsub.f32 %v64, %v69
    %v10077 = vsub.f32 %v65, %v70
    %v10078 = vsub.f32 %v66, %v71
    %v10079 = vsub.f32 %v67, %v72
    %v10080 = vsub.f32 %v68, %v73
    %v10081 = vsub.f32 %v69, %v74
    %v10082 = vsub.f32 %v70, %v75
    %v10083 = vsub.f32 %v71, %v76
    %v10084 = vsub.f32 %v72, %v77
    %v10085 = vsub.f32 %v73, %v78
    %v10086 = vsub.f32 %v74, %v79
    %v10087 = vsub.f32 %v75, %v80
    %v10088 = vsub.f32 %v76, %v81
    %v10089 = vsub.f32 %v77, %v82
    %v10090 = vsub.f32 %v78, %v83
    %v10091 = vsub.f32 %v79, %v84
    %v10092 = vsub.f32 %v80, %v85
    %v10093 = vsub.f32 %v81, %v86
    %v10094 = vsub.f32 %v82, %v87
    %v10095 = vsub.f32 %v83, %v88
    %v10096 = vsub.f32 %v84, %v89
    %v10097 = vsub.f32 %v85, %v90
    %v10098 = vsub.f32 %v86, %v91
    %v10099 = vsub.f32 %v87, %v92
    %v10100 = vsub.f32 %v88, %v93
    %v10101 = vsub.f32 %v89, %v94
    %v10102 = vsub.f32 %v90, %v95
    %v10103 = vsub.f32 %v91, %v96
    %v10104 = vsub.f32 %v92, %v97
    %v10105 = vsub.f32 %v93, %v98
    %v10106 = vsub.f32 %v94, %v99
    %v10107 = vsub.f32 %v95, %v100
    %v10108 = vsub.f32 %v96, %v101
    %v10109 = vsub.f32 %v97, %v102
    %v10110 = vsub.f32 %v98, %v103
    %v10111 = vsub.f32 %v99, %v104
    %v10112 = vsub.f32 %v100, %v105
    %v10113 = vsub.f32 %v101, %v106
    %v10114 = vsub.f32 %v102, %v107
    %v10115 = vsub.f32 %v103, %v108
    %v10116 = vsub.f32 %v104, %v109
    %v10117 = vsub.f32 %v105, %v110
    %v10118 = vsub.f32 %v106, %v111
    %v10119 = vsub.f32 %v107, %v112
    %v10120 = vsub.f32 %v108, %v113
    %v10121 = vsub.f32 %v109, %v114
    %v10122 = vsub.f32 %v110, %v115
    %v10123 = vsub.f32 %v111, %v116
    %v10124 = vsub.f32 %v112, %v117
    %v10125 = vsub.f32 %v113, %v118
    %v10126 = vsub.f32 %v114, %v119
    %v10127 = vsub.f32 %v115, %v120
    %v10128 = vsub.f32 %v116, %v121
    %v10129 = vsub.f32 %v117, %v122
    %v10130 = vsub.f32 %v118, %v123
    %v10131 = vsub.f32 %v119, %v124
    %v10132 = vsub.f32 %v120, %v125
    %v10133 = vsub.f32 %v121, %v126
    %v10134 = vsub.f32 %v122, %v127
    %v10135 = vsub.f32 %v123, %v128
    %v10136 = vsub.f32 %v124, %v129
    %v10137 = vsub.f32 %v125, %v130
    %v10138 = vsub.f32 %v126, %v131
    %v10139 = vsub.f32 %v127, %v132
    %v10140 = vsub.f32 %v128, %v133
    %v10141 = vsub.f32 %v129, %v134
    %v10142 = vsub.f32 %v130, %v135
    %v10143 = vsub.f32 %v131, %v136
    %v10144 = vsub.f32 %v132, %v137
    %v10145 = vsub.f32 %v133, %v138
    %v10146 = vsub.f32 %v134, %v139
    %v10147 = vsub.f32 %v135, %v140
    %v10148 = vsub.f32 %v136, %v141
    %v10149 = vsub.f32 %v137, %v142
    %v10150 = vsub.f32 %v138, %v143
    %v10151 = vsub.f32 %v139, %v144
    %v10152 = vsub.f32 %v140, %v145
    %v10153 = vsub.f32 %v141, %v146
    %v10154 = vsub.f32 %v142, %v147
    %v10155 = vsub.f32 %v143, %v148
    %v10156 = vsub.f32 %v144, %v149
    %v10157 = vsub.f32 %v145, %v150
    %v10158 = vsub.f32 %v146, %v151
    %v10159 = vsub.f32 %v147, %v152
    %v10160 = vsub.f32 %v148, %v153
    %v10161 = vsub.f32 %v149, %v154
    %v10162 = vsub.f32 %v150, %v155
    %v10163 = vsub.f32 %v151, %v156
    %v10164 = vsub.f32 %v152, %v157
    %v10165 = vsub.f32 %v153, %v158
    %v10166 = vsub.f32 %v154, %v159
    %v10167 = vsub.f32 %v155, %v160
    %v10168 = vsub.f32 %v156, %v161
    %v10169 = vsub.f32 %v157, %v162
    %v10170 = vsub.f32 %v158, %v163
    %v10171 = vsub.f32 %v159, %v164
    %v10172 = vsub.f32 %v160, %v165
    %v10173 = vsub.f32 %v161, %v166
    %v10174 = vsub.f32 %v162, %v167
    %v10175 = vsub.f32 %v163, %v168
    %v10176 = vsub.f32 %v164, %v169
    %v10177 = vsub.f32 %v165, %v170
    %v10178 = vsub.f32 %v166, %v171
    %v10179 = vsub.f32 %v167, %v172
    %v10180 = vsub.f32 %v168, %v173
    %v10181 = vsub.f32 %v169, %v174
    %v10182 = vsub.f32 %v170, %v175
    %v10183 = vsub.f32 %v171, %v176
    %v10184 = vsub.f32 %v172, %v177
    %v10185 = vsub.f32 %v173, %v178
    %v10186 = vsub.f32 %v174, %v179
    %v10187 = vsub.f32 %v175, %v180
    %v10188 = vsub.f32 %v176, %v181
    %v10189 = vsub.f32 %v177, %v182
    %v10190 = vsub.f32 %v178, %v183
    %v10191 = vsub.f32 %v179, %v184
    %v10192 = vsub.f32 %v180, %v185
    %v10193 = vsub.f32 %v181, %v186
    %v10194 = vsub.f32 %v182, %v187
    %v10195 = vsub.f32 %v183, %v188
    %v10196 = vsub.f32 %v184, %v189
    %v10197 = vsub.f32 %v185, %v190
    %v10198 = vsub.f32 %v186, %v191
    %v10199 = vsub.f32 %v187, %v192
    %v10200 = vsub.f32 %v193, %v198
    %v10201 = vsub.f32 %v194, %v199
    %v10202 = vsub.f32 %v195, %v200
    %v10203 = vsub.f32 %v196, %v201
    %v10204 = vsub.f32 %v197, %v202
    %v10205 = vsub.f32 %v198, %v203
    %v10206 = vsub.f32 %v199, %v204
    %v10207 = vsub.f32 %v200, %v205
    %v10208 = vsub.f32 %v201, %v206
    %v10209 = vsub.f32 %v202, %v207
    %v10210 = vsub.f32 %v203, %v208
    %v10211 = vsub.f32 %v204, %v209
    %v10212 = vsub.f32 %v205, %v210
    %v10213 = vsub.f32 %v206, %v211
    %v10214 = vsub.f32 %v207, %v212
    %v10215 = vsub.f32 %v208, %v213
    %v10216 = vsub.f32 %v209, %v214
    %v10217 = vsub.f32 %v210, %v215
    %v10218 = vsub.f32 %v211, %v216
    %v10219 = vsub.f32 %v212, %v217
    %v10220 = vsub.f32 %v213, %v218
    %v10221 = vsub.f32 %v214, %v219
    %v10222 = vsub.f32 %v215, %v220
    %v10223 = vsub.f32 %v216, %v221
    %v10224 = vsub.f32 %v217, %v222
    %v10225 = vsub.f32 %v218, %v223
    %v10226 = vsub.f32 %v219, %v224
    %v10227 = vsub.f32 %v220, %v225
    %v10228 = vsub.f32 %v221, %v226
    %v10229 = vsub.f32 %v222, %v227
    %v10230 = vsub.f32 %v223, %v228
    %v10231 = vsub.f32 %v224, %v229
    %v10232 = vsub.f32 %v225, %v230
    %v10233 = vsub.f32 %v226, %v231
    %v10234 = vsub.f32 %v227, %v232
    %v10235 = vsub.f32 %v228, %v233
    %v10236 = vsub.f32 %v229, %v234
    %v10237 = vsub.f32 %v230, %v235
    %v10238 = vsub.f32 %v231, %v236
    %v10239 = vsub.f32 %v232, %v237
    %v10240 = vsub.f32 %v233, %v238
    %v10241 = vsub.f32 %v234, %v239
    %v10242 = vsub.f32 %v235, %v240
    %v10243 = vsub.f32 %v236, %v241
    %v10244 = vsub.f32 %v237, %v242
    %v10245 = vsub.f32 %v238, %v243
    %v10246 = vsub.f32 %v239, %v244
    %v10247 = vsub.f32 %v240, %v245
    %v10248 = vsub.f32 %v241, %v246
    %v10249 = vsub.f32 %v242, %v247
    %v10250 = vsub.f32 %v243, %v248
    %v10251 = vsub.f32 %v244, %v249
    %v10252 = vsub.f32 %v245, %v250
    %v10253 = vsub.f32 %v246, %v251
    %v10254 = vsub.f32 %v247, %v252
    %v10255 = vsub.f32 %v248, %v253
    %v10256 = vsub.f32 %v249, %v254
    %v10257 = vsub.f32 %v250, %v255
    %v10258 = vsub.f32 %v251, %v256
    %v10259 = vsub.f32 %v252, %v257
    %v10260 = vsub.f32 %v253, %v258
    %v10261 = vsub.f32 %v254, %v259
    %v10262 = vsub.f32 %v255, %v260
    %v10263 = vsub.f32 %v256, %v261
    %v10264 = vsub.f32 %v257, %v262
    %v10265 = vsub.f32 %v258, %v263
    %v10266 = vsub.f32 %v259, %v264
    %v10267 = vsub.f32 %v260, %v265
    %v10268 = vsub.f32 %v261, %v266
    %v10269 = vsub.f32 %v262, %v267
    %v10270 = vsub.f32 %v263, %v268
    %v10271 = vsub.f32 %v264, %v269
    %v10272 = vsub.f32 %v265, %v270
    %v10273 = vsub.f32 %v266, %v271
    %v10274 = vsub.f32 %v267, %v272
    %v10275 = vsub.f32 %v268, %v273
    %v10276 = vsub.f32 %v269, %v274
    %v10277 = vsub.f32 %v270, %v275
    %v10278 = vsub.f32 %v271, %v276
    %v10279 = vsub.f32 %v272, %v277
    %v10280 = vsub.f32 %v273, %v278
    %v10281 = vsub.f32 %v274, %v279
    %v10282 = vsub.f32 %v275, %v280
    %v10283 = vsub.f32 %v276, %v281
    %v10284 = vsub.f32 %v277, %v282
    %v10285 = vsub.f32 %v278, %v283
    %v10286 = vsub.f32 %v279, %v284
    %v10287 = vsub.f32 %v280, %v285
    %v10288 = vsub.f32 %v281, %v286
    %v10289 = vsub.f32 %v282, %v287
    %v10290 = vsub.f32 %v283, %v288
    %v10291 = vsub.f32 %v284, %v289
    %v10292 = vsub.f32 %v285, %v290
    %v10293 = vsub.f32 %v286, %v291
    %v10294 = vsub.f32 %v287, %v292
    %v10295 = vsub.f32 %v288, %v293
    %v10296 = vsub.f32 %v289, %v294
    %v10297 = vsub.f32 %v290, %v295
    %v10298 = vsub.f32 %v291, %v296
    %v10299 = vsub.f32 %v292, %v297
    %v10300 = vsub.f32 %v293, %v298
    %v10301 = vsub.f32 %v294, %v299
    %v10302 = vsub.f32 %v295, %v300
    %v10303 = vsub.f32 %v296, %v301
    %v10304 = vsub.f32 %v297, %v302
    %v10305 = vsub.f32 %v298, %v303
    %v10306 = vsub.f32 %v299, %v304
    %v10307 = vsub.f32 %v300, %v305
    %v10308 = vsub.f32 %v301, %v306
    %v10309 = vsub.f32 %v302, %v307
    %v10310 = vsub.f32 %v303, %v308
    %v10311 = vsub.f32 %v304, %v309
    %v10312 = vsub.f32 %v305, %v310
    %v10313 = vsub.f32 %v306, %v311
    %v10314 = vsub.f32 %v307, %v312
    %v10315 = vsub.f32 %v308, %v313
    %v10316 = vsub.f32 %v309, %v314
    %v10317 = vsub.f32 %v310, %v315
    %v10318 = vsub.f32 %v311, %v316
    %v10319 = vsub.f32 %v312, %v317
    %v10320 = vsub.f32 %v313, %v318
    %v10321 = vsub.f32 %v314, %v319
    %v10322 = vsub.f32 %v315, %v320
    %v10323 = vsub.f32 %v316, %v321
    %v10324 = vsub.f32 %v317, %v322
    %v10325 = vsub.f32 %v318, %v323
    %v10326 = vsub.f32 %v319, %v324
    %v10327 = vsub.f32 %v320, %v325
    %v10328 = vsub.f32 %v321, %v326
    %v10329 = vsub.f32 %v322, %v327
    %v10330 = vsub.f32 %v323, %v328
    %v10331 = vsub.f32 %v324, %v329
    %v10332 = vsub.f32 %v325, %v330
    %v10333 = vsub.f32 %v326, %v331
    %v10334 = vsub.f32 %v327, %v332
    %v10335 = vsub.f32 %v328, %v333
    %v10336 = vsub.f32 %v329, %v334
    %v10337 = vsub.f32 %v330, %v335
    %v10338 = vsub.f32 %v331, %v336
    %v10339 = vsub.f32 %v332, %v337
    %v10340 = vsub.f32 %v333, %v338
    %v10341 = vsub.f32 %v334, %v339
    %v10342 = vsub.f32 %v335, %v340
    %v10343 = vsub.f32 %v336, %v341
    %v10344 = vsub.f32 %v337, %v342
    %v10345 = vsub.f32 %v338, %v343
    %v10346 = vsub.f32 %v339, %v344
    %v10347 = vsub.f32 %v340, %v345
    %v10348 = vsub.f32 %v341, %v346
    %v10349 = vsub.f32 %v342, %v347
    %v10350 = vsub.f32 %v343, %v348
    %v10351 = vsub.f32 %v344, %v349
    %v10352 = vsub.f32 %v345, %v350
    %v10353 = vsub.f32 %v346, %v351
    %v10354 = vsub.f32 %v347, %v352
    %v10355 = vsub.f32 %v348, %v353
    %v10356 = vsub.f32 %v349, %v354
    %v10357 = vsub.f32 %v350, %v355
    %v10358 = vsub.f32 %v351, %v356
    %v10359 = vsub.f32 %v352, %v357
    %v10360 = vsub.f32 %v358, %v363
    %v10361 = vsub.f32 %v359, %v364
    %v10362 = vsub.f32 %v360, %v365
    %v10363 = vsub.f32 %v361, %v366
    %v10364 = vsub.f32 %v362, %v367
    %v10365 = vsub.f32 %v363, %v368
    %v10366 = vsub.f32 %v364, %v369
    %v10367 = vsub.f32 %v365, %v370
    %v10368 = vsub.f32 %v366, %v371
    %v10369 = vsub.f32 %v367, %v372
    %v10370 = vsub.f32 %v368, %v373
    %v10371 = vsub.f32 %v369, %v374
    %v10372 = vsub.f32 %v370, %v375
    %v10373 = vsub.f32 %v371, %v376
    %v10374 = vsub.f32 %v372, %v377
    %v10375 = vsub.f32 %v373, %v378
    %v10376 = vsub.f32 %v374, %v379
    %v10377 = vsub.f32 %v375, %v380
    %v10378 = vsub.f32 %v376, %v381
    %v10379 = vsub.f32 %v377, %v382
    %v10380 = vsub.f32 %v378, %v383
    %v10381 = vsub.f32 %v379, %v384
    %v10382 = vsub.f32 %v380, %v385
    %v10383 = vsub.f32 %v381, %v386
    %v10384 = vsub.f32 %v382, %v387
    %v10385 = vsub.f32 %v383, %v388
    %v10386 = vsub.f32 %v384, %v389
    %v10387 = vsub.f32 %v385, %v390
    %v10388 = vsub.f32 %v386, %v391
    %v10389 = vsub.f32 %v387, %v392
    %v10390 = vsub.f32 %v388, %v393
    %v10391 = vsub.f32 %v389, %v394
    %v10392 = vsub.f32 %v390, %v395
    %v10393 = vsub.f32 %v391, %v396
    %v10394 = vsub.f32 %v392, %v397
    %v10395 = vsub.f32 %v393, %v398
    %v10396 = vsub.f32 %v394, %v399
    %v10397 = vsub.f32 %v395, %v400
    %v10398 = vsub.f32 %v396, %v401
    %v10399 = vsub.f32 %v397, %v402
    %v10400 = vsub.f32 %v398, %v403
    %v10401 = vsub.f32 %v399, %v404
    %v10402 = vsub.f32 %v400, %v405
    %v10403 = vsub.f32 %v401, %v406
    %v10404 = vsub.f32 %v402, %v407
    %v10405 = vsub.f32 %v403, %v408
    %v10406 = vsub.f32 %v404, %v409
    %v10407 = vsub.f32 %v405, %v410
    %v10408 = vsub.f32 %v406, %v411
    %v10409 = vsub.f32 %v407, %v412
    %v10410 = vsub.f32 %v408, %v413
    %v10411 = vsub.f32 %v409, %v414
    %v10412 = vsub.f32 %v410, %v415
    %v10413 = vsub.f32 %v411, %v416
    %v10414 = vsub.f32 %v412, %v417
    %v10415 = vsub.f32 %v413, %v418
    %v10416 = vsub.f32 %v414, %v419
    %v10417 = vsub.f32 %v415, %v420
    %v10418 = vsub.f32 %v416, %v421
    %v10419 = vsub.f32 %v417, %v422
    %v10420 = vsub.f32 %v418, %v423
    %v10421 = vsub.f32 %v419, %v424
    %v10422 = vsub.f32 %v420, %v425
    %v10423 = vsub.f32 %v421, %v426
    %v10424 = vsub.f32 %v422, %v427
    %v10425 = vsub.f32 %v423, %v428
    %v10426 = vsub.f32 %v424, %v429
    %v10427 = vsub.f32 %v425, %v430
    %v10428 = vsub.f32 %v426, %v431
    %v10429 = vsub.f32 %v427, %v432
    %v10430 = vsub.f32 %v428, %v433
    %v10431 = vsub.f32 %v429, %v434
    %v10432 = vsub.f32 %v430, %v435
    %v10433 = vsub.f32 %v431, %v436
    %v10434 = vsub.f32 %v432, %v437
    %v10435 = vsub.f32 %v433, %v438
    %v10436 = vsub.f32 %v434, %v439
    %v10437 = vsub.f32 %v435, %v440
    %v10438 = vsub.f32 %v436, %v441
    %v10439 = vsub.f32 %v437, %v442
    %v10440 = vsub.f32 %v438, %v443
    %v10441 = vsub.f32 %v439, %v444
    %v10442 = vsub.f32 %v440, %v445
    %v10443 = vsub.f32 %v441, %v446
    %v10444 = vsub.f32 %v442, %v447
    %v10445 = vsub.f32 %v443, %v448
    %v10446 = vsub.f32 %v444, %v449
    %v10447 = vsub.f32 %v445, %v450
    %v10448 = vsub.f32 %v446, %v451
    %v10449 = vsub.f32 %v447, %v452
    %v10450 = vsub.f32 %v448, %v453
    %v10451 = vsub.f32 %v449, %v454
    %v10452 = vsub.f32 %v450, %v455
    %v10453 = vsub.f32 %v451, %v456
    %v10454 = vsub.f32 %v452, %v457
    %v10455 = vsub.f32 %v453, %v458
    %v10456 = vsub.f32 %v454, %v459
    %v10457 = vsub.f32 %v455, %v460
    %v10458 = vsub.f32 %v456, %v461
    %v10459 = vsub.f32 %v457, %v462
    %v10460 = vsub.f32 %v458, %v463
    %v10461 = vsub.f32 %v459, %v464
    %v10462 = vsub.f32 %v460, %v465
    %v10463 = vsub.f32 %v461, %v466
    %v10464 = vsub.f32 %v462, %v467
    %v10465 = vsub.f32 %v463, %v468
    %v10466 = vsub.f32 %v464, %v469
    %v10467 = vsub.f32 %v465, %v470
    %v10468 = vsub.f32 %v466, %v471
    %v10469 = vsub.f32 %v467, %v472
    %v10470 = vsub.f32 %v468, %v473
    %v10471 = vsub.f32 %v469, %v474
    %v10472 = vsub.f32 %v470, %v475
    %v10473 = vsub.f32 %v471, %v476
    %v10474 = vsub.f32 %v472, %v477
    %v10475 = vsub.f32 %v473, %v478
    %v10476 = vsub.f32 %v474, %v479
    %v10477 = vsub.f32 %v475, %v480
    %v10478 = vsub.f32 %v476, %v481
    %v10479 = vsub.f32 %v477, %v482
    %v10480 = vsub.f32 %v478, %v483
    %v10481 = vsub.f32 %v479, %v484
    %v10482 = vsub.f32 %v480, %v485
    %v10483 = vsub.f32 %v481, %v486
    %v10484 = vsub.f32 %v482, %v487
    %v10485 = vsub.f32 %v483, %v488
    %v10486 = vsub.f32 %v484, %v489
    %v10487 = vsub.f32 %v485, %v490
    %v10488 = vsub.f32 %v486, %v491
    %v10489 = vsub.f32 %v487, %v492
    %v10490 = vsub.f32 %v488, %v493
    %v10491 = vsub.f32 %v489, %v494
    %v10492 = vsub.f32 %v490, %v495
    %v10493 = vsub.f32 %v491, %v496
    %v10494 = vsub.f32 %v492, %v497
    %v10495 = vsub.f32 %v493, %v498
    %v10496 = vsub.f32 %v494, %v499
    %v10497 = vsub.f32 %v495, %v500
    %v10498 = vsub.f32 %v496, %v501
    %v10499 = vsub.f32 %v497, %v502
    %v10500 = vsub.f32 %v498, %v503
    %v10501 = vsub.f32 %v499, %v504
    %v10502 = vsub.f32 %v500, %v505
    %v10503 = vsub.f32 %v501, %v506
    %v10504 = vsub.f32 %v502, %v507
    %v10505 = vsub.f32 %v503, %v508
    %v10506 = vsub.f32 %v504, %v509
    %v10507 = vsub.f32 %v505, %v510
    %v10508 = vsub.f32 %v506, %v511
    %v10509 = vsub.f32 %v507, %v512
    %v10510 = vsub.f32 %v508, %v513
    %v10511 = vsub.f32 %v509, %v514
    %v10512 = vsub.f32 %v510, %v515
    %v10513 = vsub.f32 %v511, %v516
    %v10514 = vsub.f32 %v512, %v517
    %v10515 = vsub.f32 %v513, %v518
    %v10516 = vsub.f32 %v514, %v519
    %v10517 = vsub.f32 %v515, %v520
    %v10518 = vsub.f32 %v516, %v521
    %v10519 = vsub.f32 %v517, %v522
    %v10520 = vmul.f32 %v10040, %v10040
    %v10521 = vmul.f32 %v10041, %v10041
    %v10522 = vmul.f32 %v10042, %v10042
    %v10523 = vmul.f32 %v10043, %v10043
    %v10524 = vmul.f32 %v10044, %v10044
    %v10525 = vmul.f32 %v10045, %v10045
    %v10526 = vmul.f32 %v10046, %v10046
    %v10527 = vmul.f32 %v10047, %v10047
    %v10528 = vmul.f32 %v10048, %v10048
    %v10529 = vmul.f32 %v10049, %v10049
    %v10530 = vmul.f32 %v10050, %v10050
    %v10531 = vmul.f32 %v10051, %v10051
    %v10532 = vmul.f32 %v10052, %v10052
    %v10533 = vmul.f32 %v10053, %v10053
    %v10534 = vmul.f32 %v10054, %v10054
    %v10535 = vmul.f32 %v10055, %v10055
    %v10536 = vmul.f32 %v10056, %v10056
    %v10537 = vmul.f32 %v10057, %v10057
    %v10538 = vmul.f32 %v10058, %v10058
    %v10539 = vmul.f32 %v10059, %v10059
    %v10540 = vmul.f32 %v10060, %v10060
    %v10541 = vmul.f32 %v10061, %v10061
    %v10542 = vmul.f32 %v10062, %v10062
    %v10543 = vmul.f32 %v10063, %v10063
    %v10544 = vmul.f32 %v10064, %v10064
    %v10545 = vmul.f32 %v10065, %v10065
    %v10546 = vmul.f32 %v10066, %v10066
    %v10547 = vmul.f32 %v10067, %v10067
    %v10548 = vmul.f32 %v10068, %v10068
    %v10549 = vmul.f32 %v10069, %v10069
    %v10550 = vmul.f32 %v10070, %v10070
    %v10551 = vmul.f32 %v10071, %v10071
    %v10552 = vmul.f32 %v10072, %v10072
    %v10553 = vmul.f32 %v10073, %v10073
    %v10554 = vmul.f32 %v10074, %v10074
    %v10555 = vmul.f32 %v10075, %v10075
    %v10556 = vmul.f32 %v10076, %v10076
    %v10557 = vmul.f32 %v10077, %v10077
    %v10558 = vmul.f32 %v10078, %v10078
    %v10559 = vmul.f32 %v10079, %v10079
    %v10560 = vmul.f32 %v10080, %v10080
    %v10561 = vmul.f32 %v10081, %v10081
    %v10562 = vmul.f32 %v10082, %v10082
    %v10563 = vmul.f32 %v10083, %v10083
    %v10564 = vmul.f32 %v10084, %v10084
    %v10565 = vmul.f32 %v10085, %v10085
    %v10566 = vmul.f32 %v10086, %v10086
    %v10567 = vmul.f32 %v10087, %v10087
    %v10568 = vmul.f32 %v10088, %v10088
    %v10569 = vmul.f32 %v10089, %v10089
    %v10570 = vmul.f32 %v10090, %v10090
    %v10571 = vmul.f32 %v10091, %v10091
    %v10572 = vmul.f32 %v10092, %v10092
    %v10573 = vmul.f32 %v10093, %v10093
    %v10574 = vmul.f32 %v10094, %v10094
    %v10575 = vmul.f32 %v10095, %v10095
    %v10576 = vmul.f32 %v10096, %v10096
    %v10577 = vmul.f32 %v10097, %v10097
    %v10578 = vmul.f32 %v10098, %v10098
    %v10579 = vmul.f32 %v10099, %v10099
    %v10580 = vmul.f32 %v10100, %v10100
    %v10581 = vmul.f32 %v10101, %v10101
    %v10582 = vmul.f32 %v10102, %v10102
    %v10583 = vmul.f32 %v10103, %v10103
    %v10584 = vmul.f32 %v10104, %v10104
    %v10585 = vmul.f32 %v10105, %v10105
    %v10586 = vmul.f32 %v10106, %v10106
    %v10587 = vmul.f32 %v10107, %v10107
    %v10588 = vmul.f32 %v10108, %v10108
    %v10589 = vmul.f32 %v10109, %v10109
    %v10590 = vmul.f32 %v10110, %v10110
    %v10591 = vmul.f32 %v10111, %v10111
    %v10592 = vmul.f32 %v10112, %v10112
    %v10593 = vmul.f32 %v10113, %v10113
    %v10594 = vmul.f32 %v10114, %v10114
    %v10595 = vmul.f32 %v10115, %v10115
    %v10596 = vmul.f32 %v10116, %v10116
    %v10597 = vmul.f32 %v10117, %v10117
    %v10598 = vmul.f32 %v10118, %v10118
    %v10599 = vmul.f32 %v10119, %v10119
    %v10600 = vmul.f32 %v10120, %v10120
    %v10601 = vmul.f32 %v10121, %v10121
    %v10602 = vmul.f32 %v10122, %v10122
    %v10603 = vmul.f32 %v10123, %v10123
    %v10604 = vmul.f32 %v10124, %v10124
    %v10605 = vmul.f32 %v10125, %v10125
    %v10606 = vmul.f32 %v10126, %v10126
    %v10607 = vmul.f32 %v10127, %v10127
    %v10608 = vmul.f32 %v10128, %v10128
    %v10609 = vmul.f32 %v10129, %v10129
    %v10610 = vmul.f32 %v10130, %v10130
    %v10611 = vmul.f32 %v10131, %v10131
    %v10612 = vmul.f32 %v10132, %v10132
    %v10613 = vmul.f32 %v10133, %v10133
    %v10614 = vmul.f32 %v10134, %v10134
    %v10615 = vmul.f32 %v10135, %v10135
    %v10616 = vmul.f32 %v10136, %v10136
    %v10617 = vmul.f32 %v10137, %v10137
    %v10618 = vmul.f32 %v10138, %v10138
    %v10619 = vmul.f32 %v10139, %v10139
    %v10620 = vmul.f32 %v10140, %v10140
    %v10621 = vmul.f32 %v10141, %v10141
    %v10622 = vmul.f32 %v10142, %v10142
    %v10623 = vmul.f32 %v10143, %v10143
    %v10624 = vmul.f32 %v10144, %v10144
    %v10625 = vmul.f32 %v10145, %v10145
    %v10626 = vmul.f32 %v10146, %v10146
    %v10627 = vmul.f32 %v10147, %v10147
    %v10628 = vmul.f32 %v10148, %v10148
    %v10629 = vmul.f32 %v10149, %v10149
    %v10630 = vmul.f32 %v10150, %v10150
    %v10631 = vmul.f32 %v10151, %v10151
    %v10632 = vmul.f32 %v10152, %v10152
    %v10633 = vmul.f32 %v10153, %v10153
    %v10634 = vmul.f32 %v10154, %v10154
    %v10635 = vmul.f32 %v10155, %v10155
    %v10636 = vmul.f32 %v10156, %v10156
    %v10637 = vmul.f32 %v10157, %v10157
    %v10638 = vmul.f32 %v10158, %v10158
    %v10639 = vmul.f32 %v10159, %v10159
    %v10640 = vmul.f32 %v10160, %v10160
    %v10641 = vmul.f32 %v10161, %v10161
    %v10642 = vmul.f32 %v10162, %v10162
    %v10643 = vmul.f32 %v10163, %v10163
    %v10644 = vmul.f32 %v10164, %v10164
    %v10645 = vmul.f32 %v10165, %v10165
    %v10646 = vmul.f32 %v10166, %v10166
    %v10647 = vmul.f32 %v10167, %v10167
    %v10648 = vmul.f32 %v10168, %v10168
    %v10649 = vmul.f32 %v10169, %v10169
    %v10650 = vmul.f32 %v10170, %v10170
    %v10651 = vmul.f32 %v10171, %v10171
    %v10652 = vmul.f32 %v10172, %v10172
    %v10653 = vmul.f32 %v10173, %v10173
    %v10654 = vmul.f32 %v10174, %v10174
    %v10655 = vmul.f32 %v10175, %v10175
    %v10656 = vmul.f32 %v10176, %v10176
    %v10657 = vmul.f32 %v10177, %v10177
    %v10658 = vmul.f32 %v10178, %v10178
    %v10659 = vmul.f32 %v10179, %v10179
    %v10660 = vmul.f32 %v10180, %v10180
    %v10661 = vmul.f32 %v10181, %v10181
    %v10662 = vmul.f32 %v10182, %v10182
    %v10663 = vmul.f32 %v10183, %v10183
    %v10664 = vmul.f32 %v10184, %v10184
    %v10665 = vmul.f32 %v10185, %v10185
    %v10666 = vmul.f32 %v10186, %v10186
    %v10667 = vmul.f32 %v10187, %v10187
    %v10668 = vmul.f32 %v10188, %v10188
    %v10669 = vmul.f32 %v10189, %v10189
    %v10670 = vmul.f32 %v10190, %v10190
    %v10671 = vmul.f32 %v10191, %v10191
    %v10672 = vmul.f32 %v10192, %v10192
    %v10673 = vmul.f32 %v10193, %v10193
    %v10674 = vmul.f32 %v10194, %v10194
    %v10675 = vmul.f32 %v10195, %v10195
    %v10676 = vmul.f32 %v10196, %v10196
    %v10677 = vmul.f32 %v10197, %v10197
    %v10678 = vmul.f32 %v10198, %v10198
    %v10679 = vmul.f32 %v10199, %v10199
    %v10680 = vmul.f32 %v10200, %v10200
    %v10681 = vmul.f32 %v10201, %v10201
    %v10682 = vmul.f32 %v10202, %v10202
    %v10683 = vmul.f32 %v10203, %v10203
    %v10684 = vmul.f32 %v10204, %v10204
    %v10685 = vmul.f32 %v10205, %v10205
    %v10686 = vmul.f32 %v10206, %v10206
    %v10687 = vmul.f32 %v10207, %v10207
    %v10688 = vmul.f32 %v10208, %v10208
    %v10689 = vmul.f32 %v10209, %v10209
    %v10690 = vmul.f32 %v10210, %v10210
    %v10691 = vmul.f32 %v10211, %v10211
    %v10692 = vmul.f32 %v10212, %v10212
    %v10693 = vmul.f32 %v10213, %v10213
    %v10694 = vmul.f32 %v10214, %v10214
    %v10695 = vmul.f32 %v10215, %v10215
    %v10696 = vmul.f32 %v10216, %v10216
    %v10697 = vmul.f32 %v10217, %v10217
    %v10698 = vmul.f32 %v10218, %v10218
    %v10699 = vmul.f32 %v10219, %v10219
    %v10700 = vmul.f32 %v10220, %v10220
    %v10701 = vmul.f32 %v10221, %v10221
    %v10702 = vmul.f32 %v10222, %v10222
    %v10703 = vmul.f32 %v10223, %v10223
    %v10704 = vmul.f32 %v10224, %v10224
    %v10705 = vmul.f32 %v10225, %v10225
    %v10706 = vmul.f32 %v10226, %v10226
    %v10707 = vmul.f32 %v10227, %v10227
    %v10708 = vmul.f32 %v10228, %v10228
    %v10709 = vmul.f32 %v10229, %v10229
    %v10710 = vmul.f32 %v10230, %v10230
    %v10711 = vmul.f32 %v10231, %v10231
    %v10712 = vmul.f32 %v10232, %v10232
    %v10713 = vmul.f32 %v10233, %v10233
    %v10714 = vmul.f32 %v10234, %v10234
    %v10715 = vmul.f32 %v10235, %v10235
    %v10716 = vmul.f32 %v10236, %v10236
    %v10717 = vmul.f32 %v10237, %v10237
    %v10718 = vmul.f32 %v10238, %v10238
    %v10719 = vmul.f32 %v10239, %v10239
    %v10720 = vmul.f32 %v10240, %v10240
    %v10721 = vmul.f32 %v10241, %v10241
    %v10722 = vmul.f32 %v10242, %v10242
    %v10723 = vmul.f32 %v10243, %v10243
    %v10724 = vmul.f32 %v10244, %v10244
    %v10725 = vmul.f32 %v10245, %v10245
    %v10726 = vmul.f32 %v10246, %v10246
    %v10727 = vmul.f32 %v10247, %v10247
    %v10728 = vmul.f32 %v10248, %v10248
    %v10729 = vmul.f32 %v10249, %v10249
    %v10730 = vmul.f32 %v10250, %v10250
    %v10731 = vmul.f32 %v10251, %v10251
    %v10732 = vmul.f32 %v10252, %v10252
    %v10733 = vmul.f32 %v10253, %v10253
    %v10734 = vmul.f32 %v10254, %v10254
    %v10735 = vmul.f32 %v10255, %v10255
    %v10736 = vmul.f32 %v10256, %v10256
    %v10737 = vmul.f32 %v10257, %v10257
    %v10738 = vmul.f32 %v10258, %v10258
    %v10739 = vmul.f32 %v10259, %v10259
    %v10740 = vmul.f32 %v10260, %v10260
    %v10741 = vmul.f32 %v10261, %v10261
    %v10742 = vmul.f32 %v10262, %v10262
    %v10743 = vmul.f32 %v10263, %v10263
    %v10744 = vmul.f32 %v10264, %v10264
    %v10745 = vmul.f32 %v10265, %v10265
    %v10746 = vmul.f32 %v10266, %v10266
    %v10747 = vmul.f32 %v10267, %v10267
    %v10748 = vmul.f32 %v10268, %v10268
    %v10749 = vmul.f32 %v10269, %v10269
    %v10750 = vmul.f32 %v10270, %v10270
    %v10751 = vmul.f32 %v10271, %v10271
    %v10752 = vmul.f32 %v10272, %v10272
    %v10753 = vmul.f32 %v10273, %v10273
    %v10754 = vmul.f32 %v10274, %v10274
    %v10755 = vmul.f32 %v10275, %v10275
    %v10756 = vmul.f32 %v10276, %v10276
    %v10757 = vmul.f32 %v10277, %v10277
    %v10758 = vmul.f32 %v10278, %v10278
    %v10759 = vmul.f32 %v10279, %v10279
    %v10760 = vmul.f32 %v10280, %v10280
    %v10761 = vmul.f32 %v10281, %v10281
    %v10762 = vmul.f32 %v10282, %v10282
    %v10763 = vmul.f32 %v10283, %v10283
    %v10764 = vmul.f32 %v10284, %v10284
    %v10765 = vmul.f32 %v10285, %v10285
    %v10766 = vmul.f32 %v10286, %v10286
    %v10767 = vmul.f32 %v10287, %v10287
    %v10768 = vmul.f32 %v10288, %v10288
    %v10769 = vmul.f32 %v10289, %v10289
    %v10770 = vmul.f32 %v10290, %v10290
    %v10771 = vmul.f32 %v10291, %v10291
    %v10772 = vmul.f32 %v10292, %v10292
    %v10773 = vmul.f32 %v10293, %v10293
    %v10774 = vmul.f32 %v10294, %v10294
    %v10775 = vmul.f32 %v10295, %v10295
    %v10776 = vmul.f32 %v10296, %v10296
    %v10777 = vmul.f32 %v10297, %v10297
    %v10778 = vmul.f32 %v10298, %v10298
    %v10779 = vmul.f32 %v10299, %v10299
    %v10780 = vmul.f32 %v10300, %v10300
    %v10781 = vmul.f32 %v10301, %v10301
    %v10782 = vmul.f32 %v10302, %v10302
    %v10783 = vmul.f32 %v10303, %v10303
    %v10784 = vmul.f32 %v10304, %v10304
    %v10785 = vmul.f32 %v10305, %v10305
    %v10786 = vmul.f32 %v10306, %v10306
    %v10787 = vmul.f32 %v10307, %v10307
    %v10788 = vmul.f32 %v10308, %v10308
    %v10789 = vmul.f32 %v10309, %v10309
    %v10790 = vmul.f32 %v10310, %v10310
    %v10791 = vmul.f32 %v10311, %v10311
    %v10792 = vmul.f32 %v10312, %v10312
    %v10793 = vmul.f32 %v10313, %v10313
    %v10794 = vmul.f32 %v10314, %v10314
    %v10795 = vmul.f32 %v10315, %v10315
    %v10796 = vmul.f32 %v10316, %v10316
    %v10797 = vmul.f32 %v10317, %v10317
    %v10798 = vmul.f32 %v10318, %v10318
    %v10799 = vmul.f32 %v10319, %v10319
    %v10800 = vmul.f32 %v10320, %v10320
    %v10801 = vmul.f32 %v10321, %v10321
    %v10802 = vmul.f32 %v10322, %v10322
    %v10803 = vmul.f32 %v10323, %v10323
    %v10804 = vmul.f32 %v10324, %v10324
    %v10805 = vmul.f32 %v10325, %v10325
    %v10806 = vmul.f32 %v10326, %v10326
    %v10807 = vmul.f32 %v10327, %v10327
    %v10808 = vmul.f32 %v10328, %v10328
    %v10809 = vmul.f32 %v10329, %v10329
    %v10810 = vmul.f32 %v10330, %v10330
    %v10811 = vmul.f32 %v10331, %v10331
    %v10812 = vmul.f32 %v10332, %v10332
    %v10813 = vmul.f32 %v10333, %v10333
    %v10814 = vmul.f32 %v10334, %v10334
    %v10815 = vmul.f32 %v10335, %v10335
    %v10816 = vmul.f32 %v10336, %v10336
    %v10817 = vmul.f32 %v10337, %v10337
    %v10818 = vmul.f32 %v10338, %v10338
    %v10819 = vmul.f32 %v10339, %v10339
    %v10820 = vmul.f32 %v10340, %v10340
    %v10821 = vmul.f32 %v10341, %v10341
    %v10822 = vmul.f32 %v10342, %v10342
    %v10823 = vmul.f32 %v10343, %v10343
    %v10824 = vmul.f32 %v10344, %v10344
    %v10825 = vmul.f32 %v10345, %v10345
    %v10826 = vmul.f32 %v10346, %v10346
    %v10827 = vmul.f32 %v10347, %v10347
    %v10828 = vmul.f32 %v10348, %v10348
    %v10829 = vmul.f32 %v10349, %v10349
    %v10830 = vmul.f32 %v10350, %v10350
    %v10831 = vmul.f32 %v10351, %v10351
    %v10832 = vmul.f32 %v10352, %v10352
    %v10833 = vmul.f32 %v10353, %v10353
    %v10834 = vmul.f32 %v10354, %v10354
    %v10835 = vmul.f32 %v10355, %v10355
    %v10836 = vmul.f32 %v10356, %v10356
    %v10837 = vmul.f32 %v10357, %v10357
    %v10838 = vmul.f32 %v10358, %v10358
    %v10839 = vmul.f32 %v10359, %v10359
    %v10840 = vmul.f32 %v10360, %v10360
    %v10841 = vmul.f32 %v10361, %v10361
    %v10842 = vmul.f32 %v10362, %v10362
    %v10843 = vmul.f32 %v10363, %v10363
    %v10844 = vmul.f32 %v10364, %v10364
    %v10845 = vmul.f32 %v10365, %v10365
    %v10846 = vmul.f32 %v10366, %v10366
    %v10847 = vmul.f32 %v10367, %v10367
    %v10848 = vmul.f32 %v10368, %v10368
    %v10849 = vmul.f32 %v10369, %v10369
    %v10850 = vmul.f32 %v10370, %v10370
    %v10851 = vmul.f32 %v10371, %v10371
    %v10852 = vmul.f32 %v10372, %v10372
    %v10853 = vmul.f32 %v10373, %v10373
    %v10854 = vmul.f32 %v10374, %v10374
    %v10855 = vmul.f32 %v10375, %v10375
    %v10856 = vmul.f32 %v10376, %v10376
    %v10857 = vmul.f32 %v10377, %v10377
    %v10858 = vmul.f32 %v10378, %v10378
    %v10859 = vmul.f32 %v10379, %v10379
    %v10860 = vmul.f32 %v10380, %v10380
    %v10861 = vmul.f32 %v10381, %v10381
    %v10862 = vmul.f32 %v10382, %v10382
    %v10863 = vmul.f32 %v10383, %v10383
    %v10864 = vmul.f32 %v10384, %v10384
    %v10865 = vmul.f32 %v10385, %v10385
    %v10866 = vmul.f32 %v10386, %v10386
    %v10867 = vmul.f32 %v10387, %v10387
    %v10868 = vmul.f32 %v10388, %v10388
    %v10869 = vmul.f32 %v10389, %v10389
    %v10870 = vmul.f32 %v10390, %v10390
    %v10871 = vmul.f32 %v10391, %v10391
    %v10872 = vmul.f32 %v10392, %v10392
    %v10873 = vmul.f32 %v10393, %v10393
    %v10874 = vmul.f32 %v10394, %v10394
    %v10875 = vmul.f32 %v10395, %v10395
    %v10876 = vmul.f32 %v10396, %v10396
    %v10877 = vmul.f32 %v10397, %v10397
    %v10878 = vmul.f32 %v10398, %v10398
    %v10879 = vmul.f32 %v10399, %v10399
    %v10880 = vmul.f32 %v10400, %v10400
    %v10881 = vmul.f32 %v10401, %v10401
    %v10882 = vmul.f32 %v10402, %v10402
    %v10883 = vmul.f32 %v10403, %v10403
    %v10884 = vmul.f32 %v10404, %v10404
    %v10885 = vmul.f32 %v10405, %v10405
    %v10886 = vmul.f32 %v10406, %v10406
    %v10887 = vmul.f32 %v10407, %v10407
    %v10888 = vmul.f32 %v10408, %v10408
    %v10889 = vmul.f32 %v10409, %v10409
    %v10890 = vmul.f32 %v10410, %v10410
    %v10891 = vmul.f32 %v10411, %v10411
    %v10892 = vmul.f32 %v10412, %v10412
    %v10893 = vmul.f32 %v10413, %v10413
    %v10894 = vmul.f32 %v10414, %v10414
    %v10895 = vmul.f32 %v10415, %v10415
    %v10896 = vmul.f32 %v10416, %v10416
    %v10897 = vmul.f32 %v10417, %v10417
    %v10898 = vmul.f32 %v10418, %v10418
    %v10899 = vmul.f32 %v10419, %v10419
    %v10900 = vmul.f32 %v10420, %v10420
    %v10901 = vmul.f32 %v10421, %v10421
    %v10902 = vmul.f32 %v10422, %v10422
    %v10903 = vmul.f32 %v10423, %v10423
    %v10904 = vmul.f32 %v10424, %v10424
    %v10905 = vmul.f32 %v10425, %v10425
    %v10906 = vmul.f32 %v10426, %v10426
    %v10907 = vmul.f32 %v10427, %v10427
    %v10908 = vmul.f32 %v10428, %v10428
    %v10909 = vmul.f32 %v10429, %v10429
    %v10910 = vmul.f32 %v10430, %v10430
    %v10911 = vmul.f32 %v10431, %v10431
    %v10912 = vmul.f32 %v10432, %v10432
    %v10913 = vmul.f32 %v10433, %v10433
    %v10914 = vmul.f32 %v10434, %v10434
    %v10915 = vmul.f32 %v10435, %v10435
    %v10916 = vmul.f32 %v10436, %v10436
    %v10917 = vmul.f32 %v10437, %v10437
    %v10918 = vmul.f32 %v10438, %v10438
    %v10919 = vmul.f32 %v10439, %v10439
    %v10920 = vmul.f32 %v10440, %v10440
    %v10921 = vmul.f32 %v10441, %v10441
    %v10922 = vmul.f32 %v10442, %v10442
    %v10923 = vmul.f32 %v10443, %v10443
    %v10924 = vmul.f32 %v10444, %v10444
    %v10925 = vmul.f32 %v10445, %v10445
    %v10926 = vmul.f32 %v10446, %v10446
    %v10927 = vmul.f32 %v10447, %v10447
    %v10928 = vmul.f32 %v10448, %v10448
    %v10929 = vmul.f32 %v10449, %v10449
    %v10930 = vmul.f32 %v10450, %v10450
    %v10931 = vmul.f32 %v10451, %v10451
    %v10932 = vmul.f32 %v10452, %v10452
    %v10933 = vmul.f32 %v10453, %v10453
    %v10934 = vmul.f32 %v10454, %v10454
    %v10935 = vmul.f32 %v10455, %v10455
    %v10936 = vmul.f32 %v10456, %v10456
    %v10937 = vmul.f32 %v10457, %v10457
    %v10938 = vmul.f32 %v10458, %v10458
    %v10939 = vmul.f32 %v10459, %v10459
    %v10940 = vmul.f32 %v10460, %v10460
    %v10941 = vmul.f32 %v10461, %v10461
    %v10942 = vmul.f32 %v10462, %v10462
    %v10943 = vmul.f32 %v10463, %v10463
    %v10944 = vmul.f32 %v10464, %v10464
    %v10945 = vmul.f32 %v10465, %v10465
    %v10946 = vmul.f32 %v10466, %v10466
    %v10947 = vmul.f32 %v10467, %v10467
    %v10948 = vmul.f32 %v10468, %v10468
    %v10949 = vmul.f32 %v10469, %v10469
    %v10950 = vmul.f32 %v10470, %v10470
    %v10951 = vmul.f32 %v10471, %v10471
    %v10952 = vmul.f32 %v10472, %v10472
    %v10953 = vmul.f32 %v10473, %v10473
    %v10954 = vmul.f32 %v10474, %v10474
    %v10955 = vmul.f32 %v10475, %v10475
    %v10956 = vmul.f32 %v10476, %v10476
    %v10957 = vmul.f32 %v10477, %v10477
    %v10958 = vmul.f32 %v10478, %v10478
    %v10959 = vmul.f32 %v10479, %v10479
    %v10960 = vmul.f32 %v10480, %v10480
    %v10961 = vmul.f32 %v10481, %v10481
    %v10962 = vmul.f32 %v10482, %v10482
    %v10963 = vmul.f32 %v10483, %v10483
    %v10964 = vmul.f32 %v10484, %v10484
    %v10965 = vmul.f32 %v10485, %v10485
    %v10966 = vmul.f32 %v10486, %v10486
    %v10967 = vmul.f32 %v10487, %v10487
    %v10968 = vmul.f32 %v10488, %v10488
    %v10969 = vmul.f32 %v10489, %v10489
    %v10970 = vmul.f32 %v10490, %v10490
    %v10971 = vmul.f32 %v10491, %v10491
    %v10972 = vmul.f32 %v10492, %v10492
    %v10973 = vmul.f32 %v10493, %v10493
    %v10974 = vmul.f32 %v10494, %v10494
    %v10975 = vmul.f32 %v10495, %v10495
    %v10976 = vmul.f32 %v10496, %v10496
    %v10977 = vmul.f32 %v10497, %v10497
    %v10978 = vmul.f32 %v10498, %v10498
    %v10979 = vmul.f32 %v10499, %v10499
    %v10980 = vmul.f32 %v10500, %v10500
    %v10981 = vmul.f32 %v10501, %v10501
    %v10982 = vmul.f32 %v10502, %v10502
    %v10983 = vmul.f32 %v10503, %v10503
    %v10984 = vmul.f32 %v10504, %v10504
    %v10985 = vmul.f32 %v10505, %v10505
    %v10986 = vmul.f32 %v10506, %v10506
    %v10987 = vmul.f32 %v10507, %v10507
    %v10988 = vmul.f32 %v10508, %v10508
    %v10989 = vmul.f32 %v10509, %v10509
    %v10990 = vmul.f32 %v10510, %v10510
    %v10991 = vmul.f32 %v10511, %v10511
    %v10992 = vmul.f32 %v10512, %v10512
    %v10993 = vmul.f32 %v10513, %v10513
    %v10994 = vmul.f32 %v10514, %v10514
    %v10995 = vmul.f32 %v10515, %v10515
    %v10996 = vmul.f32 %v10516, %v10516
    %v10997 = vmul.f32 %v10517, %v10517
    %v10998 = vmul.f32 %v10518, %v10518
    %v10999 = vmul.f32 %v10519, %v10519
    %v11000 = vsel %vm8067, %v10520, 0.0
    %v11001 = vsel %vm8067, %v10525, 0.0
    %v11002 = vadd.f32 %v11000, %v11001
    %v11003 = vsel %vm8067, %v10530, 0.0
    %v11004 = vadd.f32 %v11002, %v11003
    %v11005 = vsel %vm8067, %v10535, 0.0
    %v11006 = vadd.f32 %v11004, %v11005
    %v11007 = vsel %vm8067, %v10540, 0.0
    %v11008 = vadd.f32 %v11006, %v11007
    %v11009 = vsel %vm8067, %v10545, 0.0
    %v11010 = vadd.f32 %v11008, %v11009
    %v11011 = vsel %vm8067, %v10550, 0.0
    %v11012 = vadd.f32 %v11010, %v11011
    %v11013 = vsel %vm8067, %v10555, 0.0
    %v11014 = vadd.f32 %v11012, %v11013
    %v11015 = vsel %vm8067, %v10560, 0.0
    %v11016 = vadd.f32 %v11014, %v11015
    %v11017 = vsel %vm8067, %v10565, 0.0
    %v11018 = vadd.f32 %v11016, %v11017
    %v11019 = vsel %vm8067, %v10570, 0.0
    %v11020 = vadd.f32 %v11018, %v11019
    %v11021 = vsel %vm8067, %v10575, 0.0
    %v11022 = vadd.f32 %v11020, %v11021
    %v11023 = vsel %vm8067, %v10580, 0.0
    %v11024 = vadd.f32 %v11022, %v11023
    %v11025 = vsel %vm8067, %v10585, 0.0
    %v11026 = vadd.f32 %v11024, %v11025
    %v11027 = vsel %vm8067, %v10590, 0.0
    %v11028 = vadd.f32 %v11026, %v11027
    %v11029 = vsel %vm8067, %v10595, 0.0
    %v11030 = vadd.f32 %v11028, %v11029
    %v11031 = vsel %vm8067, %v10600, 0.0
    %v11032 = vadd.f32 %v11030, %v11031
    %v11033 = vsel %vm8067, %v10605, 0.0
    %v11034 = vadd.f32 %v11032, %v11033
    %v11035 = vsel %vm8067, %v10610, 0.0
    %v11036 = vadd.f32 %v11034, %v11035
    %v11037 = vsel %vm8067, %v10615, 0.0
    %v11038 = vadd.f32 %v11036, %v11037
    %v11039 = vsel %vm8067, %v10620, 0.0
    %v11040 = vadd.f32 %v11038, %v11039
    %v11041 = vsel %vm8067, %v10625, 0.0
    %v11042 = vadd.f32 %v11040, %v11041
    %v11043 = vsel %vm8067, %v10630, 0.0
    %v11044 = vadd.f32 %v11042, %v11043
    %v11045 = vsel %vm8067, %v10635, 0.0
    %v11046 = vadd.f32 %v11044, %v11045
    %v11047 = vsel %vm8067, %v10640, 0.0
    %v11048 = vadd.f32 %v11046, %v11047
    %v11049 = vsel %vm8067, %v10645, 0.0
    %v11050 = vadd.f32 %v11048, %v11049
    %v11051 = vsel %vm8067, %v10650, 0.0
    %v11052 = vadd.f32 %v11050, %v11051
    %v11053 = vsel %vm8067, %v10655, 0.0
    %v11054 = vadd.f32 %v11052, %v11053
    %v11055 = vsel %vm8067, %v10660, 0.0
    %v11056 = vadd.f32 %v11054, %v11055
    %v11057 = vsel %vm8067, %v10665, 0.0
    %v11058 = vadd.f32 %v11056, %v11057
    %v11059 = vsel %vm8067, %v10670, 0.0
    %v11060 = vadd.f32 %v11058, %v11059
    %v11061 = vsel %vm8067, %v10675, 0.0
    %v11062 = vadd.f32 %v11060, %v11061
    %v11063 = vsel %vm8067, %v10680, 0.0
    %v11064 = vadd.f32 %v11062, %v11063
    %v11065 = vsel %vm8067, %v10685, 0.0
    %v11066 = vadd.f32 %v11064, %v11065
    %v11067 = vsel %vm8067, %v10690, 0.0
    %v11068 = vadd.f32 %v11066, %v11067
    %v11069 = vsel %vm8067, %v10695, 0.0
    %v11070 = vadd.f32 %v11068, %v11069
    %v11071 = vsel %vm8067, %v10700, 0.0
    %v11072 = vadd.f32 %v11070, %v11071
    %v11073 = vsel %vm8067, %v10705, 0.0
    %v11074 = vadd.f32 %v11072, %v11073
    %v11075 = vsel %vm8067, %v10710, 0.0
    %v11076 = vadd.f32 %v11074, %v11075
    %v11077 = vsel %vm8067, %v10715, 0.0
    %v11078 = vadd.f32 %v11076, %v11077
    %v11079 = vsel %vm8067, %v10720, 0.0
    %v11080 = vadd.f32 %v11078, %v11079
    %v11081 = vsel %vm8067, %v10725, 0.0
    %v11082 = vadd.f32 %v11080, %v11081
    %v11083 = vsel %vm8067, %v10730, 0.0
    %v11084 = vadd.f32 %v11082, %v11083
    %v11085 = vsel %vm8067, %v10735, 0.0
    %v11086 = vadd.f32 %v11084, %v11085
    %v11087 = vsel %vm8067, %v10740, 0.0
    %v11088 = vadd.f32 %v11086, %v11087
    %v11089 = vsel %vm8067, %v10745, 0.0
    %v11090 = vadd.f32 %v11088, %v11089
    %v11091 = vsel %vm8067, %v10750, 0.0
    %v11092 = vadd.f32 %v11090, %v11091
    %v11093 = vsel %vm8067, %v10755, 0.0
    %v11094 = vadd.f32 %v11092, %v11093
    %v11095 = vsel %vm8067, %v10760, 0.0
    %v11096 = vadd.f32 %v11094, %v11095
    %v11097 = vsel %vm8067, %v10765, 0.0
    %v11098 = vadd.f32 %v11096, %v11097
    %v11099 = vsel %vm8067, %v10770, 0.0
    %v11100 = vadd.f32 %v11098, %v11099
    %v11101 = vsel %vm8067, %v10775, 0.0
    %v11102 = vadd.f32 %v11100, %v11101
    %v11103 = vsel %vm8067, %v10780, 0.0
    %v11104 = vadd.f32 %v11102, %v11103
    %v11105 = vsel %vm8067, %v10785, 0.0
    %v11106 = vadd.f32 %v11104, %v11105
    %v11107 = vsel %vm8067, %v10790, 0.0
    %v11108 = vadd.f32 %v11106, %v11107
    %v11109 = vsel %vm8067, %v10795, 0.0
    %v11110 = vadd.f32 %v11108, %v11109
    %v11111 = vsel %vm8067, %v10800, 0.0
    %v11112 = vadd.f32 %v11110, %v11111
    %v11113 = vsel %vm8067, %v10805, 0.0
    %v11114 = vadd.f32 %v11112, %v11113
    %v11115 = vsel %vm8067, %v10810, 0.0
    %v11116 = vadd.f32 %v11114, %v11115
    %v11117 = vsel %vm8067, %v10815, 0.0
    %v11118 = vadd.f32 %v11116, %v11117
    %v11119 = vsel %vm8067, %v10820, 0.0
    %v11120 = vadd.f32 %v11118, %v11119
    %v11121 = vsel %vm8067, %v10825, 0.0
    %v11122 = vadd.f32 %v11120, %v11121
    %v11123 = vsel %vm8067, %v10830, 0.0
    %v11124 = vadd.f32 %v11122, %v11123
    %v11125 = vsel %vm8067, %v10835, 0.0
    %v11126 = vadd.f32 %v11124, %v11125
    %v11127 = vsel %vm8067, %v10840, 0.0
    %v11128 = vadd.f32 %v11126, %v11127
    %v11129 = vsel %vm8067, %v10845, 0.0
    %v11130 = vadd.f32 %v11128, %v11129
    %v11131 = vsel %vm8067, %v10850, 0.0
    %v11132 = vadd.f32 %v11130, %v11131
    %v11133 = vsel %vm8067, %v10855, 0.0
    %v11134 = vadd.f32 %v11132, %v11133
    %v11135 = vsel %vm8067, %v10860, 0.0
    %v11136 = vadd.f32 %v11134, %v11135
    %v11137 = vsel %vm8067, %v10865, 0.0
    %v11138 = vadd.f32 %v11136, %v11137
    %v11139 = vsel %vm8067, %v10870, 0.0
    %v11140 = vadd.f32 %v11138, %v11139
    %v11141 = vsel %vm8067, %v10875, 0.0
    %v11142 = vadd.f32 %v11140, %v11141
    %v11143 = vsel %vm8067, %v10880, 0.0
    %v11144 = vadd.f32 %v11142, %v11143
    %v11145 = vsel %vm8067, %v10885, 0.0
    %v11146 = vadd.f32 %v11144, %v11145
    %v11147 = vsel %vm8067, %v10890, 0.0
    %v11148 = vadd.f32 %v11146, %v11147
    %v11149 = vsel %vm8067, %v10895, 0.0
    %v11150 = vadd.f32 %v11148, %v11149
    %v11151 = vsel %vm8067, %v10900, 0.0
    %v11152 = vadd.f32 %v11150, %v11151
    %v11153 = vsel %vm8067, %v10905, 0.0
    %v11154 = vadd.f32 %v11152, %v11153
    %v11155 = vsel %vm8067, %v10910, 0.0
    %v11156 = vadd.f32 %v11154, %v11155
    %v11157 = vsel %vm8067, %v10915, 0.0
    %v11158 = vadd.f32 %v11156, %v11157
    %v11159 = vsel %vm8067, %v10920, 0.0
    %v11160 = vadd.f32 %v11158, %v11159
    %v11161 = vsel %vm8067, %v10925, 0.0
    %v11162 = vadd.f32 %v11160, %v11161
    %v11163 = vsel %vm8067, %v10930, 0.0
    %v11164 = vadd.f32 %v11162, %v11163
    %v11165 = vsel %vm8067, %v10935, 0.0
    %v11166 = vadd.f32 %v11164, %v11165
    %v11167 = vsel %vm8067, %v10940, 0.0
    %v11168 = vadd.f32 %v11166, %v11167
    %v11169 = vsel %vm8067, %v10945, 0.0
    %v11170 = vadd.f32 %v11168, %v11169
    %v11171 = vsel %vm8067, %v10950, 0.0
    %v11172 = vadd.f32 %v11170, %v11171
    %v11173 = vsel %vm8067, %v10955, 0.0
    %v11174 = vadd.f32 %v11172, %v11173
    %v11175 = vsel %vm8067, %v10960, 0.0
    %v11176 = vadd.f32 %v11174, %v11175
    %v11177 = vsel %vm8067, %v10965, 0.0
    %v11178 = vadd.f32 %v11176, %v11177
    %v11179 = vsel %vm8067, %v10970, 0.0
    %v11180 = vadd.f32 %v11178, %v11179
    %v11181 = vsel %vm8067, %v10975, 0.0
    %v11182 = vadd.f32 %v11180, %v11181
    %v11183 = vsel %vm8067, %v10980, 0.0
    %v11184 = vadd.f32 %v11182, %v11183
    %v11185 = vsel %vm8067, %v10985, 0.0
    %v11186 = vadd.f32 %v11184, %v11185
    %v11187 = vsel %vm8067, %v10990, 0.0
    %v11188 = vadd.f32 %v11186, %v11187
    %v11189 = vsel %vm8067, %v10995, 0.0
    %v11190 = vadd.f32 %v11188, %v11189
    %v11191 = vsel %vm8067, %v10521, 0.0
    %v11192 = vsel %vm8067, %v10526, 0.0
    %v11193 = vadd.f32 %v11191, %v11192
    %v11194 = vsel %vm8067, %v10531, 0.0
    %v11195 = vadd.f32 %v11193, %v11194
    %v11196 = vsel %vm8067, %v10536, 0.0
    %v11197 = vadd.f32 %v11195, %v11196
    %v11198 = vsel %vm8067, %v10541, 0.0
    %v11199 = vadd.f32 %v11197, %v11198
    %v11200 = vsel %vm8067, %v10546, 0.0
    %v11201 = vadd.f32 %v11199, %v11200
    %v11202 = vsel %vm8067, %v10551, 0.0
    %v11203 = vadd.f32 %v11201, %v11202
    %v11204 = vsel %vm8067, %v10556, 0.0
    %v11205 = vadd.f32 %v11203, %v11204
    %v11206 = vsel %vm8067, %v10561, 0.0
    %v11207 = vadd.f32 %v11205, %v11206
    %v11208 = vsel %vm8067, %v10566, 0.0
    %v11209 = vadd.f32 %v11207, %v11208
    %v11210 = vsel %vm8067, %v10571, 0.0
    %v11211 = vadd.f32 %v11209, %v11210
    %v11212 = vsel %vm8067, %v10576, 0.0
    %v11213 = vadd.f32 %v11211, %v11212
    %v11214 = vsel %vm8067, %v10581, 0.0
    %v11215 = vadd.f32 %v11213, %v11214
    %v11216 = vsel %vm8067, %v10586, 0.0
    %v11217 = vadd.f32 %v11215, %v11216
    %v11218 = vsel %vm8067, %v10591, 0.0
    %v11219 = vadd.f32 %v11217, %v11218
    %v11220 = vsel %vm8067, %v10596, 0.0
    %v11221 = vadd.f32 %v11219, %v11220
    %v11222 = vsel %vm8067, %v10601, 0.0
    %v11223 = vadd.f32 %v11221, %v11222
    %v11224 = vsel %vm8067, %v10606, 0.0
    %v11225 = vadd.f32 %v11223, %v11224
    %v11226 = vsel %vm8067, %v10611, 0.0
    %v11227 = vadd.f32 %v11225, %v11226
    %v11228 = vsel %vm8067, %v10616, 0.0
    %v11229 = vadd.f32 %v11227, %v11228
    %v11230 = vsel %vm8067, %v10621, 0.0
    %v11231 = vadd.f32 %v11229, %v11230
    %v11232 = vsel %vm8067, %v10626, 0.0
    %v11233 = vadd.f32 %v11231, %v11232
    %v11234 = vsel %vm8067, %v10631, 0.0
    %v11235 = vadd.f32 %v11233, %v11234
    %v11236 = vsel %vm8067, %v10636, 0.0
    %v11237 = vadd.f32 %v11235, %v11236
    %v11238 = vsel %vm8067, %v10641, 0.0
    %v11239 = vadd.f32 %v11237, %v11238
    %v11240 = vsel %vm8067, %v10646, 0.0
    %v11241 = vadd.f32 %v11239, %v11240
    %v11242 = vsel %vm8067, %v10651, 0.0
    %v11243 = vadd.f32 %v11241, %v11242
    %v11244 = vsel %vm8067, %v10656, 0.0
    %v11245 = vadd.f32 %v11243, %v11244
    %v11246 = vsel %vm8067, %v10661, 0.0
    %v11247 = vadd.f32 %v11245, %v11246
    %v11248 = vsel %vm8067, %v10666, 0.0
    %v11249 = vadd.f32 %v11247, %v11248
    %v11250 = vsel %vm8067, %v10671, 0.0
    %v11251 = vadd.f32 %v11249, %v11250
    %v11252 = vsel %vm8067, %v10676, 0.0
    %v11253 = vadd.f32 %v11251, %v11252
    %v11254 = vsel %vm8067, %v10681, 0.0
    %v11255 = vadd.f32 %v11253, %v11254
    %v11256 = vsel %vm8067, %v10686, 0.0
    %v11257 = vadd.f32 %v11255, %v11256
    %v11258 = vsel %vm8067, %v10691, 0.0
    %v11259 = vadd.f32 %v11257, %v11258
    %v11260 = vsel %vm8067, %v10696, 0.0
    %v11261 = vadd.f32 %v11259, %v11260
    %v11262 = vsel %vm8067, %v10701, 0.0
    %v11263 = vadd.f32 %v11261, %v11262
    %v11264 = vsel %vm8067, %v10706, 0.0
    %v11265 = vadd.f32 %v11263, %v11264
    %v11266 = vsel %vm8067, %v10711, 0.0
    %v11267 = vadd.f32 %v11265, %v11266
    %v11268 = vsel %vm8067, %v10716, 0.0
    %v11269 = vadd.f32 %v11267, %v11268
    %v11270 = vsel %vm8067, %v10721, 0.0
    %v11271 = vadd.f32 %v11269, %v11270
    %v11272 = vsel %vm8067, %v10726, 0.0
    %v11273 = vadd.f32 %v11271, %v11272
    %v11274 = vsel %vm8067, %v10731, 0.0
    %v11275 = vadd.f32 %v11273, %v11274
    %v11276 = vsel %vm8067, %v10736, 0.0
    %v11277 = vadd.f32 %v11275, %v11276
    %v11278 = vsel %vm8067, %v10741, 0.0
    %v11279 = vadd.f32 %v11277, %v11278
    %v11280 = vsel %vm8067, %v10746, 0.0
    %v11281 = vadd.f32 %v11279, %v11280
    %v11282 = vsel %vm8067, %v10751, 0.0
    %v11283 = vadd.f32 %v11281, %v11282
    %v11284 = vsel %vm8067, %v10756, 0.0
    %v11285 = vadd.f32 %v11283, %v11284
    %v11286 = vsel %vm8067, %v10761, 0.0
    %v11287 = vadd.f32 %v11285, %v11286
    %v11288 = vsel %vm8067, %v10766, 0.0
    %v11289 = vadd.f32 %v11287, %v11288
    %v11290 = vsel %vm8067, %v10771, 0.0
    %v11291 = vadd.f32 %v11289, %v11290
    %v11292 = vsel %vm8067, %v10776, 0.0
    %v11293 = vadd.f32 %v11291, %v11292
    %v11294 = vsel %vm8067, %v10781, 0.0
    %v11295 = vadd.f32 %v11293, %v11294
    %v11296 = vsel %vm8067, %v10786, 0.0
    %v11297 = vadd.f32 %v11295, %v11296
    %v11298 = vsel %vm8067, %v10791, 0.0
    %v11299 = vadd.f32 %v11297, %v11298
    %v11300 = vsel %vm8067, %v10796, 0.0
    %v11301 = vadd.f32 %v11299, %v11300
    %v11302 = vsel %vm8067, %v10801, 0.0
    %v11303 = vadd.f32 %v11301, %v11302
    %v11304 = vsel %vm8067, %v10806, 0.0
    %v11305 = vadd.f32 %v11303, %v11304
    %v11306 = vsel %vm8067, %v10811, 0.0
    %v11307 = vadd.f32 %v11305, %v11306
    %v11308 = vsel %vm8067, %v10816, 0.0
    %v11309 = vadd.f32 %v11307, %v11308
    %v11310 = vsel %vm8067, %v10821, 0.0
    %v11311 = vadd.f32 %v11309, %v11310
    %v11312 = vsel %vm8067, %v10826, 0.0
    %v11313 = vadd.f32 %v11311, %v11312
    %v11314 = vsel %vm8067, %v10831, 0.0
    %v11315 = vadd.f32 %v11313, %v11314
    %v11316 = vsel %vm8067, %v10836, 0.0
    %v11317 = vadd.f32 %v11315, %v11316
    %v11318 = vsel %vm8067, %v10841, 0.0
    %v11319 = vadd.f32 %v11317, %v11318
    %v11320 = vsel %vm8067, %v10846, 0.0
    %v11321 = vadd.f32 %v11319, %v11320
    %v11322 = vsel %vm8067, %v10851, 0.0
    %v11323 = vadd.f32 %v11321, %v11322
    %v11324 = vsel %vm8067, %v10856, 0.0
    %v11325 = vadd.f32 %v11323, %v11324
    %v11326 = vsel %vm8067, %v10861, 0.0
    %v11327 = vadd.f32 %v11325, %v11326
    %v11328 = vsel %vm8067, %v10866, 0.0
    %v11329 = vadd.f32 %v11327, %v11328
    %v11330 = vsel %vm8067, %v10871, 0.0
    %v11331 = vadd.f32 %v11329, %v11330
    %v11332 = vsel %vm8067, %v10876, 0.0
    %v11333 = vadd.f32 %v11331, %v11332
    %v11334 = vsel %vm8067, %v10881, 0.0
    %v11335 = vadd.f32 %v11333, %v11334
    %v11336 = vsel %vm8067, %v10886, 0.0
    %v11337 = vadd.f32 %v11335, %v11336
    %v11338 = vsel %vm8067, %v10891, 0.0
    %v11339 = vadd.f32 %v11337, %v11338
    %v11340 = vsel %vm8067, %v10896, 0.0
    %v11341 = vadd.f32 %v11339, %v11340
    %v11342 = vsel %vm8067, %v10901, 0.0
    %v11343 = vadd.f32 %v11341, %v11342
    %v11344 = vsel %vm8067, %v10906, 0.0
    %v11345 = vadd.f32 %v11343, %v11344
    %v11346 = vsel %vm8067, %v10911, 0.0
    %v11347 = vadd.f32 %v11345, %v11346
    %v11348 = vsel %vm8067, %v10916, 0.0
    %v11349 = vadd.f32 %v11347, %v11348
    %v11350 = vsel %vm8067, %v10921, 0.0
    %v11351 = vadd.f32 %v11349, %v11350
    %v11352 = vsel %vm8067, %v10926, 0.0
    %v11353 = vadd.f32 %v11351, %v11352
    %v11354 = vsel %vm8067, %v10931, 0.0
    %v11355 = vadd.f32 %v11353, %v11354
    %v11356 = vsel %vm8067, %v10936, 0.0
    %v11357 = vadd.f32 %v11355, %v11356
    %v11358 = vsel %vm8067, %v10941, 0.0
    %v11359 = vadd.f32 %v11357, %v11358
    %v11360 = vsel %vm8067, %v10946, 0.0
    %v11361 = vadd.f32 %v11359, %v11360
    %v11362 = vsel %vm8067, %v10951, 0.0
    %v11363 = vadd.f32 %v11361, %v11362
    %v11364 = vsel %vm8067, %v10956, 0.0
    %v11365 = vadd.f32 %v11363, %v11364
    %v11366 = vsel %vm8067, %v10961, 0.0
    %v11367 = vadd.f32 %v11365, %v11366
    %v11368 = vsel %vm8067, %v10966, 0.0
    %v11369 = vadd.f32 %v11367, %v11368
    %v11370 = vsel %vm8067, %v10971, 0.0
    %v11371 = vadd.f32 %v11369, %v11370
    %v11372 = vsel %vm8067, %v10976, 0.0
    %v11373 = vadd.f32 %v11371, %v11372
    %v11374 = vsel %vm8067, %v10981, 0.0
    %v11375 = vadd.f32 %v11373, %v11374
    %v11376 = vsel %vm8067, %v10986, 0.0
    %v11377 = vadd.f32 %v11375, %v11376
    %v11378 = vsel %vm8067, %v10991, 0.0
    %v11379 = vadd.f32 %v11377, %v11378
    %v11380 = vsel %vm8067, %v10996, 0.0
    %v11381 = vadd.f32 %v11379, %v11380
    %v11382 = vsel %vm8067, %v10522, 0.0
    %v11383 = vsel %vm8067, %v10527, 0.0
    %v11384 = vadd.f32 %v11382, %v11383
    %v11385 = vsel %vm8067, %v10532, 0.0
    %v11386 = vadd.f32 %v11384, %v11385
    %v11387 = vsel %vm8067, %v10537, 0.0
    %v11388 = vadd.f32 %v11386, %v11387
    %v11389 = vsel %vm8067, %v10542, 0.0
    %v11390 = vadd.f32 %v11388, %v11389
    %v11391 = vsel %vm8067, %v10547, 0.0
    %v11392 = vadd.f32 %v11390, %v11391
    %v11393 = vsel %vm8067, %v10552, 0.0
    %v11394 = vadd.f32 %v11392, %v11393
    %v11395 = vsel %vm8067, %v10557, 0.0
    %v11396 = vadd.f32 %v11394, %v11395
    %v11397 = vsel %vm8067, %v10562, 0.0
    %v11398 = vadd.f32 %v11396, %v11397
    %v11399 = vsel %vm8067, %v10567, 0.0
    %v11400 = vadd.f32 %v11398, %v11399
    %v11401 = vsel %vm8067, %v10572, 0.0
    %v11402 = vadd.f32 %v11400, %v11401
    %v11403 = vsel %vm8067, %v10577, 0.0
    %v11404 = vadd.f32 %v11402, %v11403
    %v11405 = vsel %vm8067, %v10582, 0.0
    %v11406 = vadd.f32 %v11404, %v11405
    %v11407 = vsel %vm8067, %v10587, 0.0
    %v11408 = vadd.f32 %v11406, %v11407
    %v11409 = vsel %vm8067, %v10592, 0.0
    %v11410 = vadd.f32 %v11408, %v11409
    %v11411 = vsel %vm8067, %v10597, 0.0
    %v11412 = vadd.f32 %v11410, %v11411
    %v11413 = vsel %vm8067, %v10602, 0.0
    %v11414 = vadd.f32 %v11412, %v11413
    %v11415 = vsel %vm8067, %v10607, 0.0
    %v11416 = vadd.f32 %v11414, %v11415
    %v11417 = vsel %vm8067, %v10612, 0.0
    %v11418 = vadd.f32 %v11416, %v11417
    %v11419 = vsel %vm8067, %v10617, 0.0
    %v11420 = vadd.f32 %v11418, %v11419
    %v11421 = vsel %vm8067, %v10622, 0.0
    %v11422 = vadd.f32 %v11420, %v11421
    %v11423 = vsel %vm8067, %v10627, 0.0
    %v11424 = vadd.f32 %v11422, %v11423
    %v11425 = vsel %vm8067, %v10632, 0.0
    %v11426 = vadd.f32 %v11424, %v11425
    %v11427 = vsel %vm8067, %v10637, 0.0
    %v11428 = vadd.f32 %v11426, %v11427
    %v11429 = vsel %vm8067, %v10642, 0.0
    %v11430 = vadd.f32 %v11428, %v11429
    %v11431 = vsel %vm8067, %v10647, 0.0
    %v11432 = vadd.f32 %v11430, %v11431
    %v11433 = vsel %vm8067, %v10652, 0.0
    %v11434 = vadd.f32 %v11432, %v11433
    %v11435 = vsel %vm8067, %v10657, 0.0
    %v11436 = vadd.f32 %v11434, %v11435
    %v11437 = vsel %vm8067, %v10662, 0.0
    %v11438 = vadd.f32 %v11436, %v11437
    %v11439 = vsel %vm8067, %v10667, 0.0
    %v11440 = vadd.f32 %v11438, %v11439
    %v11441 = vsel %vm8067, %v10672, 0.0
    %v11442 = vadd.f32 %v11440, %v11441
    %v11443 = vsel %vm8067, %v10677, 0.0
    %v11444 = vadd.f32 %v11442, %v11443
    %v11445 = vsel %vm8067, %v10682, 0.0
    %v11446 = vadd.f32 %v11444, %v11445
    %v11447 = vsel %vm8067, %v10687, 0.0
    %v11448 = vadd.f32 %v11446, %v11447
    %v11449 = vsel %vm8067, %v10692, 0.0
    %v11450 = vadd.f32 %v11448, %v11449
    %v11451 = vsel %vm8067, %v10697, 0.0
    %v11452 = vadd.f32 %v11450, %v11451
    %v11453 = vsel %vm8067, %v10702, 0.0
    %v11454 = vadd.f32 %v11452, %v11453
    %v11455 = vsel %vm8067, %v10707, 0.0
    %v11456 = vadd.f32 %v11454, %v11455
    %v11457 = vsel %vm8067, %v10712, 0.0
    %v11458 = vadd.f32 %v11456, %v11457
    %v11459 = vsel %vm8067, %v10717, 0.0
    %v11460 = vadd.f32 %v11458, %v11459
    %v11461 = vsel %vm8067, %v10722, 0.0
    %v11462 = vadd.f32 %v11460, %v11461
    %v11463 = vsel %vm8067, %v10727, 0.0
    %v11464 = vadd.f32 %v11462, %v11463
    %v11465 = vsel %vm8067, %v10732, 0.0
    %v11466 = vadd.f32 %v11464, %v11465
    %v11467 = vsel %vm8067, %v10737, 0.0
    %v11468 = vadd.f32 %v11466, %v11467
    %v11469 = vsel %vm8067, %v10742, 0.0
    %v11470 = vadd.f32 %v11468, %v11469
    %v11471 = vsel %vm8067, %v10747, 0.0
    %v11472 = vadd.f32 %v11470, %v11471
    %v11473 = vsel %vm8067, %v10752, 0.0
    %v11474 = vadd.f32 %v11472, %v11473
    %v11475 = vsel %vm8067, %v10757, 0.0
    %v11476 = vadd.f32 %v11474, %v11475
    %v11477 = vsel %vm8067, %v10762, 0.0
    %v11478 = vadd.f32 %v11476, %v11477
    %v11479 = vsel %vm8067, %v10767, 0.0
    %v11480 = vadd.f32 %v11478, %v11479
    %v11481 = vsel %vm8067, %v10772, 0.0
    %v11482 = vadd.f32 %v11480, %v11481
    %v11483 = vsel %vm8067, %v10777, 0.0
    %v11484 = vadd.f32 %v11482, %v11483
    %v11485 = vsel %vm8067, %v10782, 0.0
    %v11486 = vadd.f32 %v11484, %v11485
    %v11487 = vsel %vm8067, %v10787, 0.0
    %v11488 = vadd.f32 %v11486, %v11487
    %v11489 = vsel %vm8067, %v10792, 0.0
    %v11490 = vadd.f32 %v11488, %v11489
    %v11491 = vsel %vm8067, %v10797, 0.0
    %v11492 = vadd.f32 %v11490, %v11491
    %v11493 = vsel %vm8067, %v10802, 0.0
    %v11494 = vadd.f32 %v11492, %v11493
    %v11495 = vsel %vm8067, %v10807, 0.0
    %v11496 = vadd.f32 %v11494, %v11495
    %v11497 = vsel %vm8067, %v10812, 0.0
    %v11498 = vadd.f32 %v11496, %v11497
    %v11499 = vsel %vm8067, %v10817, 0.0
    %v11500 = vadd.f32 %v11498, %v11499
    %v11501 = vsel %vm8067, %v10822, 0.0
    %v11502 = vadd.f32 %v11500, %v11501
    %v11503 = vsel %vm8067, %v10827, 0.0
    %v11504 = vadd.f32 %v11502, %v11503
    %v11505 = vsel %vm8067, %v10832, 0.0
    %v11506 = vadd.f32 %v11504, %v11505
    %v11507 = vsel %vm8067, %v10837, 0.0
    %v11508 = vadd.f32 %v11506, %v11507
    %v11509 = vsel %vm8067, %v10842, 0.0
    %v11510 = vadd.f32 %v11508, %v11509
    %v11511 = vsel %vm8067, %v10847, 0.0
    %v11512 = vadd.f32 %v11510, %v11511
    %v11513 = vsel %vm8067, %v10852, 0.0
    %v11514 = vadd.f32 %v11512, %v11513
    %v11515 = vsel %vm8067, %v10857, 0.0
    %v11516 = vadd.f32 %v11514, %v11515
    %v11517 = vsel %vm8067, %v10862, 0.0
    %v11518 = vadd.f32 %v11516, %v11517
    %v11519 = vsel %vm8067, %v10867, 0.0
    %v11520 = vadd.f32 %v11518, %v11519
    %v11521 = vsel %vm8067, %v10872, 0.0
    %v11522 = vadd.f32 %v11520, %v11521
    %v11523 = vsel %vm8067, %v10877, 0.0
    %v11524 = vadd.f32 %v11522, %v11523
    %v11525 = vsel %vm8067, %v10882, 0.0
    %v11526 = vadd.f32 %v11524, %v11525
    %v11527 = vsel %vm8067, %v10887, 0.0
    %v11528 = vadd.f32 %v11526, %v11527
    %v11529 = vsel %vm8067, %v10892, 0.0
    %v11530 = vadd.f32 %v11528, %v11529
    %v11531 = vsel %vm8067, %v10897, 0.0
    %v11532 = vadd.f32 %v11530, %v11531
    %v11533 = vsel %vm8067, %v10902, 0.0
    %v11534 = vadd.f32 %v11532, %v11533
    %v11535 = vsel %vm8067, %v10907, 0.0
    %v11536 = vadd.f32 %v11534, %v11535
    %v11537 = vsel %vm8067, %v10912, 0.0
    %v11538 = vadd.f32 %v11536, %v11537
    %v11539 = vsel %vm8067, %v10917, 0.0
    %v11540 = vadd.f32 %v11538, %v11539
    %v11541 = vsel %vm8067, %v10922, 0.0
    %v11542 = vadd.f32 %v11540, %v11541
    %v11543 = vsel %vm8067, %v10927, 0.0
    %v11544 = vadd.f32 %v11542, %v11543
    %v11545 = vsel %vm8067, %v10932, 0.0
    %v11546 = vadd.f32 %v11544, %v11545
    %v11547 = vsel %vm8067, %v10937, 0.0
    %v11548 = vadd.f32 %v11546, %v11547
    %v11549 = vsel %vm8067, %v10942, 0.0
    %v11550 = vadd.f32 %v11548, %v11549
    %v11551 = vsel %vm8067, %v10947, 0.0
    %v11552 = vadd.f32 %v11550, %v11551
    %v11553 = vsel %vm8067, %v10952, 0.0
    %v11554 = vadd.f32 %v11552, %v11553
    %v11555 = vsel %vm8067, %v10957, 0.0
    %v11556 = vadd.f32 %v11554, %v11555
    %v11557 = vsel %vm8067, %v10962, 0.0
    %v11558 = vadd.f32 %v11556, %v11557
    %v11559 = vsel %vm8067, %v10967, 0.0
    %v11560 = vadd.f32 %v11558, %v11559
    %v11561 = vsel %vm8067, %v10972, 0.0
    %v11562 = vadd.f32 %v11560, %v11561
    %v11563 = vsel %vm8067, %v10977, 0.0
    %v11564 = vadd.f32 %v11562, %v11563
    %v11565 = vsel %vm8067, %v10982, 0.0
    %v11566 = vadd.f32 %v11564, %v11565
    %v11567 = vsel %vm8067, %v10987, 0.0
    %v11568 = vadd.f32 %v11566, %v11567
    %v11569 = vsel %vm8067, %v10992, 0.0
    %v11570 = vadd.f32 %v11568, %v11569
    %v11571 = vsel %vm8067, %v10997, 0.0
    %v11572 = vadd.f32 %v11570, %v11571
    %v11573 = vsel %vm8067, %v10523, 0.0
    %v11574 = vsel %vm8067, %v10528, 0.0
    %v11575 = vadd.f32 %v11573, %v11574
    %v11576 = vsel %vm8067, %v10533, 0.0
    %v11577 = vadd.f32 %v11575, %v11576
    %v11578 = vsel %vm8067, %v10538, 0.0
    %v11579 = vadd.f32 %v11577, %v11578
    %v11580 = vsel %vm8067, %v10543, 0.0
    %v11581 = vadd.f32 %v11579, %v11580
    %v11582 = vsel %vm8067, %v10548, 0.0
    %v11583 = vadd.f32 %v11581, %v11582
    %v11584 = vsel %vm8067, %v10553, 0.0
    %v11585 = vadd.f32 %v11583, %v11584
    %v11586 = vsel %vm8067, %v10558, 0.0
    %v11587 = vadd.f32 %v11585, %v11586
    %v11588 = vsel %vm8067, %v10563, 0.0
    %v11589 = vadd.f32 %v11587, %v11588
    %v11590 = vsel %vm8067, %v10568, 0.0
    %v11591 = vadd.f32 %v11589, %v11590
    %v11592 = vsel %vm8067, %v10573, 0.0
    %v11593 = vadd.f32 %v11591, %v11592
    %v11594 = vsel %vm8067, %v10578, 0.0
    %v11595 = vadd.f32 %v11593, %v11594
    %v11596 = vsel %vm8067, %v10583, 0.0
    %v11597 = vadd.f32 %v11595, %v11596
    %v11598 = vsel %vm8067, %v10588, 0.0
    %v11599 = vadd.f32 %v11597, %v11598
    %v11600 = vsel %vm8067, %v10593, 0.0
    %v11601 = vadd.f32 %v11599, %v11600
    %v11602 = vsel %vm8067, %v10598, 0.0
    %v11603 = vadd.f32 %v11601, %v11602
    %v11604 = vsel %vm8067, %v10603, 0.0
    %v11605 = vadd.f32 %v11603, %v11604
    %v11606 = vsel %vm8067, %v10608, 0.0
    %v11607 = vadd.f32 %v11605, %v11606
    %v11608 = vsel %vm8067, %v10613, 0.0
    %v11609 = vadd.f32 %v11607, %v11608
    %v11610 = vsel %vm8067, %v10618, 0.0
    %v11611 = vadd.f32 %v11609, %v11610
    %v11612 = vsel %vm8067, %v10623, 0.0
    %v11613 = vadd.f32 %v11611, %v11612
    %v11614 = vsel %vm8067, %v10628, 0.0
    %v11615 = vadd.f32 %v11613, %v11614
    %v11616 = vsel %vm8067, %v10633, 0.0
    %v11617 = vadd.f32 %v11615, %v11616
    %v11618 = vsel %vm8067, %v10638, 0.0
    %v11619 = vadd.f32 %v11617, %v11618
    %v11620 = vsel %vm8067, %v10643, 0.0
    %v11621 = vadd.f32 %v11619, %v11620
    %v11622 = vsel %vm8067, %v10648, 0.0
    %v11623 = vadd.f32 %v11621, %v11622
    %v11624 = vsel %vm8067, %v10653, 0.0
    %v11625 = vadd.f32 %v11623, %v11624
    %v11626 = vsel %vm8067, %v10658, 0.0
    %v11627 = vadd.f32 %v11625, %v11626
    %v11628 = vsel %vm8067, %v10663, 0.0
    %v11629 = vadd.f32 %v11627, %v11628
    %v11630 = vsel %vm8067, %v10668, 0.0
    %v11631 = vadd.f32 %v11629, %v11630
    %v11632 = vsel %vm8067, %v10673, 0.0
    %v11633 = vadd.f32 %v11631, %v11632
    %v11634 = vsel %vm8067, %v10678, 0.0
    %v11635 = vadd.f32 %v11633, %v11634
    %v11636 = vsel %vm8067, %v10683, 0.0
    %v11637 = vadd.f32 %v11635, %v11636
    %v11638 = vsel %vm8067, %v10688, 0.0
    %v11639 = vadd.f32 %v11637, %v11638
    %v11640 = vsel %vm8067, %v10693, 0.0
    %v11641 = vadd.f32 %v11639, %v11640
    %v11642 = vsel %vm8067, %v10698, 0.0
    %v11643 = vadd.f32 %v11641, %v11642
    %v11644 = vsel %vm8067, %v10703, 0.0
    %v11645 = vadd.f32 %v11643, %v11644
    %v11646 = vsel %vm8067, %v10708, 0.0
    %v11647 = vadd.f32 %v11645, %v11646
    %v11648 = vsel %vm8067, %v10713, 0.0
    %v11649 = vadd.f32 %v11647, %v11648
    %v11650 = vsel %vm8067, %v10718, 0.0
    %v11651 = vadd.f32 %v11649, %v11650
    %v11652 = vsel %vm8067, %v10723, 0.0
    %v11653 = vadd.f32 %v11651, %v11652
    %v11654 = vsel %vm8067, %v10728, 0.0
    %v11655 = vadd.f32 %v11653, %v11654
    %v11656 = vsel %vm8067, %v10733, 0.0
    %v11657 = vadd.f32 %v11655, %v11656
    %v11658 = vsel %vm8067, %v10738, 0.0
    %v11659 = vadd.f32 %v11657, %v11658
    %v11660 = vsel %vm8067, %v10743, 0.0
    %v11661 = vadd.f32 %v11659, %v11660
    %v11662 = vsel %vm8067, %v10748, 0.0
    %v11663 = vadd.f32 %v11661, %v11662
    %v11664 = vsel %vm8067, %v10753, 0.0
    %v11665 = vadd.f32 %v11663, %v11664
    %v11666 = vsel %vm8067, %v10758, 0.0
    %v11667 = vadd.f32 %v11665, %v11666
    %v11668 = vsel %vm8067, %v10763, 0.0
    %v11669 = vadd.f32 %v11667, %v11668
    %v11670 = vsel %vm8067, %v10768, 0.0
    %v11671 = vadd.f32 %v11669, %v11670
    %v11672 = vsel %vm8067, %v10773, 0.0
    %v11673 = vadd.f32 %v11671, %v11672
    %v11674 = vsel %vm8067, %v10778, 0.0
    %v11675 = vadd.f32 %v11673, %v11674
    %v11676 = vsel %vm8067, %v10783, 0.0
    %v11677 = vadd.f32 %v11675, %v11676
    %v11678 = vsel %vm8067, %v10788, 0.0
    %v11679 = vadd.f32 %v11677, %v11678
    %v11680 = vsel %vm8067, %v10793, 0.0
    %v11681 = vadd.f32 %v11679, %v11680
    %v11682 = vsel %vm8067, %v10798, 0.0
    %v11683 = vadd.f32 %v11681, %v11682
    %v11684 = vsel %vm8067, %v10803, 0.0
    %v11685 = vadd.f32 %v11683, %v11684
    %v11686 = vsel %vm8067, %v10808, 0.0
    %v11687 = vadd.f32 %v11685, %v11686
    %v11688 = vsel %vm8067, %v10813, 0.0
    %v11689 = vadd.f32 %v11687, %v11688
    %v11690 = vsel %vm8067, %v10818, 0.0
    %v11691 = vadd.f32 %v11689, %v11690
    %v11692 = vsel %vm8067, %v10823, 0.0
    %v11693 = vadd.f32 %v11691, %v11692
    %v11694 = vsel %vm8067, %v10828, 0.0
    %v11695 = vadd.f32 %v11693, %v11694
    %v11696 = vsel %vm8067, %v10833, 0.0
    %v11697 = vadd.f32 %v11695, %v11696
    %v11698 = vsel %vm8067, %v10838, 0.0
    %v11699 = vadd.f32 %v11697, %v11698
    %v11700 = vsel %vm8067, %v10843, 0.0
    %v11701 = vadd.f32 %v11699, %v11700
    %v11702 = vsel %vm8067, %v10848, 0.0
    %v11703 = vadd.f32 %v11701, %v11702
    %v11704 = vsel %vm8067, %v10853, 0.0
    %v11705 = vadd.f32 %v11703, %v11704
    %v11706 = vsel %vm8067, %v10858, 0.0
    %v11707 = vadd.f32 %v11705, %v11706
    %v11708 = vsel %vm8067, %v10863, 0.0
    %v11709 = vadd.f32 %v11707, %v11708
    %v11710 = vsel %vm8067, %v10868, 0.0
    %v11711 = vadd.f32 %v11709, %v11710
    %v11712 = vsel %vm8067, %v10873, 0.0
    %v11713 = vadd.f32 %v11711, %v11712
    %v11714 = vsel %vm8067, %v10878, 0.0
    %v11715 = vadd.f32 %v11713, %v11714
    %v11716 = vsel %vm8067, %v10883, 0.0
    %v11717 = vadd.f32 %v11715, %v11716
    %v11718 = vsel %vm8067, %v10888, 0.0
    %v11719 = vadd.f32 %v11717, %v11718
    %v11720 = vsel %vm8067, %v10893, 0.0
    %v11721 = vadd.f32 %v11719, %v11720
    %v11722 = vsel %vm8067, %v10898, 0.0
    %v11723 = vadd.f32 %v11721, %v11722
    %v11724 = vsel %vm8067, %v10903, 0.0
    %v11725 = vadd.f32 %v11723, %v11724
    %v11726 = vsel %vm8067, %v10908, 0.0
    %v11727 = vadd.f32 %v11725, %v11726
    %v11728 = vsel %vm8067, %v10913, 0.0
    %v11729 = vadd.f32 %v11727, %v11728
    %v11730 = vsel %vm8067, %v10918, 0.0
    %v11731 = vadd.f32 %v11729, %v11730
    %v11732 = vsel %vm8067, %v10923, 0.0
    %v11733 = vadd.f32 %v11731, %v11732
    %v11734 = vsel %vm8067, %v10928, 0.0
    %v11735 = vadd.f32 %v11733, %v11734
    %v11736 = vsel %vm8067, %v10933, 0.0
    %v11737 = vadd.f32 %v11735, %v11736
    %v11738 = vsel %vm8067, %v10938, 0.0
    %v11739 = vadd.f32 %v11737, %v11738
    %v11740 = vsel %vm8067, %v10943, 0.0
    %v11741 = vadd.f32 %v11739, %v11740
    %v11742 = vsel %vm8067, %v10948, 0.0
    %v11743 = vadd.f32 %v11741, %v11742
    %v11744 = vsel %vm8067, %v10953, 0.0
    %v11745 = vadd.f32 %v11743, %v11744
    %v11746 = vsel %vm8067, %v10958, 0.0
    %v11747 = vadd.f32 %v11745, %v11746
    %v11748 = vsel %vm8067, %v10963, 0.0
    %v11749 = vadd.f32 %v11747, %v11748
    %v11750 = vsel %vm8067, %v10968, 0.0
    %v11751 = vadd.f32 %v11749, %v11750
    %v11752 = vsel %vm8067, %v10973, 0.0
    %v11753 = vadd.f32 %v11751, %v11752
    %v11754 = vsel %vm8067, %v10978, 0.0
    %v11755 = vadd.f32 %v11753, %v11754
    %v11756 = vsel %vm8067, %v10983, 0.0
    %v11757 = vadd.f32 %v11755, %v11756
    %v11758 = vsel %vm8067, %v10988, 0.0
    %v11759 = vadd.f32 %v11757, %v11758
    %v11760 = vsel %vm8067, %v10993, 0.0
    %v11761 = vadd.f32 %v11759, %v11760
    %v11762 = vsel %vm8067, %v10998, 0.0
    %v11763 = vadd.f32 %v11761, %v11762
    %vm11764 = vcmask 262144
    %v11765 = vsel %vm11764, %v10524, 0.0
    %v11766 = vsel %vm11764, %v10529, 0.0
    %v11767 = vadd.f32 %v11765, %v11766
    %v11768 = vsel %vm11764, %v10534, 0.0
    %v11769 = vadd.f32 %v11767, %v11768
    %v11770 = vsel %vm11764, %v10539, 0.0
    %v11771 = vadd.f32 %v11769, %v11770
    %v11772 = vsel %vm11764, %v10544, 0.0
    %v11773 = vadd.f32 %v11771, %v11772
    %v11774 = vsel %vm11764, %v10549, 0.0
    %v11775 = vadd.f32 %v11773, %v11774
    %v11776 = vsel %vm11764, %v10554, 0.0
    %v11777 = vadd.f32 %v11775, %v11776
    %v11778 = vsel %vm11764, %v10559, 0.0
    %v11779 = vadd.f32 %v11777, %v11778
    %v11780 = vsel %vm11764, %v10564, 0.0
    %v11781 = vadd.f32 %v11779, %v11780
    %v11782 = vsel %vm11764, %v10569, 0.0
    %v11783 = vadd.f32 %v11781, %v11782
    %v11784 = vsel %vm11764, %v10574, 0.0
    %v11785 = vadd.f32 %v11783, %v11784
    %v11786 = vsel %vm11764, %v10579, 0.0
    %v11787 = vadd.f32 %v11785, %v11786
    %v11788 = vsel %vm11764, %v10584, 0.0
    %v11789 = vadd.f32 %v11787, %v11788
    %v11790 = vsel %vm11764, %v10589, 0.0
    %v11791 = vadd.f32 %v11789, %v11790
    %v11792 = vsel %vm11764, %v10594, 0.0
    %v11793 = vadd.f32 %v11791, %v11792
    %v11794 = vsel %vm11764, %v10599, 0.0
    %v11795 = vadd.f32 %v11793, %v11794
    %v11796 = vsel %vm11764, %v10604, 0.0
    %v11797 = vadd.f32 %v11795, %v11796
    %v11798 = vsel %vm11764, %v10609, 0.0
    %v11799 = vadd.f32 %v11797, %v11798
    %v11800 = vsel %vm11764, %v10614, 0.0
    %v11801 = vadd.f32 %v11799, %v11800
    %v11802 = vsel %vm11764, %v10619, 0.0
    %v11803 = vadd.f32 %v11801, %v11802
    %v11804 = vsel %vm11764, %v10624, 0.0
    %v11805 = vadd.f32 %v11803, %v11804
    %v11806 = vsel %vm11764, %v10629, 0.0
    %v11807 = vadd.f32 %v11805, %v11806
    %v11808 = vsel %vm11764, %v10634, 0.0
    %v11809 = vadd.f32 %v11807, %v11808
    %v11810 = vsel %vm11764, %v10639, 0.0
    %v11811 = vadd.f32 %v11809, %v11810
    %v11812 = vsel %vm11764, %v10644, 0.0
    %v11813 = vadd.f32 %v11811, %v11812
    %v11814 = vsel %vm11764, %v10649, 0.0
    %v11815 = vadd.f32 %v11813, %v11814
    %v11816 = vsel %vm11764, %v10654, 0.0
    %v11817 = vadd.f32 %v11815, %v11816
    %v11818 = vsel %vm11764, %v10659, 0.0
    %v11819 = vadd.f32 %v11817, %v11818
    %v11820 = vsel %vm11764, %v10664, 0.0
    %v11821 = vadd.f32 %v11819, %v11820
    %v11822 = vsel %vm11764, %v10669, 0.0
    %v11823 = vadd.f32 %v11821, %v11822
    %v11824 = vsel %vm11764, %v10674, 0.0
    %v11825 = vadd.f32 %v11823, %v11824
    %v11826 = vsel %vm11764, %v10679, 0.0
    %v11827 = vadd.f32 %v11825, %v11826
    %v11828 = vsel %vm11764, %v10684, 0.0
    %v11829 = vadd.f32 %v11827, %v11828
    %v11830 = vsel %vm11764, %v10689, 0.0
    %v11831 = vadd.f32 %v11829, %v11830
    %v11832 = vsel %vm11764, %v10694, 0.0
    %v11833 = vadd.f32 %v11831, %v11832
    %v11834 = vsel %vm11764, %v10699, 0.0
    %v11835 = vadd.f32 %v11833, %v11834
    %v11836 = vsel %vm11764, %v10704, 0.0
    %v11837 = vadd.f32 %v11835, %v11836
    %v11838 = vsel %vm11764, %v10709, 0.0
    %v11839 = vadd.f32 %v11837, %v11838
    %v11840 = vsel %vm11764, %v10714, 0.0
    %v11841 = vadd.f32 %v11839, %v11840
    %v11842 = vsel %vm11764, %v10719, 0.0
    %v11843 = vadd.f32 %v11841, %v11842
    %v11844 = vsel %vm11764, %v10724, 0.0
    %v11845 = vadd.f32 %v11843, %v11844
    %v11846 = vsel %vm11764, %v10729, 0.0
    %v11847 = vadd.f32 %v11845, %v11846
    %v11848 = vsel %vm11764, %v10734, 0.0
    %v11849 = vadd.f32 %v11847, %v11848
    %v11850 = vsel %vm11764, %v10739, 0.0
    %v11851 = vadd.f32 %v11849, %v11850
    %v11852 = vsel %vm11764, %v10744, 0.0
    %v11853 = vadd.f32 %v11851, %v11852
    %v11854 = vsel %vm11764, %v10749, 0.0
    %v11855 = vadd.f32 %v11853, %v11854
    %v11856 = vsel %vm11764, %v10754, 0.0
    %v11857 = vadd.f32 %v11855, %v11856
    %v11858 = vsel %vm11764, %v10759, 0.0
    %v11859 = vadd.f32 %v11857, %v11858
    %v11860 = vsel %vm11764, %v10764, 0.0
    %v11861 = vadd.f32 %v11859, %v11860
    %v11862 = vsel %vm11764, %v10769, 0.0
    %v11863 = vadd.f32 %v11861, %v11862
    %v11864 = vsel %vm11764, %v10774, 0.0
    %v11865 = vadd.f32 %v11863, %v11864
    %v11866 = vsel %vm11764, %v10779, 0.0
    %v11867 = vadd.f32 %v11865, %v11866
    %v11868 = vsel %vm11764, %v10784, 0.0
    %v11869 = vadd.f32 %v11867, %v11868
    %v11870 = vsel %vm11764, %v10789, 0.0
    %v11871 = vadd.f32 %v11869, %v11870
    %v11872 = vsel %vm11764, %v10794, 0.0
    %v11873 = vadd.f32 %v11871, %v11872
    %v11874 = vsel %vm11764, %v10799, 0.0
    %v11875 = vadd.f32 %v11873, %v11874
    %v11876 = vsel %vm11764, %v10804, 0.0
    %v11877 = vadd.f32 %v11875, %v11876
    %v11878 = vsel %vm11764, %v10809, 0.0
    %v11879 = vadd.f32 %v11877, %v11878
    %v11880 = vsel %vm11764, %v10814, 0.0
    %v11881 = vadd.f32 %v11879, %v11880
    %v11882 = vsel %vm11764, %v10819, 0.0
    %v11883 = vadd.f32 %v11881, %v11882
    %v11884 = vsel %vm11764, %v10824, 0.0
    %v11885 = vadd.f32 %v11883, %v11884
    %v11886 = vsel %vm11764, %v10829, 0.0
    %v11887 = vadd.f32 %v11885, %v11886
    %v11888 = vsel %vm11764, %v10834, 0.0
    %v11889 = vadd.f32 %v11887, %v11888
    %v11890 = vsel %vm11764, %v10839, 0.0
    %v11891 = vadd.f32 %v11889, %v11890
    %v11892 = vsel %vm11764, %v10844, 0.0
    %v11893 = vadd.f32 %v11891, %v11892
    %v11894 = vsel %vm11764, %v10849, 0.0
    %v11895 = vadd.f32 %v11893, %v11894
    %v11896 = vsel %vm11764, %v10854, 0.0
    %v11897 = vadd.f32 %v11895, %v11896
    %v11898 = vsel %vm11764, %v10859, 0.0
    %v11899 = vadd.f32 %v11897, %v11898
    %v11900 = vsel %vm11764, %v10864, 0.0
    %v11901 = vadd.f32 %v11899, %v11900
    %v11902 = vsel %vm11764, %v10869, 0.0
    %v11903 = vadd.f32 %v11901, %v11902
    %v11904 = vsel %vm11764, %v10874, 0.0
    %v11905 = vadd.f32 %v11903, %v11904
    %v11906 = vsel %vm11764, %v10879, 0.0
    %v11907 = vadd.f32 %v11905, %v11906
    %v11908 = vsel %vm11764, %v10884, 0.0
    %v11909 = vadd.f32 %v11907, %v11908
    %v11910 = vsel %vm11764, %v10889, 0.0
    %v11911 = vadd.f32 %v11909, %v11910
    %v11912 = vsel %vm11764, %v10894, 0.0
    %v11913 = vadd.f32 %v11911, %v11912
    %v11914 = vsel %vm11764, %v10899, 0.0
    %v11915 = vadd.f32 %v11913, %v11914
    %v11916 = vsel %vm11764, %v10904, 0.0
    %v11917 = vadd.f32 %v11915, %v11916
    %v11918 = vsel %vm11764, %v10909, 0.0
    %v11919 = vadd.f32 %v11917, %v11918
    %v11920 = vsel %vm11764, %v10914, 0.0
    %v11921 = vadd.f32 %v11919, %v11920
    %v11922 = vsel %vm11764, %v10919, 0.0
    %v11923 = vadd.f32 %v11921, %v11922
    %v11924 = vsel %vm11764, %v10924, 0.0
    %v11925 = vadd.f32 %v11923, %v11924
    %v11926 = vsel %vm11764, %v10929, 0.0
    %v11927 = vadd.f32 %v11925, %v11926
    %v11928 = vsel %vm11764, %v10934, 0.0
    %v11929 = vadd.f32 %v11927, %v11928
    %v11930 = vsel %vm11764, %v10939, 0.0
    %v11931 = vadd.f32 %v11929, %v11930
    %v11932 = vsel %vm11764, %v10944, 0.0
    %v11933 = vadd.f32 %v11931, %v11932
    %v11934 = vsel %vm11764, %v10949, 0.0
    %v11935 = vadd.f32 %v11933, %v11934
    %v11936 = vsel %vm11764, %v10954, 0.0
    %v11937 = vadd.f32 %v11935, %v11936
    %v11938 = vsel %vm11764, %v10959, 0.0
    %v11939 = vadd.f32 %v11937, %v11938
    %v11940 = vsel %vm11764, %v10964, 0.0
    %v11941 = vadd.f32 %v11939, %v11940
    %v11942 = vsel %vm11764, %v10969, 0.0
    %v11943 = vadd.f32 %v11941, %v11942
    %v11944 = vsel %vm11764, %v10974, 0.0
    %v11945 = vadd.f32 %v11943, %v11944
    %v11946 = vsel %vm11764, %v10979, 0.0
    %v11947 = vadd.f32 %v11945, %v11946
    %v11948 = vsel %vm11764, %v10984, 0.0
    %v11949 = vadd.f32 %v11947, %v11948
    %v11950 = vsel %vm11764, %v10989, 0.0
    %v11951 = vadd.f32 %v11949, %v11950
    %v11952 = vsel %vm11764, %v10994, 0.0
    %v11953 = vadd.f32 %v11951, %v11952
    %v11954 = vsel %vm11764, %v10999, 0.0
    %v11955 = vadd.f32 %v11953, %v11954
    %v11956 = vadd.f32 %v10520, %v10675
    %v11957 = vadd.f32 %v10521, %v10676
    %v11958 = vadd.f32 %v10522, %v10677
    %v11959 = vadd.f32 %v10523, %v10678
    %v11960 = vadd.f32 %v10524, %v10679
    %v11961 = vadd.f32 %v10680, %v10835
    %v11962 = vadd.f32 %v10681, %v10836
    %v11963 = vadd.f32 %v10682, %v10837
    %v11964 = vadd.f32 %v10683, %v10838
    %v11965 = vadd.f32 %v10684, %v10839
    %v11966 = vadd.f32 %v10840, %v10995
    %v11967 = vadd.f32 %v10841, %v10996
    %v11968 = vadd.f32 %v10842, %v10997
    %v11969 = vadd.f32 %v10843, %v10998
    %v11970 = vadd.f32 %v10844, %v10999
    %v11971 = vsel %vm8067, %v11956, 0.0
    %v11972 = vsel %vm8067, %v11961, 0.0
    %v11973 = vadd.f32 %v11971, %v11972
    %v11974 = vsel %vm8067, %v11966, 0.0
    %v11975 = vadd.f32 %v11973, %v11974
    %v11976 = vsel %vm8067, %v11957, 0.0
    %v11977 = vsel %vm8067, %v11962, 0.0
    %v11978 = vadd.f32 %v11976, %v11977
    %v11979 = vsel %vm8067, %v11967, 0.0
    %v11980 = vadd.f32 %v11978, %v11979
    %v11981 = vsel %vm8067, %v11958, 0.0
    %v11982 = vsel %vm8067, %v11963, 0.0
    %v11983 = vadd.f32 %v11981, %v11982
    %v11984 = vsel %vm8067, %v11968, 0.0
    %v11985 = vadd.f32 %v11983, %v11984
    %v11986 = vsel %vm8067, %v11959, 0.0
    %v11987 = vsel %vm8067, %v11964, 0.0
    %v11988 = vadd.f32 %v11986, %v11987
    %v11989 = vsel %vm8067, %v11969, 0.0
    %v11990 = vadd.f32 %v11988, %v11989
    %v11991 = vsel %vm11764, %v11960, 0.0
    %v11992 = vsel %vm11764, %v11965, 0.0
    %v11993 = vadd.f32 %v11991, %v11992
    %v11994 = vsel %vm11764, %v11970, 0.0
    %v11995 = vadd.f32 %v11993, %v11994
    %v11996 = vadd.f32 %v11190, %v11975
    %v11997 = vadd.f32 %v11381, %v11980
    %v11998 = vadd.f32 %v11572, %v11985
    %v11999 = vadd.f32 %v11763, %v11990
    %v12000 = vadd.f32 %v11955, %v11995
    %v12001 = vmax.f32 %v10040, 0.0
    %v12002 = vmax.f32 %v10041, 0.0
    %v12003 = vmax.f32 %v10042, 0.0
    %v12004 = vmax.f32 %v10043, 0.0
    %v12005 = vmax.f32 %v10044, 0.0
    %v12006 = vmax.f32 %v10045, 0.0
    %v12007 = vmax.f32 %v10046, 0.0
    %v12008 = vmax.f32 %v10047, 0.0
    %v12009 = vmax.f32 %v10048, 0.0
    %v12010 = vmax.f32 %v10049, 0.0
    %v12011 = vmax.f32 %v10050, 0.0
    %v12012 = vmax.f32 %v10051, 0.0
    %v12013 = vmax.f32 %v10052, 0.0
    %v12014 = vmax.f32 %v10053, 0.0
    %v12015 = vmax.f32 %v10054, 0.0
    %v12016 = vmax.f32 %v10055, 0.0
    %v12017 = vmax.f32 %v10056, 0.0
    %v12018 = vmax.f32 %v10057, 0.0
    %v12019 = vmax.f32 %v10058, 0.0
    %v12020 = vmax.f32 %v10059, 0.0
    %v12021 = vmax.f32 %v10060, 0.0
    %v12022 = vmax.f32 %v10061, 0.0
    %v12023 = vmax.f32 %v10062, 0.0
    %v12024 = vmax.f32 %v10063, 0.0
    %v12025 = vmax.f32 %v10064, 0.0
    %v12026 = vmax.f32 %v10065, 0.0
    %v12027 = vmax.f32 %v10066, 0.0
    %v12028 = vmax.f32 %v10067, 0.0
    %v12029 = vmax.f32 %v10068, 0.0
    %v12030 = vmax.f32 %v10069, 0.0
    %v12031 = vmax.f32 %v10070, 0.0
    %v12032 = vmax.f32 %v10071, 0.0
    %v12033 = vmax.f32 %v10072, 0.0
    %v12034 = vmax.f32 %v10073, 0.0
    %v12035 = vmax.f32 %v10074, 0.0
    %v12036 = vmax.f32 %v10075, 0.0
    %v12037 = vmax.f32 %v10076, 0.0
    %v12038 = vmax.f32 %v10077, 0.0
    %v12039 = vmax.f32 %v10078, 0.0
    %v12040 = vmax.f32 %v10079, 0.0
    %v12041 = vmax.f32 %v10080, 0.0
    %v12042 = vmax.f32 %v10081, 0.0
    %v12043 = vmax.f32 %v10082, 0.0
    %v12044 = vmax.f32 %v10083, 0.0
    %v12045 = vmax.f32 %v10084, 0.0
    %v12046 = vmax.f32 %v10085, 0.0
    %v12047 = vmax.f32 %v10086, 0.0
    %v12048 = vmax.f32 %v10087, 0.0
    %v12049 = vmax.f32 %v10088, 0.0
    %v12050 = vmax.f32 %v10089, 0.0
    %v12051 = vmax.f32 %v10090, 0.0
    %v12052 = vmax.f32 %v10091, 0.0
    %v12053 = vmax.f32 %v10092, 0.0
    %v12054 = vmax.f32 %v10093, 0.0
    %v12055 = vmax.f32 %v10094, 0.0
    %v12056 = vmax.f32 %v10095, 0.0
    %v12057 = vmax.f32 %v10096, 0.0
    %v12058 = vmax.f32 %v10097, 0.0
    %v12059 = vmax.f32 %v10098, 0.0
    %v12060 = vmax.f32 %v10099, 0.0
    %v12061 = vmax.f32 %v10100, 0.0
    %v12062 = vmax.f32 %v10101, 0.0
    %v12063 = vmax.f32 %v10102, 0.0
    %v12064 = vmax.f32 %v10103, 0.0
    %v12065 = vmax.f32 %v10104, 0.0
    %v12066 = vmax.f32 %v10105, 0.0
    %v12067 = vmax.f32 %v10106, 0.0
    %v12068 = vmax.f32 %v10107, 0.0
    %v12069 = vmax.f32 %v10108, 0.0
    %v12070 = vmax.f32 %v10109, 0.0
    %v12071 = vmax.f32 %v10110, 0.0
    %v12072 = vmax.f32 %v10111, 0.0
    %v12073 = vmax.f32 %v10112, 0.0
    %v12074 = vmax.f32 %v10113, 0.0
    %v12075 = vmax.f32 %v10114, 0.0
    %v12076 = vmax.f32 %v10115, 0.0
    %v12077 = vmax.f32 %v10116, 0.0
    %v12078 = vmax.f32 %v10117, 0.0
    %v12079 = vmax.f32 %v10118, 0.0
    %v12080 = vmax.f32 %v10119, 0.0
    %v12081 = vmax.f32 %v10120, 0.0
    %v12082 = vmax.f32 %v10121, 0.0
    %v12083 = vmax.f32 %v10122, 0.0
    %v12084 = vmax.f32 %v10123, 0.0
    %v12085 = vmax.f32 %v10124, 0.0
    %v12086 = vmax.f32 %v10125, 0.0
    %v12087 = vmax.f32 %v10126, 0.0
    %v12088 = vmax.f32 %v10127, 0.0
    %v12089 = vmax.f32 %v10128, 0.0
    %v12090 = vmax.f32 %v10129, 0.0
    %v12091 = vmax.f32 %v10130, 0.0
    %v12092 = vmax.f32 %v10131, 0.0
    %v12093 = vmax.f32 %v10132, 0.0
    %v12094 = vmax.f32 %v10133, 0.0
    %v12095 = vmax.f32 %v10134, 0.0
    %v12096 = vmax.f32 %v10135, 0.0
    %v12097 = vmax.f32 %v10136, 0.0
    %v12098 = vmax.f32 %v10137, 0.0
    %v12099 = vmax.f32 %v10138, 0.0
    %v12100 = vmax.f32 %v10139, 0.0
    %v12101 = vmax.f32 %v10140, 0.0
    %v12102 = vmax.f32 %v10141, 0.0
    %v12103 = vmax.f32 %v10142, 0.0
    %v12104 = vmax.f32 %v10143, 0.0
    %v12105 = vmax.f32 %v10144, 0.0
    %v12106 = vmax.f32 %v10145, 0.0
    %v12107 = vmax.f32 %v10146, 0.0
    %v12108 = vmax.f32 %v10147, 0.0
    %v12109 = vmax.f32 %v10148, 0.0
    %v12110 = vmax.f32 %v10149, 0.0
    %v12111 = vmax.f32 %v10150, 0.0
    %v12112 = vmax.f32 %v10151, 0.0
    %v12113 = vmax.f32 %v10152, 0.0
    %v12114 = vmax.f32 %v10153, 0.0
    %v12115 = vmax.f32 %v10154, 0.0
    %v12116 = vmax.f32 %v10155, 0.0
    %v12117 = vmax.f32 %v10156, 0.0
    %v12118 = vmax.f32 %v10157, 0.0
    %v12119 = vmax.f32 %v10158, 0.0
    %v12120 = vmax.f32 %v10159, 0.0
    %v12121 = vmax.f32 %v10160, 0.0
    %v12122 = vmax.f32 %v10161, 0.0
    %v12123 = vmax.f32 %v10162, 0.0
    %v12124 = vmax.f32 %v10163, 0.0
    %v12125 = vmax.f32 %v10164, 0.0
    %v12126 = vmax.f32 %v10165, 0.0
    %v12127 = vmax.f32 %v10166, 0.0
    %v12128 = vmax.f32 %v10167, 0.0
    %v12129 = vmax.f32 %v10168, 0.0
    %v12130 = vmax.f32 %v10169, 0.0
    %v12131 = vmax.f32 %v10170, 0.0
    %v12132 = vmax.f32 %v10171, 0.0
    %v12133 = vmax.f32 %v10172, 0.0
    %v12134 = vmax.f32 %v10173, 0.0
    %v12135 = vmax.f32 %v10174, 0.0
    %v12136 = vmax.f32 %v10175, 0.0
    %v12137 = vmax.f32 %v10176, 0.0
    %v12138 = vmax.f32 %v10177, 0.0
    %v12139 = vmax.f32 %v10178, 0.0
    %v12140 = vmax.f32 %v10179, 0.0
    %v12141 = vmax.f32 %v10180, 0.0
    %v12142 = vmax.f32 %v10181, 0.0
    %v12143 = vmax.f32 %v10182, 0.0
    %v12144 = vmax.f32 %v10183, 0.0
    %v12145 = vmax.f32 %v10184, 0.0
    %v12146 = vmax.f32 %v10185, 0.0
    %v12147 = vmax.f32 %v10186, 0.0
    %v12148 = vmax.f32 %v10187, 0.0
    %v12149 = vmax.f32 %v10188, 0.0
    %v12150 = vmax.f32 %v10189, 0.0
    %v12151 = vmax.f32 %v10190, 0.0
    %v12152 = vmax.f32 %v10191, 0.0
    %v12153 = vmax.f32 %v10192, 0.0
    %v12154 = vmax.f32 %v10193, 0.0
    %v12155 = vmax.f32 %v10194, 0.0
    %v12156 = vmax.f32 %v10195, 0.0
    %v12157 = vmax.f32 %v10196, 0.0
    %v12158 = vmax.f32 %v10197, 0.0
    %v12159 = vmax.f32 %v10198, 0.0
    %v12160 = vmax.f32 %v10199, 0.0
    %v12161 = vmax.f32 %v10200, 0.0
    %v12162 = vmax.f32 %v10201, 0.0
    %v12163 = vmax.f32 %v10202, 0.0
    %v12164 = vmax.f32 %v10203, 0.0
    %v12165 = vmax.f32 %v10204, 0.0
    %v12166 = vmax.f32 %v10205, 0.0
    %v12167 = vmax.f32 %v10206, 0.0
    %v12168 = vmax.f32 %v10207, 0.0
    %v12169 = vmax.f32 %v10208, 0.0
    %v12170 = vmax.f32 %v10209, 0.0
    %v12171 = vmax.f32 %v10210, 0.0
    %v12172 = vmax.f32 %v10211, 0.0
    %v12173 = vmax.f32 %v10212, 0.0
    %v12174 = vmax.f32 %v10213, 0.0
    %v12175 = vmax.f32 %v10214, 0.0
    %v12176 = vmax.f32 %v10215, 0.0
    %v12177 = vmax.f32 %v10216, 0.0
    %v12178 = vmax.f32 %v10217, 0.0
    %v12179 = vmax.f32 %v10218, 0.0
    %v12180 = vmax.f32 %v10219, 0.0
    %v12181 = vmax.f32 %v10220, 0.0
    %v12182 = vmax.f32 %v10221, 0.0
    %v12183 = vmax.f32 %v10222, 0.0
    %v12184 = vmax.f32 %v10223, 0.0
    %v12185 = vmax.f32 %v10224, 0.0
    %v12186 = vmax.f32 %v10225, 0.0
    %v12187 = vmax.f32 %v10226, 0.0
    %v12188 = vmax.f32 %v10227, 0.0
    %v12189 = vmax.f32 %v10228, 0.0
    %v12190 = vmax.f32 %v10229, 0.0
    %v12191 = vmax.f32 %v10230, 0.0
    %v12192 = vmax.f32 %v10231, 0.0
    %v12193 = vmax.f32 %v10232, 0.0
    %v12194 = vmax.f32 %v10233, 0.0
    %v12195 = vmax.f32 %v10234, 0.0
    %v12196 = vmax.f32 %v10235, 0.0
    %v12197 = vmax.f32 %v10236, 0.0
    %v12198 = vmax.f32 %v10237, 0.0
    %v12199 = vmax.f32 %v10238, 0.0
    %v12200 = vmax.f32 %v10239, 0.0
    %v12201 = vmax.f32 %v10240, 0.0
    %v12202 = vmax.f32 %v10241, 0.0
    %v12203 = vmax.f32 %v10242, 0.0
    %v12204 = vmax.f32 %v10243, 0.0
    %v12205 = vmax.f32 %v10244, 0.0
    %v12206 = vmax.f32 %v10245, 0.0
    %v12207 = vmax.f32 %v10246, 0.0
    %v12208 = vmax.f32 %v10247, 0.0
    %v12209 = vmax.f32 %v10248, 0.0
    %v12210 = vmax.f32 %v10249, 0.0
    %v12211 = vmax.f32 %v10250, 0.0
    %v12212 = vmax.f32 %v10251, 0.0
    %v12213 = vmax.f32 %v10252, 0.0
    %v12214 = vmax.f32 %v10253, 0.0
    %v12215 = vmax.f32 %v10254, 0.0
    %v12216 = vmax.f32 %v10255, 0.0
    %v12217 = vmax.f32 %v10256, 0.0
    %v12218 = vmax.f32 %v10257, 0.0
    %v12219 = vmax.f32 %v10258, 0.0
    %v12220 = vmax.f32 %v10259, 0.0
    %v12221 = vmax.f32 %v10260, 0.0
    %v12222 = vmax.f32 %v10261, 0.0
    %v12223 = vmax.f32 %v10262, 0.0
    %v12224 = vmax.f32 %v10263, 0.0
    %v12225 = vmax.f32 %v10264, 0.0
    %v12226 = vmax.f32 %v10265, 0.0
    %v12227 = vmax.f32 %v10266, 0.0
    %v12228 = vmax.f32 %v10267, 0.0
    %v12229 = vmax.f32 %v10268, 0.0
    %v12230 = vmax.f32 %v10269, 0.0
    %v12231 = vmax.f32 %v10270, 0.0
    %v12232 = vmax.f32 %v10271, 0.0
    %v12233 = vmax.f32 %v10272, 0.0
    %v12234 = vmax.f32 %v10273, 0.0
    %v12235 = vmax.f32 %v10274, 0.0
    %v12236 = vmax.f32 %v10275, 0.0
    %v12237 = vmax.f32 %v10276, 0.0
    %v12238 = vmax.f32 %v10277, 0.0
    %v12239 = vmax.f32 %v10278, 0.0
    %v12240 = vmax.f32 %v10279, 0.0
    %v12241 = vmax.f32 %v10280, 0.0
    %v12242 = vmax.f32 %v10281, 0.0
    %v12243 = vmax.f32 %v10282, 0.0
    %v12244 = vmax.f32 %v10283, 0.0
    %v12245 = vmax.f32 %v10284, 0.0
    %v12246 = vmax.f32 %v10285, 0.0
    %v12247 = vmax.f32 %v10286, 0.0
    %v12248 = vmax.f32 %v10287, 0.0
    %v12249 = vmax.f32 %v10288, 0.0
    %v12250 = vmax.f32 %v10289, 0.0
    %v12251 = vmax.f32 %v10290, 0.0
    %v12252 = vmax.f32 %v10291, 0.0
    %v12253 = vmax.f32 %v10292, 0.0
    %v12254 = vmax.f32 %v10293, 0.0
    %v12255 = vmax.f32 %v10294, 0.0
    %v12256 = vmax.f32 %v10295, 0.0
    %v12257 = vmax.f32 %v10296, 0.0
    %v12258 = vmax.f32 %v10297, 0.0
    %v12259 = vmax.f32 %v10298, 0.0
    %v12260 = vmax.f32 %v10299, 0.0
    %v12261 = vmax.f32 %v10300, 0.0
    %v12262 = vmax.f32 %v10301, 0.0
    %v12263 = vmax.f32 %v10302, 0.0
    %v12264 = vmax.f32 %v10303, 0.0
    %v12265 = vmax.f32 %v10304, 0.0
    %v12266 = vmax.f32 %v10305, 0.0
    %v12267 = vmax.f32 %v10306, 0.0
    %v12268 = vmax.f32 %v10307, 0.0
    %v12269 = vmax.f32 %v10308, 0.0
    %v12270 = vmax.f32 %v10309, 0.0
    %v12271 = vmax.f32 %v10310, 0.0
    %v12272 = vmax.f32 %v10311, 0.0
    %v12273 = vmax.f32 %v10312, 0.0
    %v12274 = vmax.f32 %v10313, 0.0
    %v12275 = vmax.f32 %v10314, 0.0
    %v12276 = vmax.f32 %v10315, 0.0
    %v12277 = vmax.f32 %v10316, 0.0
    %v12278 = vmax.f32 %v10317, 0.0
    %v12279 = vmax.f32 %v10318, 0.0
    %v12280 = vmax.f32 %v10319, 0.0
    %v12281 = vmax.f32 %v10320, 0.0
    %v12282 = vmax.f32 %v10321, 0.0
    %v12283 = vmax.f32 %v10322, 0.0
    %v12284 = vmax.f32 %v10323, 0.0
    %v12285 = vmax.f32 %v10324, 0.0
    %v12286 = vmax.f32 %v10325, 0.0
    %v12287 = vmax.f32 %v10326, 0.0
    %v12288 = vmax.f32 %v10327, 0.0
    %v12289 = vmax.f32 %v10328, 0.0
    %v12290 = vmax.f32 %v10329, 0.0
    %v12291 = vmax.f32 %v10330, 0.0
    %v12292 = vmax.f32 %v10331, 0.0
    %v12293 = vmax.f32 %v10332, 0.0
    %v12294 = vmax.f32 %v10333, 0.0
    %v12295 = vmax.f32 %v10334, 0.0
    %v12296 = vmax.f32 %v10335, 0.0
    %v12297 = vmax.f32 %v10336, 0.0
    %v12298 = vmax.f32 %v10337, 0.0
    %v12299 = vmax.f32 %v10338, 0.0
    %v12300 = vmax.f32 %v10339, 0.0
    %v12301 = vmax.f32 %v10340, 0.0
    %v12302 = vmax.f32 %v10341, 0.0
    %v12303 = vmax.f32 %v10342, 0.0
    %v12304 = vmax.f32 %v10343, 0.0
    %v12305 = vmax.f32 %v10344, 0.0
    %v12306 = vmax.f32 %v10345, 0.0
    %v12307 = vmax.f32 %v10346, 0.0
    %v12308 = vmax.f32 %v10347, 0.0
    %v12309 = vmax.f32 %v10348, 0.0
    %v12310 = vmax.f32 %v10349, 0.0
    %v12311 = vmax.f32 %v10350, 0.0
    %v12312 = vmax.f32 %v10351, 0.0
    %v12313 = vmax.f32 %v10352, 0.0
    %v12314 = vmax.f32 %v10353, 0.0
    %v12315 = vmax.f32 %v10354, 0.0
    %v12316 = vmax.f32 %v10355, 0.0
    %v12317 = vmax.f32 %v10356, 0.0
    %v12318 = vmax.f32 %v10357, 0.0
    %v12319 = vmax.f32 %v10358, 0.0
    %v12320 = vmax.f32 %v10359, 0.0
    %v12321 = vmax.f32 %v10360, 0.0
    %v12322 = vmax.f32 %v10361, 0.0
    %v12323 = vmax.f32 %v10362, 0.0
    %v12324 = vmax.f32 %v10363, 0.0
    %v12325 = vmax.f32 %v10364, 0.0
    %v12326 = vmax.f32 %v10365, 0.0
    %v12327 = vmax.f32 %v10366, 0.0
    %v12328 = vmax.f32 %v10367, 0.0
    %v12329 = vmax.f32 %v10368, 0.0
    %v12330 = vmax.f32 %v10369, 0.0
    %v12331 = vmax.f32 %v10370, 0.0
    %v12332 = vmax.f32 %v10371, 0.0
    %v12333 = vmax.f32 %v10372, 0.0
    %v12334 = vmax.f32 %v10373, 0.0
    %v12335 = vmax.f32 %v10374, 0.0
    %v12336 = vmax.f32 %v10375, 0.0
    %v12337 = vmax.f32 %v10376, 0.0
    %v12338 = vmax.f32 %v10377, 0.0
    %v12339 = vmax.f32 %v10378, 0.0
    %v12340 = vmax.f32 %v10379, 0.0
    %v12341 = vmax.f32 %v10380, 0.0
    %v12342 = vmax.f32 %v10381, 0.0
    %v12343 = vmax.f32 %v10382, 0.0
    %v12344 = vmax.f32 %v10383, 0.0
    %v12345 = vmax.f32 %v10384, 0.0
    %v12346 = vmax.f32 %v10385, 0.0
    %v12347 = vmax.f32 %v10386, 0.0
    %v12348 = vmax.f32 %v10387, 0.0
    %v12349 = vmax.f32 %v10388, 0.0
    %v12350 = vmax.f32 %v10389, 0.0
    %v12351 = vmax.f32 %v10390, 0.0
    %v12352 = vmax.f32 %v10391, 0.0
    %v12353 = vmax.f32 %v10392, 0.0
    %v12354 = vmax.f32 %v10393, 0.0
    %v12355 = vmax.f32 %v10394, 0.0
    %v12356 = vmax.f32 %v10395, 0.0
    %v12357 = vmax.f32 %v10396, 0.0
    %v12358 = vmax.f32 %v10397, 0.0
    %v12359 = vmax.f32 %v10398, 0.0
    %v12360 = vmax.f32 %v10399, 0.0
    %v12361 = vmax.f32 %v10400, 0.0
    %v12362 = vmax.f32 %v10401, 0.0
    %v12363 = vmax.f32 %v10402, 0.0
    %v12364 = vmax.f32 %v10403, 0.0
    %v12365 = vmax.f32 %v10404, 0.0
    %v12366 = vmax.f32 %v10405, 0.0
    %v12367 = vmax.f32 %v10406, 0.0
    %v12368 = vmax.f32 %v10407, 0.0
    %v12369 = vmax.f32 %v10408, 0.0
    %v12370 = vmax.f32 %v10409, 0.0
    %v12371 = vmax.f32 %v10410, 0.0
    %v12372 = vmax.f32 %v10411, 0.0
    %v12373 = vmax.f32 %v10412, 0.0
    %v12374 = vmax.f32 %v10413, 0.0
    %v12375 = vmax.f32 %v10414, 0.0
    %v12376 = vmax.f32 %v10415, 0.0
    %v12377 = vmax.f32 %v10416, 0.0
    %v12378 = vmax.f32 %v10417, 0.0
    %v12379 = vmax.f32 %v10418, 0.0
    %v12380 = vmax.f32 %v10419, 0.0
    %v12381 = vmax.f32 %v10420, 0.0
    %v12382 = vmax.f32 %v10421, 0.0
    %v12383 = vmax.f32 %v10422, 0.0
    %v12384 = vmax.f32 %v10423, 0.0
    %v12385 = vmax.f32 %v10424, 0.0
    %v12386 = vmax.f32 %v10425, 0.0
    %v12387 = vmax.f32 %v10426, 0.0
    %v12388 = vmax.f32 %v10427, 0.0
    %v12389 = vmax.f32 %v10428, 0.0
    %v12390 = vmax.f32 %v10429, 0.0
    %v12391 = vmax.f32 %v10430, 0.0
    %v12392 = vmax.f32 %v10431, 0.0
    %v12393 = vmax.f32 %v10432, 0.0
    %v12394 = vmax.f32 %v10433, 0.0
    %v12395 = vmax.f32 %v10434, 0.0
    %v12396 = vmax.f32 %v10435, 0.0
    %v12397 = vmax.f32 %v10436, 0.0
    %v12398 = vmax.f32 %v10437, 0.0
    %v12399 = vmax.f32 %v10438, 0.0
    %v12400 = vmax.f32 %v10439, 0.0
    %v12401 = vmax.f32 %v10440, 0.0
    %v12402 = vmax.f32 %v10441, 0.0
    %v12403 = vmax.f32 %v10442, 0.0
    %v12404 = vmax.f32 %v10443, 0.0
    %v12405 = vmax.f32 %v10444, 0.0
    %v12406 = vmax.f32 %v10445, 0.0
    %v12407 = vmax.f32 %v10446, 0.0
    %v12408 = vmax.f32 %v10447, 0.0
    %v12409 = vmax.f32 %v10448, 0.0
    %v12410 = vmax.f32 %v10449, 0.0
    %v12411 = vmax.f32 %v10450, 0.0
    %v12412 = vmax.f32 %v10451, 0.0
    %v12413 = vmax.f32 %v10452, 0.0
    %v12414 = vmax.f32 %v10453, 0.0
    %v12415 = vmax.f32 %v10454, 0.0
    %v12416 = vmax.f32 %v10455, 0.0
    %v12417 = vmax.f32 %v10456, 0.0
    %v12418 = vmax.f32 %v10457, 0.0
    %v12419 = vmax.f32 %v10458, 0.0
    %v12420 = vmax.f32 %v10459, 0.0
    %v12421 = vmax.f32 %v10460, 0.0
    %v12422 = vmax.f32 %v10461, 0.0
    %v12423 = vmax.f32 %v10462, 0.0
    %v12424 = vmax.f32 %v10463, 0.0
    %v12425 = vmax.f32 %v10464, 0.0
    %v12426 = vmax.f32 %v10465, 0.0
    %v12427 = vmax.f32 %v10466, 0.0
    %v12428 = vmax.f32 %v10467, 0.0
    %v12429 = vmax.f32 %v10468, 0.0
    %v12430 = vmax.f32 %v10469, 0.0
    %v12431 = vmax.f32 %v10470, 0.0
    %v12432 = vmax.f32 %v10471, 0.0
    %v12433 = vmax.f32 %v10472, 0.0
    %v12434 = vmax.f32 %v10473, 0.0
    %v12435 = vmax.f32 %v10474, 0.0
    %v12436 = vmax.f32 %v10475, 0.0
    %v12437 = vmax.f32 %v10476, 0.0
    %v12438 = vmax.f32 %v10477, 0.0
    %v12439 = vmax.f32 %v10478, 0.0
    %v12440 = vmax.f32 %v10479, 0.0
    %v12441 = vmax.f32 %v10480, 0.0
    %v12442 = vmax.f32 %v10481, 0.0
    %v12443 = vmax.f32 %v10482, 0.0
    %v12444 = vmax.f32 %v10483, 0.0
    %v12445 = vmax.f32 %v10484, 0.0
    %v12446 = vmax.f32 %v10485, 0.0
    %v12447 = vmax.f32 %v10486, 0.0
    %v12448 = vmax.f32 %v10487, 0.0
    %v12449 = vmax.f32 %v10488, 0.0
    %v12450 = vmax.f32 %v10489, 0.0
    %v12451 = vmax.f32 %v10490, 0.0
    %v12452 = vmax.f32 %v10491, 0.0
    %v12453 = vmax.f32 %v10492, 0.0
    %v12454 = vmax.f32 %v10493, 0.0
    %v12455 = vmax.f32 %v10494, 0.0
    %v12456 = vmax.f32 %v10495, 0.0
    %v12457 = vmax.f32 %v10496, 0.0
    %v12458 = vmax.f32 %v10497, 0.0
    %v12459 = vmax.f32 %v10498, 0.0
    %v12460 = vmax.f32 %v10499, 0.0
    %v12461 = vmax.f32 %v10500, 0.0
    %v12462 = vmax.f32 %v10501, 0.0
    %v12463 = vmax.f32 %v10502, 0.0
    %v12464 = vmax.f32 %v10503, 0.0
    %v12465 = vmax.f32 %v10504, 0.0
    %v12466 = vmax.f32 %v10505, 0.0
    %v12467 = vmax.f32 %v10506, 0.0
    %v12468 = vmax.f32 %v10507, 0.0
    %v12469 = vmax.f32 %v10508, 0.0
    %v12470 = vmax.f32 %v10509, 0.0
    %v12471 = vmax.f32 %v10510, 0.0
    %v12472 = vmax.f32 %v10511, 0.0
    %v12473 = vmax.f32 %v10512, 0.0
    %v12474 = vmax.f32 %v10513, 0.0
    %v12475 = vmax.f32 %v10514, 0.0
    %v12476 = vmax.f32 %v10515, 0.0
    %v12477 = vmax.f32 %v10516, 0.0
    %v12478 = vmax.f32 %v10517, 0.0
    %v12479 = vmax.f32 %v10518, 0.0
    %v12480 = vmax.f32 %v10519, 0.0
    %v12481 = vsel %vm8067, %v12001, 0.0
    %v12482 = vsel %vm8067, %v12006, 0.0
    %v12483 = vadd.f32 %v12481, %v12482
    %v12484 = vsel %vm8067, %v12011, 0.0
    %v12485 = vadd.f32 %v12483, %v12484
    %v12486 = vsel %vm8067, %v12016, 0.0
    %v12487 = vadd.f32 %v12485, %v12486
    %v12488 = vsel %vm8067, %v12021, 0.0
    %v12489 = vadd.f32 %v12487, %v12488
    %v12490 = vsel %vm8067, %v12026, 0.0
    %v12491 = vadd.f32 %v12489, %v12490
    %v12492 = vsel %vm8067, %v12031, 0.0
    %v12493 = vadd.f32 %v12491, %v12492
    %v12494 = vsel %vm8067, %v12036, 0.0
    %v12495 = vadd.f32 %v12493, %v12494
    %v12496 = vsel %vm8067, %v12041, 0.0
    %v12497 = vadd.f32 %v12495, %v12496
    %v12498 = vsel %vm8067, %v12046, 0.0
    %v12499 = vadd.f32 %v12497, %v12498
    %v12500 = vsel %vm8067, %v12051, 0.0
    %v12501 = vadd.f32 %v12499, %v12500
    %v12502 = vsel %vm8067, %v12056, 0.0
    %v12503 = vadd.f32 %v12501, %v12502
    %v12504 = vsel %vm8067, %v12061, 0.0
    %v12505 = vadd.f32 %v12503, %v12504
    %v12506 = vsel %vm8067, %v12066, 0.0
    %v12507 = vadd.f32 %v12505, %v12506
    %v12508 = vsel %vm8067, %v12071, 0.0
    %v12509 = vadd.f32 %v12507, %v12508
    %v12510 = vsel %vm8067, %v12076, 0.0
    %v12511 = vadd.f32 %v12509, %v12510
    %v12512 = vsel %vm8067, %v12081, 0.0
    %v12513 = vadd.f32 %v12511, %v12512
    %v12514 = vsel %vm8067, %v12086, 0.0
    %v12515 = vadd.f32 %v12513, %v12514
    %v12516 = vsel %vm8067, %v12091, 0.0
    %v12517 = vadd.f32 %v12515, %v12516
    %v12518 = vsel %vm8067, %v12096, 0.0
    %v12519 = vadd.f32 %v12517, %v12518
    %v12520 = vsel %vm8067, %v12101, 0.0
    %v12521 = vadd.f32 %v12519, %v12520
    %v12522 = vsel %vm8067, %v12106, 0.0
    %v12523 = vadd.f32 %v12521, %v12522
    %v12524 = vsel %vm8067, %v12111, 0.0
    %v12525 = vadd.f32 %v12523, %v12524
    %v12526 = vsel %vm8067, %v12116, 0.0
    %v12527 = vadd.f32 %v12525, %v12526
    %v12528 = vsel %vm8067, %v12121, 0.0
    %v12529 = vadd.f32 %v12527, %v12528
    %v12530 = vsel %vm8067, %v12126, 0.0
    %v12531 = vadd.f32 %v12529, %v12530
    %v12532 = vsel %vm8067, %v12131, 0.0
    %v12533 = vadd.f32 %v12531, %v12532
    %v12534 = vsel %vm8067, %v12136, 0.0
    %v12535 = vadd.f32 %v12533, %v12534
    %v12536 = vsel %vm8067, %v12141, 0.0
    %v12537 = vadd.f32 %v12535, %v12536
    %v12538 = vsel %vm8067, %v12146, 0.0
    %v12539 = vadd.f32 %v12537, %v12538
    %v12540 = vsel %vm8067, %v12151, 0.0
    %v12541 = vadd.f32 %v12539, %v12540
    %v12542 = vsel %vm8067, %v12156, 0.0
    %v12543 = vadd.f32 %v12541, %v12542
    %v12544 = vsel %vm8067, %v12161, 0.0
    %v12545 = vadd.f32 %v12543, %v12544
    %v12546 = vsel %vm8067, %v12166, 0.0
    %v12547 = vadd.f32 %v12545, %v12546
    %v12548 = vsel %vm8067, %v12171, 0.0
    %v12549 = vadd.f32 %v12547, %v12548
    %v12550 = vsel %vm8067, %v12176, 0.0
    %v12551 = vadd.f32 %v12549, %v12550
    %v12552 = vsel %vm8067, %v12181, 0.0
    %v12553 = vadd.f32 %v12551, %v12552
    %v12554 = vsel %vm8067, %v12186, 0.0
    %v12555 = vadd.f32 %v12553, %v12554
    %v12556 = vsel %vm8067, %v12191, 0.0
    %v12557 = vadd.f32 %v12555, %v12556
    %v12558 = vsel %vm8067, %v12196, 0.0
    %v12559 = vadd.f32 %v12557, %v12558
    %v12560 = vsel %vm8067, %v12201, 0.0
    %v12561 = vadd.f32 %v12559, %v12560
    %v12562 = vsel %vm8067, %v12206, 0.0
    %v12563 = vadd.f32 %v12561, %v12562
    %v12564 = vsel %vm8067, %v12211, 0.0
    %v12565 = vadd.f32 %v12563, %v12564
    %v12566 = vsel %vm8067, %v12216, 0.0
    %v12567 = vadd.f32 %v12565, %v12566
    %v12568 = vsel %vm8067, %v12221, 0.0
    %v12569 = vadd.f32 %v12567, %v12568
    %v12570 = vsel %vm8067, %v12226, 0.0
    %v12571 = vadd.f32 %v12569, %v12570
    %v12572 = vsel %vm8067, %v12231, 0.0
    %v12573 = vadd.f32 %v12571, %v12572
    %v12574 = vsel %vm8067, %v12236, 0.0
    %v12575 = vadd.f32 %v12573, %v12574
    %v12576 = vsel %vm8067, %v12241, 0.0
    %v12577 = vadd.f32 %v12575, %v12576
    %v12578 = vsel %vm8067, %v12246, 0.0
    %v12579 = vadd.f32 %v12577, %v12578
    %v12580 = vsel %vm8067, %v12251, 0.0
    %v12581 = vadd.f32 %v12579, %v12580
    %v12582 = vsel %vm8067, %v12256, 0.0
    %v12583 = vadd.f32 %v12581, %v12582
    %v12584 = vsel %vm8067, %v12261, 0.0
    %v12585 = vadd.f32 %v12583, %v12584
    %v12586 = vsel %vm8067, %v12266, 0.0
    %v12587 = vadd.f32 %v12585, %v12586
    %v12588 = vsel %vm8067, %v12271, 0.0
    %v12589 = vadd.f32 %v12587, %v12588
    %v12590 = vsel %vm8067, %v12276, 0.0
    %v12591 = vadd.f32 %v12589, %v12590
    %v12592 = vsel %vm8067, %v12281, 0.0
    %v12593 = vadd.f32 %v12591, %v12592
    %v12594 = vsel %vm8067, %v12286, 0.0
    %v12595 = vadd.f32 %v12593, %v12594
    %v12596 = vsel %vm8067, %v12291, 0.0
    %v12597 = vadd.f32 %v12595, %v12596
    %v12598 = vsel %vm8067, %v12296, 0.0
    %v12599 = vadd.f32 %v12597, %v12598
    %v12600 = vsel %vm8067, %v12301, 0.0
    %v12601 = vadd.f32 %v12599, %v12600
    %v12602 = vsel %vm8067, %v12306, 0.0
    %v12603 = vadd.f32 %v12601, %v12602
    %v12604 = vsel %vm8067, %v12311, 0.0
    %v12605 = vadd.f32 %v12603, %v12604
    %v12606 = vsel %vm8067, %v12316, 0.0
    %v12607 = vadd.f32 %v12605, %v12606
    %v12608 = vsel %vm8067, %v12321, 0.0
    %v12609 = vadd.f32 %v12607, %v12608
    %v12610 = vsel %vm8067, %v12326, 0.0
    %v12611 = vadd.f32 %v12609, %v12610
    %v12612 = vsel %vm8067, %v12331, 0.0
    %v12613 = vadd.f32 %v12611, %v12612
    %v12614 = vsel %vm8067, %v12336, 0.0
    %v12615 = vadd.f32 %v12613, %v12614
    %v12616 = vsel %vm8067, %v12341, 0.0
    %v12617 = vadd.f32 %v12615, %v12616
    %v12618 = vsel %vm8067, %v12346, 0.0
    %v12619 = vadd.f32 %v12617, %v12618
    %v12620 = vsel %vm8067, %v12351, 0.0
    %v12621 = vadd.f32 %v12619, %v12620
    %v12622 = vsel %vm8067, %v12356, 0.0
    %v12623 = vadd.f32 %v12621, %v12622
    %v12624 = vsel %vm8067, %v12361, 0.0
    %v12625 = vadd.f32 %v12623, %v12624
    %v12626 = vsel %vm8067, %v12366, 0.0
    %v12627 = vadd.f32 %v12625, %v12626
    %v12628 = vsel %vm8067, %v12371, 0.0
    %v12629 = vadd.f32 %v12627, %v12628
    %v12630 = vsel %vm8067, %v12376, 0.0
    %v12631 = vadd.f32 %v12629, %v12630
    %v12632 = vsel %vm8067, %v12381, 0.0
    %v12633 = vadd.f32 %v12631, %v12632
    %v12634 = vsel %vm8067, %v12386, 0.0
    %v12635 = vadd.f32 %v12633, %v12634
    %v12636 = vsel %vm8067, %v12391, 0.0
    %v12637 = vadd.f32 %v12635, %v12636
    %v12638 = vsel %vm8067, %v12396, 0.0
    %v12639 = vadd.f32 %v12637, %v12638
    %v12640 = vsel %vm8067, %v12401, 0.0
    %v12641 = vadd.f32 %v12639, %v12640
    %v12642 = vsel %vm8067, %v12406, 0.0
    %v12643 = vadd.f32 %v12641, %v12642
    %v12644 = vsel %vm8067, %v12411, 0.0
    %v12645 = vadd.f32 %v12643, %v12644
    %v12646 = vsel %vm8067, %v12416, 0.0
    %v12647 = vadd.f32 %v12645, %v12646
    %v12648 = vsel %vm8067, %v12421, 0.0
    %v12649 = vadd.f32 %v12647, %v12648
    %v12650 = vsel %vm8067, %v12426, 0.0
    %v12651 = vadd.f32 %v12649, %v12650
    %v12652 = vsel %vm8067, %v12431, 0.0
    %v12653 = vadd.f32 %v12651, %v12652
    %v12654 = vsel %vm8067, %v12436, 0.0
    %v12655 = vadd.f32 %v12653, %v12654
    %v12656 = vsel %vm8067, %v12441, 0.0
    %v12657 = vadd.f32 %v12655, %v12656
    %v12658 = vsel %vm8067, %v12446, 0.0
    %v12659 = vadd.f32 %v12657, %v12658
    %v12660 = vsel %vm8067, %v12451, 0.0
    %v12661 = vadd.f32 %v12659, %v12660
    %v12662 = vsel %vm8067, %v12456, 0.0
    %v12663 = vadd.f32 %v12661, %v12662
    %v12664 = vsel %vm8067, %v12461, 0.0
    %v12665 = vadd.f32 %v12663, %v12664
    %v12666 = vsel %vm8067, %v12466, 0.0
    %v12667 = vadd.f32 %v12665, %v12666
    %v12668 = vsel %vm8067, %v12471, 0.0
    %v12669 = vadd.f32 %v12667, %v12668
    %v12670 = vsel %vm8067, %v12476, 0.0
    %v12671 = vadd.f32 %v12669, %v12670
    %v12672 = vsel %vm8067, %v12002, 0.0
    %v12673 = vsel %vm8067, %v12007, 0.0
    %v12674 = vadd.f32 %v12672, %v12673
    %v12675 = vsel %vm8067, %v12012, 0.0
    %v12676 = vadd.f32 %v12674, %v12675
    %v12677 = vsel %vm8067, %v12017, 0.0
    %v12678 = vadd.f32 %v12676, %v12677
    %v12679 = vsel %vm8067, %v12022, 0.0
    %v12680 = vadd.f32 %v12678, %v12679
    %v12681 = vsel %vm8067, %v12027, 0.0
    %v12682 = vadd.f32 %v12680, %v12681
    %v12683 = vsel %vm8067, %v12032, 0.0
    %v12684 = vadd.f32 %v12682, %v12683
    %v12685 = vsel %vm8067, %v12037, 0.0
    %v12686 = vadd.f32 %v12684, %v12685
    %v12687 = vsel %vm8067, %v12042, 0.0
    %v12688 = vadd.f32 %v12686, %v12687
    %v12689 = vsel %vm8067, %v12047, 0.0
    %v12690 = vadd.f32 %v12688, %v12689
    %v12691 = vsel %vm8067, %v12052, 0.0
    %v12692 = vadd.f32 %v12690, %v12691
    %v12693 = vsel %vm8067, %v12057, 0.0
    %v12694 = vadd.f32 %v12692, %v12693
    %v12695 = vsel %vm8067, %v12062, 0.0
    %v12696 = vadd.f32 %v12694, %v12695
    %v12697 = vsel %vm8067, %v12067, 0.0
    %v12698 = vadd.f32 %v12696, %v12697
    %v12699 = vsel %vm8067, %v12072, 0.0
    %v12700 = vadd.f32 %v12698, %v12699
    %v12701 = vsel %vm8067, %v12077, 0.0
    %v12702 = vadd.f32 %v12700, %v12701
    %v12703 = vsel %vm8067, %v12082, 0.0
    %v12704 = vadd.f32 %v12702, %v12703
    %v12705 = vsel %vm8067, %v12087, 0.0
    %v12706 = vadd.f32 %v12704, %v12705
    %v12707 = vsel %vm8067, %v12092, 0.0
    %v12708 = vadd.f32 %v12706, %v12707
    %v12709 = vsel %vm8067, %v12097, 0.0
    %v12710 = vadd.f32 %v12708, %v12709
    %v12711 = vsel %vm8067, %v12102, 0.0
    %v12712 = vadd.f32 %v12710, %v12711
    %v12713 = vsel %vm8067, %v12107, 0.0
    %v12714 = vadd.f32 %v12712, %v12713
    %v12715 = vsel %vm8067, %v12112, 0.0
    %v12716 = vadd.f32 %v12714, %v12715
    %v12717 = vsel %vm8067, %v12117, 0.0
    %v12718 = vadd.f32 %v12716, %v12717
    %v12719 = vsel %vm8067, %v12122, 0.0
    %v12720 = vadd.f32 %v12718, %v12719
    %v12721 = vsel %vm8067, %v12127, 0.0
    %v12722 = vadd.f32 %v12720, %v12721
    %v12723 = vsel %vm8067, %v12132, 0.0
    %v12724 = vadd.f32 %v12722, %v12723
    %v12725 = vsel %vm8067, %v12137, 0.0
    %v12726 = vadd.f32 %v12724, %v12725
    %v12727 = vsel %vm8067, %v12142, 0.0
    %v12728 = vadd.f32 %v12726, %v12727
    %v12729 = vsel %vm8067, %v12147, 0.0
    %v12730 = vadd.f32 %v12728, %v12729
    %v12731 = vsel %vm8067, %v12152, 0.0
    %v12732 = vadd.f32 %v12730, %v12731
    %v12733 = vsel %vm8067, %v12157, 0.0
    %v12734 = vadd.f32 %v12732, %v12733
    %v12735 = vsel %vm8067, %v12162, 0.0
    %v12736 = vadd.f32 %v12734, %v12735
    %v12737 = vsel %vm8067, %v12167, 0.0
    %v12738 = vadd.f32 %v12736, %v12737
    %v12739 = vsel %vm8067, %v12172, 0.0
    %v12740 = vadd.f32 %v12738, %v12739
    %v12741 = vsel %vm8067, %v12177, 0.0
    %v12742 = vadd.f32 %v12740, %v12741
    %v12743 = vsel %vm8067, %v12182, 0.0
    %v12744 = vadd.f32 %v12742, %v12743
    %v12745 = vsel %vm8067, %v12187, 0.0
    %v12746 = vadd.f32 %v12744, %v12745
    %v12747 = vsel %vm8067, %v12192, 0.0
    %v12748 = vadd.f32 %v12746, %v12747
    %v12749 = vsel %vm8067, %v12197, 0.0
    %v12750 = vadd.f32 %v12748, %v12749
    %v12751 = vsel %vm8067, %v12202, 0.0
    %v12752 = vadd.f32 %v12750, %v12751
    %v12753 = vsel %vm8067, %v12207, 0.0
    %v12754 = vadd.f32 %v12752, %v12753
    %v12755 = vsel %vm8067, %v12212, 0.0
    %v12756 = vadd.f32 %v12754, %v12755
    %v12757 = vsel %vm8067, %v12217, 0.0
    %v12758 = vadd.f32 %v12756, %v12757
    %v12759 = vsel %vm8067, %v12222, 0.0
    %v12760 = vadd.f32 %v12758, %v12759
    %v12761 = vsel %vm8067, %v12227, 0.0
    %v12762 = vadd.f32 %v12760, %v12761
    %v12763 = vsel %vm8067, %v12232, 0.0
    %v12764 = vadd.f32 %v12762, %v12763
    %v12765 = vsel %vm8067, %v12237, 0.0
    %v12766 = vadd.f32 %v12764, %v12765
    %v12767 = vsel %vm8067, %v12242, 0.0
    %v12768 = vadd.f32 %v12766, %v12767
    %v12769 = vsel %vm8067, %v12247, 0.0
    %v12770 = vadd.f32 %v12768, %v12769
    %v12771 = vsel %vm8067, %v12252, 0.0
    %v12772 = vadd.f32 %v12770, %v12771
    %v12773 = vsel %vm8067, %v12257, 0.0
    %v12774 = vadd.f32 %v12772, %v12773
    %v12775 = vsel %vm8067, %v12262, 0.0
    %v12776 = vadd.f32 %v12774, %v12775
    %v12777 = vsel %vm8067, %v12267, 0.0
    %v12778 = vadd.f32 %v12776, %v12777
    %v12779 = vsel %vm8067, %v12272, 0.0
    %v12780 = vadd.f32 %v12778, %v12779
    %v12781 = vsel %vm8067, %v12277, 0.0
    %v12782 = vadd.f32 %v12780, %v12781
    %v12783 = vsel %vm8067, %v12282, 0.0
    %v12784 = vadd.f32 %v12782, %v12783
    %v12785 = vsel %vm8067, %v12287, 0.0
    %v12786 = vadd.f32 %v12784, %v12785
    %v12787 = vsel %vm8067, %v12292, 0.0
    %v12788 = vadd.f32 %v12786, %v12787
    %v12789 = vsel %vm8067, %v12297, 0.0
    %v12790 = vadd.f32 %v12788, %v12789
    %v12791 = vsel %vm8067, %v12302, 0.0
    %v12792 = vadd.f32 %v12790, %v12791
    %v12793 = vsel %vm8067, %v12307, 0.0
    %v12794 = vadd.f32 %v12792, %v12793
    %v12795 = vsel %vm8067, %v12312, 0.0
    %v12796 = vadd.f32 %v12794, %v12795
    %v12797 = vsel %vm8067, %v12317, 0.0
    %v12798 = vadd.f32 %v12796, %v12797
    %v12799 = vsel %vm8067, %v12322, 0.0
    %v12800 = vadd.f32 %v12798, %v12799
    %v12801 = vsel %vm8067, %v12327, 0.0
    %v12802 = vadd.f32 %v12800, %v12801
    %v12803 = vsel %vm8067, %v12332, 0.0
    %v12804 = vadd.f32 %v12802, %v12803
    %v12805 = vsel %vm8067, %v12337, 0.0
    %v12806 = vadd.f32 %v12804, %v12805
    %v12807 = vsel %vm8067, %v12342, 0.0
    %v12808 = vadd.f32 %v12806, %v12807
    %v12809 = vsel %vm8067, %v12347, 0.0
    %v12810 = vadd.f32 %v12808, %v12809
    %v12811 = vsel %vm8067, %v12352, 0.0
    %v12812 = vadd.f32 %v12810, %v12811
    %v12813 = vsel %vm8067, %v12357, 0.0
    %v12814 = vadd.f32 %v12812, %v12813
    %v12815 = vsel %vm8067, %v12362, 0.0
    %v12816 = vadd.f32 %v12814, %v12815
    %v12817 = vsel %vm8067, %v12367, 0.0
    %v12818 = vadd.f32 %v12816, %v12817
    %v12819 = vsel %vm8067, %v12372, 0.0
    %v12820 = vadd.f32 %v12818, %v12819
    %v12821 = vsel %vm8067, %v12377, 0.0
    %v12822 = vadd.f32 %v12820, %v12821
    %v12823 = vsel %vm8067, %v12382, 0.0
    %v12824 = vadd.f32 %v12822, %v12823
    %v12825 = vsel %vm8067, %v12387, 0.0
    %v12826 = vadd.f32 %v12824, %v12825
    %v12827 = vsel %vm8067, %v12392, 0.0
    %v12828 = vadd.f32 %v12826, %v12827
    %v12829 = vsel %vm8067, %v12397, 0.0
    %v12830 = vadd.f32 %v12828, %v12829
    %v12831 = vsel %vm8067, %v12402, 0.0
    %v12832 = vadd.f32 %v12830, %v12831
    %v12833 = vsel %vm8067, %v12407, 0.0
    %v12834 = vadd.f32 %v12832, %v12833
    %v12835 = vsel %vm8067, %v12412, 0.0
    %v12836 = vadd.f32 %v12834, %v12835
    %v12837 = vsel %vm8067, %v12417, 0.0
    %v12838 = vadd.f32 %v12836, %v12837
    %v12839 = vsel %vm8067, %v12422, 0.0
    %v12840 = vadd.f32 %v12838, %v12839
    %v12841 = vsel %vm8067, %v12427, 0.0
    %v12842 = vadd.f32 %v12840, %v12841
    %v12843 = vsel %vm8067, %v12432, 0.0
    %v12844 = vadd.f32 %v12842, %v12843
    %v12845 = vsel %vm8067, %v12437, 0.0
    %v12846 = vadd.f32 %v12844, %v12845
    %v12847 = vsel %vm8067, %v12442, 0.0
    %v12848 = vadd.f32 %v12846, %v12847
    %v12849 = vsel %vm8067, %v12447, 0.0
    %v12850 = vadd.f32 %v12848, %v12849
    %v12851 = vsel %vm8067, %v12452, 0.0
    %v12852 = vadd.f32 %v12850, %v12851
    %v12853 = vsel %vm8067, %v12457, 0.0
    %v12854 = vadd.f32 %v12852, %v12853
    %v12855 = vsel %vm8067, %v12462, 0.0
    %v12856 = vadd.f32 %v12854, %v12855
    %v12857 = vsel %vm8067, %v12467, 0.0
    %v12858 = vadd.f32 %v12856, %v12857
    %v12859 = vsel %vm8067, %v12472, 0.0
    %v12860 = vadd.f32 %v12858, %v12859
    %v12861 = vsel %vm8067, %v12477, 0.0
    %v12862 = vadd.f32 %v12860, %v12861
    %v12863 = vsel %vm8067, %v12003, 0.0
    %v12864 = vsel %vm8067, %v12008, 0.0
    %v12865 = vadd.f32 %v12863, %v12864
    %v12866 = vsel %vm8067, %v12013, 0.0
    %v12867 = vadd.f32 %v12865, %v12866
    %v12868 = vsel %vm8067, %v12018, 0.0
    %v12869 = vadd.f32 %v12867, %v12868
    %v12870 = vsel %vm8067, %v12023, 0.0
    %v12871 = vadd.f32 %v12869, %v12870
    %v12872 = vsel %vm8067, %v12028, 0.0
    %v12873 = vadd.f32 %v12871, %v12872
    %v12874 = vsel %vm8067, %v12033, 0.0
    %v12875 = vadd.f32 %v12873, %v12874
    %v12876 = vsel %vm8067, %v12038, 0.0
    %v12877 = vadd.f32 %v12875, %v12876
    %v12878 = vsel %vm8067, %v12043, 0.0
    %v12879 = vadd.f32 %v12877, %v12878
    %v12880 = vsel %vm8067, %v12048, 0.0
    %v12881 = vadd.f32 %v12879, %v12880
    %v12882 = vsel %vm8067, %v12053, 0.0
    %v12883 = vadd.f32 %v12881, %v12882
    %v12884 = vsel %vm8067, %v12058, 0.0
    %v12885 = vadd.f32 %v12883, %v12884
    %v12886 = vsel %vm8067, %v12063, 0.0
    %v12887 = vadd.f32 %v12885, %v12886
    %v12888 = vsel %vm8067, %v12068, 0.0
    %v12889 = vadd.f32 %v12887, %v12888
    %v12890 = vsel %vm8067, %v12073, 0.0
    %v12891 = vadd.f32 %v12889, %v12890
    %v12892 = vsel %vm8067, %v12078, 0.0
    %v12893 = vadd.f32 %v12891, %v12892
    %v12894 = vsel %vm8067, %v12083, 0.0
    %v12895 = vadd.f32 %v12893, %v12894
    %v12896 = vsel %vm8067, %v12088, 0.0
    %v12897 = vadd.f32 %v12895, %v12896
    %v12898 = vsel %vm8067, %v12093, 0.0
    %v12899 = vadd.f32 %v12897, %v12898
    %v12900 = vsel %vm8067, %v12098, 0.0
    %v12901 = vadd.f32 %v12899, %v12900
    %v12902 = vsel %vm8067, %v12103, 0.0
    %v12903 = vadd.f32 %v12901, %v12902
    %v12904 = vsel %vm8067, %v12108, 0.0
    %v12905 = vadd.f32 %v12903, %v12904
    %v12906 = vsel %vm8067, %v12113, 0.0
    %v12907 = vadd.f32 %v12905, %v12906
    %v12908 = vsel %vm8067, %v12118, 0.0
    %v12909 = vadd.f32 %v12907, %v12908
    %v12910 = vsel %vm8067, %v12123, 0.0
    %v12911 = vadd.f32 %v12909, %v12910
    %v12912 = vsel %vm8067, %v12128, 0.0
    %v12913 = vadd.f32 %v12911, %v12912
    %v12914 = vsel %vm8067, %v12133, 0.0
    %v12915 = vadd.f32 %v12913, %v12914
    %v12916 = vsel %vm8067, %v12138, 0.0
    %v12917 = vadd.f32 %v12915, %v12916
    %v12918 = vsel %vm8067, %v12143, 0.0
    %v12919 = vadd.f32 %v12917, %v12918
    %v12920 = vsel %vm8067, %v12148, 0.0
    %v12921 = vadd.f32 %v12919, %v12920
    %v12922 = vsel %vm8067, %v12153, 0.0
    %v12923 = vadd.f32 %v12921, %v12922
    %v12924 = vsel %vm8067, %v12158, 0.0
    %v12925 = vadd.f32 %v12923, %v12924
    %v12926 = vsel %vm8067, %v12163, 0.0
    %v12927 = vadd.f32 %v12925, %v12926
    %v12928 = vsel %vm8067, %v12168, 0.0
    %v12929 = vadd.f32 %v12927, %v12928
    %v12930 = vsel %vm8067, %v12173, 0.0
    %v12931 = vadd.f32 %v12929, %v12930
    %v12932 = vsel %vm8067, %v12178, 0.0
    %v12933 = vadd.f32 %v12931, %v12932
    %v12934 = vsel %vm8067, %v12183, 0.0
    %v12935 = vadd.f32 %v12933, %v12934
    %v12936 = vsel %vm8067, %v12188, 0.0
    %v12937 = vadd.f32 %v12935, %v12936
    %v12938 = vsel %vm8067, %v12193, 0.0
    %v12939 = vadd.f32 %v12937, %v12938
    %v12940 = vsel %vm8067, %v12198, 0.0
    %v12941 = vadd.f32 %v12939, %v12940
    %v12942 = vsel %vm8067, %v12203, 0.0
    %v12943 = vadd.f32 %v12941, %v12942
    %v12944 = vsel %vm8067, %v12208, 0.0
    %v12945 = vadd.f32 %v12943, %v12944
    %v12946 = vsel %vm8067, %v12213, 0.0
    %v12947 = vadd.f32 %v12945, %v12946
    %v12948 = vsel %vm8067, %v12218, 0.0
    %v12949 = vadd.f32 %v12947, %v12948
    %v12950 = vsel %vm8067, %v12223, 0.0
    %v12951 = vadd.f32 %v12949, %v12950
    %v12952 = vsel %vm8067, %v12228, 0.0
    %v12953 = vadd.f32 %v12951, %v12952
    %v12954 = vsel %vm8067, %v12233, 0.0
    %v12955 = vadd.f32 %v12953, %v12954
    %v12956 = vsel %vm8067, %v12238, 0.0
    %v12957 = vadd.f32 %v12955, %v12956
    %v12958 = vsel %vm8067, %v12243, 0.0
    %v12959 = vadd.f32 %v12957, %v12958
    %v12960 = vsel %vm8067, %v12248, 0.0
    %v12961 = vadd.f32 %v12959, %v12960
    %v12962 = vsel %vm8067, %v12253, 0.0
    %v12963 = vadd.f32 %v12961, %v12962
    %v12964 = vsel %vm8067, %v12258, 0.0
    %v12965 = vadd.f32 %v12963, %v12964
    %v12966 = vsel %vm8067, %v12263, 0.0
    %v12967 = vadd.f32 %v12965, %v12966
    %v12968 = vsel %vm8067, %v12268, 0.0
    %v12969 = vadd.f32 %v12967, %v12968
    %v12970 = vsel %vm8067, %v12273, 0.0
    %v12971 = vadd.f32 %v12969, %v12970
    %v12972 = vsel %vm8067, %v12278, 0.0
    %v12973 = vadd.f32 %v12971, %v12972
    %v12974 = vsel %vm8067, %v12283, 0.0
    %v12975 = vadd.f32 %v12973, %v12974
    %v12976 = vsel %vm8067, %v12288, 0.0
    %v12977 = vadd.f32 %v12975, %v12976
    %v12978 = vsel %vm8067, %v12293, 0.0
    %v12979 = vadd.f32 %v12977, %v12978
    %v12980 = vsel %vm8067, %v12298, 0.0
    %v12981 = vadd.f32 %v12979, %v12980
    %v12982 = vsel %vm8067, %v12303, 0.0
    %v12983 = vadd.f32 %v12981, %v12982
    %v12984 = vsel %vm8067, %v12308, 0.0
    %v12985 = vadd.f32 %v12983, %v12984
    %v12986 = vsel %vm8067, %v12313, 0.0
    %v12987 = vadd.f32 %v12985, %v12986
    %v12988 = vsel %vm8067, %v12318, 0.0
    %v12989 = vadd.f32 %v12987, %v12988
    %v12990 = vsel %vm8067, %v12323, 0.0
    %v12991 = vadd.f32 %v12989, %v12990
    %v12992 = vsel %vm8067, %v12328, 0.0
    %v12993 = vadd.f32 %v12991, %v12992
    %v12994 = vsel %vm8067, %v12333, 0.0
    %v12995 = vadd.f32 %v12993, %v12994
    %v12996 = vsel %vm8067, %v12338, 0.0
    %v12997 = vadd.f32 %v12995, %v12996
    %v12998 = vsel %vm8067, %v12343, 0.0
    %v12999 = vadd.f32 %v12997, %v12998
    %v13000 = vsel %vm8067, %v12348, 0.0
    %v13001 = vadd.f32 %v12999, %v13000
    %v13002 = vsel %vm8067, %v12353, 0.0
    %v13003 = vadd.f32 %v13001, %v13002
    %v13004 = vsel %vm8067, %v12358, 0.0
    %v13005 = vadd.f32 %v13003, %v13004
    %v13006 = vsel %vm8067, %v12363, 0.0
    %v13007 = vadd.f32 %v13005, %v13006
    %v13008 = vsel %vm8067, %v12368, 0.0
    %v13009 = vadd.f32 %v13007, %v13008
    %v13010 = vsel %vm8067, %v12373, 0.0
    %v13011 = vadd.f32 %v13009, %v13010
    %v13012 = vsel %vm8067, %v12378, 0.0
    %v13013 = vadd.f32 %v13011, %v13012
    %v13014 = vsel %vm8067, %v12383, 0.0
    %v13015 = vadd.f32 %v13013, %v13014
    %v13016 = vsel %vm8067, %v12388, 0.0
    %v13017 = vadd.f32 %v13015, %v13016
    %v13018 = vsel %vm8067, %v12393, 0.0
    %v13019 = vadd.f32 %v13017, %v13018
    %v13020 = vsel %vm8067, %v12398, 0.0
    %v13021 = vadd.f32 %v13019, %v13020
    %v13022 = vsel %vm8067, %v12403, 0.0
    %v13023 = vadd.f32 %v13021, %v13022
    %v13024 = vsel %vm8067, %v12408, 0.0
    %v13025 = vadd.f32 %v13023, %v13024
    %v13026 = vsel %vm8067, %v12413, 0.0
    %v13027 = vadd.f32 %v13025, %v13026
    %v13028 = vsel %vm8067, %v12418, 0.0
    %v13029 = vadd.f32 %v13027, %v13028
    %v13030 = vsel %vm8067, %v12423, 0.0
    %v13031 = vadd.f32 %v13029, %v13030
    %v13032 = vsel %vm8067, %v12428, 0.0
    %v13033 = vadd.f32 %v13031, %v13032
    %v13034 = vsel %vm8067, %v12433, 0.0
    %v13035 = vadd.f32 %v13033, %v13034
    %v13036 = vsel %vm8067, %v12438, 0.0
    %v13037 = vadd.f32 %v13035, %v13036
    %v13038 = vsel %vm8067, %v12443, 0.0
    %v13039 = vadd.f32 %v13037, %v13038
    %v13040 = vsel %vm8067, %v12448, 0.0
    %v13041 = vadd.f32 %v13039, %v13040
    %v13042 = vsel %vm8067, %v12453, 0.0
    %v13043 = vadd.f32 %v13041, %v13042
    %v13044 = vsel %vm8067, %v12458, 0.0
    %v13045 = vadd.f32 %v13043, %v13044
    %v13046 = vsel %vm8067, %v12463, 0.0
    %v13047 = vadd.f32 %v13045, %v13046
    %v13048 = vsel %vm8067, %v12468, 0.0
    %v13049 = vadd.f32 %v13047, %v13048
    %v13050 = vsel %vm8067, %v12473, 0.0
    %v13051 = vadd.f32 %v13049, %v13050
    %v13052 = vsel %vm8067, %v12478, 0.0
    %v13053 = vadd.f32 %v13051, %v13052
    %v13054 = vsel %vm8067, %v12004, 0.0
    %v13055 = vsel %vm8067, %v12009, 0.0
    %v13056 = vadd.f32 %v13054, %v13055
    %v13057 = vsel %vm8067, %v12014, 0.0
    %v13058 = vadd.f32 %v13056, %v13057
    %v13059 = vsel %vm8067, %v12019, 0.0
    %v13060 = vadd.f32 %v13058, %v13059
    %v13061 = vsel %vm8067, %v12024, 0.0
    %v13062 = vadd.f32 %v13060, %v13061
    %v13063 = vsel %vm8067, %v12029, 0.0
    %v13064 = vadd.f32 %v13062, %v13063
    %v13065 = vsel %vm8067, %v12034, 0.0
    %v13066 = vadd.f32 %v13064, %v13065
    %v13067 = vsel %vm8067, %v12039, 0.0
    %v13068 = vadd.f32 %v13066, %v13067
    %v13069 = vsel %vm8067, %v12044, 0.0
    %v13070 = vadd.f32 %v13068, %v13069
    %v13071 = vsel %vm8067, %v12049, 0.0
    %v13072 = vadd.f32 %v13070, %v13071
    %v13073 = vsel %vm8067, %v12054, 0.0
    %v13074 = vadd.f32 %v13072, %v13073
    %v13075 = vsel %vm8067, %v12059, 0.0
    %v13076 = vadd.f32 %v13074, %v13075
    %v13077 = vsel %vm8067, %v12064, 0.0
    %v13078 = vadd.f32 %v13076, %v13077
    %v13079 = vsel %vm8067, %v12069, 0.0
    %v13080 = vadd.f32 %v13078, %v13079
    %v13081 = vsel %vm8067, %v12074, 0.0
    %v13082 = vadd.f32 %v13080, %v13081
    %v13083 = vsel %vm8067, %v12079, 0.0
    %v13084 = vadd.f32 %v13082, %v13083
    %v13085 = vsel %vm8067, %v12084, 0.0
    %v13086 = vadd.f32 %v13084, %v13085
    %v13087 = vsel %vm8067, %v12089, 0.0
    %v13088 = vadd.f32 %v13086, %v13087
    %v13089 = vsel %vm8067, %v12094, 0.0
    %v13090 = vadd.f32 %v13088, %v13089
    %v13091 = vsel %vm8067, %v12099, 0.0
    %v13092 = vadd.f32 %v13090, %v13091
    %v13093 = vsel %vm8067, %v12104, 0.0
    %v13094 = vadd.f32 %v13092, %v13093
    %v13095 = vsel %vm8067, %v12109, 0.0
    %v13096 = vadd.f32 %v13094, %v13095
    %v13097 = vsel %vm8067, %v12114, 0.0
    %v13098 = vadd.f32 %v13096, %v13097
    %v13099 = vsel %vm8067, %v12119, 0.0
    %v13100 = vadd.f32 %v13098, %v13099
    %v13101 = vsel %vm8067, %v12124, 0.0
    %v13102 = vadd.f32 %v13100, %v13101
    %v13103 = vsel %vm8067, %v12129, 0.0
    %v13104 = vadd.f32 %v13102, %v13103
    %v13105 = vsel %vm8067, %v12134, 0.0
    %v13106 = vadd.f32 %v13104, %v13105
    %v13107 = vsel %vm8067, %v12139, 0.0
    %v13108 = vadd.f32 %v13106, %v13107
    %v13109 = vsel %vm8067, %v12144, 0.0
    %v13110 = vadd.f32 %v13108, %v13109
    %v13111 = vsel %vm8067, %v12149, 0.0
    %v13112 = vadd.f32 %v13110, %v13111
    %v13113 = vsel %vm8067, %v12154, 0.0
    %v13114 = vadd.f32 %v13112, %v13113
    %v13115 = vsel %vm8067, %v12159, 0.0
    %v13116 = vadd.f32 %v13114, %v13115
    %v13117 = vsel %vm8067, %v12164, 0.0
    %v13118 = vadd.f32 %v13116, %v13117
    %v13119 = vsel %vm8067, %v12169, 0.0
    %v13120 = vadd.f32 %v13118, %v13119
    %v13121 = vsel %vm8067, %v12174, 0.0
    %v13122 = vadd.f32 %v13120, %v13121
    %v13123 = vsel %vm8067, %v12179, 0.0
    %v13124 = vadd.f32 %v13122, %v13123
    %v13125 = vsel %vm8067, %v12184, 0.0
    %v13126 = vadd.f32 %v13124, %v13125
    %v13127 = vsel %vm8067, %v12189, 0.0
    %v13128 = vadd.f32 %v13126, %v13127
    %v13129 = vsel %vm8067, %v12194, 0.0
    %v13130 = vadd.f32 %v13128, %v13129
    %v13131 = vsel %vm8067, %v12199, 0.0
    %v13132 = vadd.f32 %v13130, %v13131
    %v13133 = vsel %vm8067, %v12204, 0.0
    %v13134 = vadd.f32 %v13132, %v13133
    %v13135 = vsel %vm8067, %v12209, 0.0
    %v13136 = vadd.f32 %v13134, %v13135
    %v13137 = vsel %vm8067, %v12214, 0.0
    %v13138 = vadd.f32 %v13136, %v13137
    %v13139 = vsel %vm8067, %v12219, 0.0
    %v13140 = vadd.f32 %v13138, %v13139
    %v13141 = vsel %vm8067, %v12224, 0.0
    %v13142 = vadd.f32 %v13140, %v13141
    %v13143 = vsel %vm8067, %v12229, 0.0
    %v13144 = vadd.f32 %v13142, %v13143
    %v13145 = vsel %vm8067, %v12234, 0.0
    %v13146 = vadd.f32 %v13144, %v13145
    %v13147 = vsel %vm8067, %v12239, 0.0
    %v13148 = vadd.f32 %v13146, %v13147
    %v13149 = vsel %vm8067, %v12244, 0.0
    %v13150 = vadd.f32 %v13148, %v13149
    %v13151 = vsel %vm8067, %v12249, 0.0
    %v13152 = vadd.f32 %v13150, %v13151
    %v13153 = vsel %vm8067, %v12254, 0.0
    %v13154 = vadd.f32 %v13152, %v13153
    %v13155 = vsel %vm8067, %v12259, 0.0
    %v13156 = vadd.f32 %v13154, %v13155
    %v13157 = vsel %vm8067, %v12264, 0.0
    %v13158 = vadd.f32 %v13156, %v13157
    %v13159 = vsel %vm8067, %v12269, 0.0
    %v13160 = vadd.f32 %v13158, %v13159
    %v13161 = vsel %vm8067, %v12274, 0.0
    %v13162 = vadd.f32 %v13160, %v13161
    %v13163 = vsel %vm8067, %v12279, 0.0
    %v13164 = vadd.f32 %v13162, %v13163
    %v13165 = vsel %vm8067, %v12284, 0.0
    %v13166 = vadd.f32 %v13164, %v13165
    %v13167 = vsel %vm8067, %v12289, 0.0
    %v13168 = vadd.f32 %v13166, %v13167
    %v13169 = vsel %vm8067, %v12294, 0.0
    %v13170 = vadd.f32 %v13168, %v13169
    %v13171 = vsel %vm8067, %v12299, 0.0
    %v13172 = vadd.f32 %v13170, %v13171
    %v13173 = vsel %vm8067, %v12304, 0.0
    %v13174 = vadd.f32 %v13172, %v13173
    %v13175 = vsel %vm8067, %v12309, 0.0
    %v13176 = vadd.f32 %v13174, %v13175
    %v13177 = vsel %vm8067, %v12314, 0.0
    %v13178 = vadd.f32 %v13176, %v13177
    %v13179 = vsel %vm8067, %v12319, 0.0
    %v13180 = vadd.f32 %v13178, %v13179
    %v13181 = vsel %vm8067, %v12324, 0.0
    %v13182 = vadd.f32 %v13180, %v13181
    %v13183 = vsel %vm8067, %v12329, 0.0
    %v13184 = vadd.f32 %v13182, %v13183
    %v13185 = vsel %vm8067, %v12334, 0.0
    %v13186 = vadd.f32 %v13184, %v13185
    %v13187 = vsel %vm8067, %v12339, 0.0
    %v13188 = vadd.f32 %v13186, %v13187
    %v13189 = vsel %vm8067, %v12344, 0.0
    %v13190 = vadd.f32 %v13188, %v13189
    %v13191 = vsel %vm8067, %v12349, 0.0
    %v13192 = vadd.f32 %v13190, %v13191
    %v13193 = vsel %vm8067, %v12354, 0.0
    %v13194 = vadd.f32 %v13192, %v13193
    %v13195 = vsel %vm8067, %v12359, 0.0
    %v13196 = vadd.f32 %v13194, %v13195
    %v13197 = vsel %vm8067, %v12364, 0.0
    %v13198 = vadd.f32 %v13196, %v13197
    %v13199 = vsel %vm8067, %v12369, 0.0
    %v13200 = vadd.f32 %v13198, %v13199
    %v13201 = vsel %vm8067, %v12374, 0.0
    %v13202 = vadd.f32 %v13200, %v13201
    %v13203 = vsel %vm8067, %v12379, 0.0
    %v13204 = vadd.f32 %v13202, %v13203
    %v13205 = vsel %vm8067, %v12384, 0.0
    %v13206 = vadd.f32 %v13204, %v13205
    %v13207 = vsel %vm8067, %v12389, 0.0
    %v13208 = vadd.f32 %v13206, %v13207
    %v13209 = vsel %vm8067, %v12394, 0.0
    %v13210 = vadd.f32 %v13208, %v13209
    %v13211 = vsel %vm8067, %v12399, 0.0
    %v13212 = vadd.f32 %v13210, %v13211
    %v13213 = vsel %vm8067, %v12404, 0.0
    %v13214 = vadd.f32 %v13212, %v13213
    %v13215 = vsel %vm8067, %v12409, 0.0
    %v13216 = vadd.f32 %v13214, %v13215
    %v13217 = vsel %vm8067, %v12414, 0.0
    %v13218 = vadd.f32 %v13216, %v13217
    %v13219 = vsel %vm8067, %v12419, 0.0
    %v13220 = vadd.f32 %v13218, %v13219
    %v13221 = vsel %vm8067, %v12424, 0.0
    %v13222 = vadd.f32 %v13220, %v13221
    %v13223 = vsel %vm8067, %v12429, 0.0
    %v13224 = vadd.f32 %v13222, %v13223
    %v13225 = vsel %vm8067, %v12434, 0.0
    %v13226 = vadd.f32 %v13224, %v13225
    %v13227 = vsel %vm8067, %v12439, 0.0
    %v13228 = vadd.f32 %v13226, %v13227
    %v13229 = vsel %vm8067, %v12444, 0.0
    %v13230 = vadd.f32 %v13228, %v13229
    %v13231 = vsel %vm8067, %v12449, 0.0
    %v13232 = vadd.f32 %v13230, %v13231
    %v13233 = vsel %vm8067, %v12454, 0.0
    %v13234 = vadd.f32 %v13232, %v13233
    %v13235 = vsel %vm8067, %v12459, 0.0
    %v13236 = vadd.f32 %v13234, %v13235
    %v13237 = vsel %vm8067, %v12464, 0.0
    %v13238 = vadd.f32 %v13236, %v13237
    %v13239 = vsel %vm8067, %v12469, 0.0
    %v13240 = vadd.f32 %v13238, %v13239
    %v13241 = vsel %vm8067, %v12474, 0.0
    %v13242 = vadd.f32 %v13240, %v13241
    %v13243 = vsel %vm8067, %v12479, 0.0
    %v13244 = vadd.f32 %v13242, %v13243
    %v13245 = vsel %vm11764, %v12005, 0.0
    %v13246 = vsel %vm11764, %v12010, 0.0
    %v13247 = vadd.f32 %v13245, %v13246
    %v13248 = vsel %vm11764, %v12015, 0.0
    %v13249 = vadd.f32 %v13247, %v13248
    %v13250 = vsel %vm11764, %v12020, 0.0
    %v13251 = vadd.f32 %v13249, %v13250
    %v13252 = vsel %vm11764, %v12025, 0.0
    %v13253 = vadd.f32 %v13251, %v13252
    %v13254 = vsel %vm11764, %v12030, 0.0
    %v13255 = vadd.f32 %v13253, %v13254
    %v13256 = vsel %vm11764, %v12035, 0.0
    %v13257 = vadd.f32 %v13255, %v13256
    %v13258 = vsel %vm11764, %v12040, 0.0
    %v13259 = vadd.f32 %v13257, %v13258
    %v13260 = vsel %vm11764, %v12045, 0.0
    %v13261 = vadd.f32 %v13259, %v13260
    %v13262 = vsel %vm11764, %v12050, 0.0
    %v13263 = vadd.f32 %v13261, %v13262
    %v13264 = vsel %vm11764, %v12055, 0.0
    %v13265 = vadd.f32 %v13263, %v13264
    %v13266 = vsel %vm11764, %v12060, 0.0
    %v13267 = vadd.f32 %v13265, %v13266
    %v13268 = vsel %vm11764, %v12065, 0.0
    %v13269 = vadd.f32 %v13267, %v13268
    %v13270 = vsel %vm11764, %v12070, 0.0
    %v13271 = vadd.f32 %v13269, %v13270
    %v13272 = vsel %vm11764, %v12075, 0.0
    %v13273 = vadd.f32 %v13271, %v13272
    %v13274 = vsel %vm11764, %v12080, 0.0
    %v13275 = vadd.f32 %v13273, %v13274
    %v13276 = vsel %vm11764, %v12085, 0.0
    %v13277 = vadd.f32 %v13275, %v13276
    %v13278 = vsel %vm11764, %v12090, 0.0
    %v13279 = vadd.f32 %v13277, %v13278
    %v13280 = vsel %vm11764, %v12095, 0.0
    %v13281 = vadd.f32 %v13279, %v13280
    %v13282 = vsel %vm11764, %v12100, 0.0
    %v13283 = vadd.f32 %v13281, %v13282
    %v13284 = vsel %vm11764, %v12105, 0.0
    %v13285 = vadd.f32 %v13283, %v13284
    %v13286 = vsel %vm11764, %v12110, 0.0
    %v13287 = vadd.f32 %v13285, %v13286
    %v13288 = vsel %vm11764, %v12115, 0.0
    %v13289 = vadd.f32 %v13287, %v13288
    %v13290 = vsel %vm11764, %v12120, 0.0
    %v13291 = vadd.f32 %v13289, %v13290
    %v13292 = vsel %vm11764, %v12125, 0.0
    %v13293 = vadd.f32 %v13291, %v13292
    %v13294 = vsel %vm11764, %v12130, 0.0
    %v13295 = vadd.f32 %v13293, %v13294
    %v13296 = vsel %vm11764, %v12135, 0.0
    %v13297 = vadd.f32 %v13295, %v13296
    %v13298 = vsel %vm11764, %v12140, 0.0
    %v13299 = vadd.f32 %v13297, %v13298
    %v13300 = vsel %vm11764, %v12145, 0.0
    %v13301 = vadd.f32 %v13299, %v13300
    %v13302 = vsel %vm11764, %v12150, 0.0
    %v13303 = vadd.f32 %v13301, %v13302
    %v13304 = vsel %vm11764, %v12155, 0.0
    %v13305 = vadd.f32 %v13303, %v13304
    %v13306 = vsel %vm11764, %v12160, 0.0
    %v13307 = vadd.f32 %v13305, %v13306
    %v13308 = vsel %vm11764, %v12165, 0.0
    %v13309 = vadd.f32 %v13307, %v13308
    %v13310 = vsel %vm11764, %v12170, 0.0
    %v13311 = vadd.f32 %v13309, %v13310
    %v13312 = vsel %vm11764, %v12175, 0.0
    %v13313 = vadd.f32 %v13311, %v13312
    %v13314 = vsel %vm11764, %v12180, 0.0
    %v13315 = vadd.f32 %v13313, %v13314
    %v13316 = vsel %vm11764, %v12185, 0.0
    %v13317 = vadd.f32 %v13315, %v13316
    %v13318 = vsel %vm11764, %v12190, 0.0
    %v13319 = vadd.f32 %v13317, %v13318
    %v13320 = vsel %vm11764, %v12195, 0.0
    %v13321 = vadd.f32 %v13319, %v13320
    %v13322 = vsel %vm11764, %v12200, 0.0
    %v13323 = vadd.f32 %v13321, %v13322
    %v13324 = vsel %vm11764, %v12205, 0.0
    %v13325 = vadd.f32 %v13323, %v13324
    %v13326 = vsel %vm11764, %v12210, 0.0
    %v13327 = vadd.f32 %v13325, %v13326
    %v13328 = vsel %vm11764, %v12215, 0.0
    %v13329 = vadd.f32 %v13327, %v13328
    %v13330 = vsel %vm11764, %v12220, 0.0
    %v13331 = vadd.f32 %v13329, %v13330
    %v13332 = vsel %vm11764, %v12225, 0.0
    %v13333 = vadd.f32 %v13331, %v13332
    %v13334 = vsel %vm11764, %v12230, 0.0
    %v13335 = vadd.f32 %v13333, %v13334
    %v13336 = vsel %vm11764, %v12235, 0.0
    %v13337 = vadd.f32 %v13335, %v13336
    %v13338 = vsel %vm11764, %v12240, 0.0
    %v13339 = vadd.f32 %v13337, %v13338
    %v13340 = vsel %vm11764, %v12245, 0.0
    %v13341 = vadd.f32 %v13339, %v13340
    %v13342 = vsel %vm11764, %v12250, 0.0
    %v13343 = vadd.f32 %v13341, %v13342
    %v13344 = vsel %vm11764, %v12255, 0.0
    %v13345 = vadd.f32 %v13343, %v13344
    %v13346 = vsel %vm11764, %v12260, 0.0
    %v13347 = vadd.f32 %v13345, %v13346
    %v13348 = vsel %vm11764, %v12265, 0.0
    %v13349 = vadd.f32 %v13347, %v13348
    %v13350 = vsel %vm11764, %v12270, 0.0
    %v13351 = vadd.f32 %v13349, %v13350
    %v13352 = vsel %vm11764, %v12275, 0.0
    %v13353 = vadd.f32 %v13351, %v13352
    %v13354 = vsel %vm11764, %v12280, 0.0
    %v13355 = vadd.f32 %v13353, %v13354
    %v13356 = vsel %vm11764, %v12285, 0.0
    %v13357 = vadd.f32 %v13355, %v13356
    %v13358 = vsel %vm11764, %v12290, 0.0
    %v13359 = vadd.f32 %v13357, %v13358
    %v13360 = vsel %vm11764, %v12295, 0.0
    %v13361 = vadd.f32 %v13359, %v13360
    %v13362 = vsel %vm11764, %v12300, 0.0
    %v13363 = vadd.f32 %v13361, %v13362
    %v13364 = vsel %vm11764, %v12305, 0.0
    %v13365 = vadd.f32 %v13363, %v13364
    %v13366 = vsel %vm11764, %v12310, 0.0
    %v13367 = vadd.f32 %v13365, %v13366
    %v13368 = vsel %vm11764, %v12315, 0.0
    %v13369 = vadd.f32 %v13367, %v13368
    %v13370 = vsel %vm11764, %v12320, 0.0
    %v13371 = vadd.f32 %v13369, %v13370
    %v13372 = vsel %vm11764, %v12325, 0.0
    %v13373 = vadd.f32 %v13371, %v13372
    %v13374 = vsel %vm11764, %v12330, 0.0
    %v13375 = vadd.f32 %v13373, %v13374
    %v13376 = vsel %vm11764, %v12335, 0.0
    %v13377 = vadd.f32 %v13375, %v13376
    %v13378 = vsel %vm11764, %v12340, 0.0
    %v13379 = vadd.f32 %v13377, %v13378
    %v13380 = vsel %vm11764, %v12345, 0.0
    %v13381 = vadd.f32 %v13379, %v13380
    %v13382 = vsel %vm11764, %v12350, 0.0
    %v13383 = vadd.f32 %v13381, %v13382
    %v13384 = vsel %vm11764, %v12355, 0.0
    %v13385 = vadd.f32 %v13383, %v13384
    %v13386 = vsel %vm11764, %v12360, 0.0
    %v13387 = vadd.f32 %v13385, %v13386
    %v13388 = vsel %vm11764, %v12365, 0.0
    %v13389 = vadd.f32 %v13387, %v13388
    %v13390 = vsel %vm11764, %v12370, 0.0
    %v13391 = vadd.f32 %v13389, %v13390
    %v13392 = vsel %vm11764, %v12375, 0.0
    %v13393 = vadd.f32 %v13391, %v13392
    %v13394 = vsel %vm11764, %v12380, 0.0
    %v13395 = vadd.f32 %v13393, %v13394
    %v13396 = vsel %vm11764, %v12385, 0.0
    %v13397 = vadd.f32 %v13395, %v13396
    %v13398 = vsel %vm11764, %v12390, 0.0
    %v13399 = vadd.f32 %v13397, %v13398
    %v13400 = vsel %vm11764, %v12395, 0.0
    %v13401 = vadd.f32 %v13399, %v13400
    %v13402 = vsel %vm11764, %v12400, 0.0
    %v13403 = vadd.f32 %v13401, %v13402
    %v13404 = vsel %vm11764, %v12405, 0.0
    %v13405 = vadd.f32 %v13403, %v13404
    %v13406 = vsel %vm11764, %v12410, 0.0
    %v13407 = vadd.f32 %v13405, %v13406
    %v13408 = vsel %vm11764, %v12415, 0.0
    %v13409 = vadd.f32 %v13407, %v13408
    %v13410 = vsel %vm11764, %v12420, 0.0
    %v13411 = vadd.f32 %v13409, %v13410
    %v13412 = vsel %vm11764, %v12425, 0.0
    %v13413 = vadd.f32 %v13411, %v13412
    %v13414 = vsel %vm11764, %v12430, 0.0
    %v13415 = vadd.f32 %v13413, %v13414
    %v13416 = vsel %vm11764, %v12435, 0.0
    %v13417 = vadd.f32 %v13415, %v13416
    %v13418 = vsel %vm11764, %v12440, 0.0
    %v13419 = vadd.f32 %v13417, %v13418
    %v13420 = vsel %vm11764, %v12445, 0.0
    %v13421 = vadd.f32 %v13419, %v13420
    %v13422 = vsel %vm11764, %v12450, 0.0
    %v13423 = vadd.f32 %v13421, %v13422
    %v13424 = vsel %vm11764, %v12455, 0.0
    %v13425 = vadd.f32 %v13423, %v13424
    %v13426 = vsel %vm11764, %v12460, 0.0
    %v13427 = vadd.f32 %v13425, %v13426
    %v13428 = vsel %vm11764, %v12465, 0.0
    %v13429 = vadd.f32 %v13427, %v13428
    %v13430 = vsel %vm11764, %v12470, 0.0
    %v13431 = vadd.f32 %v13429, %v13430
    %v13432 = vsel %vm11764, %v12475, 0.0
    %v13433 = vadd.f32 %v13431, %v13432
    %v13434 = vsel %vm11764, %v12480, 0.0
    %v13435 = vadd.f32 %v13433, %v13434
    %v13436 = vmul.f32 %v3717, %v528
    %v13437 = vmul.f32 %v3914, %v528
    %v13438 = vmul.f32 %v4111, %v528
    %v13439 = vmul.f32 %v4308, %v528
    %v13440 = vmul.f32 %v4506, %v528
    %v13441 = vsel %vm3520, %v13436, 0.0
    %v13442 = vsel %vm3520, %v13437, 0.0
    %v13443 = vadd.f32 %v13441, %v13442
    %v13444 = vsel %vm3520, %v13438, 0.0
    %v13445 = vadd.f32 %v13443, %v13444
    %v13446 = vsel %vm3520, %v13439, 0.0
    %v13447 = vadd.f32 %v13445, %v13446
    %v13448 = vsel %vm4309, %v13440, 0.0
    %v13449 = vadd.f32 %v13447, %v13448
    %13450 = vadd.xlane.f32.xlu0 %v13449
    %v13451 = vpop.xlane.xlu0 %13450
    %v13452 = vrot.slane %v13451, 4
    %v13453 = vadd.f32 %v13451, %v13452
    %v13454 = vrot.slane %v13453, 2
    %v13455 = vadd.f32 %v13453, %v13454
    %v13456 = vrot.slane %v13455, 1
    %v13457 = vadd.f32 %v13455, %v13456
    %s13458 = vtos %v13457
    %v13459 = vmul.f32 %v8264, %v546
    %v13460 = vmul.f32 %v8461, %v547
    %v13461 = vmul.f32 %v8658, %v548
    %v13462 = vmul.f32 %v8855, %v549
    %v13463 = vsel %vm8067, %v13459, 0.0
    %v13464 = vsel %vm8067, %v13460, 0.0
    %v13465 = vadd.f32 %v13463, %v13464
    %v13466 = vsel %vm8067, %v13461, 0.0
    %v13467 = vadd.f32 %v13465, %v13466
    %v13468 = vsel %vm8067, %v13462, 0.0
    %v13469 = vadd.f32 %v13467, %v13468
    %13470 = vadd.xlane.f32.xlu0 %v13469
    %v13471 = vpop.xlane.xlu0 %13470
    %v13472 = vrot.slane %v13471, 4
    %v13473 = vadd.f32 %v13471, %v13472
    %v13474 = vrot.slane %v13473, 2
    %v13475 = vadd.f32 %v13473, %v13474
    %v13476 = vrot.slane %v13475, 1
    %v13477 = vadd.f32 %v13475, %v13476
    %s13478 = vtos %v13477
    %s13479 = sadd.f32 %s13458, %s13478
    %v13480 = vsel %vm8067, %v11996, 0.0
    %v13481 = vsel %vm8067, %v11997, 0.0
    %v13482 = vadd.f32 %v13480, %v13481
    %v13483 = vsel %vm8067, %v11998, 0.0
    %v13484 = vadd.f32 %v13482, %v13483
    %v13485 = vsel %vm8067, %v11999, 0.0
    %v13486 = vadd.f32 %v13484, %v13485
    %v13487 = vsel %vm11764, %v12000, 0.0
    %v13488 = vadd.f32 %v13486, %v13487
    %13489 = vadd.xlane.f32.xlu0 %v13488
    %v13490 = vpop.xlane.xlu0 %13489
    %v13491 = vrot.slane %v13490, 4
    %v13492 = vadd.f32 %v13490, %v13491
    %v13493 = vrot.slane %v13492, 2
    %v13494 = vadd.f32 %v13492, %v13493
    %v13495 = vrot.slane %v13494, 1
    %v13496 = vadd.f32 %v13494, %v13495
    %s13497 = vtos %v13496
    %s13498 = sadd.f32 %s13479, %s13497
    %v13499 = vsel %vm3520, %v5198, 0.0
    %v13500 = vsel %vm3520, %v5395, 0.0
    %v13501 = vadd.f32 %v13499, %v13500
    %v13502 = vsel %vm3520, %v5592, 0.0
    %v13503 = vadd.f32 %v13501, %v13502
    %v13504 = vsel %vm3520, %v5789, 0.0
    %v13505 = vadd.f32 %v13503, %v13504
    %v13506 = vsel %vm4309, %v5986, 0.0
    %v13507 = vadd.f32 %v13505, %v13506
    %13508 = vadd.xlane.f32.xlu0 %v13507
    %v13509 = vpop.xlane.xlu0 %13508
    %v13510 = vrot.slane %v13509, 4
    %v13511 = vadd.f32 %v13509, %v13510
    %v13512 = vrot.slane %v13511, 2
    %v13513 = vadd.f32 %v13511, %v13512
    %v13514 = vrot.slane %v13513, 1
    %v13515 = vadd.f32 %v13513, %v13514
    %s13516 = vtos %v13515
    %v13517 = vsel %vm8067, %v9448, 0.0
    %v13518 = vsel %vm8067, %v9645, 0.0
    %v13519 = vadd.f32 %v13517, %v13518
    %v13520 = vsel %vm8067, %v9842, 0.0
    %v13521 = vadd.f32 %v13519, %v13520
    %v13522 = vsel %vm8067, %v10039, 0.0
    %v13523 = vadd.f32 %v13521, %v13522
    %13524 = vadd.xlane.f32.xlu0 %v13523
    %v13525 = vpop.xlane.xlu0 %13524
    %v13526 = vrot.slane %v13525, 4
    %v13527 = vadd.f32 %v13525, %v13526
    %v13528 = vrot.slane %v13527, 2
    %v13529 = vadd.f32 %v13527, %v13528
    %v13530 = vrot.slane %v13529, 1
    %v13531 = vadd.f32 %v13529, %v13530
    %s13532 = vtos %v13531
    %s13533 = sadd.f32 %s13516, %s13532
    %v13534 = vsel %vm8067, %v12671, 0.0
    %v13535 = vsel %vm8067, %v12862, 0.0
    %v13536 = vadd.f32 %v13534, %v13535
    %v13537 = vsel %vm8067, %v13053, 0.0
    %v13538 = vadd.f32 %v13536, %v13537
    %v13539 = vsel %vm8067, %v13244, 0.0
    %v13540 = vadd.f32 %v13538, %v13539
    %v13541 = vsel %vm11764, %v13435, 0.0
    %v13542 = vadd.f32 %v13540, %v13541
    %13543 = vadd.xlane.f32.xlu0 %v13542
    %v13544 = vpop.xlane.xlu0 %13543
    %v13545 = vrot.slane %v13544, 4
    %v13546 = vadd.f32 %v13544, %v13545
    %v13547 = vrot.slane %v13546, 2
    %v13548 = vadd.f32 %v13546, %v13547
    %v13549 = vrot.slane %v13548, 1
    %v13550 = vadd.f32 %v13548, %v13549
    %s13551 = vtos %v13550
    %s13552 = sadd.f32 %s13533, %s13551
    %s13553 = smul.f32 %s13498, 9.56535e-06
    %v13554 = vstv %s13553
    %vm13555 = vcmask 0
    %13556 = vst.msk [vmem:[#allocation5] sm:$0x1] %vm13555, %v13554
    %s13557 = smul.f32 %s13552, 9.56535e-06
    %v13558 = vstv %s13557
    %13559 = vst.msk [vmem:[#allocation6] sm:$0x1] %vm13555, %v13558
    // Predicated region
    $region10: #{tpu_custom_call.1} parent=1 // pred_check
      _
    $region11: #{tpu_custom_call.1} parent=1 // pred_check_branch
      %13561 = sbr.rel (0) target = $region13
    $region12: #{tpu_custom_call.1} parent=1 // pred_region
      %13563 = vsyncadd [#allocation4], 0
      %s13565 = sshll.u32 [#allocation5], 4
      %s13566 = int_to_ptr.vmem [resolvable:$true] %s13565
      %s13567 = sshll.u32 %s1, 4
      %s13568 = int_to_ptr.hbm [resolvable:$true] %s13567
      %13570 = dma.vmem_to_hbm [thread:$0]  %s13566, 16, %s13568, [#allocation4]
    $region13: #{tpu_custom_call.1} parent=1 // pred_fallthru
      _
    // Predicated region
    $region14: #{tpu_custom_call.1} parent=1 // pred_check
      _
    $region15: #{tpu_custom_call.1} parent=1 // pred_check_branch
      %13572 = sbr.rel (0) target = $region17
    $region16: #{tpu_custom_call.1} parent=1 // pred_region
      %13574 = vsyncadd [#allocation7], 0
      %s13576 = sshll.u32 [#allocation6], 4
      %s13577 = int_to_ptr.vmem [resolvable:$true] %s13576
      %s13578 = sshll.u32 %s2, 4
      %s13579 = int_to_ptr.hbm [resolvable:$true] %s13578
      %13581 = dma.vmem_to_hbm [thread:$0]  %s13577, 16, %s13579, [#allocation7]
    $region17: #{tpu_custom_call.1} parent=1 // pred_fallthru
      _
    // Predicated region
    $region18: #{tpu_custom_call.1} parent=1 // pred_check
      _
    $region19: #{tpu_custom_call.1} parent=1 // pred_check_branch
      %13583 = sbr.rel (0) target = $region21
    $region20: #{tpu_custom_call.1} parent=1 // pred_region
      %13585 = dma.done [#allocation4], 16
    $region21: #{tpu_custom_call.1} parent=1 // pred_fallthru
      _
    // Predicated region
    $region22: #{tpu_custom_call.1} parent=1 // pred_check
      _
    $region23: #{tpu_custom_call.1} parent=1 // pred_check_branch
      %13587 = sbr.rel (0) target = $region25
    $region24: #{tpu_custom_call.1} parent=1 // pred_region
      %13589 = dma.done [#allocation7], 16
    $region25: #{tpu_custom_call.1} parent=1 // pred_fallthru
      _
    %13590 = vsyncpa [#allocation3], 1
    %13591 = vsyncpa [#allocation4], 1
    %13592 = vsyncpa [#allocation7], 1

</llo_original>
